<compile_context>
chip_gen: v5e
topology: v5e:2x2
jax: 0.10.0
libtpu: 0.0.40
codegen_flags: <defaults>
</compile_context>

<pallas_src>
import functools

import jax
import jax.numpy as jnp
from jax.experimental import pallas as pl
from jax.experimental.pallas import tpu as pltpu

VMEM = pltpu.MemorySpace.VMEM


def _vmem_limit_bytes():
    base = 32 * 1024 * 1024
    try:
        cap = int(pltpu.get_tpu_info().vmem_capacity_bytes)
    except Exception:  # no TPU info available -> conservative default
        return base
    # ~half of physical: 32 MiB on v7x (64 MiB phys), 64 MiB on v5e/v6e.
    return max(base, min(cap // 2, 96 * 1024 * 1024))


_VMEM_LIMIT = _vmem_limit_bytes()


def _pick_chunk(total, target):
    """Largest divisor of `total` that is a multiple of 8 and <= target."""
    target = max(8, min(target, total))
    for c in range(target, 7, -1):
        if total % c == 0 and c % 8 == 0:
            return c
    return total  # tiny / awkward sizes: single full block (== full dim is legal)


# ----------------------------------------------------------------------------
# Kernel 1: stem 3x3 stride-2 pad-1 conv (as a single K=27 matmul) + folded BN
# + swish.  Grid (batch, spatial-chunk), both independent ("parallel").
# ----------------------------------------------------------------------------
def _stem_kernel(p_ref, w_ref, b_ref, o_ref):
    y = jnp.dot(p_ref[0], w_ref[...], preferred_element_type=jnp.float32)
    y = y + b_ref[...]                       # BN scale pre-folded into w
    y = y * jax.nn.sigmoid(y)                # swish (f32)
    # TODO(synk): output last dim is 32 (<128 lanes); kept as-is — folding to
    # (rows, Wo*32) in-kernel needs a lane-splitting reshape (lowering risk).
    o_ref[0] = y.astype(o_ref.dtype)


def stem_conv_bn_swish(patches, w27, bias, Cout):
    B, M, K = patches.shape
    chunk = _pick_chunk(M, min(512, max(8, M // 2)))
    return pl.pallas_call(
        _stem_kernel,
        out_shape=jax.ShapeDtypeStruct((B, M, Cout), jnp.bfloat16),
        grid=(B, M // chunk),
        in_specs=[pl.BlockSpec((1, chunk, K), lambda b, s: (b, s, 0)),
                  pl.BlockSpec((K, Cout), lambda b, s: (0, 0)),
                  pl.BlockSpec((1, Cout), lambda b, s: (0, 0))],
        out_specs=pl.BlockSpec((1, chunk, Cout), lambda b, s: (b, s, 0)),
        compiler_params=pltpu.CompilerParams(
            dimension_semantics=("parallel", "parallel"),
            vmem_limit_bytes=_VMEM_LIMIT),
    )(patches, w27, bias.reshape(1, Cout).astype(jnp.float32))


# ----------------------------------------------------------------------------
# Kernel 2: depthwise 3x3 (stride 1, pad 1) + folded BN + swish, PLUS the
# squeeze-excite global-average-pool column sums as a second output.
# Lane-dense folded layout (B, H, W*C); halo via pltpu.roll (XLU) + hoisted
# boundary masks; BN scale folded into the tiled weights.
# TODO(synk): no row-chunk grid axis here (halo across chunks); per-batch
# working set is small at these shapes.
# ----------------------------------------------------------------------------
def _dwconv_kernel(x_ref, w_ref, b_ref, o_ref, sum_ref, *, Ho, Wo, C):
    WC = Wo * C
    x = x_ref[0].astype(jnp.float32)                      # (Ho, WC)
    w = w_ref[...]                                        # (9, WC) f32, scale-folded

    # hoisted index grids / boundary masks (computed once, reused by all taps)
    row = jax.lax.broadcasted_iota(jnp.int32, (Ho, WC), 0)
    lane = jax.lax.broadcasted_iota(jnp.int32, (Ho, WC), 1)
    zero = jnp.zeros((Ho, WC), jnp.float32)
    m_row = {1: row < Ho - 1, -1: row >= 1}
    m_col = {1: lane < WC - C, -1: lane >= C}

    acc = zero
    for dy in (-1, 0, 1):
        if dy == 0:
            xr = x
        else:
            xr = jnp.where(m_row[dy],
                           pltpu.roll(x, shift=(-dy) % Ho, axis=0), zero)
        for dx in (-1, 0, 1):
            if dx == 0:
                tap = xr
            else:
                tap = jnp.where(m_col[dx],
                                pltpu.roll(xr, shift=(-dx * C) % WC, axis=1), zero)
            acc = acc + tap * w[(dy + 1) * 3 + (dx + 1)]

    y = acc + b_ref[...]                                  # folded BN bias
    y = y * jax.nn.sigmoid(y)                             # swish
    o_ref[0] = y.astype(o_ref.dtype)
    sum_ref[0] = jnp.sum(y, axis=0, keepdims=True)        # SE pool (per W*C column)


def dwconv3x3_bn_swish(x_fold, w_tiled, bias_tiled, Ho, Wo, C):
    B = x_fold.shape[0]
    WC = Wo * C
    kernel = functools.partial(_dwconv_kernel, Ho=Ho, Wo=Wo, C=C)
    return pl.pallas_call(
        kernel,
        out_shape=(jax.ShapeDtypeStruct((B, Ho, WC), jnp.bfloat16),
                   jax.ShapeDtypeStruct((B, 1, WC), jnp.float32)),
        grid=(B,),
        in_specs=[pl.BlockSpec((1, Ho, WC), lambda b: (b, 0, 0)),
                  pl.BlockSpec((9, WC), lambda b: (0, 0)),
                  pl.BlockSpec((1, WC), lambda b: (0, 0))],
        out_specs=(pl.BlockSpec((1, Ho, WC), lambda b: (b, 0, 0)),
                   pl.BlockSpec((1, 1, WC), lambda b: (b, 0, 0))),
        compiler_params=pltpu.CompilerParams(
            dimension_semantics=("parallel",),
            vmem_limit_bytes=_VMEM_LIMIT),
    )(x_fold, w_tiled.astype(jnp.float32),
      bias_tiled.reshape(1, WC).astype(jnp.float32))


# ----------------------------------------------------------------------------
# Kernel 3: squeeze-excite FCs on the pre-pooled column sums.
# The fold over W is absorbed into a tiled reduce weight, so this kernel never
# touches the big activation again.
# ----------------------------------------------------------------------------
def _se_kernel(cs_ref, wr_ref, br_ref, we_ref, be_ref, o_ref, *, inv_hw):
    r = jnp.dot(cs_ref[...], wr_ref[...],
                preferred_element_type=jnp.float32) * inv_hw
    r = r + br_ref[...]
    r = r * jax.nn.sigmoid(r)                             # swish
    e = jnp.dot(r, we_ref[...], preferred_element_type=jnp.float32) + be_ref[...]
    o_ref[...] = jax.nn.sigmoid(e)                        # (B, C) gate


def se_gate(colsums, wr_tiled, br, we, be, *, inv_hw):
    B, _ = colsums.shape
    C = we.shape[1]
    kernel = functools.partial(_se_kernel, inv_hw=inv_hw)
    return pl.pallas_call(
        kernel,
        out_shape=jax.ShapeDtypeStruct((B, C), jnp.float32),
        in_specs=[pl.BlockSpec(memory_space=VMEM)] * 5,
        out_specs=pl.BlockSpec(memory_space=VMEM),
        compiler_params=pltpu.CompilerParams(vmem_limit_bytes=_VMEM_LIMIT),
    )(colsums, wr_tiled.astype(jnp.float32),
      br.reshape(1, -1).astype(jnp.float32),
      we.astype(jnp.float32), be.reshape(1, -1).astype(jnp.float32))


# ----------------------------------------------------------------------------
# Kernel 4: fused MBConv tail + classifier head.
#   SE rescale + proj 1x1 + BN + top 1x1 + BN are pre-fused into ONE (C,1280)
#   weight: the gate is folded into it once per batch (si==0) into a bf16 VMEM
#   scratch.  Then: swish (= last_hidden rows) -> F.relu -> running spatial sum
#   in a VMEM accumulator -> avgpool((1,1)) -> flatten -> dropout(eval) -> fc.
# Grid (batch "parallel", spatial chunks "arbitrary"); weights stay resident.
# ----------------------------------------------------------------------------
def _tail_head_kernel(x_ref, g_ref, w2_ref, b2_ref, wfc_ref, bfc_ref,
                      o_ref, wg_ref, acc_ref, *, inv_hw):
    si = pl.program_id(1)

    @pl.when(si == 0)
    def _():
        acc_ref[...] = jnp.zeros_like(acc_ref)
        # gate (C,1) folded into the combined proj+top weight, once per batch.
        wg_ref[...] = (g_ref[0] * w2_ref[...]).astype(wg_ref.dtype)

    t = jnp.dot(x_ref[0], wg_ref[...], preferred_element_type=jnp.float32)
    t = t + b2_ref[...]                                   # fused proj/top BN bias
    t = t * jax.nn.sigmoid(t)                             # swish => last_hidden rows
    t = jnp.maximum(t, 0.0)                               # head: F.relu
    acc_ref[...] += jnp.sum(t, axis=0, keepdims=True)     # running spatial sum

    @pl.when(si == pl.num_programs(1) - 1)
    def _():
        pooled = acc_ref[...] * inv_hw                    # avgpool((1,1)) + flatten
        # nn.Dropout(0.1) is identity in eval mode.
        # TODO(synk): training-mode stochastic dropout (RNG mask) not implemented.
        o_ref[0] = jnp.dot(pooled, wfc_ref[...],
                           preferred_element_type=jnp.float32) + bfc_ref[...]


def mbconv_tail_and_head(h, gate_col, w2, b2, wfc, bfc):
    B, HW, C = h.shape
    hidden = w2.shape[1]
    ncls = wfc.shape[1]
    chunk = _pick_chunk(HW, min(512, max(8, HW // 2)))
    kernel = functools.partial(_tail_head_kernel, inv_hw=1.0 / HW)
    out = pl.pallas_call(
        kernel,
        out_shape=jax.ShapeDtypeStruct((B, 1, ncls), jnp.float32),
        grid=(B, HW // chunk),
        in_specs=[
            pl.BlockSpec((1, chunk, C), lambda b, s: (b, s, 0)),
            pl.BlockSpec((1, C, 1), lambda b, s: (b, 0, 0)),
            pl.BlockSpec((C, hidden), lambda b, s: (0, 0)),
            pl.BlockSpec((1, hidden), lambda b, s: (0, 0)),
            pl.BlockSpec((hidden, ncls), lambda b, s: (0, 0)),
            pl.BlockSpec((1, ncls), lambda b, s: (0, 0)),
        ],
        out_specs=pl.BlockSpec((1, 1, ncls), lambda b, s: (b, 0, 0)),
        scratch_shapes=[pltpu.VMEM((C, hidden), jnp.bfloat16),
                        pltpu.VMEM((1, hidden), jnp.float32)],
        compiler_params=pltpu.CompilerParams(
            dimension_semantics=("parallel", "arbitrary"),
            vmem_limit_bytes=_VMEM_LIMIT),
    )(h, gate_col, w2.astype(jnp.float32),
      b2.reshape(1, hidden).astype(jnp.float32),
      wfc.astype(jnp.float32), bfc.reshape(1, ncls).astype(jnp.float32))
    return out.reshape(B, ncls)


# ----------------------------------------------------------------------------
# Parameters (deterministic synthetic init; BN stored as scale/bias).
# ----------------------------------------------------------------------------
def init_params(key, cin=3, stem_c=32, proj_c=16, se_c=8, hidden=1280,
                num_classes=10):
    keys = jax.random.split(key, 8)
    s = 0.25

    def nrm(k, shape):
        return s * jax.random.normal(k, shape, dtype=jnp.float32)

    return {
        "stem_w": nrm(keys[0], (9, cin, stem_c)),          # tap = dy*3+dx
        "stem_scale": jnp.ones((stem_c,), jnp.float32),
        "stem_bias": jnp.zeros((stem_c,), jnp.float32),
        "dw_w": nrm(keys[1], (9, stem_c)),
        "dw_scale": jnp.ones((stem_c,), jnp.float32),
        "dw_bias": jnp.zeros((stem_c,), jnp.float32),
        "se_red_w": nrm(keys[2], (stem_c, se_c)),
        "se_red_b": jnp.zeros((se_c,), jnp.float32),
        "se_exp_w": nrm(keys[3], (se_c, stem_c)),
        "se_exp_b": jnp.zeros((stem_c,), jnp.float32),
        "proj_w": nrm(keys[4], (stem_c, proj_c)),
        "proj_scale": jnp.ones((proj_c,), jnp.float32),
        "proj_bias": jnp.zeros((proj_c,), jnp.float32),
        "top_w": nrm(keys[5], (proj_c, hidden)),
        "top_scale": jnp.ones((hidden,), jnp.float32),
        "top_bias": jnp.zeros((hidden,), jnp.float32),
        "fc_w": nrm(keys[6], (hidden, num_classes)),
        "fc_b": jnp.zeros((num_classes,), jnp.float32),
    }


# ----------------------------------------------------------------------------
# Full forward pass (EfficientNet_b1.forward equivalent).
# ----------------------------------------------------------------------------
def efficientnet_b1_forward(x_nchw, p):
    x = jnp.transpose(x_nchw, (0, 2, 3, 1))                # NCHW -> NHWC once
    B, H, W, Cin = x.shape
    # TODO(synk): odd spatial sizes need an extra row/col of stem halo handling.
    assert H % 2 == 0 and W % 2 == 0, "stem expects even spatial dims"
    Ho, Wo = H // 2, W // 2
    HW = Ho * Wo
    C = p["stem_scale"].shape[0]

    # --- stem: lane-dense (B, Ho*Wo, 27) patch tensor (stride-2 => ~input-
    #     sized), then one K=27 matmul per chunk inside the kernel ------------
    xp = jnp.pad(x, ((0, 0), (1, 1), (1, 1), (0, 0)))
    taps = [xp[:, dy:dy + 2 * Ho:2, dx:dx + 2 * Wo:2, :]
            for dy in range(3) for dx in range(3)]
    patches = jnp.concatenate(taps, axis=-1).reshape(B, HW, 9 * Cin)
    patches = patches.astype(jnp.bfloat16)
    w27 = (p["stem_w"].reshape(9 * Cin, C) * p["stem_scale"][None, :]
           ).astype(jnp.bfloat16)                          # BN scale folded
    h1 = stem_conv_bn_swish(patches, w27, p["stem_bias"], C)   # (B, HW, C) bf16

    # --- MBConv: depthwise 3x3 + BN + swish (+ fused SE pool) ----------------
    h1_fold = h1.reshape(B, Ho, Wo * C)                    # free HBM reshape
    dw_w_t = jnp.tile(p["dw_w"] * p["dw_scale"][None, :], (1, Wo))
    dw_b_t = jnp.tile(p["dw_bias"], Wo)
    h2_fold, colsums = dwconv3x3_bn_swish(h1_fold, dw_w_t, dw_b_t, Ho, Wo, C)

    # --- squeeze-excite gate from the pre-pooled column sums -----------------
    wr_tiled = jnp.tile(p["se_red_w"], (Wo, 1))            # fold over W absorbed
    gate = se_gate(colsums.reshape(B, Wo * C), wr_tiled, p["se_red_b"],
                   p["se_exp_w"], p["se_exp_b"], inv_hw=1.0 / HW)   # (B, C)
    gate_col = gate[:, :, None]                            # (B, C, 1)

    # --- algebraic proj+top fusion (both BNs are linear, no activation
    #     between): W2 = (Wp*ps) @ (Wt*ts), b2 = pb @ (Wt*ts) + tb ------------
    wt_s = p["top_w"] * p["top_scale"][None, :]
    w2 = (p["proj_w"] * p["proj_scale"][None, :]) @ wt_s   # (C, hidden)
    b2 = p["proj_bias"] @ wt_s + p["top_bias"]             # (hidden,)

    # --- fused tail + head -----------------------------------------------------
    h2 = h2_fold.reshape(B, HW, C)                         # free HBM reshape
    return mbconv_tail_and_head(h2, gate_col, w2, b2, p["fc_w"], p["fc_b"])


# ----------------------------------------------------------------------------
# Pure-JAX f32 reference (same math, standard XLA ops) for validation.
# ----------------------------------------------------------------------------
def _reference_forward(x_nchw, p):
    x = jnp.transpose(x_nchw, (0, 2, 3, 1)).astype(jnp.float32)
    Cin = x.shape[-1]
    C = p["stem_scale"].shape[0]
    w = p["stem_w"].reshape(3, 3, Cin, C)
    h = jax.lax.conv_general_dilated(x, w, (2, 2), ((1, 1), (1, 1)),
                                     dimension_numbers=("NHWC", "HWIO", "NHWC"))
    h = h * p["stem_scale"] + p["stem_bias"]
    h = h * jax.nn.sigmoid(h)
    dw = p["dw_w"].reshape(3, 3, C)[:, :, None, :]
    d = jax.lax.conv_general_dilated(h, dw, (1, 1), ((1, 1), (1, 1)),
                                     dimension_numbers=("NHWC", "HWIO", "NHWC"),
                                     feature_group_count=C)
    d = d * p["dw_scale"] + p["dw_bias"]
    d = d * jax.nn.sigmoid(d)
    pooled = jnp.mean(d, axis=(1, 2))
    r = pooled @ p["se_red_w"] + p["se_red_b"]
    r = r * jax.nn.sigmoid(r)
    g = jax.nn.sigmoid(r @ p["se_exp_w"] + p["se_exp_b"])
    dg = d * g[:, None, None, :]
    pr = dg @ p["proj_w"] * p["proj_scale"] + p["proj_bias"]
    t = pr @ p["top_w"] * p["top_scale"] + p["top_bias"]
    t = t * jax.nn.sigmoid(t)                              # last_hidden_state
    t = jnp.maximum(t, 0.0)                                # head: relu
    pooled_t = jnp.mean(t, axis=(1, 2))                    # avgpool + flatten
    return pooled_t @ p["fc_w"] + p["fc_b"]                # dropout(eval) + fc


if __name__ == "__main__":
    key = jax.random.PRNGKey(0)
    pkey, xkey = jax.random.split(key)
    params = init_params(pkey, num_classes=10)
    # Small NCHW image batch consistent with the module's conv input convention.
    x = jax.random.normal(xkey, (2, 3, 32, 32), dtype=jnp.float32)

    out = jax.jit(efficientnet_b1_forward)(x, params)
    out = jax.block_until_ready(out)

    assert out.shape == (2, 10), out.shape
    assert bool(jnp.all(jnp.isfinite(out)))

    # Validate against the pure-JAX f32 reference (loose tol for bf16 MXU path).
    ref = _reference_forward(x, params)
    err = float(jnp.max(jnp.abs(out - ref)))
    tol = 5e-2 + 1e-1 * float(jnp.max(jnp.abs(ref)))
    assert err < tol, (err, tol)

    print("KERNEL_OK")
</pallas_src>

<mosaic_0001>
module attributes {stable_mosaic.version = 11 : i64} {
  func.func @_stem_kernel(%arg0: i32, %arg1: i32, %arg2: memref<1x128x27xbf16, #tpu.memory_space<vmem>>, %arg3: memref<27x32xbf16, #tpu.memory_space<vmem>>, %arg4: memref<1x32xf32, #tpu.memory_space<vmem>>, %arg5: memref<1x128x32xbf16, #tpu.memory_space<vmem>>) attributes {dimension_semantics = [#tpu.dimension_semantics<parallel>, #tpu.dimension_semantics<parallel>], iteration_bounds = array<i64: 2, 2>, scalar_prefetch = 0 : i64, scratch_operands = 0 : i64, tpu.core_type = #tpu.core_type<tc>, window_params = [{transform_indices = @transform_0, window_bounds = array<i64: 1, 128, 27>}, {pipeline_mode = #tpu.pipeline_mode<synchronous>, transform_indices = @transform_1, window_bounds = array<i64: 27, 32>}, {pipeline_mode = #tpu.pipeline_mode<synchronous>, transform_indices = @transform_2, window_bounds = array<i64: 1, 32>}, {transform_indices = @transform_3, window_bounds = array<i64: 1, 128, 32>}]} {
    %c0 = arith.constant 0 : index
    %c0_0 = arith.constant 0 : index
    %c0_1 = arith.constant 0 : index
    %0 = vector.load %arg2[%c0, %c0_0, %c0_1] : memref<1x128x27xbf16, #tpu.memory_space<vmem>>, vector<1x128x27xbf16>
    %1 = vector.shape_cast %0 : vector<1x128x27xbf16> to vector<128x27xbf16>
    %c0_2 = arith.constant 0 : index
    %c0_3 = arith.constant 0 : index
    %2 = vector.load %arg3[%c0_2, %c0_3] : memref<27x32xbf16, #tpu.memory_space<vmem>>, vector<27x32xbf16>
    %cst = arith.constant dense<0.000000e+00> : vector<128x32xf32>
    %3 = tpu.matmul %1, %2, %cst {dimension_numbers = #tpu.dot_dimension_numbers<[1], [0], [0], [1], [0, 0, 1, 1], [], []>} : vector<128x27xbf16>, vector<27x32xbf16>, vector<128x32xf32> -> vector<128x32xf32>
    %c0_4 = arith.constant 0 : index
    %c0_5 = arith.constant 0 : index
    %4 = vector.load %arg4[%c0_4, %c0_5] : memref<1x32xf32, #tpu.memory_space<vmem>>, vector<1x32xf32>
    %5 = vector.broadcast %4 : vector<1x32xf32> to vector<128x32xf32>
    %6 = arith.addf %3, %5 : vector<128x32xf32>
    %7 = arith.negf %6 : vector<128x32xf32>
    %8 = math.exp %7 : vector<128x32xf32>
    %cst_6 = arith.constant 1.000000e+00 : f32
    %9 = vector.broadcast %cst_6 : f32 to vector<128x32xf32>
    %10 = arith.addf %9, %8 : vector<128x32xf32>
    %11 = arith.divf %9, %10 : vector<128x32xf32>
    %12 = arith.mulf %6, %11 : vector<128x32xf32>
    %13 = arith.truncf %12 : vector<128x32xf32> to vector<128x32xbf16>
    %c0_7 = arith.constant 0 : index
    %c0_8 = arith.constant 0 : index
    %c0_9 = arith.constant 0 : index
    %14 = vector.load %arg5[%c0_7, %c0_8, %c0_9] : memref<1x128x32xbf16, #tpu.memory_space<vmem>>, vector<1x128x32xbf16>
    %15 = vector.shape_cast %14 : vector<1x128x32xbf16> to vector<128x32xbf16>
    %16 = vector.shape_cast %13 : vector<128x32xbf16> to vector<1x128x32xbf16>
    tpu.vector_store %arg5[%c0_7, %c0_8, %c0_9], %16 {strides = array<i32>} : memref<1x128x32xbf16, #tpu.memory_space<vmem>>, vector<1x128x32xbf16>,
    return
  }
  func.func @transform_0(%arg0: i32, %arg1: i32) -> (i32, i32, i32) {
    %c0_i32 = arith.constant 0 : i32
    %c0_i32_0 = arith.constant 0 : i32
    return %arg0, %arg1, %c0_i32 : i32, i32, i32
  }
  func.func @transform_1(%arg0: i32, %arg1: i32) -> (i32, i32) {
    %c0_i32 = arith.constant 0 : i32
    %c0_i32_0 = arith.constant 0 : i32
    %c0_i32_1 = arith.constant 0 : i32
    return %c0_i32, %c0_i32_0 : i32, i32
  }
  func.func @transform_2(%arg0: i32, %arg1: i32) -> (i32, i32) {
    %c0_i32 = arith.constant 0 : i32
    %c0_i32_0 = arith.constant 0 : i32
    %c0_i32_1 = arith.constant 0 : i32
    return %c0_i32, %c0_i32_0 : i32, i32
  }
  func.func @transform_3(%arg0: i32, %arg1: i32) -> (i32, i32, i32) {
    %c0_i32 = arith.constant 0 : i32
    %c0_i32_0 = arith.constant 0 : i32
    return %arg0, %arg1, %c0_i32 : i32, i32, i32
  }
}

module attributes {stable_mosaic.version = 11 : i64} {
  func.func @_dwconv_kernel(%arg0: i32, %arg1: memref<1x16x512xbf16, #tpu.memory_space<vmem>>, %arg2: memref<9x512xf32, #tpu.memory_space<vmem>>, %arg3: memref<1x512xf32, #tpu.memory_space<vmem>>, %arg4: memref<1x16x512xbf16, #tpu.memory_space<vmem>>, %arg5: memref<1x1x512xf32, #tpu.memory_space<vmem>>) attributes {dimension_semantics = [#tpu.dimension_semantics<parallel>], iteration_bounds = array<i64: 2>, scalar_prefetch = 0 : i64, scratch_operands = 0 : i64, tpu.core_type = #tpu.core_type<tc>, window_params = [{transform_indices = @transform_0, window_bounds = array<i64: 1, 16, 512>}, {pipeline_mode = #tpu.pipeline_mode<synchronous>, transform_indices = @transform_1, window_bounds = array<i64: 9, 512>}, {pipeline_mode = #tpu.pipeline_mode<synchronous>, transform_indices = @transform_2, window_bounds = array<i64: 1, 512>}, {transform_indices = @transform_3, window_bounds = array<i64: 1, 16, 512>}, {transform_indices = @transform_4, window_bounds = array<i64: 1, 1, 512>}]} {
    %c0 = arith.constant 0 : index
    %c0_0 = arith.constant 0 : index
    %c0_1 = arith.constant 0 : index
    %0 = vector.load %arg1[%c0, %c0_0, %c0_1] : memref<1x16x512xbf16, #tpu.memory_space<vmem>>, vector<1x16x512xbf16>
    %1 = vector.shape_cast %0 : vector<1x16x512xbf16> to vector<16x512xbf16>
    %2 = arith.extf %1 : vector<16x512xbf16> to vector<16x512xf32>
    %c0_2 = arith.constant 0 : index
    %c0_3 = arith.constant 0 : index
    %3 = vector.load %arg2[%c0_2, %c0_3] : memref<9x512xf32, #tpu.memory_space<vmem>>, vector<9x512xf32>
    %4 = tpu.iota {dimensions = array<i32: 0>} : vector<16x512xi32>
    %5 = tpu.iota {dimensions = array<i32: 1>} : vector<16x512xi32>
    %cst = arith.constant 0.000000e+00 : f32
    %6 = vector.broadcast %cst : f32 to vector<16x512xf32>
    %c15_i32 = arith.constant 15 : i32
    %7 = vector.broadcast %c15_i32 : i32 to vector<16x512xi32>
    %8 = arith.cmpi slt, %4, %7 : vector<16x512xi32>
    %c1_i32 = arith.constant 1 : i32
    %9 = vector.broadcast %c1_i32 : i32 to vector<16x512xi32>
    %10 = arith.cmpi sge, %4, %9 : vector<16x512xi32>
    %c480_i32 = arith.constant 480 : i32
    %11 = vector.broadcast %c480_i32 : i32 to vector<16x512xi32>
    %12 = arith.cmpi slt, %5, %11 : vector<16x512xi32>
    %c32_i32 = arith.constant 32 : i32
    %13 = vector.broadcast %c32_i32 : i32 to vector<16x512xi32>
    %14 = arith.cmpi sge, %5, %13 : vector<16x512xi32>
    %c1_i32_4 = arith.constant 1 : i32
    %15 = tpu.dynamic_rotate %2 by %c1_i32_4 dim 0 : vector<16x512xf32>, i32 -> vector<16x512xf32>
    %16 = arith.select %10, %15, %6 : vector<16x512xi1>, vector<16x512xf32>
    %c32_i32_5 = arith.constant 32 : i32
    %17 = tpu.dynamic_rotate %16 by %c32_i32_5 dim 1 : vector<16x512xf32>, i32 -> vector<16x512xf32>
    %18 = arith.select %14, %17, %6 : vector<16x512xi1>, vector<16x512xf32>
    %19 = vector.extract_strided_slice %3 {offsets = [0, 0], sizes = [1, 512], strides = [1, 1]} : vector<9x512xf32> to vector<1x512xf32>
    %20 = vector.shape_cast %19 : vector<1x512xf32> to vector<512xf32>
    %21 = vector.shape_cast %20 : vector<512xf32> to vector<1x512xf32>
    %22 = vector.broadcast %21 : vector<1x512xf32> to vector<16x512xf32>
    %23 = arith.mulf %18, %22 : vector<16x512xf32>
    %24 = arith.addf %6, %23 : vector<16x512xf32>
    %25 = vector.extract_strided_slice %3 {offsets = [1, 0], sizes = [1, 512], strides = [1, 1]} : vector<9x512xf32> to vector<1x512xf32>
    %26 = vector.shape_cast %25 : vector<1x512xf32> to vector<512xf32>
    %27 = vector.shape_cast %26 : vector<512xf32> to vector<1x512xf32>
    %28 = vector.broadcast %27 : vector<1x512xf32> to vector<16x512xf32>
    %29 = arith.mulf %16, %28 : vector<16x512xf32>
    %30 = arith.addf %24, %29 : vector<16x512xf32>
    %c480_i32_6 = arith.constant 480 : i32
    %31 = tpu.dynamic_rotate %16 by %c480_i32_6 dim 1 : vector<16x512xf32>, i32 -> vector<16x512xf32>
    %32 = arith.select %12, %31, %6 : vector<16x512xi1>, vector<16x512xf32>
    %33 = vector.extract_strided_slice %3 {offsets = [2, 0], sizes = [1, 512], strides = [1, 1]} : vector<9x512xf32> to vector<1x512xf32>
    %34 = vector.shape_cast %33 : vector<1x512xf32> to vector<512xf32>
    %35 = vector.shape_cast %34 : vector<512xf32> to vector<1x512xf32>
    %36 = vector.broadcast %35 : vector<1x512xf32> to vector<16x512xf32>
    %37 = arith.mulf %32, %36 : vector<16x512xf32>
    %38 = arith.addf %30, %37 : vector<16x512xf32>
    %c32_i32_7 = arith.constant 32 : i32
    %39 = tpu.dynamic_rotate %2 by %c32_i32_7 dim 1 : vector<16x512xf32>, i32 -> vector<16x512xf32>
    %40 = arith.select %14, %39, %6 : vector<16x512xi1>, vector<16x512xf32>
    %41 = vector.extract_strided_slice %3 {offsets = [3, 0], sizes = [1, 512], strides = [1, 1]} : vector<9x512xf32> to vector<1x512xf32>
    %42 = vector.shape_cast %41 : vector<1x512xf32> to vector<512xf32>
    %43 = vector.shape_cast %42 : vector<512xf32> to vector<1x512xf32>
    %44 = vector.broadcast %43 : vector<1x512xf32> to vector<16x512xf32>
    %45 = arith.mulf %40, %44 : vector<16x512xf32>
    %46 = arith.addf %38, %45 : vector<16x512xf32>
    %47 = vector.extract_strided_slice %3 {offsets = [4, 0], sizes = [1, 512], strides = [1, 1]} : vector<9x512xf32> to vector<1x512xf32>
    %48 = vector.shape_cast %47 : vector<1x512xf32> to vector<512xf32>
    %49 = vector.shape_cast %48 : vector<512xf32> to vector<1x512xf32>
    %50 = vector.broadcast %49 : vector<1x512xf32> to vector<16x512xf32>
    %51 = arith.mulf %2, %50 : vector<16x512xf32>
    %52 = arith.addf %46, %51 : vector<16x512xf32>
    %c480_i32_8 = arith.constant 480 : i32
    %53 = tpu.dynamic_rotate %2 by %c480_i32_8 dim 1 : vector<16x512xf32>, i32 -> vector<16x512xf32>
    %54 = arith.select %12, %53, %6 : vector<16x512xi1>, vector<16x512xf32>
    %55 = vector.extract_strided_slice %3 {offsets = [5, 0], sizes = [1, 512], strides = [1, 1]} : vector<9x512xf32> to vector<1x512xf32>
    %56 = vector.shape_cast %55 : vector<1x512xf32> to vector<512xf32>
    %57 = vector.shape_cast %56 : vector<512xf32> to vector<1x512xf32>
    %58 = vector.broadcast %57 : vector<1x512xf32> to vector<16x512xf32>
    %59 = arith.mulf %54, %58 : vector<16x512xf32>
    %60 = arith.addf %52, %59 : vector<16x512xf32>
    %c15_i32_9 = arith.constant 15 : i32
    %61 = tpu.dynamic_rotate %2 by %c15_i32_9 dim 0 : vector<16x512xf32>, i32 -> vector<16x512xf32>
    %62 = arith.select %8, %61, %6 : vector<16x512xi1>, vector<16x512xf32>
    %c32_i32_10 = arith.constant 32 : i32
    %63 = tpu.dynamic_rotate %62 by %c32_i32_10 dim 1 : vector<16x512xf32>, i32 -> vector<16x512xf32>
    %64 = arith.select %14, %63, %6 : vector<16x512xi1>, vector<16x512xf32>
    %65 = vector.extract_strided_slice %3 {offsets = [6, 0], sizes = [1, 512], strides = [1, 1]} : vector<9x512xf32> to vector<1x512xf32>
    %66 = vector.shape_cast %65 : vector<1x512xf32> to vector<512xf32>
    %67 = vector.shape_cast %66 : vector<512xf32> to vector<1x512xf32>
    %68 = vector.broadcast %67 : vector<1x512xf32> to vector<16x512xf32>
    %69 = arith.mulf %64, %68 : vector<16x512xf32>
    %70 = arith.addf %60, %69 : vector<16x512xf32>
    %71 = vector.extract_strided_slice %3 {offsets = [7, 0], sizes = [1, 512], strides = [1, 1]} : vector<9x512xf32> to vector<1x512xf32>
    %72 = vector.shape_cast %71 : vector<1x512xf32> to vector<512xf32>
    %73 = vector.shape_cast %72 : vector<512xf32> to vector<1x512xf32>
    %74 = vector.broadcast %73 : vector<1x512xf32> to vector<16x512xf32>
    %75 = arith.mulf %62, %74 : vector<16x512xf32>
    %76 = arith.addf %70, %75 : vector<16x512xf32>
    %c480_i32_11 = arith.constant 480 : i32
    %77 = tpu.dynamic_rotate %62 by %c480_i32_11 dim 1 : vector<16x512xf32>, i32 -> vector<16x512xf32>
    %78 = arith.select %12, %77, %6 : vector<16x512xi1>, vector<16x512xf32>
    %79 = vector.extract_strided_slice %3 {offsets = [8, 0], sizes = [1, 512], strides = [1, 1]} : vector<9x512xf32> to vector<1x512xf32>
    %80 = vector.shape_cast %79 : vector<1x512xf32> to vector<512xf32>
    %81 = vector.shape_cast %80 : vector<512xf32> to vector<1x512xf32>
    %82 = vector.broadcast %81 : vector<1x512xf32> to vector<16x512xf32>
    %83 = arith.mulf %78, %82 : vector<16x512xf32>
    %84 = arith.addf %76, %83 : vector<16x512xf32>
    %c0_12 = arith.constant 0 : index
    %c0_13 = arith.constant 0 : index
    %85 = vector.load %arg3[%c0_12, %c0_13] : memref<1x512xf32, #tpu.memory_space<vmem>>, vector<1x512xf32>
    %86 = vector.broadcast %85 : vector<1x512xf32> to vector<16x512xf32>
    %87 = arith.addf %84, %86 : vector<16x512xf32>
    %88 = arith.negf %87 : vector<16x512xf32>
    %89 = math.exp %88 : vector<16x512xf32>
    %cst_14 = arith.constant 1.000000e+00 : f32
    %90 = vector.broadcast %cst_14 : f32 to vector<16x512xf32>
    %91 = arith.addf %90, %89 : vector<16x512xf32>
    %92 = arith.divf %90, %91 : vector<16x512xf32>
    %93 = arith.mulf %87, %92 : vector<16x512xf32>
    %94 = arith.truncf %93 : vector<16x512xf32> to vector<16x512xbf16>
    %c0_15 = arith.constant 0 : index
    %c0_16 = arith.constant 0 : index
    %c0_17 = arith.constant 0 : index
    %95 = vector.load %arg4[%c0_15, %c0_16, %c0_17] : memref<1x16x512xbf16, #tpu.memory_space<vmem>>, vector<1x16x512xbf16>
    %96 = vector.shape_cast %95 : vector<1x16x512xbf16> to vector<16x512xbf16>
    %97 = vector.shape_cast %94 : vector<16x512xbf16> to vector<1x16x512xbf16>
    tpu.vector_store %arg4[%c0_15, %c0_16, %c0_17], %97 {strides = array<i32>} : memref<1x16x512xbf16, #tpu.memory_space<vmem>>, vector<1x16x512xbf16>,
    %cst_18 = arith.constant dense<0.000000e+00> : vector<512xf32>
    %98 = vector.multi_reduction <add>, %93, %cst_18 [0] : vector<16x512xf32> to vector<512xf32>
    %99 = vector.shape_cast %98 : vector<512xf32> to vector<1x512xf32>
    %c0_19 = arith.constant 0 : index
    %c0_20 = arith.constant 0 : index
    %c0_21 = arith.constant 0 : index
    %100 = vector.load %arg5[%c0_19, %c0_20, %c0_21] : memref<1x1x512xf32, #tpu.memory_space<vmem>>, vector<1x1x512xf32>
    %101 = vector.shape_cast %100 : vector<1x1x512xf32> to vector<1x512xf32>
    %102 = vector.shape_cast %99 : vector<1x512xf32> to vector<1x1x512xf32>
    tpu.vector_store %arg5[%c0_19, %c0_20, %c0_21], %102 {strides = array<i32>} : memref<1x1x512xf32, #tpu.memory_space<vmem>>, vector<1x1x512xf32>,
    return
  }
  func.func @transform_0(%arg0: i32) -> (i32, i32, i32) {
    %c0_i32 = arith.constant 0 : i32
    %c0_i32_0 = arith.constant 0 : i32
    %c0_i32_1 = arith.constant 0 : i32
    return %arg0, %c0_i32, %c0_i32_0 : i32, i32, i32
  }
  func.func @transform_1(%arg0: i32) -> (i32, i32) {
    %c0_i32 = arith.constant 0 : i32
    %c0_i32_0 = arith.constant 0 : i32
    %c0_i32_1 = arith.constant 0 : i32
    return %c0_i32, %c0_i32_0 : i32, i32
  }
  func.func @transform_2(%arg0: i32) -> (i32, i32) {
    %c0_i32 = arith.constant 0 : i32
    %c0_i32_0 = arith.constant 0 : i32
    %c0_i32_1 = arith.constant 0 : i32
    return %c0_i32, %c0_i32_0 : i32, i32
  }
  func.func @transform_3(%arg0: i32) -> (i32, i32, i32) {
    %c0_i32 = arith.constant 0 : i32
    %c0_i32_0 = arith.constant 0 : i32
    %c0_i32_1 = arith.constant 0 : i32
    return %arg0, %c0_i32, %c0_i32_0 : i32, i32, i32
  }
  func.func @transform_4(%arg0: i32) -> (i32, i32, i32) {
    %c0_i32 = arith.constant 0 : i32
    %c0_i32_0 = arith.constant 0 : i32
    %c0_i32_1 = arith.constant 0 : i32
    return %arg0, %c0_i32, %c0_i32_0 : i32, i32, i32
  }
}

module attributes {stable_mosaic.version = 11 : i64} {
  func.func @_se_kernel(%arg0: memref<2x512xf32, #tpu.memory_space<vmem>>, %arg1: memref<512x8xf32, #tpu.memory_space<vmem>>, %arg2: memref<1x8xf32, #tpu.memory_space<vmem>>, %arg3: memref<8x32xf32, #tpu.memory_space<vmem>>, %arg4: memref<1x32xf32, #tpu.memory_space<vmem>>, %arg5: memref<2x32xf32, #tpu.memory_space<vmem>>) attributes {dimension_semantics = [], scalar_prefetch = 0 : i64, scratch_operands = 0 : i64, tpu.core_type = #tpu.core_type<tc>} {
    %c0 = arith.constant 0 : index
    %c0_0 = arith.constant 0 : index
    %0 = vector.load %arg0[%c0, %c0_0] : memref<2x512xf32, #tpu.memory_space<vmem>>, vector<2x512xf32>
    %c0_1 = arith.constant 0 : index
    %c0_2 = arith.constant 0 : index
    %1 = vector.load %arg1[%c0_1, %c0_2] : memref<512x8xf32, #tpu.memory_space<vmem>>, vector<512x8xf32>
    %cst = arith.constant dense<0.000000e+00> : vector<2x8xf32>
    %2 = tpu.matmul %0, %1, %cst {dimension_numbers = #tpu.dot_dimension_numbers<[1], [0], [0], [1], [0, 0, 1, 1], [], []>} : vector<2x512xf32>, vector<512x8xf32>, vector<2x8xf32> -> vector<2x8xf32>
    %cst_3 = arith.constant 3.906250e-03 : f32
    %3 = vector.broadcast %cst_3 : f32 to vector<2x8xf32>
    %4 = arith.mulf %2, %3 : vector<2x8xf32>
    %c0_4 = arith.constant 0 : index
    %c0_5 = arith.constant 0 : index
    %5 = vector.load %arg2[%c0_4, %c0_5] : memref<1x8xf32, #tpu.memory_space<vmem>>, vector<1x8xf32>
    %6 = vector.broadcast %5 : vector<1x8xf32> to vector<2x8xf32>
    %7 = arith.addf %4, %6 : vector<2x8xf32>
    %8 = arith.negf %7 : vector<2x8xf32>
    %9 = math.exp %8 : vector<2x8xf32>
    %cst_6 = arith.constant 1.000000e+00 : f32
    %10 = vector.broadcast %cst_6 : f32 to vector<2x8xf32>
    %11 = arith.addf %10, %9 : vector<2x8xf32>
    %12 = arith.divf %10, %11 : vector<2x8xf32>
    %13 = arith.mulf %7, %12 : vector<2x8xf32>
    %c0_7 = arith.constant 0 : index
    %c0_8 = arith.constant 0 : index
    %14 = vector.load %arg3[%c0_7, %c0_8] : memref<8x32xf32, #tpu.memory_space<vmem>>, vector<8x32xf32>
    %cst_9 = arith.constant dense<0.000000e+00> : vector<2x32xf32>
    %15 = tpu.matmul %13, %14, %cst_9 {dimension_numbers = #tpu.dot_dimension_numbers<[1], [0], [0], [1], [0, 0, 1, 1], [], []>} : vector<2x8xf32>, vector<8x32xf32>, vector<2x32xf32> -> vector<2x32xf32>
    %c0_10 = arith.constant 0 : index
    %c0_11 = arith.constant 0 : index
    %16 = vector.load %arg4[%c0_10, %c0_11] : memref<1x32xf32, #tpu.memory_space<vmem>>, vector<1x32xf32>
    %17 = vector.broadcast %16 : vector<1x32xf32> to vector<2x32xf32>
    %18 = arith.addf %15, %17 : vector<2x32xf32>
    %19 = arith.negf %18 : vector<2x32xf32>
    %20 = math.exp %19 : vector<2x32xf32>
    %cst_12 = arith.constant 1.000000e+00 : f32
    %21 = vector.broadcast %cst_12 : f32 to vector<2x32xf32>
    %22 = arith.addf %21, %20 : vector<2x32xf32>
    %23 = arith.divf %21, %22 : vector<2x32xf32>
    %c0_13 = arith.constant 0 : index
    %c0_14 = arith.constant 0 : index
    %24 = vector.load %arg5[%c0_13, %c0_14] : memref<2x32xf32, #tpu.memory_space<vmem>>, vector<2x32xf32>
    tpu.vector_store %arg5[%c0_13, %c0_14], %23 {strides = array<i32>} : memref<2x32xf32, #tpu.memory_space<vmem>>, vector<2x32xf32>,
    return
  }
}

module attributes {stable_mosaic.version = 11 : i64} {
  func.func @_tail_head_kernel(%arg0: i32, %arg1: i32, %arg2: memref<1x128x32xbf16, #tpu.memory_space<vmem>>, %arg3: memref<1x32x1xf32, #tpu.memory_space<vmem>>, %arg4: memref<32x1280xf32, #tpu.memory_space<vmem>>, %arg5: memref<1x1280xf32, #tpu.memory_space<vmem>>, %arg6: memref<1280x10xf32, #tpu.memory_space<vmem>>, %arg7: memref<1x10xf32, #tpu.memory_space<vmem>>, %arg8: memref<1x1x10xf32, #tpu.memory_space<vmem>>, %arg9: memref<32x1280xbf16, #tpu.memory_space<vmem>>, %arg10: memref<1x1280xf32, #tpu.memory_space<vmem>>) attributes {dimension_semantics = [#tpu.dimension_semantics<parallel>, #tpu.dimension_semantics<arbitrary>], iteration_bounds = array<i64: 2, 2>, scalar_prefetch = 0 : i64, scratch_operands = 2 : i64, tpu.core_type = #tpu.core_type<tc>, window_params = [{transform_indices = @transform_0, window_bounds = array<i64: 1, 128, 32>}, {transform_indices = @transform_1, window_bounds = array<i64: 1, 32, 1>}, {pipeline_mode = #tpu.pipeline_mode<synchronous>, transform_indices = @transform_2, window_bounds = array<i64: 32, 1280>}, {pipeline_mode = #tpu.pipeline_mode<synchronous>, transform_indices = @transform_3, window_bounds = array<i64: 1, 1280>}, {pipeline_mode = #tpu.pipeline_mode<synchronous>, transform_indices = @transform_4, window_bounds = array<i64: 1280, 10>}, {pipeline_mode = #tpu.pipeline_mode<synchronous>, transform_indices = @transform_5, window_bounds = array<i64: 1, 10>}, {transform_indices = @transform_6, window_bounds = array<i64: 1, 1, 10>}]} {
    %c0_i32 = arith.constant 0 : i32
    %0 = arith.cmpi eq, %arg1, %c0_i32 : i32
    %1 = arith.extui %0 : i1 to i32
    %c0_i32_0 = arith.constant 0 : i32
    %2 = arith.cmpi ne, %1, %c0_i32_0 : i32
    scf.if %2 {
      %cst_15 = arith.constant 0.000000e+00 : f32
      %26 = vector.broadcast %cst_15 : f32 to vector<1x1280xf32>
      %c0_16 = arith.constant 0 : index
      %c0_17 = arith.constant 0 : index
      %27 = vector.load %arg10[%c0_16, %c0_17] : memref<1x1280xf32, #tpu.memory_space<vmem>>, vector<1x1280xf32>
      tpu.vector_store %arg10[%c0_16, %c0_17], %26 {strides = array<i32>} : memref<1x1280xf32, #tpu.memory_space<vmem>>, vector<1x1280xf32>,
      %c0_18 = arith.constant 0 : index
      %c0_19 = arith.constant 0 : index
      %c0_20 = arith.constant 0 : index
      %28 = vector.load %arg3[%c0_18, %c0_19, %c0_20] : memref<1x32x1xf32, #tpu.memory_space<vmem>>, vector<1x32x1xf32>
      %29 = vector.shape_cast %28 : vector<1x32x1xf32> to vector<32x1xf32>
      %c0_21 = arith.constant 0 : index
      %c0_22 = arith.constant 0 : index
      %30 = vector.load %arg4[%c0_21, %c0_22] : memref<32x1280xf32, #tpu.memory_space<vmem>>, vector<32x1280xf32>
      %31 = vector.broadcast %29 : vector<32x1xf32> to vector<32x1280xf32>
      %32 = arith.mulf %31, %30 : vector<32x1280xf32>
      %33 = arith.truncf %32 : vector<32x1280xf32> to vector<32x1280xbf16>
      %c0_23 = arith.constant 0 : index
      %c0_24 = arith.constant 0 : index
      %34 = vector.load %arg9[%c0_23, %c0_24] : memref<32x1280xbf16, #tpu.memory_space<vmem>>, vector<32x1280xbf16>
      tpu.vector_store %arg9[%c0_23, %c0_24], %33 {strides = array<i32>} : memref<32x1280xbf16, #tpu.memory_space<vmem>>, vector<32x1280xbf16>,
    } else {
    }
    %c0 = arith.constant 0 : index
    %c0_1 = arith.constant 0 : index
    %c0_2 = arith.constant 0 : index
    %3 = vector.load %arg2[%c0, %c0_1, %c0_2] : memref<1x128x32xbf16, #tpu.memory_space<vmem>>, vector<1x128x32xbf16>
    %4 = vector.shape_cast %3 : vector<1x128x32xbf16> to vector<128x32xbf16>
    %c0_3 = arith.constant 0 : index
    %c0_4 = arith.constant 0 : index
    %5 = vector.load %arg9[%c0_3, %c0_4] : memref<32x1280xbf16, #tpu.memory_space<vmem>>, vector<32x1280xbf16>
    %cst = arith.constant dense<0.000000e+00> : vector<128x1280xf32>
    %6 = tpu.matmul %4, %5, %cst {dimension_numbers = #tpu.dot_dimension_numbers<[1], [0], [0], [1], [0, 0, 1, 1], [], []>} : vector<128x32xbf16>, vector<32x1280xbf16>, vector<128x1280xf32> -> vector<128x1280xf32>
    %c0_5 = arith.constant 0 : index
    %c0_6 = arith.constant 0 : index
    %7 = vector.load %arg5[%c0_5, %c0_6] : memref<1x1280xf32, #tpu.memory_space<vmem>>, vector<1x1280xf32>
    %8 = vector.broadcast %7 : vector<1x1280xf32> to vector<128x1280xf32>
    %9 = arith.addf %6, %8 : vector<128x1280xf32>
    %10 = arith.negf %9 : vector<128x1280xf32>
    %11 = math.exp %10 : vector<128x1280xf32>
    %cst_7 = arith.constant 1.000000e+00 : f32
    %12 = vector.broadcast %cst_7 : f32 to vector<128x1280xf32>
    %13 = arith.addf %12, %11 : vector<128x1280xf32>
    %14 = arith.divf %12, %13 : vector<128x1280xf32>
    %15 = arith.mulf %9, %14 : vector<128x1280xf32>
    %cst_8 = arith.constant 0.000000e+00 : f32
    %16 = vector.broadcast %cst_8 : f32 to vector<128x1280xf32>
    %17 = arith.maximumf %15, %16 : vector<128x1280xf32>
    %c0_9 = arith.constant 0 : index
    %c0_10 = arith.constant 0 : index
    %18 = vector.load %arg10[%c0_9, %c0_10] : memref<1x1280xf32, #tpu.memory_space<vmem>>, vector<1x1280xf32>
    %cst_11 = arith.constant dense<0.000000e+00> : vector<1280xf32>
    %19 = vector.multi_reduction <add>, %17, %cst_11 [0] : vector<128x1280xf32> to vector<1280xf32>
    %20 = vector.shape_cast %19 : vector<1280xf32> to vector<1x1280xf32>
    %21 = arith.addf %18, %20 : vector<1x1280xf32>
    %c0_12 = arith.constant 0 : index
    %c0_13 = arith.constant 0 : index
    %22 = vector.load %arg10[%c0_12, %c0_13] : memref<1x1280xf32, #tpu.memory_space<vmem>>, vector<1x1280xf32>
    tpu.vector_store %arg10[%c0_12, %c0_13], %21 {strides = array<i32>} : memref<1x1280xf32, #tpu.memory_space<vmem>>, vector<1x1280xf32>,
    %c1_i32 = arith.constant 1 : i32
    %23 = arith.cmpi eq, %arg1, %c1_i32 : i32
    %24 = arith.extui %23 : i1 to i32
    %c0_i32_14 = arith.constant 0 : i32
    %25 = arith.cmpi ne, %24, %c0_i32_14 : i32
    scf.if %25 {
      %c0_15 = arith.constant 0 : index
      %c0_16 = arith.constant 0 : index
      %26 = vector.load %arg10[%c0_15, %c0_16] : memref<1x1280xf32, #tpu.memory_space<vmem>>, vector<1x1280xf32>
      %cst_17 = arith.constant 3.906250e-03 : f32
      %27 = vector.broadcast %cst_17 : f32 to vector<1x1280xf32>
      %28 = arith.mulf %26, %27 : vector<1x1280xf32>
      %c0_18 = arith.constant 0 : index
      %c0_19 = arith.constant 0 : index
      %29 = vector.load %arg6[%c0_18, %c0_19] : memref<1280x10xf32, #tpu.memory_space<vmem>>, vector<1280x10xf32>
      %cst_20 = arith.constant dense<0.000000e+00> : vector<1x10xf32>
      %30 = tpu.matmul %28, %29, %cst_20 {dimension_numbers = #tpu.dot_dimension_numbers<[1], [0], [0], [1], [0, 0, 1, 1], [], []>} : vector<1x1280xf32>, vector<1280x10xf32>, vector<1x10xf32> -> vector<1x10xf32>
      %c0_21 = arith.constant 0 : index
      %c0_22 = arith.constant 0 : index
      %31 = vector.load %arg7[%c0_21, %c0_22] : memref<1x10xf32, #tpu.memory_space<vmem>>, vector<1x10xf32>
      %32 = arith.addf %30, %31 : vector<1x10xf32>
      %c0_23 = arith.constant 0 : index
      %c0_24 = arith.constant 0 : index
      %c0_25 = arith.constant 0 : index
      %33 = vector.load %arg8[%c0_23, %c0_24, %c0_25] : memref<1x1x10xf32, #tpu.memory_space<vmem>>, vector<1x1x10xf32>
      %34 = vector.shape_cast %33 : vector<1x1x10xf32> to vector<1x10xf32>
      %35 = vector.shape_cast %32 : vector<1x10xf32> to vector<1x1x10xf32>
      tpu.vector_store %arg8[%c0_23, %c0_24, %c0_25], %35 {strides = array<i32>} : memref<1x1x10xf32, #tpu.memory_space<vmem>>, vector<1x1x10xf32>,
    } else {
    }
    return
  }
  func.func @transform_0(%arg0: i32, %arg1: i32) -> (i32, i32, i32) {
    %c0_i32 = arith.constant 0 : i32
    %c0_i32_0 = arith.constant 0 : i32
    return %arg0, %arg1, %c0_i32 : i32, i32, i32
  }
  func.func @transform_1(%arg0: i32, %arg1: i32) -> (i32, i32, i32) {
    %c0_i32 = arith.constant 0 : i32
    %c0_i32_0 = arith.constant 0 : i32
    %c0_i32_1 = arith.constant 0 : i32
    return %arg0, %c0_i32, %c0_i32_0 : i32, i32, i32
  }
  func.func @transform_2(%arg0: i32, %arg1: i32) -> (i32, i32) {
    %c0_i32 = arith.constant 0 : i32
    %c0_i32_0 = arith.constant 0 : i32
    %c0_i32_1 = arith.constant 0 : i32
    return %c0_i32, %c0_i32_0 : i32, i32
  }
  func.func @transform_3(%arg0: i32, %arg1: i32) -> (i32, i32) {
    %c0_i32 = arith.constant 0 : i32
    %c0_i32_0 = arith.constant 0 : i32
    %c0_i32_1 = arith.constant 0 : i32
    return %c0_i32, %c0_i32_0 : i32, i32
  }
  func.func @transform_4(%arg0: i32, %arg1: i32) -> (i32, i32) {
    %c0_i32 = arith.constant 0 : i32
    %c0_i32_0 = arith.constant 0 : i32
    %c0_i32_1 = arith.constant 0 : i32
    return %c0_i32, %c0_i32_0 : i32, i32
  }
  func.func @transform_5(%arg0: i32, %arg1: i32) -> (i32, i32) {
    %c0_i32 = arith.constant 0 : i32
    %c0_i32_0 = arith.constant 0 : i32
    %c0_i32_1 = arith.constant 0 : i32
    return %c0_i32, %c0_i32_0 : i32, i32
  }
  func.func @transform_6(%arg0: i32, %arg1: i32) -> (i32, i32, i32) {
    %c0_i32 = arith.constant 0 : i32
    %c0_i32_0 = arith.constant 0 : i32
    %c0_i32_1 = arith.constant 0 : i32
    return %arg0, %c0_i32, %c0_i32_0 : i32, i32, i32
  }
}

</mosaic_0001>

<llo_original>
// kernel: tile.24
$region0: #{tile.24}
  %s0 = inlined_call_operand.vmem [shape: f32[16,32], index: 0, kind: input, shape index: {}]
  %s1 = inlined_call_operand.vmem [shape: f32[1,512], index: 1, kind: output, shape index: {}]
  $region1: #{tile.24} parent=0
    #allocation0 [shape = 'u8[16384]{0}', space=vmem, size = 0x4000, scoped, tag = 'scoped mem for output reshape']
    %v2 = vld [vmem:[%s0] ss:$4 sm:$0xf]
    %vm3 = vcmask 261120
    %4 = vst.msk [vmem:[#allocation0] ss:$8 sm:$0xf] %vm3, %v2
    %s5 = scalar_lea.vmem %s0, 3
    %v6 = vld [vmem:[%s5] ss:$4 sm:$0xf]
    %7 = vrot.lane.b32.xlu0 %v6, 96
    %v8 = vpop.permute.xlu0 %7
    %vm9 = vcmask 1048320
    %10 = vst.msk [vmem:[#allocation0] ss:$8 sm:$0xf] %vm9, %v8
    %s11 = scalar_lea.vmem %s0, 2
    %v12 = vld [vmem:[%s11] ss:$4 sm:$0xf]
    %13 = vrot.lane.b32.xlu0 %v12, 64
    %v14 = vpop.permute.xlu0 %13
    %vm15 = vcmask 785920
    %16 = vst.msk [vmem:[#allocation0] ss:$8 sm:$0xf] %vm15, %v14
    %s17 = scalar_lea.vmem %s0, 1
    %v18 = vld [vmem:[%s17] ss:$4 sm:$0xf]
    %19 = vrot.lane.b32.xlu0 %v18, 32
    %v20 = vpop.permute.xlu0 %19
    %vm21 = vcmask 523520
    %22 = vst.msk [vmem:[#allocation0] ss:$8 sm:$0xf] %vm21, %v20
    %s24 = ssub.s32 2, 1
    %v25 = vld [vmem:[#allocation0] sm:%s24]
    %s27 = ssub.s32 2, 1
    %28 = vst [vmem:[%s1] sm:%s27] %v25
    %s29 = scalar_lea.vmem [#allocation0], 8
    %v30 = vld [vmem:[%s29] sm:%s24]
    %s32 = ssub.s32 2, 1
    %s33 = scalar_lea.vmem %s1, 1
    %34 = vst [vmem:[%s33] sm:%s32] %v30
    %s35 = scalar_lea.vmem [#allocation0], 16
    %v36 = vld [vmem:[%s35] sm:%s24]
    %s38 = ssub.s32 2, 1
    %s39 = scalar_lea.vmem %s1, 2
    %40 = vst [vmem:[%s39] sm:%s38] %v36
    %s41 = scalar_lea.vmem [#allocation0], 24
    %v42 = vld [vmem:[%s41] sm:%s24]
    %s44 = ssub.s32 2, 1
    %s45 = scalar_lea.vmem %s1, 3
    %46 = vst [vmem:[%s45] sm:%s44] %v42

// kernel: tile.23
$region0: #{tile.23}
  #allocation0 [shape = 's32[1]{0}', space=sflag, size = 0x4, scoped, tag = 'scoped memory for tile.23']
  %s0 = inlined_call_operand.vmem [shape: f32[32], index: 0, kind: input, shape index: {}]
  %s1 = inlined_call_operand.vmem [shape: f32[16,32], index: 1, kind: output, shape index: {}]
  // Predicated region
  $region2: #{tile.23} parent=0 // pred_check
    _
  $region3: #{tile.23} parent=0 // pred_check_branch
    %3 = sbr.rel (0) target = $region5
  $region4: #{tile.23} parent=0 // pred_region
    _
  $region5: #{tile.23} parent=0 // pred_fallthru
    _
  %v4 = vld [vmem:[%s0] ss:$0 sm:$0xff]
  %5 = vst [vmem:[%s1] sm:$0xff] %v4
  %s6 = scalar_lea.vmem %s1, 8
  %7 = vst [vmem:[%s6] sm:$0xff] %v4

// kernel: tile.19
$region0: #{tile.19}
  %s0 = inlined_call_operand.vmem [shape: f32[9,16,32], index: 0, kind: input, shape index: {}]
  %s1 = inlined_call_operand.vmem [shape: f32[9,512], index: 1, kind: output, shape index: {}]
  %v2 = vld [vmem:[%s0] ss:$4 sm:$0xff]
  %vm3 = vcmask 261120
  %4 = vst.msk [vmem:[%s1] ss:$8 sm:$0xf] %vm3, %v2
  %s5 = scalar_lea.vmem %s1, 4294967265
  %6 = vst.msk [vmem:[%s5] ss:$8 sm:$0xf0] %vm3, %v2
  %s7 = scalar_lea.vmem %s0, 32
  %v8 = vld [vmem:[%s7] ss:$4 sm:$0xff]
  %vm9 = vcmask 261120
  %s10 = scalar_lea.vmem %s1, 2
  %11 = vst.msk [vmem:[%s10] ss:$8 sm:$0xf] %vm9, %v8
  %s12 = scalar_lea.vmem %s1, 4294967267
  %13 = vst.msk [vmem:[%s12] ss:$8 sm:$0xf0] %vm9, %v8
  %s14 = scalar_lea.vmem %s0, 64
  %v15 = vld [vmem:[%s14] ss:$4 sm:$0xff]
  %vm16 = vcmask 261120
  %s17 = scalar_lea.vmem %s1, 4
  %18 = vst.msk [vmem:[%s17] ss:$8 sm:$0xf] %vm16, %v15
  %s19 = scalar_lea.vmem %s1, 4294967269
  %20 = vst.msk [vmem:[%s19] ss:$8 sm:$0xf0] %vm16, %v15
  %s21 = scalar_lea.vmem %s0, 96
  %v22 = vld [vmem:[%s21] ss:$4 sm:$0xff]
  %vm23 = vcmask 261120
  %s24 = scalar_lea.vmem %s1, 6
  %25 = vst.msk [vmem:[%s24] ss:$8 sm:$0xf] %vm23, %v22
  %s26 = scalar_lea.vmem %s1, 4294967271
  %27 = vst.msk [vmem:[%s26] ss:$8 sm:$0xf0] %vm23, %v22
  %s28 = scalar_lea.vmem %s0, 128
  %v29 = vld [vmem:[%s28] ss:$4 sm:$0xf]
  %vm30 = vcmask 261120
  %s31 = scalar_lea.vmem %s1, 32
  %32 = vst.msk [vmem:[%s31] ss:$8 sm:$0xf] %vm30, %v29
  %s33 = scalar_lea.vmem %s0, 3
  %s34 = smov 3
  %v35 = vld [vmem:[%s33] ss:$16 sm:%s34]
  %s36 = scalar_lea.vmem %s0, 3
  %s37 = smov 12
  %v38 = vld [vmem:[%s36] ss:$16 sm:%s37]
  %vm39 = vcmask 1043458
  %v40 = vsel %vm39, %v38, %v35
  %s41 = scalar_lea.vmem %s0, 3
  %s42 = smov 48
  %v43 = vld [vmem:[%s41] ss:$16 sm:%s42]
  %vm44 = vcmask 1045508
  %v45 = vsel %vm44, %v43, %v40
  %s46 = scalar_lea.vmem %s0, 3
  %s47 = smov 192
  %v48 = vld [vmem:[%s46] ss:$16 sm:%s47]
  %vm49 = vcmask 1047558
  %v50 = vsel %vm49, %v48, %v45
  %51 = vrot.lane.b32.xlu0 %v50, 96
  %v52 = vpop.permute.xlu0 %51
  %vm53 = vcmask 1048320
  %54 = vst.msk [vmem:[%s1] sm:$0xff] %vm53, %v52
  %s55 = scalar_lea.vmem %s0, 131
  %s56 = smov 3
  %v57 = vld [vmem:[%s55] ss:$-124 sm:%s56]
  %s58 = scalar_lea.vmem %s0, 4294967287
  %s59 = smov 12
  %v60 = vld [vmem:[%s58] ss:$16 sm:%s59]
  %vm61 = vcmask 1043458
  %v62 = vsel %vm61, %v60, %v57
  %s63 = scalar_lea.vmem %s0, 4294967287
  %s64 = smov 48
  %v65 = vld [vmem:[%s63] ss:$16 sm:%s64]
  %vm66 = vcmask 1045508
  %v67 = vsel %vm66, %v65, %v62
  %s68 = scalar_lea.vmem %s0, 4294967287
  %s69 = smov 192
  %v70 = vld [vmem:[%s68] ss:$16 sm:%s69]
  %vm71 = vcmask 1047558
  %v72 = vsel %vm71, %v70, %v67
  %73 = vrot.lane.b32.xlu0 %v72, 96
  %v74 = vpop.permute.xlu0 %73
  %vm75 = vcmask 1048320
  %s76 = scalar_lea.vmem %s1, 32
  %77 = vst.msk [vmem:[%s76] ss:$-24 sm:$0x3] %vm75, %v74
  %s78 = scalar_lea.vmem %s1, 7
  %79 = vst.msk [vmem:[%s78] sm:$0xfc] %vm75, %v74
  %s80 = scalar_lea.vmem %s0, 135
  %s81 = smov 3
  %v82 = vld [vmem:[%s80] ss:$-16 sm:%s81]
  %s83 = scalar_lea.vmem %s0, 4294967275
  %s84 = smov 12
  %v85 = vld [vmem:[%s83] ss:$16 sm:%s84]
  %vm86 = vcmask 1043458
  %v87 = vsel %vm86, %v85, %v82
  %s88 = scalar_lea.vmem %s0, 4294967275
  %s89 = smov 48
  %v90 = vld [vmem:[%s88] ss:$16 sm:%s89]
  %vm91 = vcmask 1045508
  %v92 = vsel %vm91, %v90, %v87
  %s93 = scalar_lea.vmem %s0, 4294967275
  %s94 = smov 192
  %v95 = vld [vmem:[%s93] ss:$16 sm:%s94]
  %vm96 = vcmask 1047558
  %v97 = vsel %vm96, %v95, %v92
  %98 = vrot.lane.b32.xlu0 %v97, 96
  %v99 = vpop.permute.xlu0 %98
  %vm100 = vcmask 1048320
  %s101 = scalar_lea.vmem %s1, 40
  %102 = vst.msk [vmem:[%s101] ss:$-25 sm:$0x3] %vm100, %v99
  %s103 = scalar_lea.vmem %s1, 14
  %104 = vst.msk [vmem:[%s103] sm:$0xfc] %vm100, %v99
  %s105 = scalar_lea.vmem %s0, 139
  %v106 = vld [vmem:[%s105] sm:$0x1]
  %s107 = scalar_lea.vmem %s0, 91
  %s108 = smov 6
  %v109 = vld [vmem:[%s107] ss:$16 sm:%s108]
  %vm110 = vcmask 1042433
  %v111 = vsel %vm110, %v109, %v106
  %s112 = scalar_lea.vmem %s0, 4294967263
  %s113 = smov 24
  %v114 = vld [vmem:[%s112] ss:$16 sm:%s113]
  %vm115 = vcmask 1044483
  %v116 = vsel %vm115, %v114, %v111
  %s117 = scalar_lea.vmem %s0, 4294967263
  %s118 = smov 96
  %v119 = vld [vmem:[%s117] ss:$16 sm:%s118]
  %vm120 = vcmask 1046533
  %v121 = vsel %vm120, %v119, %v116
  %s122 = scalar_lea.vmem %s0, 72
  %v123 = vld [vmem:[%s122] sm:$0x80]
  %vm124 = vcmask 1047559
  %v125 = vsel %vm124, %v123, %v121
  %126 = vrot.lane.b32.xlu0 %v125, 96
  %v127 = vpop.permute.xlu0 %126
  %vm128 = vcmask 1048320
  %s129 = scalar_lea.vmem %s1, 48
  %130 = vst.msk [vmem:[%s129] ss:$-26 sm:$0x3] %vm128, %v127
  %s131 = scalar_lea.vmem %s1, 21
  %132 = vst.msk [vmem:[%s131] sm:$0xfc] %vm128, %v127
  %s133 = scalar_lea.vmem %s0, 143
  %s134 = smov 3
  %v135 = vld [vmem:[%s133] ss:$-48 sm:%s134]
  %s136 = scalar_lea.vmem %s0, 79
  %s137 = smov 12
  %v138 = vld [vmem:[%s136] ss:$16 sm:%s137]
  %vm139 = vcmask 1043458
  %v140 = vsel %vm139, %v138, %v135
  %141 = vrot.lane.b32.xlu0 %v140, 96
  %v142 = vpop.permute.xlu0 %141
  %vm143 = vcmask 1048320
  %s144 = scalar_lea.vmem %s1, 56
  %145 = vst.msk [vmem:[%s144] ss:$-27 sm:$0x3] %vm143, %v142
  %s146 = scalar_lea.vmem %s1, 28
  %147 = vst.msk [vmem:[%s146] sm:$0xc] %vm143, %v142
  %s148 = scalar_lea.vmem %s0, 2
  %s149 = smov 3
  %v150 = vld [vmem:[%s148] ss:$16 sm:%s149]
  %s151 = scalar_lea.vmem %s0, 2
  %s152 = smov 12
  %v153 = vld [vmem:[%s151] ss:$16 sm:%s152]
  %vm154 = vcmask 1043458
  %v155 = vsel %vm154, %v153, %v150
  %s156 = scalar_lea.vmem %s0, 2
  %s157 = smov 48
  %v158 = vld [vmem:[%s156] ss:$16 sm:%s157]
  %vm159 = vcmask 1045508
  %v160 = vsel %vm159, %v158, %v155
  %s161 = scalar_lea.vmem %s0, 2
  %s162 = smov 192
  %v163 = vld [vmem:[%s161] ss:$16 sm:%s162]
  %vm164 = vcmask 1047558
  %v165 = vsel %vm164, %v163, %v160
  %166 = vrot.lane.b32.xlu0 %v165, 64
  %v167 = vpop.permute.xlu0 %166
  %vm168 = vcmask 785920
  %169 = vst.msk [vmem:[%s1] sm:$0xff] %vm168, %v167
  %s170 = scalar_lea.vmem %s0, 130
  %s171 = smov 3
  %v172 = vld [vmem:[%s170] ss:$-124 sm:%s171]
  %s173 = scalar_lea.vmem %s0, 4294967286
  %s174 = smov 12
  %v175 = vld [vmem:[%s173] ss:$16 sm:%s174]
  %vm176 = vcmask 1043458
  %v177 = vsel %vm176, %v175, %v172
  %s178 = scalar_lea.vmem %s0, 4294967286
  %s179 = smov 48
  %v180 = vld [vmem:[%s178] ss:$16 sm:%s179]
  %vm181 = vcmask 1045508
  %v182 = vsel %vm181, %v180, %v177
  %s183 = scalar_lea.vmem %s0, 4294967286
  %s184 = smov 192
  %v185 = vld [vmem:[%s183] ss:$16 sm:%s184]
  %vm186 = vcmask 1047558
  %v187 = vsel %vm186, %v185, %v182
  %188 = vrot.lane.b32.xlu0 %v187, 64
  %v189 = vpop.permute.xlu0 %188
  %vm190 = vcmask 785920
  %s191 = scalar_lea.vmem %s1, 32
  %192 = vst.msk [vmem:[%s191] ss:$-24 sm:$0x3] %vm190, %v189
  %s193 = scalar_lea.vmem %s1, 7
  %194 = vst.msk [vmem:[%s193] sm:$0xfc] %vm190, %v189
  %s195 = scalar_lea.vmem %s0, 134
  %s196 = smov 3
  %v197 = vld [vmem:[%s195] ss:$-16 sm:%s196]
  %s198 = scalar_lea.vmem %s0, 4294967274
  %s199 = smov 12
  %v200 = vld [vmem:[%s198] ss:$16 sm:%s199]
  %vm201 = vcmask 1043458
  %v202 = vsel %vm201, %v200, %v197
  %s203 = scalar_lea.vmem %s0, 4294967274
  %s204 = smov 48
  %v205 = vld [vmem:[%s203] ss:$16 sm:%s204]
  %vm206 = vcmask 1045508
  %v207 = vsel %vm206, %v205, %v202
  %s208 = scalar_lea.vmem %s0, 4294967274
  %s209 = smov 192
  %v210 = vld [vmem:[%s208] ss:$16 sm:%s209]
  %vm211 = vcmask 1047558
  %v212 = vsel %vm211, %v210, %v207
  %213 = vrot.lane.b32.xlu0 %v212, 64
  %v214 = vpop.permute.xlu0 %213
  %vm215 = vcmask 785920
  %s216 = scalar_lea.vmem %s1, 40
  %217 = vst.msk [vmem:[%s216] ss:$-25 sm:$0x3] %vm215, %v214
  %s218 = scalar_lea.vmem %s1, 14
  %219 = vst.msk [vmem:[%s218] sm:$0xfc] %vm215, %v214
  %s220 = scalar_lea.vmem %s0, 138
  %v221 = vld [vmem:[%s220] sm:$0x1]
  %s222 = scalar_lea.vmem %s0, 90
  %s223 = smov 6
  %v224 = vld [vmem:[%s222] ss:$16 sm:%s223]
  %vm225 = vcmask 1042433
  %v226 = vsel %vm225, %v224, %v221
  %s227 = scalar_lea.vmem %s0, 4294967262
  %s228 = smov 24
  %v229 = vld [vmem:[%s227] ss:$16 sm:%s228]
  %vm230 = vcmask 1044483
  %v231 = vsel %vm230, %v229, %v226
  %s232 = scalar_lea.vmem %s0, 4294967262
  %s233 = smov 96
  %v234 = vld [vmem:[%s232] ss:$16 sm:%s233]
  %vm235 = vcmask 1046533
  %v236 = vsel %vm235, %v234, %v231
  %s237 = scalar_lea.vmem %s0, 71
  %v238 = vld [vmem:[%s237] sm:$0x80]
  %vm239 = vcmask 1047559
  %v240 = vsel %vm239, %v238, %v236
  %241 = vrot.lane.b32.xlu0 %v240, 64
  %v242 = vpop.permute.xlu0 %241
  %vm243 = vcmask 785920
  %s244 = scalar_lea.vmem %s1, 48
  %245 = vst.msk [vmem:[%s244] ss:$-26 sm:$0x3] %vm243, %v242
  %s246 = scalar_lea.vmem %s1, 21
  %247 = vst.msk [vmem:[%s246] sm:$0xfc] %vm243, %v242
  %s248 = scalar_lea.vmem %s0, 142
  %s249 = smov 3
  %v250 = vld [vmem:[%s248] ss:$-48 sm:%s249]
  %s251 = scalar_lea.vmem %s0, 78
  %s252 = smov 12
  %v253 = vld [vmem:[%s251] ss:$16 sm:%s252]
  %vm254 = vcmask 1043458
  %v255 = vsel %vm254, %v253, %v250
  %256 = vrot.lane.b32.xlu0 %v255, 64
  %v257 = vpop.permute.xlu0 %256
  %vm258 = vcmask 785920
  %s259 = scalar_lea.vmem %s1, 56
  %260 = vst.msk [vmem:[%s259] ss:$-27 sm:$0x3] %vm258, %v257
  %s261 = scalar_lea.vmem %s1, 28
  %262 = vst.msk [vmem:[%s261] sm:$0xc] %vm258, %v257
  %s263 = scalar_lea.vmem %s0, 1
  %s264 = smov 3
  %v265 = vld [vmem:[%s263] ss:$16 sm:%s264]
  %s266 = scalar_lea.vmem %s0, 1
  %s267 = smov 12
  %v268 = vld [vmem:[%s266] ss:$16 sm:%s267]
  %vm269 = vcmask 1043458
  %v270 = vsel %vm269, %v268, %v265
  %s271 = scalar_lea.vmem %s0, 1
  %s272 = smov 48
  %v273 = vld [vmem:[%s271] ss:$16 sm:%s272]
  %vm274 = vcmask 1045508
  %v275 = vsel %vm274, %v273, %v270
  %s276 = scalar_lea.vmem %s0, 1
  %s277 = smov 192
  %v278 = vld [vmem:[%s276] ss:$16 sm:%s277]
  %vm279 = vcmask 1047558
  %v280 = vsel %vm279, %v278, %v275
  %281 = vrot.lane.b32.xlu0 %v280, 32
  %v282 = vpop.permute.xlu0 %281
  %vm283 = vcmask 523520
  %284 = vst.msk [vmem:[%s1] sm:$0xff] %vm283, %v282
  %s285 = scalar_lea.vmem %s0, 129
  %s286 = smov 3
  %v287 = vld [vmem:[%s285] ss:$-124 sm:%s286]
  %s288 = scalar_lea.vmem %s0, 4294967285
  %s289 = smov 12
  %v290 = vld [vmem:[%s288] ss:$16 sm:%s289]
  %vm291 = vcmask 1043458
  %v292 = vsel %vm291, %v290, %v287
  %s293 = scalar_lea.vmem %s0, 4294967285
  %s294 = smov 48
  %v295 = vld [vmem:[%s293] ss:$16 sm:%s294]
  %vm296 = vcmask 1045508
  %v297 = vsel %vm296, %v295, %v292
  %s298 = scalar_lea.vmem %s0, 4294967285
  %s299 = smov 192
  %v300 = vld [vmem:[%s298] ss:$16 sm:%s299]
  %vm301 = vcmask 1047558
  %v302 = vsel %vm301, %v300, %v297
  %303 = vrot.lane.b32.xlu0 %v302, 32
  %v304 = vpop.permute.xlu0 %303
  %vm305 = vcmask 523520
  %s306 = scalar_lea.vmem %s1, 32
  %307 = vst.msk [vmem:[%s306] ss:$-24 sm:$0x3] %vm305, %v304
  %s308 = scalar_lea.vmem %s1, 7
  %309 = vst.msk [vmem:[%s308] sm:$0xfc] %vm305, %v304
  %s310 = scalar_lea.vmem %s0, 133
  %s311 = smov 3
  %v312 = vld [vmem:[%s310] ss:$-16 sm:%s311]
  %s313 = scalar_lea.vmem %s0, 4294967273
  %s314 = smov 12
  %v315 = vld [vmem:[%s313] ss:$16 sm:%s314]
  %vm316 = vcmask 1043458
  %v317 = vsel %vm316, %v315, %v312
  %s318 = scalar_lea.vmem %s0, 4294967273
  %s319 = smov 48
  %v320 = vld [vmem:[%s318] ss:$16 sm:%s319]
  %vm321 = vcmask 1045508
  %v322 = vsel %vm321, %v320, %v317
  %s323 = scalar_lea.vmem %s0, 4294967273
  %s324 = smov 192
  %v325 = vld [vmem:[%s323] ss:$16 sm:%s324]
  %vm326 = vcmask 1047558
  %v327 = vsel %vm326, %v325, %v322
  %328 = vrot.lane.b32.xlu0 %v327, 32
  %v329 = vpop.permute.xlu0 %328
  %vm330 = vcmask 523520
  %s331 = scalar_lea.vmem %s1, 40
  %332 = vst.msk [vmem:[%s331] ss:$-25 sm:$0x3] %vm330, %v329
  %s333 = scalar_lea.vmem %s1, 14
  %334 = vst.msk [vmem:[%s333] sm:$0xfc] %vm330, %v329
  %s335 = scalar_lea.vmem %s0, 137
  %v336 = vld [vmem:[%s335] sm:$0x1]
  %s337 = scalar_lea.vmem %s0, 89
  %s338 = smov 6
  %v339 = vld [vmem:[%s337] ss:$16 sm:%s338]
  %vm340 = vcmask 1042433
  %v341 = vsel %vm340, %v339, %v336
  %s342 = scalar_lea.vmem %s0, 4294967261
  %s343 = smov 24
  %v344 = vld [vmem:[%s342] ss:$16 sm:%s343]
  %vm345 = vcmask 1044483
  %v346 = vsel %vm345, %v344, %v341
  %s347 = scalar_lea.vmem %s0, 4294967261
  %s348 = smov 96
  %v349 = vld [vmem:[%s347] ss:$16 sm:%s348]
  %vm350 = vcmask 1046533
  %v351 = vsel %vm350, %v349, %v346
  %s352 = scalar_lea.vmem %s0, 70
  %v353 = vld [vmem:[%s352] sm:$0x80]
  %vm354 = vcmask 1047559
  %v355 = vsel %vm354, %v353, %v351
  %356 = vrot.lane.b32.xlu0 %v355, 32
  %v357 = vpop.permute.xlu0 %356
  %vm358 = vcmask 523520
  %s359 = scalar_lea.vmem %s1, 48
  %360 = vst.msk [vmem:[%s359] ss:$-26 sm:$0x3] %vm358, %v357
  %s361 = scalar_lea.vmem %s1, 21
  %362 = vst.msk [vmem:[%s361] sm:$0xfc] %vm358, %v357
  %s363 = scalar_lea.vmem %s0, 141
  %s364 = smov 3
  %v365 = vld [vmem:[%s363] ss:$-48 sm:%s364]
  %s366 = scalar_lea.vmem %s0, 77
  %s367 = smov 12
  %v368 = vld [vmem:[%s366] ss:$16 sm:%s367]
  %vm369 = vcmask 1043458
  %v370 = vsel %vm369, %v368, %v365
  %371 = vrot.lane.b32.xlu0 %v370, 32
  %v372 = vpop.permute.xlu0 %371
  %vm373 = vcmask 523520
  %s374 = scalar_lea.vmem %s1, 56
  %375 = vst.msk [vmem:[%s374] ss:$-27 sm:$0x3] %vm373, %v372
  %s376 = scalar_lea.vmem %s1, 28
  %377 = vst.msk [vmem:[%s376] sm:$0xc] %vm373, %v372

// kernel: efficientnet_b1_forward.5
$region0: #{efficientnet_b1_forward.5}
  #allocation0 [shape = 'u32[]', space=smem, size = 0x4, offset = 0x4, fixed_abs, tag = 'smem constant byte address 0x4 - core index']
  #allocation1 [shape = 'u32[72,128]{1,0:T(1,128)}', space=vmem, size = 0x9000, scoped, tag = 'internal scratch']
  %s0 = inlined_call_operand.vmem [shape: bf16[2,16,512], index: 0, kind: input, shape index: {}]
  %s1 = inlined_call_operand.vmem [shape: f32[9,512], index: 1, kind: input, shape index: {}]
  %s2 = inlined_call_operand.vmem [shape: f32[1,512], index: 2, kind: input, shape index: {}]
  %s3 = inlined_call_operand.vmem [shape: bf16[2,16,512], index: 3, kind: output, shape index: {0}]
  %s4 = inlined_call_operand.vmem [shape: f32[2,1,512], index: 4, kind: output, shape index: {1}]
  %5 = xla_tuple %s3, %s4
  %s6 = sld [smem:[#allocation0]]
  $region53: #{efficientnet_b1_forward.5} parent=0
    _
  %s8 = ssub.s32 1, %s6
  %s9 = scalar_select 0, %s8, %s6
  loop: start=0, step=1, limit=4
  $region2: #{efficientnet_b1_forward.5} parent=0 // loop_pre_header
    _
  $region3: #{efficientnet_b1_forward.5} parent=0 // loop_header
    %s11 = sphi 0, %s15
    %p12 = scmp.ge.s32.totalorder %s11, 4
    %s21 = sphi 0, %s23
    %s24 = sphi 0, %s21
    %s25 = sphi 0, %s24
    %s41 = sphi 0, %s25
    %s45 = sphi 0, %s45
    %s47 = sphi 0, %s45
    %s48 = sphi 0, %s47
    %s62 = sphi 0, %s48
    %s66 = sphi 0, %s66
    %s68 = sphi 0, %s66
    %s69 = sphi 0, %s68
    %s83 = sphi 0, %s69
    %s89 = sphi 0, %s91
    %s92 = sphi 0, %s89
    %s93 = sphi 0, %s92
    %s109 = sphi 0, %s93
    %s115 = sphi 0, %s117
    %s118 = sphi 0, %s115
    %s119 = sphi 0, %s118
    %s135 = sphi 0, %s119
  $region4: #{efficientnet_b1_forward.5} parent=0 // loop_header_branch
    %14 = sbr.rel (%p12) target = $region8
  $region5: #{efficientnet_b1_forward.5} parent=0 // loop_body
    %s16 = ssub.s32 %s11, 1
    %s17 = ssub.s32 %s11, 2
    %s18 = sadd.s32 %s11, 1
    %s19 = ssub.s32 %s11, %s18
    %p20 = scmp.eq.s32.totalorder %s19, 0
    %s22 = sadd.s32 %s21, 1
    %s23 = scalar_select %p20, %s21, %s22
    %p26 = pneg %p20
    %p27 = scmp.eq.s32.totalorder %s11, 1
    %p28 = por %p26, %p27
    %p29 = scmp.ne.s32.totalorder %s21, %s24
    %p30 = scmp.eq.s32.totalorder %s11, 0
    %p31 = por %p29, %p30
    %p32 = scmp.ne.s32.totalorder %s21, %s24
    %p33 = scmp.eq.s32.totalorder %s16, 1
    %p34 = por %p32, %p33
    %p35 = scmp.ne.s32.totalorder %s24, %s25
    %p36 = scmp.eq.s32.totalorder %s16, 0
    %p37 = por %p35, %p36
    %p38 = scmp.ne.s32.totalorder %s24, %s25
    %p39 = scmp.eq.s32.totalorder %s17, 1
    %p40 = por %p38, %p39
    %p42 = scmp.ne.s32.totalorder %s25, %s41
    %p43 = scmp.eq.s32.totalorder %s17, 0
    %p44 = por %p42, %p43
    %s46 = sadd.s32 %s45, 1
    %p49 = scmp.eq.s32.totalorder %s11, 1
    %p50 = scmp.ne.s32.totalorder %s45, %s47
    %p51 = scmp.eq.s32.totalorder %s11, 0
    %p52 = por %p50, %p51
    %p53 = scmp.ne.s32.totalorder %s45, %s47
    %p54 = scmp.eq.s32.totalorder %s16, 1
    %p55 = por %p53, %p54
    %p56 = scmp.ne.s32.totalorder %s47, %s48
    %p57 = scmp.eq.s32.totalorder %s16, 0
    %p58 = por %p56, %p57
    %p59 = scmp.ne.s32.totalorder %s47, %s48
    %p60 = scmp.eq.s32.totalorder %s17, 1
    %p61 = por %p59, %p60
    %p63 = scmp.ne.s32.totalorder %s48, %s62
    %p64 = scmp.eq.s32.totalorder %s17, 0
    %p65 = por %p63, %p64
    %s67 = sadd.s32 %s66, 1
    %p70 = scmp.eq.s32.totalorder %s11, 1
    %p71 = scmp.ne.s32.totalorder %s66, %s68
    %p72 = scmp.eq.s32.totalorder %s11, 0
    %p73 = por %p71, %p72
    %p74 = scmp.ne.s32.totalorder %s66, %s68
    %p75 = scmp.eq.s32.totalorder %s16, 1
    %p76 = por %p74, %p75
    %p77 = scmp.ne.s32.totalorder %s68, %s69
    %p78 = scmp.eq.s32.totalorder %s16, 0
    %p79 = por %p77, %p78
    %p80 = scmp.ne.s32.totalorder %s68, %s69
    %p81 = scmp.eq.s32.totalorder %s17, 1
    %p82 = por %p80, %p81
    %p84 = scmp.ne.s32.totalorder %s69, %s83
    %p85 = scmp.eq.s32.totalorder %s17, 0
    %p86 = por %p84, %p85
    %s87 = ssub.s32 %s11, %s18
    %p88 = scmp.eq.s32.totalorder %s87, 0
    %s90 = sadd.s32 %s89, 1
    %s91 = scalar_select %p88, %s89, %s90
    %p94 = pneg %p88
    %p95 = scmp.eq.s32.totalorder %s11, 1
    %p96 = por %p94, %p95
    %p97 = scmp.ne.s32.totalorder %s89, %s92
    %p98 = scmp.eq.s32.totalorder %s11, 0
    %p99 = por %p97, %p98
    %p100 = scmp.ne.s32.totalorder %s89, %s92
    %p101 = scmp.eq.s32.totalorder %s16, 1
    %p102 = por %p100, %p101
    %p103 = scmp.ne.s32.totalorder %s92, %s93
    %p104 = scmp.eq.s32.totalorder %s16, 0
    %p105 = por %p103, %p104
    %p106 = scmp.ne.s32.totalorder %s92, %s93
    %p107 = scmp.eq.s32.totalorder %s17, 1
    %p108 = por %p106, %p107
    %p110 = scmp.ne.s32.totalorder %s93, %s109
    %p111 = scmp.eq.s32.totalorder %s17, 0
    %p112 = por %p110, %p111
    %s113 = ssub.s32 %s11, %s18
    %p114 = scmp.eq.s32.totalorder %s113, 0
    %s116 = sadd.s32 %s115, 1
    %s117 = scalar_select %p114, %s115, %s116
    %p120 = pneg %p114
    %p121 = scmp.eq.s32.totalorder %s11, 1
    %p122 = por %p120, %p121
    %p123 = scmp.ne.s32.totalorder %s115, %s118
    %p124 = scmp.eq.s32.totalorder %s11, 0
    %p125 = por %p123, %p124
    %p126 = scmp.ne.s32.totalorder %s115, %s118
    %p127 = scmp.eq.s32.totalorder %s16, 1
    %p128 = por %p126, %p127
    %p129 = scmp.ne.s32.totalorder %s118, %s119
    %p130 = scmp.eq.s32.totalorder %s16, 0
    %p131 = por %p129, %p130
    %p132 = scmp.ne.s32.totalorder %s118, %s119
    %p133 = scmp.eq.s32.totalorder %s17, 1
    %p134 = por %p132, %p133
    %p136 = scmp.ne.s32.totalorder %s119, %s135
    %p137 = scmp.eq.s32.totalorder %s17, 0
    %p138 = por %p136, %p137
    %p139 = scmp.le.s32.totalorder 1, %s11
    %p140 = scmp.lt.s32.totalorder %s11, 3
    %p141 = pnand %p139, %p140
    %p142 = pneg %p141
    // Predicated region
    $region9: #{efficientnet_b1_forward.5} parent=5 // pred_check
      _
    $region10: #{efficientnet_b1_forward.5} parent=5 // pred_check_branch
      %144 = sbr.rel (%p141) target = $region12
    $region11: #{efficientnet_b1_forward.5} parent=5 // pred_region
      %s145 = ssub.s32 %s11, 1
      // Predicated region
      $region13: #{efficientnet_b1_forward.5} parent=11 // pred_check
        %p146 = pneg %p58
      $region14: #{efficientnet_b1_forward.5} parent=11 // pred_check_branch
        %148 = sbr.rel (%p146) target = $region16
      $region15: #{efficientnet_b1_forward.5} parent=11 // pred_region
        _
      $region16: #{efficientnet_b1_forward.5} parent=11 // pred_fallthru
        _
      // Predicated region
      $region17: #{efficientnet_b1_forward.5} parent=11 // pred_check
        %p149 = pneg %p79
      $region18: #{efficientnet_b1_forward.5} parent=11 // pred_check_branch
        %151 = sbr.rel (%p149) target = $region20
      $region19: #{efficientnet_b1_forward.5} parent=11 // pred_region
        _
      $region20: #{efficientnet_b1_forward.5} parent=11 // pred_fallthru
        _
    $region12: #{efficientnet_b1_forward.5} parent=5 // pred_fallthru
      _
    %p152 = scmp.lt.s32.totalorder %s11, 2
    // Predicated region
    $region21: #{efficientnet_b1_forward.5} parent=5 // pred_check
      %p153 = pneg %p152
    $region22: #{efficientnet_b1_forward.5} parent=5 // pred_check_branch
      %155 = sbr.rel (%p153) target = $region24
    $region23: #{efficientnet_b1_forward.5} parent=5 // pred_region
      // Predicated region
      $region25: #{efficientnet_b1_forward.5} parent=23 // pred_check
        %p156 = pneg %p31
      $region26: #{efficientnet_b1_forward.5} parent=23 // pred_check_branch
        %158 = sbr.rel (%p156) target = $region28
      $region27: #{efficientnet_b1_forward.5} parent=23 // pred_region
        %p159 = scmp.lt.s32.totalorder %s11, 1
        %s160 = scalar_select %p159, %s11, 1
        %s161 = smul.addr %s160, 8
        %s162 = smul.addr %s161, 4
        %s163 = scalar_lea.vmem %s0, %s162
      $region28: #{efficientnet_b1_forward.5} parent=23 // pred_fallthru
        _
    $region24: #{efficientnet_b1_forward.5} parent=5 // pred_fallthru
      _
    %p164 = scmp.le.s32.totalorder 1, %s11
    %p165 = scmp.lt.s32.totalorder %s11, 3
    %p166 = pnand %p164, %p165
    %p167 = pneg %p166
    // Predicated region
    $region29: #{efficientnet_b1_forward.5} parent=5 // pred_check
      _
    $region30: #{efficientnet_b1_forward.5} parent=5 // pred_check_branch
      %169 = sbr.rel (%p166) target = $region32
    $region31: #{efficientnet_b1_forward.5} parent=5 // pred_region
      %s170 = ssub.s32 %s11, 1
      %p171 = scmp.lt.s32.totalorder %s16, 1
      %s172 = scalar_select %p171, %s16, 1
      %s173 = smul.addr %s172, 8
      %s174 = smul.addr %s173, 4
      %s175 = scalar_lea.vmem %s0, %s174
      %p176 = pneg %p37
      %p177 = pneg %p34
      %p178 = pneg %p58
      %p179 = pneg %p55
      %p180 = pneg %p79
      %p181 = pneg %p76
      %p182 = pneg %p105
      %p183 = pneg %p102
      %p184 = scmp.lt.s32.totalorder %s16, 1
      %s185 = scalar_select %p184, %s16, 1
      %s186 = smul.addr %s185, 8
      %s187 = smul.addr %s186, 4
      %s188 = scalar_lea.vmem %s3, %s187
      %p189 = pneg %p131
      %p190 = pneg %p128
      %p191 = scmp.lt.s32.totalorder %s16, 1
      %s192 = scalar_select %p191, %s16, 1
      %s193 = smul.addr %s192, 4
      %s194 = scalar_lea.vmem %s4, %s193
      %p195 = scmp.lt.s32.totalorder %s16, 1
      %s196 = scalar_select %p195, %s16, 1
      %s197 = smul.addr %s196, 8
      %s198 = smul.addr %s197, 4
      %s199 = scalar_lea.vmem %s0, %s198
      %p200 = scmp.lt.s32.totalorder %s16, 1
      %s201 = scalar_select %p200, %s16, 1
      %s202 = smul.addr %s201, 8
      %s203 = smul.addr %s202, 4
      %s204 = scalar_lea.vmem %s3, %s203
      %p205 = scmp.lt.s32.totalorder %s16, 1
      %s206 = scalar_select %p205, %s16, 1
      %s207 = smul.addr %s206, 4
      %s208 = scalar_lea.vmem %s4, %s207
      %v209 = vld [vmem:[%s199] sm:$0xff]
      %v210 = vld [vmem:[%s199 + $0x8] sm:$0xff]
      %v211 = vld [vmem:[%s199 + $0x10] sm:$0xff]
      %v212 = vld [vmem:[%s199 + $0x18] sm:$0xff]
      %v213 = vunpack.c.l.bf16 %v209
      %v214 = vunpack.c.h.bf16 %v209
      %v215 = vunpack.c.l.bf16 %v210
      %v216 = vunpack.c.h.bf16 %v210
      %v217 = vunpack.c.l.bf16 %v211
      %v218 = vunpack.c.h.bf16 %v211
      %v219 = vunpack.c.l.bf16 %v212
      %v220 = vunpack.c.h.bf16 %v212
      %v221 = vld [vmem:[%s1] sm:$0xff]
      %v222 = vld [vmem:[%s1 + $0x8] sm:$0xff]
      %v223 = vld [vmem:[%s1 + $0x10] sm:$0xff]
      %v224 = vld [vmem:[%s1 + $0x18] sm:$0xff]
      %v225 = vld [vmem:[%s1 + $0x20] sm:$0x1]
      %v226 = vld [vmem:[%s1 + $0x28] sm:$0x1]
      %v227 = vld [vmem:[%s1 + $0x30] sm:$0x1]
      %v228 = vld [vmem:[%s1 + $0x38] sm:$0x1]
      %v229 = vlaneseq
      %v230 = vshrl.u32 %v229, 7
      %v231 = vadd.s32 %v230, 8
      %v232 = vlaneseq
      %v233 = vand.u32 %v232, 127
      %v234 = vadd.s32 %v233, 128
      %v235 = vadd.s32 %v233, 256
      %v236 = vadd.s32 %v233, 384
      %vm237 = vcmp.lt.s32.totalorder %v230, 15
      %vm238 = vcmp.lt.s32.totalorder %v231, 15
      %vm239 = vcmp.ge.s32.totalorder %v230, 1
      %vm240 = vcmp.ge.s32.totalorder %v231, 1
      %vm241 = vcmp.lt.s32.totalorder %v233, 480
      %vm242 = vcmp.lt.s32.totalorder %v234, 480
      %vm243 = vcmp.lt.s32.totalorder %v235, 480
      %vm244 = vcmp.lt.s32.totalorder %v236, 480
      %vm245 = vcmp.ge.s32.totalorder %v233, 32
      %vm246 = vcmp.ge.s32.totalorder %v234, 32
      %vm247 = vcmp.ge.s32.totalorder %v235, 32
      %vm248 = vcmp.ge.s32.totalorder %v236, 32
      %v249 = vrot.slane %v213, 7
      %v250 = vrot.slane %v214, 7
      %v251 = vrot.slane %v215, 7
      %v252 = vrot.slane %v216, 7
      %v253 = vrot.slane %v217, 7
      %v254 = vrot.slane %v218, 7
      %v255 = vrot.slane %v219, 7
      %v256 = vrot.slane %v220, 7
      %vm257 = vcmp.lt.s32.totalorder %v230, 1
      %v258 = vsel %vm257, %v249, %v253
      %v259 = vsel %vm257, %v250, %v254
      %v260 = vsel %vm257, %v251, %v255
      %v261 = vsel %vm257, %v252, %v256
      %v262 = vsel %vm257, %v253, %v249
      %v263 = vsel %vm257, %v254, %v250
      %v264 = vsel %vm257, %v255, %v251
      %v265 = vsel %vm257, %v256, %v252
      %v266 = vsel %vm239, %v262, 0.0
      %v267 = vsel %vm239, %v263, 0.0
      %v268 = vsel %vm239, %v264, 0.0
      %v269 = vsel %vm239, %v265, 0.0
      %v270 = vsel %vm240, %v258, 0.0
      %v271 = vsel %vm240, %v259, 0.0
      %v272 = vsel %vm240, %v260, 0.0
      %v273 = vsel %vm240, %v261, 0.0
      %274 = vrot.lane.b32.xlu0 %v266, 32
      %v275 = vpop.permute.xlu0 %274
      %276 = vrot.lane.b32.xlu0 %v270, 32
      %v277 = vpop.permute.xlu0 %276
      %278 = vrot.lane.b32.xlu0 %v267, 32
      %v279 = vpop.permute.xlu0 %278
      %280 = vrot.lane.b32.xlu0 %v271, 32
      %v281 = vpop.permute.xlu0 %280
      %282 = vrot.lane.b32.xlu0 %v268, 32
      %v283 = vpop.permute.xlu0 %282
      %284 = vrot.lane.b32.xlu0 %v272, 32
      %v285 = vpop.permute.xlu0 %284
      %286 = vrot.lane.b32.xlu0 %v269, 32
      %v287 = vpop.permute.xlu0 %286
      %288 = vrot.lane.b32.xlu0 %v273, 32
      %v289 = vpop.permute.xlu0 %288
      %vm290 = vcmp.lt.s32.totalorder %v233, 32
      %v291 = vsel %vm290, %v283, %v287
      %v292 = vsel %vm290, %v285, %v289
      %v293 = vsel %vm290, %v279, %v283
      %v294 = vsel %vm290, %v281, %v285
      %v295 = vsel %vm290, %v275, %v279
      %v296 = vsel %vm290, %v277, %v281
      %v297 = vsel %vm290, %v287, %v275
      %v298 = vsel %vm290, %v289, %v277
      %v299 = vsel %vm245, %v297, 0.0
      %v300 = vsel %vm246, %v295, 0.0
      %v301 = vsel %vm247, %v293, 0.0
      %v302 = vsel %vm248, %v291, 0.0
      %v303 = vsel %vm245, %v298, 0.0
      %v304 = vsel %vm246, %v296, 0.0
      %v305 = vsel %vm247, %v294, 0.0
      %v306 = vsel %vm248, %v292, 0.0
      %v307 = vperm.slane %v221, 0
      %v308 = vperm.slane %v222, 0
      %v309 = vperm.slane %v223, 0
      %v310 = vperm.slane %v224, 0
      %v311 = vmul.f32 %v299, %v307
      %v312 = vmul.f32 %v300, %v308
      %v313 = vmul.f32 %v301, %v309
      %v314 = vmul.f32 %v302, %v310
      %v315 = vmul.f32 %v303, %v307
      %v316 = vmul.f32 %v304, %v308
      %v317 = vmul.f32 %v305, %v309
      %v318 = vmul.f32 %v306, %v310
      %v319 = vadd.f32 %v311, 0.0
      %v320 = vadd.f32 %v312, 0.0
      %v321 = vadd.f32 %v313, 0.0
      %v322 = vadd.f32 %v314, 0.0
      %v323 = vadd.f32 %v315, 0.0
      %v324 = vadd.f32 %v316, 0.0
      %v325 = vadd.f32 %v317, 0.0
      %v326 = vadd.f32 %v318, 0.0
      %v327 = vperm.slane %v221, 1
      %v328 = vperm.slane %v222, 1
      %v329 = vperm.slane %v223, 1
      %v330 = vperm.slane %v224, 1
      %v331 = vmul.f32 %v266, %v327
      %v332 = vmul.f32 %v267, %v328
      %v333 = vmul.f32 %v268, %v329
      %v334 = vmul.f32 %v269, %v330
      %v335 = vmul.f32 %v270, %v327
      %v336 = vmul.f32 %v271, %v328
      %v337 = vmul.f32 %v272, %v329
      %v338 = vmul.f32 %v273, %v330
      %v339 = vadd.f32 %v319, %v331
      %v340 = vadd.f32 %v320, %v332
      %v341 = vadd.f32 %v321, %v333
      %v342 = vadd.f32 %v322, %v334
      %v343 = vadd.f32 %v323, %v335
      %v344 = vadd.f32 %v324, %v336
      %v345 = vadd.f32 %v325, %v337
      %v346 = vadd.f32 %v326, %v338
      %347 = vrot.lane.b32.xlu0 %v266, 96
      %v348 = vpop.permute.xlu0 %347
      %349 = vrot.lane.b32.xlu0 %v270, 96
      %v350 = vpop.permute.xlu0 %349
      %351 = vrot.lane.b32.xlu0 %v267, 96
      %v352 = vpop.permute.xlu0 %351
      %353 = vrot.lane.b32.xlu0 %v271, 96
      %v354 = vpop.permute.xlu0 %353
      %355 = vrot.lane.b32.xlu0 %v268, 96
      %v356 = vpop.permute.xlu0 %355
      %357 = vrot.lane.b32.xlu0 %v272, 96
      %v358 = vpop.permute.xlu0 %357
      %359 = vrot.lane.b32.xlu0 %v269, 96
      %v360 = vpop.permute.xlu0 %359
      %361 = vrot.lane.b32.xlu0 %v273, 96
      %v362 = vpop.permute.xlu0 %361
      %vm363 = vcmp.lt.s32.totalorder %v233, 96
      %v364 = vsel %vm363, %v356, %v360
      %v365 = vsel %vm363, %v358, %v362
      %v366 = vsel %vm363, %v352, %v356
      %v367 = vsel %vm363, %v354, %v358
      %v368 = vsel %vm363, %v348, %v352
      %v369 = vsel %vm363, %v350, %v354
      %v370 = vsel %vm363, %v360, %v348
      %v371 = vsel %vm363, %v362, %v350
      %v372 = vsel %vm241, %v368, 0.0
      %v373 = vsel %vm242, %v366, 0.0
      %v374 = vsel %vm243, %v364, 0.0
      %v375 = vsel %vm244, %v370, 0.0
      %v376 = vsel %vm241, %v369, 0.0
      %v377 = vsel %vm242, %v367, 0.0
      %v378 = vsel %vm243, %v365, 0.0
      %v379 = vsel %vm244, %v371, 0.0
      %v380 = vperm.slane %v221, 2
      %v381 = vperm.slane %v222, 2
      %v382 = vperm.slane %v223, 2
      %v383 = vperm.slane %v224, 2
      %v384 = vmul.f32 %v372, %v380
      %v385 = vmul.f32 %v373, %v381
      %v386 = vmul.f32 %v374, %v382
      %v387 = vmul.f32 %v375, %v383
      %v388 = vmul.f32 %v376, %v380
      %v389 = vmul.f32 %v377, %v381
      %v390 = vmul.f32 %v378, %v382
      %v391 = vmul.f32 %v379, %v383
      %v392 = vadd.f32 %v339, %v384
      %v393 = vadd.f32 %v340, %v385
      %v394 = vadd.f32 %v341, %v386
      %v395 = vadd.f32 %v342, %v387
      %v396 = vadd.f32 %v343, %v388
      %v397 = vadd.f32 %v344, %v389
      %v398 = vadd.f32 %v345, %v390
      %v399 = vadd.f32 %v346, %v391
      %400 = vrot.lane.b32.xlu0 %v213, 32
      %v401 = vpop.permute.xlu0 %400
      %402 = vrot.lane.b32.xlu0 %v217, 32
      %v403 = vpop.permute.xlu0 %402
      %404 = vrot.lane.b32.xlu0 %v214, 32
      %v405 = vpop.permute.xlu0 %404
      %406 = vrot.lane.b32.xlu0 %v218, 32
      %v407 = vpop.permute.xlu0 %406
      %408 = vrot.lane.b32.xlu0 %v215, 32
      %v409 = vpop.permute.xlu0 %408
      %410 = vrot.lane.b32.xlu0 %v219, 32
      %v411 = vpop.permute.xlu0 %410
      %412 = vrot.lane.b32.xlu0 %v216, 32
      %v413 = vpop.permute.xlu0 %412
      %414 = vrot.lane.b32.xlu0 %v220, 32
      %v415 = vpop.permute.xlu0 %414
      %v416 = vsel %vm290, %v409, %v413
      %v417 = vsel %vm290, %v411, %v415
      %v418 = vsel %vm290, %v405, %v409
      %v419 = vsel %vm290, %v407, %v411
      %v420 = vsel %vm290, %v401, %v405
      %v421 = vsel %vm290, %v403, %v407
      %v422 = vsel %vm290, %v413, %v401
      %v423 = vsel %vm290, %v415, %v403
      %v424 = vsel %vm245, %v422, 0.0
      %v425 = vsel %vm246, %v420, 0.0
      %v426 = vsel %vm247, %v418, 0.0
      %v427 = vsel %vm248, %v416, 0.0
      %v428 = vsel %vm245, %v423, 0.0
      %v429 = vsel %vm246, %v421, 0.0
      %v430 = vsel %vm247, %v419, 0.0
      %v431 = vsel %vm248, %v417, 0.0
      %v432 = vperm.slane %v221, 3
      %v433 = vperm.slane %v222, 3
      %v434 = vperm.slane %v223, 3
      %v435 = vperm.slane %v224, 3
      %v436 = vmul.f32 %v424, %v432
      %v437 = vmul.f32 %v425, %v433
      %v438 = vmul.f32 %v426, %v434
      %v439 = vmul.f32 %v427, %v435
      %v440 = vmul.f32 %v428, %v432
      %v441 = vmul.f32 %v429, %v433
      %v442 = vmul.f32 %v430, %v434
      %v443 = vmul.f32 %v431, %v435
      %v444 = vadd.f32 %v392, %v436
      %v445 = vadd.f32 %v393, %v437
      %v446 = vadd.f32 %v394, %v438
      %v447 = vadd.f32 %v395, %v439
      %v448 = vadd.f32 %v396, %v440
      %v449 = vadd.f32 %v397, %v441
      %v450 = vadd.f32 %v398, %v442
      %v451 = vadd.f32 %v399, %v443
      %v452 = vperm.slane %v221, 4
      %v453 = vperm.slane %v222, 4
      %v454 = vperm.slane %v223, 4
      %v455 = vperm.slane %v224, 4
      %v456 = vmul.f32 %v213, %v452
      %v457 = vmul.f32 %v214, %v453
      %v458 = vmul.f32 %v215, %v454
      %v459 = vmul.f32 %v216, %v455
      %v460 = vmul.f32 %v217, %v452
      %v461 = vmul.f32 %v218, %v453
      %v462 = vmul.f32 %v219, %v454
      %v463 = vmul.f32 %v220, %v455
      %v464 = vadd.f32 %v444, %v456
      %v465 = vadd.f32 %v445, %v457
      %v466 = vadd.f32 %v446, %v458
      %v467 = vadd.f32 %v447, %v459
      %v468 = vadd.f32 %v448, %v460
      %v469 = vadd.f32 %v449, %v461
      %v470 = vadd.f32 %v450, %v462
      %v471 = vadd.f32 %v451, %v463
      %472 = vrot.lane.b32.xlu0 %v213, 96
      %v473 = vpop.permute.xlu0 %472
      %474 = vrot.lane.b32.xlu0 %v217, 96
      %v475 = vpop.permute.xlu0 %474
      %476 = vrot.lane.b32.xlu0 %v214, 96
      %v477 = vpop.permute.xlu0 %476
      %478 = vrot.lane.b32.xlu0 %v218, 96
      %v479 = vpop.permute.xlu0 %478
      %480 = vrot.lane.b32.xlu0 %v215, 96
      %v481 = vpop.permute.xlu0 %480
      %482 = vrot.lane.b32.xlu0 %v219, 96
      %v483 = vpop.permute.xlu0 %482
      %484 = vrot.lane.b32.xlu0 %v216, 96
      %v485 = vpop.permute.xlu0 %484
      %486 = vrot.lane.b32.xlu0 %v220, 96
      %v487 = vpop.permute.xlu0 %486
      %v488 = vsel %vm363, %v481, %v485
      %v489 = vsel %vm363, %v483, %v487
      %v490 = vsel %vm363, %v477, %v481
      %v491 = vsel %vm363, %v479, %v483
      %v492 = vsel %vm363, %v473, %v477
      %v493 = vsel %vm363, %v475, %v479
      %v494 = vsel %vm363, %v485, %v473
      %v495 = vsel %vm363, %v487, %v475
      %v496 = vsel %vm241, %v492, 0.0
      %v497 = vsel %vm242, %v490, 0.0
      %v498 = vsel %vm243, %v488, 0.0
      %v499 = vsel %vm244, %v494, 0.0
      %v500 = vsel %vm241, %v493, 0.0
      %v501 = vsel %vm242, %v491, 0.0
      %v502 = vsel %vm243, %v489, 0.0
      %v503 = vsel %vm244, %v495, 0.0
      %v504 = vperm.slane %v221, 5
      %v505 = vperm.slane %v222, 5
      %v506 = vperm.slane %v223, 5
      %v507 = vperm.slane %v224, 5
      %v508 = vmul.f32 %v496, %v504
      %v509 = vmul.f32 %v497, %v505
      %v510 = vmul.f32 %v498, %v506
      %v511 = vmul.f32 %v499, %v507
      %v512 = vmul.f32 %v500, %v504
      %v513 = vmul.f32 %v501, %v505
      %v514 = vmul.f32 %v502, %v506
      %v515 = vmul.f32 %v503, %v507
      %v516 = vadd.f32 %v464, %v508
      %v517 = vadd.f32 %v465, %v509
      %v518 = vadd.f32 %v466, %v510
      %v519 = vadd.f32 %v467, %v511
      %v520 = vadd.f32 %v468, %v512
      %v521 = vadd.f32 %v469, %v513
      %v522 = vadd.f32 %v470, %v514
      %v523 = vadd.f32 %v471, %v515
      %v524 = vrot.slane %v213, 1
      %v525 = vrot.slane %v214, 1
      %v526 = vrot.slane %v215, 1
      %v527 = vrot.slane %v216, 1
      %v528 = vrot.slane %v217, 1
      %v529 = vrot.slane %v218, 1
      %v530 = vrot.slane %v219, 1
      %v531 = vrot.slane %v220, 1
      %vm532 = vcmp.lt.s32.totalorder %v230, 7
      %v533 = vsel %vm532, %v524, %v528
      %v534 = vsel %vm532, %v525, %v529
      %v535 = vsel %vm532, %v526, %v530
      %v536 = vsel %vm532, %v527, %v531
      %v537 = vsel %vm532, %v528, %v524
      %v538 = vsel %vm532, %v529, %v525
      %v539 = vsel %vm532, %v530, %v526
      %v540 = vsel %vm532, %v531, %v527
      %v541 = vsel %vm237, %v533, 0.0
      %v542 = vsel %vm237, %v534, 0.0
      %v543 = vsel %vm237, %v535, 0.0
      %v544 = vsel %vm237, %v536, 0.0
      %v545 = vsel %vm238, %v537, 0.0
      %v546 = vsel %vm238, %v538, 0.0
      %v547 = vsel %vm238, %v539, 0.0
      %v548 = vsel %vm238, %v540, 0.0
      %549 = vrot.lane.b32.xlu0 %v541, 32
      %v550 = vpop.permute.xlu0 %549
      %551 = vrot.lane.b32.xlu0 %v545, 32
      %v552 = vpop.permute.xlu0 %551
      %553 = vrot.lane.b32.xlu0 %v542, 32
      %v554 = vpop.permute.xlu0 %553
      %555 = vrot.lane.b32.xlu0 %v546, 32
      %v556 = vpop.permute.xlu0 %555
      %557 = vrot.lane.b32.xlu0 %v543, 32
      %v558 = vpop.permute.xlu0 %557
      %559 = vrot.lane.b32.xlu0 %v547, 32
      %v560 = vpop.permute.xlu0 %559
      %561 = vrot.lane.b32.xlu0 %v544, 32
      %v562 = vpop.permute.xlu0 %561
      %563 = vrot.lane.b32.xlu0 %v548, 32
      %v564 = vpop.permute.xlu0 %563
      %v565 = vsel %vm290, %v558, %v562
      %v566 = vsel %vm290, %v560, %v564
      %v567 = vsel %vm290, %v554, %v558
      %v568 = vsel %vm290, %v556, %v560
      %v569 = vsel %vm290, %v550, %v554
      %v570 = vsel %vm290, %v552, %v556
      %v571 = vsel %vm290, %v562, %v550
      %v572 = vsel %vm290, %v564, %v552
      %v573 = vsel %vm245, %v571, 0.0
      %v574 = vsel %vm246, %v569, 0.0
      %v575 = vsel %vm247, %v567, 0.0
      %v576 = vsel %vm248, %v565, 0.0
      %v577 = vsel %vm245, %v572, 0.0
      %v578 = vsel %vm246, %v570, 0.0
      %v579 = vsel %vm247, %v568, 0.0
      %v580 = vsel %vm248, %v566, 0.0
      %v581 = vperm.slane %v221, 6
      %v582 = vperm.slane %v222, 6
      %v583 = vperm.slane %v223, 6
      %v584 = vperm.slane %v224, 6
      %v585 = vmul.f32 %v573, %v581
      %v586 = vmul.f32 %v574, %v582
      %v587 = vmul.f32 %v575, %v583
      %v588 = vmul.f32 %v576, %v584
      %v589 = vmul.f32 %v577, %v581
      %v590 = vmul.f32 %v578, %v582
      %v591 = vmul.f32 %v579, %v583
      %v592 = vmul.f32 %v580, %v584
      %v593 = vadd.f32 %v516, %v585
      %v594 = vadd.f32 %v517, %v586
      %v595 = vadd.f32 %v518, %v587
      %v596 = vadd.f32 %v519, %v588
      %v597 = vadd.f32 %v520, %v589
      %v598 = vadd.f32 %v521, %v590
      %v599 = vadd.f32 %v522, %v591
      %v600 = vadd.f32 %v523, %v592
      %v601 = vperm.slane %v221, 7
      %v602 = vperm.slane %v222, 7
      %v603 = vperm.slane %v223, 7
      %v604 = vperm.slane %v224, 7
      %v605 = vmul.f32 %v541, %v601
      %v606 = vmul.f32 %v542, %v602
      %v607 = vmul.f32 %v543, %v603
      %v608 = vmul.f32 %v544, %v604
      %v609 = vmul.f32 %v545, %v601
      %v610 = vmul.f32 %v546, %v602
      %v611 = vmul.f32 %v547, %v603
      %v612 = vmul.f32 %v548, %v604
      %v613 = vadd.f32 %v593, %v605
      %v614 = vadd.f32 %v594, %v606
      %v615 = vadd.f32 %v595, %v607
      %v616 = vadd.f32 %v596, %v608
      %v617 = vadd.f32 %v597, %v609
      %v618 = vadd.f32 %v598, %v610
      %v619 = vadd.f32 %v599, %v611
      %v620 = vadd.f32 %v600, %v612
      %621 = vrot.lane.b32.xlu0 %v541, 96
      %v622 = vpop.permute.xlu0 %621
      %623 = vrot.lane.b32.xlu0 %v545, 96
      %v624 = vpop.permute.xlu0 %623
      %625 = vrot.lane.b32.xlu0 %v542, 96
      %v626 = vpop.permute.xlu0 %625
      %627 = vrot.lane.b32.xlu0 %v546, 96
      %v628 = vpop.permute.xlu0 %627
      %629 = vrot.lane.b32.xlu0 %v543, 96
      %v630 = vpop.permute.xlu0 %629
      %631 = vrot.lane.b32.xlu0 %v547, 96
      %v632 = vpop.permute.xlu0 %631
      %633 = vrot.lane.b32.xlu0 %v544, 96
      %v634 = vpop.permute.xlu0 %633
      %635 = vrot.lane.b32.xlu0 %v548, 96
      %v636 = vpop.permute.xlu0 %635
      %v637 = vsel %vm363, %v630, %v634
      %v638 = vsel %vm363, %v632, %v636
      %v639 = vsel %vm363, %v626, %v630
      %v640 = vsel %vm363, %v628, %v632
      %v641 = vsel %vm363, %v622, %v626
      %v642 = vsel %vm363, %v624, %v628
      %v643 = vsel %vm363, %v634, %v622
      %v644 = vsel %vm363, %v636, %v624
      %v645 = vsel %vm241, %v641, 0.0
      %v646 = vsel %vm242, %v639, 0.0
      %v647 = vsel %vm243, %v637, 0.0
      %v648 = vsel %vm244, %v643, 0.0
      %v649 = vsel %vm241, %v642, 0.0
      %v650 = vsel %vm242, %v640, 0.0
      %v651 = vsel %vm243, %v638, 0.0
      %v652 = vsel %vm244, %v644, 0.0
      %v653 = vperm.slane %v225, 0
      %v654 = vperm.slane %v226, 0
      %v655 = vperm.slane %v227, 0
      %v656 = vperm.slane %v228, 0
      %v657 = vmul.f32 %v645, %v653
      %v658 = vmul.f32 %v646, %v654
      %v659 = vmul.f32 %v647, %v655
      %v660 = vmul.f32 %v648, %v656
      %v661 = vmul.f32 %v649, %v653
      %v662 = vmul.f32 %v650, %v654
      %v663 = vmul.f32 %v651, %v655
      %v664 = vmul.f32 %v652, %v656
      %v665 = vadd.f32 %v613, %v657
      %v666 = vadd.f32 %v614, %v658
      %v667 = vadd.f32 %v615, %v659
      %v668 = vadd.f32 %v616, %v660
      %v669 = vadd.f32 %v617, %v661
      %v670 = vadd.f32 %v618, %v662
      %v671 = vadd.f32 %v619, %v663
      %v672 = vadd.f32 %v620, %v664
      %v673 = vld [vmem:[%s2] sm:$0xf]
      %v675 = vperm.slane %v673, 0
      %v676 = vperm.slane %v673, 1
      %v677 = vperm.slane %v673, 2
      %v678 = vperm.slane %v673, 3
      %v683 = vadd.f32 %v665, %v675
      %v684 = vadd.f32 %v666, %v676
      %v685 = vadd.f32 %v667, %v677
      %v686 = vadd.f32 %v668, %v678
      %v687 = vadd.f32 %v669, %v675
      %v688 = vadd.f32 %v670, %v676
      %v689 = vadd.f32 %v671, %v677
      %v690 = vadd.f32 %v672, %v678
      %v691 = vxor.u32 %v683, 2147483648
      %v692 = vxor.u32 %v684, 2147483648
      %v693 = vxor.u32 %v685, 2147483648
      %v694 = vxor.u32 %v686, 2147483648
      %v695 = vxor.u32 %v687, 2147483648
      %v696 = vxor.u32 %v688, 2147483648
      %v697 = vxor.u32 %v689, 2147483648
      %v698 = vxor.u32 %v690, 2147483648
      %v699 = vmul.f32 %v691, 1.442695
      %v700 = vpow.pop %v699
      %v701 = vmul.f32 %v692, 1.442695
      %v702 = vpow.pop %v701
      %v703 = vmul.f32 %v693, 1.442695
      %v704 = vpow.pop %v703
      %v705 = vmul.f32 %v694, 1.442695
      %v706 = vpow.pop %v705
      %v707 = vmul.f32 %v695, 1.442695
      %v708 = vpow.pop %v707
      %v709 = vmul.f32 %v696, 1.442695
      %v710 = vpow.pop %v709
      %v711 = vmul.f32 %v697, 1.442695
      %v712 = vpow.pop %v711
      %v713 = vmul.f32 %v698, 1.442695
      %v714 = vpow.pop %v713
      %v715 = vadd.f32 %v700, 1.0
      %v716 = vadd.f32 %v702, 1.0
      %v717 = vadd.f32 %v704, 1.0
      %v718 = vadd.f32 %v706, 1.0
      %v719 = vadd.f32 %v708, 1.0
      %v720 = vadd.f32 %v710, 1.0
      %v721 = vadd.f32 %v712, 1.0
      %v722 = vadd.f32 %v714, 1.0
      %v723 = vrcp.pop %v715
      %v724 = vmul.f32 %v715, %v723
      %v725 = vsub.f32 1.0, %v724
      %v726 = vmul.f32 %v723, %v725
      %v727 = vadd.f32 %v723, %v726
      %vm728 = vweird.f32 %v715
      %vm729 = vweird.f32 %v723
      %vm730 = vmor %vm728, %vm729
      %v731 = vsel %vm730, %v723, %v727
      %v732 = vand.u32 2147483647, %v715
      %vm733 = vcmp.eq.f32.partialorder %v732, 8.507059e+37
      %v734 = vand.u32 %v715, 2147483648
      %v735 = vor.u32 1.1754944e-38, %v734
      %v736 = vsel %vm733, %v735, %v731
      %v737 = vmul.f32 1.0, %v736
      %v738 = vrcp.pop %v716
      %v739 = vmul.f32 %v716, %v738
      %v740 = vsub.f32 1.0, %v739
      %v741 = vmul.f32 %v738, %v740
      %v742 = vadd.f32 %v738, %v741
      %vm743 = vweird.f32 %v716
      %vm744 = vweird.f32 %v738
      %vm745 = vmor %vm743, %vm744
      %v746 = vsel %vm745, %v738, %v742
      %v747 = vand.u32 2147483647, %v716
      %vm748 = vcmp.eq.f32.partialorder %v747, 8.507059e+37
      %v749 = vand.u32 %v716, 2147483648
      %v750 = vor.u32 1.1754944e-38, %v749
      %v751 = vsel %vm748, %v750, %v746
      %v752 = vmul.f32 1.0, %v751
      %v753 = vrcp.pop %v717
      %v754 = vmul.f32 %v717, %v753
      %v755 = vsub.f32 1.0, %v754
      %v756 = vmul.f32 %v753, %v755
      %v757 = vadd.f32 %v753, %v756
      %vm758 = vweird.f32 %v717
      %vm759 = vweird.f32 %v753
      %vm760 = vmor %vm758, %vm759
      %v761 = vsel %vm760, %v753, %v757
      %v762 = vand.u32 2147483647, %v717
      %vm763 = vcmp.eq.f32.partialorder %v762, 8.507059e+37
      %v764 = vand.u32 %v717, 2147483648
      %v765 = vor.u32 1.1754944e-38, %v764
      %v766 = vsel %vm763, %v765, %v761
      %v767 = vmul.f32 1.0, %v766
      %v768 = vrcp.pop %v718
      %v769 = vmul.f32 %v718, %v768
      %v770 = vsub.f32 1.0, %v769
      %v771 = vmul.f32 %v768, %v770
      %v772 = vadd.f32 %v768, %v771
      %vm773 = vweird.f32 %v718
      %vm774 = vweird.f32 %v768
      %vm775 = vmor %vm773, %vm774
      %v776 = vsel %vm775, %v768, %v772
      %v777 = vand.u32 2147483647, %v718
      %vm778 = vcmp.eq.f32.partialorder %v777, 8.507059e+37
      %v779 = vand.u32 %v718, 2147483648
      %v780 = vor.u32 1.1754944e-38, %v779
      %v781 = vsel %vm778, %v780, %v776
      %v782 = vmul.f32 1.0, %v781
      %v783 = vrcp.pop %v719
      %v784 = vmul.f32 %v719, %v783
      %v785 = vsub.f32 1.0, %v784
      %v786 = vmul.f32 %v783, %v785
      %v787 = vadd.f32 %v783, %v786
      %vm788 = vweird.f32 %v719
      %vm789 = vweird.f32 %v783
      %vm790 = vmor %vm788, %vm789
      %v791 = vsel %vm790, %v783, %v787
      %v792 = vand.u32 2147483647, %v719
      %vm793 = vcmp.eq.f32.partialorder %v792, 8.507059e+37
      %v794 = vand.u32 %v719, 2147483648
      %v795 = vor.u32 1.1754944e-38, %v794
      %v796 = vsel %vm793, %v795, %v791
      %v797 = vmul.f32 1.0, %v796
      %v798 = vrcp.pop %v720
      %v799 = vmul.f32 %v720, %v798
      %v800 = vsub.f32 1.0, %v799
      %v801 = vmul.f32 %v798, %v800
      %v802 = vadd.f32 %v798, %v801
      %vm803 = vweird.f32 %v720
      %vm804 = vweird.f32 %v798
      %vm805 = vmor %vm803, %vm804
      %v806 = vsel %vm805, %v798, %v802
      %v807 = vand.u32 2147483647, %v720
      %vm808 = vcmp.eq.f32.partialorder %v807, 8.507059e+37
      %v809 = vand.u32 %v720, 2147483648
      %v810 = vor.u32 1.1754944e-38, %v809
      %v811 = vsel %vm808, %v810, %v806
      %v812 = vmul.f32 1.0, %v811
      %v813 = vrcp.pop %v721
      %v814 = vmul.f32 %v721, %v813
      %v815 = vsub.f32 1.0, %v814
      %v816 = vmul.f32 %v813, %v815
      %v817 = vadd.f32 %v813, %v816
      %vm818 = vweird.f32 %v721
      %vm819 = vweird.f32 %v813
      %vm820 = vmor %vm818, %vm819
      %v821 = vsel %vm820, %v813, %v817
      %v822 = vand.u32 2147483647, %v721
      %vm823 = vcmp.eq.f32.partialorder %v822, 8.507059e+37
      %v824 = vand.u32 %v721, 2147483648
      %v825 = vor.u32 1.1754944e-38, %v824
      %v826 = vsel %vm823, %v825, %v821
      %v827 = vmul.f32 1.0, %v826
      %v828 = vrcp.pop %v722
      %v829 = vmul.f32 %v722, %v828
      %v830 = vsub.f32 1.0, %v829
      %v831 = vmul.f32 %v828, %v830
      %v832 = vadd.f32 %v828, %v831
      %vm833 = vweird.f32 %v722
      %vm834 = vweird.f32 %v828
      %vm835 = vmor %vm833, %vm834
      %v836 = vsel %vm835, %v828, %v832
      %v837 = vand.u32 2147483647, %v722
      %vm838 = vcmp.eq.f32.partialorder %v837, 8.507059e+37
      %v839 = vand.u32 %v722, 2147483648
      %v840 = vor.u32 1.1754944e-38, %v839
      %v841 = vsel %vm838, %v840, %v836
      %v842 = vmul.f32 1.0, %v841
      %v843 = vmul.f32 %v683, %v737
      %v844 = vmul.f32 %v684, %v752
      %v845 = vmul.f32 %v685, %v767
      %v846 = vmul.f32 %v686, %v782
      %v847 = vmul.f32 %v687, %v797
      %v848 = vmul.f32 %v688, %v812
      %v849 = vmul.f32 %v689, %v827
      %v850 = vmul.f32 %v690, %v842
      %v851 = vpack.c.bf16 %v844, %v843
      %v852 = vpack.c.bf16 %v846, %v845
      %v853 = vpack.c.bf16 %v848, %v847
      %v854 = vpack.c.bf16 %v850, %v849
      %855 = vst [vmem:[%s204] sm:$0xff] %v851
      %856 = vst [vmem:[%s204 + $0x8] sm:$0xff] %v852
      %857 = vst [vmem:[%s204 + $0x10] sm:$0xff] %v853
      %858 = vst [vmem:[%s204 + $0x18] sm:$0xff] %v854
      %v859 = vadd.f32 %v843, %v847
      %v860 = vrot.slane %v859, 4
      %v861 = vadd.f32 %v859, %v860
      %v862 = vrot.slane %v861, 2
      %v863 = vadd.f32 %v861, %v862
      %v864 = vrot.slane %v863, 1
      %v865 = vadd.f32 %v863, %v864
      %v866 = vadd.f32 %v844, %v848
      %v867 = vrot.slane %v866, 4
      %v868 = vadd.f32 %v866, %v867
      %v869 = vrot.slane %v868, 2
      %v870 = vadd.f32 %v868, %v869
      %v871 = vrot.slane %v870, 1
      %v872 = vadd.f32 %v870, %v871
      %v873 = vadd.f32 %v845, %v849
      %v874 = vrot.slane %v873, 4
      %v875 = vadd.f32 %v873, %v874
      %v876 = vrot.slane %v875, 2
      %v877 = vadd.f32 %v875, %v876
      %v878 = vrot.slane %v877, 1
      %v879 = vadd.f32 %v877, %v878
      %v880 = vadd.f32 %v846, %v850
      %v881 = vrot.slane %v880, 4
      %v882 = vadd.f32 %v880, %v881
      %v883 = vrot.slane %v882, 2
      %v884 = vadd.f32 %v882, %v883
      %v885 = vrot.slane %v884, 1
      %v886 = vadd.f32 %v884, %v885
      %v891 = vrot.slane %v872, 7
      %v892 = vrot.slane %v879, 6
      %v893 = vrot.slane %v886, 5
      %vm894 = vcmask 1040384
      %v895 = vsel %vm894, %v865, %v891
      %vm896 = vcmask 1042434
      %v897 = vsel %vm896, %v892, %v893
      %vm898 = vcmask 1041408
      %v899 = vsel %vm898, %v895, %v897
      %v901 = vlaneseq
      %vm902 = vcmp.ge.s32.totalorder %v901, 0
      %vm903 = vcmp.lt.s32.totalorder %v901, 512
      %vm904 = vmand %vm902, %vm903
      %905 = vst.msk [vmem:[%s208] sm:$0xf] %vm904, %v899
      %p906 = scmp.lt.s32.totalorder %s16, 1
      %s907 = scalar_select %p906, %s16, 1
      %s908 = smul.addr %s907, 8
      %s909 = smul.addr %s908, 4
      %s910 = scalar_lea.vmem %s3, %s909
      %p911 = scmp.lt.s32.totalorder %s16, 1
      %s912 = scalar_select %p911, %s16, 1
      %s913 = smul.addr %s912, 4
      %s914 = scalar_lea.vmem %s4, %s913
      // Predicated region
      $region33: #{efficientnet_b1_forward.5} parent=31 // pred_check
        %p915 = pneg %p102
      $region34: #{efficientnet_b1_forward.5} parent=31 // pred_check_branch
        %917 = sbr.rel (%p915) target = $region36
      $region35: #{efficientnet_b1_forward.5} parent=31 // pred_region
        _
      $region36: #{efficientnet_b1_forward.5} parent=31 // pred_fallthru
        _
      // Predicated region
      $region37: #{efficientnet_b1_forward.5} parent=31 // pred_check
        %p918 = pneg %p128
      $region38: #{efficientnet_b1_forward.5} parent=31 // pred_check_branch
        %920 = sbr.rel (%p918) target = $region40
      $region39: #{efficientnet_b1_forward.5} parent=31 // pred_region
        _
      $region40: #{efficientnet_b1_forward.5} parent=31 // pred_fallthru
        _
    $region32: #{efficientnet_b1_forward.5} parent=5 // pred_fallthru
      _
    %p921 = scmp.le.s32.totalorder 2, %s11
    // Predicated region
    $region41: #{efficientnet_b1_forward.5} parent=5 // pred_check
      %p922 = pneg %p921
    $region42: #{efficientnet_b1_forward.5} parent=5 // pred_check_branch
      %924 = sbr.rel (%p922) target = $region44
    $region43: #{efficientnet_b1_forward.5} parent=5 // pred_region
      %s925 = ssub.s32 %s11, 2
      // Predicated region
      $region45: #{efficientnet_b1_forward.5} parent=43 // pred_check
        %p926 = pneg %p108
      $region46: #{efficientnet_b1_forward.5} parent=43 // pred_check_branch
        %928 = sbr.rel (%p926) target = $region48
      $region47: #{efficientnet_b1_forward.5} parent=43 // pred_region
        %p929 = scmp.lt.s32.totalorder %s17, 1
        %s930 = scalar_select %p929, %s17, 1
        %s931 = smul.addr %s930, 8
        %s932 = smul.addr %s931, 4
        %s933 = scalar_lea.vmem %s3, %s932
      $region48: #{efficientnet_b1_forward.5} parent=43 // pred_fallthru
        _
      // Predicated region
      $region49: #{efficientnet_b1_forward.5} parent=43 // pred_check
        %p934 = pneg %p134
      $region50: #{efficientnet_b1_forward.5} parent=43 // pred_check_branch
        %936 = sbr.rel (%p934) target = $region52
      $region51: #{efficientnet_b1_forward.5} parent=43 // pred_region
        %p937 = scmp.lt.s32.totalorder %s17, 1
        %s938 = scalar_select %p937, %s17, 1
        %s939 = smul.addr %s938, 4
        %s940 = scalar_lea.vmem %s4, %s939
      $region52: #{efficientnet_b1_forward.5} parent=43 // pred_fallthru
        _
    $region44: #{efficientnet_b1_forward.5} parent=5 // pred_fallthru
      _
  $region6: #{efficientnet_b1_forward.5} parent=0 // loop_footer
    %s15 = sadd.s32 1, %s11
  $region7: #{efficientnet_b1_forward.5} parent=0 // loop_footer_branch
    %10 = sbr.rel target = $region3
  $region8: #{efficientnet_b1_forward.5} parent=0 // loop_exit
    _

// kernel: efficientnet_b1_forward.4
$region0: #{efficientnet_b1_forward.4}
  #allocation0 [shape = 'u32[]', space=smem, size = 0x4, offset = 0x4, fixed_abs, tag = 'smem constant byte address 0x4 - core index']
  #allocation1 [shape = 'u32[72,128]{1,0:T(1,128)}', space=vmem, size = 0x9000, scoped, tag = 'internal scratch']
  %s0 = inlined_call_operand.vmem [shape: bf16[2,256,27], index: 0, kind: input, shape index: {}]
  %s1 = inlined_call_operand.vmem [shape: bf16[27,32], index: 1, kind: input, shape index: {}]
  %s2 = inlined_call_operand.vmem [shape: f32[1,32], index: 2, kind: input, shape index: {}]
  %s3 = inlined_call_operand.vmem [shape: bf16[2,256,32], index: 3, kind: output, shape index: {}]
  %s4 = sld [smem:[#allocation0]]
  $region45: #{efficientnet_b1_forward.4} parent=0
    _
  %s6 = ssub.s32 1, %s4
  %s7 = scalar_select 0, %s6, %s4
  loop: start=0, step=1, limit=6
  $region2: #{efficientnet_b1_forward.4} parent=0 // loop_pre_header
    _
  $region3: #{efficientnet_b1_forward.4} parent=0 // loop_header
    %s9 = sphi 0, %s13
    %p10 = scmp.ge.s32.totalorder %s9, 6
    %s16 = sphi 0, %s28
    %s17 = sphi 0, %s24
    %s18 = sphi 0, %s16
    %s19 = sphi 0, %s17
    %s20 = sphi 0, %s18
    %s21 = sphi 0, %s19
    %s33 = sphi 0, %s35
    %s36 = sphi 0, %s33
    %s37 = sphi 0, %s36
    %s53 = sphi 0, %s37
    %s57 = sphi 0, %s57
    %s59 = sphi 0, %s57
    %s60 = sphi 0, %s59
    %s74 = sphi 0, %s60
    %s78 = sphi 0, %s78
    %s80 = sphi 0, %s78
    %s81 = sphi 0, %s80
    %s95 = sphi 0, %s81
    %s103 = sphi 0, %s105
    %s106 = sphi 0, %s103
    %s107 = sphi 0, %s106
    %s123 = sphi 0, %s107
  $region4: #{efficientnet_b1_forward.4} parent=0 // loop_header_branch
    %12 = sbr.rel (%p10) target = $region8
  $region5: #{efficientnet_b1_forward.4} parent=0 // loop_body
    %s14 = ssub.s32 %s9, 1
    %s15 = ssub.s32 %s9, 2
    %s22 = sadd.s32 1, %s17
    %p23 = scmp.ge.s32.totalorder %s22, 2
    %s24 = scalar_select %p23, 0, %s22
    %s25 = sadd.s32 1, %s16
    %s26 = scalar_select %p23, %s25, %s16
    %p27 = scmp.ge.s32.totalorder %s26, 2
    %s28 = scalar_select %p27, 0, %s26
    %s29 = ssub.s32 %s16, %s28
    %s30 = ssub.s32 %s17, %s24
    %s31 = sor.u32 %s29, %s30
    %p32 = scmp.eq.s32.totalorder %s31, 0
    %s34 = sadd.s32 %s33, 1
    %s35 = scalar_select %p32, %s33, %s34
    %p38 = pneg %p32
    %p39 = scmp.eq.s32.totalorder %s9, 3
    %p40 = por %p38, %p39
    %p41 = scmp.ne.s32.totalorder %s33, %s36
    %p42 = scmp.eq.s32.totalorder %s9, 0
    %p43 = por %p41, %p42
    %p44 = scmp.ne.s32.totalorder %s33, %s36
    %p45 = scmp.eq.s32.totalorder %s14, 3
    %p46 = por %p44, %p45
    %p47 = scmp.ne.s32.totalorder %s36, %s37
    %p48 = scmp.eq.s32.totalorder %s14, 0
    %p49 = por %p47, %p48
    %p50 = scmp.ne.s32.totalorder %s36, %s37
    %p51 = scmp.eq.s32.totalorder %s15, 3
    %p52 = por %p50, %p51
    %p54 = scmp.ne.s32.totalorder %s37, %s53
    %p55 = scmp.eq.s32.totalorder %s15, 0
    %p56 = por %p54, %p55
    %s58 = sadd.s32 %s57, 1
    %p61 = scmp.eq.s32.totalorder %s9, 3
    %p62 = scmp.ne.s32.totalorder %s57, %s59
    %p63 = scmp.eq.s32.totalorder %s9, 0
    %p64 = por %p62, %p63
    %p65 = scmp.ne.s32.totalorder %s57, %s59
    %p66 = scmp.eq.s32.totalorder %s14, 3
    %p67 = por %p65, %p66
    %p68 = scmp.ne.s32.totalorder %s59, %s60
    %p69 = scmp.eq.s32.totalorder %s14, 0
    %p70 = por %p68, %p69
    %p71 = scmp.ne.s32.totalorder %s59, %s60
    %p72 = scmp.eq.s32.totalorder %s15, 3
    %p73 = por %p71, %p72
    %p75 = scmp.ne.s32.totalorder %s60, %s74
    %p76 = scmp.eq.s32.totalorder %s15, 0
    %p77 = por %p75, %p76
    %s79 = sadd.s32 %s78, 1
    %p82 = scmp.eq.s32.totalorder %s9, 3
    %p83 = scmp.ne.s32.totalorder %s78, %s80
    %p84 = scmp.eq.s32.totalorder %s9, 0
    %p85 = por %p83, %p84
    %p86 = scmp.ne.s32.totalorder %s78, %s80
    %p87 = scmp.eq.s32.totalorder %s14, 3
    %p88 = por %p86, %p87
    %p89 = scmp.ne.s32.totalorder %s80, %s81
    %p90 = scmp.eq.s32.totalorder %s14, 0
    %p91 = por %p89, %p90
    %p92 = scmp.ne.s32.totalorder %s80, %s81
    %p93 = scmp.eq.s32.totalorder %s15, 3
    %p94 = por %p92, %p93
    %p96 = scmp.ne.s32.totalorder %s81, %s95
    %p97 = scmp.eq.s32.totalorder %s15, 0
    %p98 = por %p96, %p97
    %s99 = ssub.s32 %s16, %s28
    %s100 = ssub.s32 %s17, %s24
    %s101 = sor.u32 %s99, %s100
    %p102 = scmp.eq.s32.totalorder %s101, 0
    %s104 = sadd.s32 %s103, 1
    %s105 = scalar_select %p102, %s103, %s104
    %p108 = pneg %p102
    %p109 = scmp.eq.s32.totalorder %s9, 3
    %p110 = por %p108, %p109
    %p111 = scmp.ne.s32.totalorder %s103, %s106
    %p112 = scmp.eq.s32.totalorder %s9, 0
    %p113 = por %p111, %p112
    %p114 = scmp.ne.s32.totalorder %s103, %s106
    %p115 = scmp.eq.s32.totalorder %s14, 3
    %p116 = por %p114, %p115
    %p117 = scmp.ne.s32.totalorder %s106, %s107
    %p118 = scmp.eq.s32.totalorder %s14, 0
    %p119 = por %p117, %p118
    %p120 = scmp.ne.s32.totalorder %s106, %s107
    %p121 = scmp.eq.s32.totalorder %s15, 3
    %p122 = por %p120, %p121
    %p124 = scmp.ne.s32.totalorder %s107, %s123
    %p125 = scmp.eq.s32.totalorder %s15, 0
    %p126 = por %p124, %p125
    %p127 = scmp.le.s32.totalorder 1, %s9
    %p128 = scmp.lt.s32.totalorder %s9, 5
    %p129 = pnand %p127, %p128
    %p130 = pneg %p129
    // Predicated region
    $region9: #{efficientnet_b1_forward.4} parent=5 // pred_check
      _
    $region10: #{efficientnet_b1_forward.4} parent=5 // pred_check_branch
      %132 = sbr.rel (%p129) target = $region12
    $region11: #{efficientnet_b1_forward.4} parent=5 // pred_region
      %s133 = ssub.s32 %s9, 1
      // Predicated region
      $region13: #{efficientnet_b1_forward.4} parent=11 // pred_check
        %p134 = pneg %p70
      $region14: #{efficientnet_b1_forward.4} parent=11 // pred_check_branch
        %136 = sbr.rel (%p134) target = $region16
      $region15: #{efficientnet_b1_forward.4} parent=11 // pred_region
        _
      $region16: #{efficientnet_b1_forward.4} parent=11 // pred_fallthru
        _
      // Predicated region
      $region17: #{efficientnet_b1_forward.4} parent=11 // pred_check
        %p137 = pneg %p91
      $region18: #{efficientnet_b1_forward.4} parent=11 // pred_check_branch
        %139 = sbr.rel (%p137) target = $region20
      $region19: #{efficientnet_b1_forward.4} parent=11 // pred_region
        _
      $region20: #{efficientnet_b1_forward.4} parent=11 // pred_fallthru
        _
    $region12: #{efficientnet_b1_forward.4} parent=5 // pred_fallthru
      _
    %p140 = scmp.lt.s32.totalorder %s9, 4
    // Predicated region
    $region21: #{efficientnet_b1_forward.4} parent=5 // pred_check
      %p141 = pneg %p140
    $region22: #{efficientnet_b1_forward.4} parent=5 // pred_check_branch
      %143 = sbr.rel (%p141) target = $region24
    $region23: #{efficientnet_b1_forward.4} parent=5 // pred_region
      // Predicated region
      $region25: #{efficientnet_b1_forward.4} parent=23 // pred_check
        %p144 = pneg %p43
      $region26: #{efficientnet_b1_forward.4} parent=23 // pred_check_branch
        %146 = sbr.rel (%p144) target = $region28
      $region27: #{efficientnet_b1_forward.4} parent=23 // pred_region
        %s147 = smul.u32 16, %s17
        %p148 = scmp.lt.s32.totalorder %s16, 1
        %s149 = scalar_select %p148, %s16, 1
        %p150 = scmp.lt.s32.totalorder %s147, 31
        %s151 = scalar_select %p150, %s147, 31
        %s152 = smul.addr %s149, 32
        %s153 = sadd.s32 %s151, %s152
        %s154 = smul.addr %s153, 4
        %s155 = scalar_lea.vmem %s0, %s154
        %s156 = smul.u32 16, %s17
      $region28: #{efficientnet_b1_forward.4} parent=23 // pred_fallthru
        _
    $region24: #{efficientnet_b1_forward.4} parent=5 // pred_fallthru
      _
    %p157 = scmp.le.s32.totalorder 1, %s9
    %p158 = scmp.lt.s32.totalorder %s9, 5
    %p159 = pnand %p157, %p158
    %p160 = pneg %p159
    // Predicated region
    $region29: #{efficientnet_b1_forward.4} parent=5 // pred_check
      _
    $region30: #{efficientnet_b1_forward.4} parent=5 // pred_check_branch
      %162 = sbr.rel (%p159) target = $region32
    $region31: #{efficientnet_b1_forward.4} parent=5 // pred_region
      %s163 = ssub.s32 %s9, 1
      %s164 = smul.u32 16, %s19
      %p165 = scmp.lt.s32.totalorder %s18, 1
      %s166 = scalar_select %p165, %s18, 1
      %p167 = scmp.lt.s32.totalorder %s164, 31
      %s168 = scalar_select %p167, %s164, 31
      %s169 = smul.addr %s166, 32
      %s170 = sadd.s32 %s168, %s169
      %s171 = smul.addr %s170, 4
      %s172 = scalar_lea.vmem %s0, %s171
      %p173 = pneg %p49
      %p174 = pneg %p46
      %p175 = pneg %p70
      %p176 = pneg %p67
      %p177 = pneg %p91
      %p178 = pneg %p88
      %p179 = pneg %p119
      %p180 = pneg %p116
      %s181 = smul.u32 16, %s19
      %p182 = scmp.lt.s32.totalorder %s18, 1
      %s183 = scalar_select %p182, %s18, 1
      %p184 = scmp.lt.s32.totalorder %s181, 31
      %s185 = scalar_select %p184, %s181, 31
      %s186 = smul.addr %s183, 32
      %s187 = sadd.s32 %s185, %s186
      %s188 = smul.addr %s187, 4
      %s189 = scalar_lea.vmem %s3, %s188
      %s190 = smul.u32 16, %s19
      %p191 = scmp.lt.s32.totalorder %s18, 1
      %s192 = scalar_select %p191, %s18, 1
      %p193 = scmp.lt.s32.totalorder %s190, 31
      %s194 = scalar_select %p193, %s190, 31
      %s195 = smul.addr %s192, 32
      %s196 = sadd.s32 %s194, %s195
      %s197 = smul.addr %s196, 4
      %s198 = scalar_lea.vmem %s0, %s197
      %s199 = smul.u32 16, %s19
      %s200 = smul.u32 16, %s19
      %p201 = scmp.lt.s32.totalorder %s18, 1
      %s202 = scalar_select %p201, %s18, 1
      %p203 = scmp.lt.s32.totalorder %s200, 31
      %s204 = scalar_select %p203, %s200, 31
      %s205 = smul.addr %s202, 32
      %s206 = sadd.s32 %s204, %s205
      %s207 = smul.addr %s206, 4
      %s208 = scalar_lea.vmem %s3, %s207
      %s209 = smul.u32 16, %s19
      %v211 = vld [vmem:[%s198] sm:$0xf]
      %v212 = vld [vmem:[%s198 + $0x4] sm:$0xf]
      %v213 = vld [vmem:[%s198 + $0x8] sm:$0xf]
      %v214 = vld [vmem:[%s198 + $0xc] sm:$0xf]
      %v215 = vld [vmem:[%s198 + $0x10] sm:$0xf]
      %v216 = vld [vmem:[%s198 + $0x14] sm:$0xf]
      %v217 = vld [vmem:[%s198 + $0x18] sm:$0xf]
      %v218 = vld [vmem:[%s198 + $0x1c] sm:$0xf]
      %v219 = vld [vmem:[%s198 + $0x20] sm:$0xf]
      %v220 = vld [vmem:[%s198 + $0x24] sm:$0xf]
      %v221 = vld [vmem:[%s198 + $0x28] sm:$0xf]
      %v222 = vld [vmem:[%s198 + $0x2c] sm:$0xf]
      %v223 = vld [vmem:[%s198 + $0x30] sm:$0xf]
      %v224 = vld [vmem:[%s198 + $0x34] sm:$0xf]
      %v225 = vld [vmem:[%s198 + $0x38] sm:$0xf]
      %v226 = vld [vmem:[%s198 + $0x3c] sm:$0xf]
      %v227 = vld [vmem:[%s1] sm:$0xf]
      %v228 = vld [vmem:[%s1 + $0x4] sm:$0xf]
      %v229 = vld [vmem:[%s1 + $0x8] sm:$0xf]
      %v230 = vld [vmem:[%s1 + $0xc] sm:$0x3]
      %v231 = vld [vmem:[%s2] sm:$0x1]
      %v233 = vperm.slane %v231, 0
      %v251 = vunpack.c.l.b16 %v211
      %v252 = vunpack.c.l.b16 %v212
      %v253 = vunpack.c.l.b16 %v213
      %v254 = vunpack.c.l.b16 %v214
      %v255 = vunpack.c.l.b16 %v215
      %v256 = vunpack.c.l.b16 %v216
      %v257 = vunpack.c.l.b16 %v217
      %v258 = vunpack.c.l.b16 %v218
      %v259 = vunpack.c.l.b16 %v219
      %v260 = vunpack.c.l.b16 %v220
      %v261 = vunpack.c.l.b16 %v221
      %v262 = vunpack.c.l.b16 %v222
      %v263 = vunpack.c.l.b16 %v223
      %v264 = vunpack.c.l.b16 %v224
      %v265 = vunpack.c.l.b16 %v225
      %v266 = vunpack.c.l.b16 %v226
      %v267 = vpack.c.b16 %v252, %v251
      %v268 = vpack.c.b16 %v254, %v253
      %v269 = vpack.c.b16 %v256, %v255
      %v270 = vpack.c.b16 %v258, %v257
      %v271 = vpack.c.b16 %v260, %v259
      %v272 = vpack.c.b16 %v262, %v261
      %v273 = vpack.c.b16 %v264, %v263
      %v274 = vpack.c.b16 %v266, %v265
      %v279 = vunpack.c.l.b16 %v227
      %v280 = vunpack.c.l.b16 %v228
      %v281 = vunpack.c.l.b16 %v229
      %v282 = vunpack.c.l.b16 %v230
      %v283 = vpack.c.b16 %v280, %v279
      %v284 = vpack.c.b16 %v282, %v281
      %vm286 = vcmask 220160
      %v288 = vsel %vm286, %v267, 0
      %v291 = vsel %vm286, %v268, 0
      %v294 = vsel %vm286, %v269, 0
      %v297 = vsel %vm286, %v270, 0
      %v300 = vsel %vm286, %v271, 0
      %v303 = vsel %vm286, %v272, 0
      %v306 = vsel %vm286, %v273, 0
      %v309 = vsel %vm286, %v274, 0
      %vm311 = vcmask 1044480
      %vm312 = vcmask 1045504
      %v313 = vsel %vm311, 4294967295, 65535
      %v314 = vsel %vm312, %v313, 0
      %v316 = vand.u32 %v284, %v314
      %318 = vmatpush.bf16.msra.mxu0 0
      %319 = vmatpush.bf16.msra.mxu0 0
      %320 = vmatpush.bf16.msra.mxu0 0
      %321 = vmatpush.bf16.msra.mxu0 0
      %322 = vmatpush.bf16.msra.mxu0 0
      %323 = vmatpush.bf16.msra.mxu0 0
      %324 = vmatpush.bf16.msra.mxu0 %v316
      %325 = vmatpush.bf16.msra.mxu0 %v283
      %326 = vmatmul.bf16.gmra.mxu0 %v288
      %v327 = vpop.f32.mrf.mxu0
      %v328 = vadd.f32 %v233, %v327
      %v329 = vpop.f32.mrf.mxu0
      %v330 = vadd.f32 %v233, %v329
      %331 = vmatmul.bf16.gmra.mxu0 %v291
      %v332 = vpop.f32.mrf.mxu0
      %v333 = vadd.f32 %v233, %v332
      %v334 = vpop.f32.mrf.mxu0
      %v335 = vadd.f32 %v233, %v334
      %336 = vmatmul.bf16.gmra.mxu0 %v294
      %v337 = vpop.f32.mrf.mxu0
      %v338 = vadd.f32 %v233, %v337
      %v339 = vpop.f32.mrf.mxu0
      %v340 = vadd.f32 %v233, %v339
      %341 = vmatmul.bf16.gmra.mxu0 %v297
      %v342 = vpop.f32.mrf.mxu0
      %v343 = vadd.f32 %v233, %v342
      %v344 = vpop.f32.mrf.mxu0
      %v345 = vadd.f32 %v233, %v344
      %346 = vmatmul.bf16.gmra.mxu0 %v300
      %v347 = vpop.f32.mrf.mxu0
      %v348 = vadd.f32 %v233, %v347
      %v349 = vpop.f32.mrf.mxu0
      %v350 = vadd.f32 %v233, %v349
      %351 = vmatmul.bf16.gmra.mxu0 %v303
      %v352 = vpop.f32.mrf.mxu0
      %v353 = vadd.f32 %v233, %v352
      %v354 = vpop.f32.mrf.mxu0
      %v355 = vadd.f32 %v233, %v354
      %356 = vmatmul.bf16.gmra.mxu0 %v306
      %v357 = vpop.f32.mrf.mxu0
      %v358 = vadd.f32 %v233, %v357
      %v359 = vpop.f32.mrf.mxu0
      %v360 = vadd.f32 %v233, %v359
      %361 = vmatmul.bf16.gmra.mxu0 %v309
      %v362 = vpop.f32.mrf.mxu0
      %v363 = vadd.f32 %v233, %v362
      %v364 = vpop.f32.mrf.mxu0
      %v365 = vadd.f32 %v233, %v364
      %366 = vdwg.mxu0
      %v367 = vxor.u32 %v328, 2147483648
      %v368 = vxor.u32 %v330, 2147483648
      %v369 = vxor.u32 %v333, 2147483648
      %v370 = vxor.u32 %v335, 2147483648
      %v371 = vxor.u32 %v338, 2147483648
      %v372 = vxor.u32 %v340, 2147483648
      %v373 = vxor.u32 %v343, 2147483648
      %v374 = vxor.u32 %v345, 2147483648
      %v375 = vxor.u32 %v348, 2147483648
      %v376 = vxor.u32 %v350, 2147483648
      %v377 = vxor.u32 %v353, 2147483648
      %v378 = vxor.u32 %v355, 2147483648
      %v379 = vxor.u32 %v358, 2147483648
      %v380 = vxor.u32 %v360, 2147483648
      %v381 = vxor.u32 %v363, 2147483648
      %v382 = vxor.u32 %v365, 2147483648
      %v383 = vmul.f32 %v367, 1.442695
      %v384 = vpow.pop %v383
      %v385 = vmul.f32 %v368, 1.442695
      %v386 = vpow.pop %v385
      %v387 = vmul.f32 %v369, 1.442695
      %v388 = vpow.pop %v387
      %v389 = vmul.f32 %v370, 1.442695
      %v390 = vpow.pop %v389
      %v391 = vmul.f32 %v371, 1.442695
      %v392 = vpow.pop %v391
      %v393 = vmul.f32 %v372, 1.442695
      %v394 = vpow.pop %v393
      %v395 = vmul.f32 %v373, 1.442695
      %v396 = vpow.pop %v395
      %v397 = vmul.f32 %v374, 1.442695
      %v398 = vpow.pop %v397
      %v399 = vmul.f32 %v375, 1.442695
      %v400 = vpow.pop %v399
      %v401 = vmul.f32 %v376, 1.442695
      %v402 = vpow.pop %v401
      %v403 = vmul.f32 %v377, 1.442695
      %v404 = vpow.pop %v403
      %v405 = vmul.f32 %v378, 1.442695
      %v406 = vpow.pop %v405
      %v407 = vmul.f32 %v379, 1.442695
      %v408 = vpow.pop %v407
      %v409 = vmul.f32 %v380, 1.442695
      %v410 = vpow.pop %v409
      %v411 = vmul.f32 %v381, 1.442695
      %v412 = vpow.pop %v411
      %v413 = vmul.f32 %v382, 1.442695
      %v414 = vpow.pop %v413
      %v415 = vadd.f32 %v384, 1.0
      %v416 = vadd.f32 %v386, 1.0
      %v417 = vadd.f32 %v388, 1.0
      %v418 = vadd.f32 %v390, 1.0
      %v419 = vadd.f32 %v392, 1.0
      %v420 = vadd.f32 %v394, 1.0
      %v421 = vadd.f32 %v396, 1.0
      %v422 = vadd.f32 %v398, 1.0
      %v423 = vadd.f32 %v400, 1.0
      %v424 = vadd.f32 %v402, 1.0
      %v425 = vadd.f32 %v404, 1.0
      %v426 = vadd.f32 %v406, 1.0
      %v427 = vadd.f32 %v408, 1.0
      %v428 = vadd.f32 %v410, 1.0
      %v429 = vadd.f32 %v412, 1.0
      %v430 = vadd.f32 %v414, 1.0
      %v431 = vrcp.pop %v415
      %v432 = vmul.f32 %v415, %v431
      %v433 = vsub.f32 1.0, %v432
      %v434 = vmul.f32 %v431, %v433
      %v435 = vadd.f32 %v431, %v434
      %vm436 = vweird.f32 %v415
      %vm437 = vweird.f32 %v431
      %vm438 = vmor %vm436, %vm437
      %v439 = vsel %vm438, %v431, %v435
      %v440 = vand.u32 2147483647, %v415
      %vm441 = vcmp.eq.f32.partialorder %v440, 8.507059e+37
      %v442 = vand.u32 %v415, 2147483648
      %v443 = vor.u32 1.1754944e-38, %v442
      %v444 = vsel %vm441, %v443, %v439
      %v445 = vmul.f32 1.0, %v444
      %v446 = vrcp.pop %v416
      %v447 = vmul.f32 %v416, %v446
      %v448 = vsub.f32 1.0, %v447
      %v449 = vmul.f32 %v446, %v448
      %v450 = vadd.f32 %v446, %v449
      %vm451 = vweird.f32 %v416
      %vm452 = vweird.f32 %v446
      %vm453 = vmor %vm451, %vm452
      %v454 = vsel %vm453, %v446, %v450
      %v455 = vand.u32 2147483647, %v416
      %vm456 = vcmp.eq.f32.partialorder %v455, 8.507059e+37
      %v457 = vand.u32 %v416, 2147483648
      %v458 = vor.u32 1.1754944e-38, %v457
      %v459 = vsel %vm456, %v458, %v454
      %v460 = vmul.f32 1.0, %v459
      %v461 = vrcp.pop %v417
      %v462 = vmul.f32 %v417, %v461
      %v463 = vsub.f32 1.0, %v462
      %v464 = vmul.f32 %v461, %v463
      %v465 = vadd.f32 %v461, %v464
      %vm466 = vweird.f32 %v417
      %vm467 = vweird.f32 %v461
      %vm468 = vmor %vm466, %vm467
      %v469 = vsel %vm468, %v461, %v465
      %v470 = vand.u32 2147483647, %v417
      %vm471 = vcmp.eq.f32.partialorder %v470, 8.507059e+37
      %v472 = vand.u32 %v417, 2147483648
      %v473 = vor.u32 1.1754944e-38, %v472
      %v474 = vsel %vm471, %v473, %v469
      %v475 = vmul.f32 1.0, %v474
      %v476 = vrcp.pop %v418
      %v477 = vmul.f32 %v418, %v476
      %v478 = vsub.f32 1.0, %v477
      %v479 = vmul.f32 %v476, %v478
      %v480 = vadd.f32 %v476, %v479
      %vm481 = vweird.f32 %v418
      %vm482 = vweird.f32 %v476
      %vm483 = vmor %vm481, %vm482
      %v484 = vsel %vm483, %v476, %v480
      %v485 = vand.u32 2147483647, %v418
      %vm486 = vcmp.eq.f32.partialorder %v485, 8.507059e+37
      %v487 = vand.u32 %v418, 2147483648
      %v488 = vor.u32 1.1754944e-38, %v487
      %v489 = vsel %vm486, %v488, %v484
      %v490 = vmul.f32 1.0, %v489
      %v491 = vrcp.pop %v419
      %v492 = vmul.f32 %v419, %v491
      %v493 = vsub.f32 1.0, %v492
      %v494 = vmul.f32 %v491, %v493
      %v495 = vadd.f32 %v491, %v494
      %vm496 = vweird.f32 %v419
      %vm497 = vweird.f32 %v491
      %vm498 = vmor %vm496, %vm497
      %v499 = vsel %vm498, %v491, %v495
      %v500 = vand.u32 2147483647, %v419
      %vm501 = vcmp.eq.f32.partialorder %v500, 8.507059e+37
      %v502 = vand.u32 %v419, 2147483648
      %v503 = vor.u32 1.1754944e-38, %v502
      %v504 = vsel %vm501, %v503, %v499
      %v505 = vmul.f32 1.0, %v504
      %v506 = vrcp.pop %v420
      %v507 = vmul.f32 %v420, %v506
      %v508 = vsub.f32 1.0, %v507
      %v509 = vmul.f32 %v506, %v508
      %v510 = vadd.f32 %v506, %v509
      %vm511 = vweird.f32 %v420
      %vm512 = vweird.f32 %v506
      %vm513 = vmor %vm511, %vm512
      %v514 = vsel %vm513, %v506, %v510
      %v515 = vand.u32 2147483647, %v420
      %vm516 = vcmp.eq.f32.partialorder %v515, 8.507059e+37
      %v517 = vand.u32 %v420, 2147483648
      %v518 = vor.u32 1.1754944e-38, %v517
      %v519 = vsel %vm516, %v518, %v514
      %v520 = vmul.f32 1.0, %v519
      %v521 = vrcp.pop %v421
      %v522 = vmul.f32 %v421, %v521
      %v523 = vsub.f32 1.0, %v522
      %v524 = vmul.f32 %v521, %v523
      %v525 = vadd.f32 %v521, %v524
      %vm526 = vweird.f32 %v421
      %vm527 = vweird.f32 %v521
      %vm528 = vmor %vm526, %vm527
      %v529 = vsel %vm528, %v521, %v525
      %v530 = vand.u32 2147483647, %v421
      %vm531 = vcmp.eq.f32.partialorder %v530, 8.507059e+37
      %v532 = vand.u32 %v421, 2147483648
      %v533 = vor.u32 1.1754944e-38, %v532
      %v534 = vsel %vm531, %v533, %v529
      %v535 = vmul.f32 1.0, %v534
      %v536 = vrcp.pop %v422
      %v537 = vmul.f32 %v422, %v536
      %v538 = vsub.f32 1.0, %v537
      %v539 = vmul.f32 %v536, %v538
      %v540 = vadd.f32 %v536, %v539
      %vm541 = vweird.f32 %v422
      %vm542 = vweird.f32 %v536
      %vm543 = vmor %vm541, %vm542
      %v544 = vsel %vm543, %v536, %v540
      %v545 = vand.u32 2147483647, %v422
      %vm546 = vcmp.eq.f32.partialorder %v545, 8.507059e+37
      %v547 = vand.u32 %v422, 2147483648
      %v548 = vor.u32 1.1754944e-38, %v547
      %v549 = vsel %vm546, %v548, %v544
      %v550 = vmul.f32 1.0, %v549
      %v551 = vrcp.pop %v423
      %v552 = vmul.f32 %v423, %v551
      %v553 = vsub.f32 1.0, %v552
      %v554 = vmul.f32 %v551, %v553
      %v555 = vadd.f32 %v551, %v554
      %vm556 = vweird.f32 %v423
      %vm557 = vweird.f32 %v551
      %vm558 = vmor %vm556, %vm557
      %v559 = vsel %vm558, %v551, %v555
      %v560 = vand.u32 2147483647, %v423
      %vm561 = vcmp.eq.f32.partialorder %v560, 8.507059e+37
      %v562 = vand.u32 %v423, 2147483648
      %v563 = vor.u32 1.1754944e-38, %v562
      %v564 = vsel %vm561, %v563, %v559
      %v565 = vmul.f32 1.0, %v564
      %v566 = vrcp.pop %v424
      %v567 = vmul.f32 %v424, %v566
      %v568 = vsub.f32 1.0, %v567
      %v569 = vmul.f32 %v566, %v568
      %v570 = vadd.f32 %v566, %v569
      %vm571 = vweird.f32 %v424
      %vm572 = vweird.f32 %v566
      %vm573 = vmor %vm571, %vm572
      %v574 = vsel %vm573, %v566, %v570
      %v575 = vand.u32 2147483647, %v424
      %vm576 = vcmp.eq.f32.partialorder %v575, 8.507059e+37
      %v577 = vand.u32 %v424, 2147483648
      %v578 = vor.u32 1.1754944e-38, %v577
      %v579 = vsel %vm576, %v578, %v574
      %v580 = vmul.f32 1.0, %v579
      %v581 = vrcp.pop %v425
      %v582 = vmul.f32 %v425, %v581
      %v583 = vsub.f32 1.0, %v582
      %v584 = vmul.f32 %v581, %v583
      %v585 = vadd.f32 %v581, %v584
      %vm586 = vweird.f32 %v425
      %vm587 = vweird.f32 %v581
      %vm588 = vmor %vm586, %vm587
      %v589 = vsel %vm588, %v581, %v585
      %v590 = vand.u32 2147483647, %v425
      %vm591 = vcmp.eq.f32.partialorder %v590, 8.507059e+37
      %v592 = vand.u32 %v425, 2147483648
      %v593 = vor.u32 1.1754944e-38, %v592
      %v594 = vsel %vm591, %v593, %v589
      %v595 = vmul.f32 1.0, %v594
      %v596 = vrcp.pop %v426
      %v597 = vmul.f32 %v426, %v596
      %v598 = vsub.f32 1.0, %v597
      %v599 = vmul.f32 %v596, %v598
      %v600 = vadd.f32 %v596, %v599
      %vm601 = vweird.f32 %v426
      %vm602 = vweird.f32 %v596
      %vm603 = vmor %vm601, %vm602
      %v604 = vsel %vm603, %v596, %v600
      %v605 = vand.u32 2147483647, %v426
      %vm606 = vcmp.eq.f32.partialorder %v605, 8.507059e+37
      %v607 = vand.u32 %v426, 2147483648
      %v608 = vor.u32 1.1754944e-38, %v607
      %v609 = vsel %vm606, %v608, %v604
      %v610 = vmul.f32 1.0, %v609
      %v611 = vrcp.pop %v427
      %v612 = vmul.f32 %v427, %v611
      %v613 = vsub.f32 1.0, %v612
      %v614 = vmul.f32 %v611, %v613
      %v615 = vadd.f32 %v611, %v614
      %vm616 = vweird.f32 %v427
      %vm617 = vweird.f32 %v611
      %vm618 = vmor %vm616, %vm617
      %v619 = vsel %vm618, %v611, %v615
      %v620 = vand.u32 2147483647, %v427
      %vm621 = vcmp.eq.f32.partialorder %v620, 8.507059e+37
      %v622 = vand.u32 %v427, 2147483648
      %v623 = vor.u32 1.1754944e-38, %v622
      %v624 = vsel %vm621, %v623, %v619
      %v625 = vmul.f32 1.0, %v624
      %v626 = vrcp.pop %v428
      %v627 = vmul.f32 %v428, %v626
      %v628 = vsub.f32 1.0, %v627
      %v629 = vmul.f32 %v626, %v628
      %v630 = vadd.f32 %v626, %v629
      %vm631 = vweird.f32 %v428
      %vm632 = vweird.f32 %v626
      %vm633 = vmor %vm631, %vm632
      %v634 = vsel %vm633, %v626, %v630
      %v635 = vand.u32 2147483647, %v428
      %vm636 = vcmp.eq.f32.partialorder %v635, 8.507059e+37
      %v637 = vand.u32 %v428, 2147483648
      %v638 = vor.u32 1.1754944e-38, %v637
      %v639 = vsel %vm636, %v638, %v634
      %v640 = vmul.f32 1.0, %v639
      %v641 = vrcp.pop %v429
      %v642 = vmul.f32 %v429, %v641
      %v643 = vsub.f32 1.0, %v642
      %v644 = vmul.f32 %v641, %v643
      %v645 = vadd.f32 %v641, %v644
      %vm646 = vweird.f32 %v429
      %vm647 = vweird.f32 %v641
      %vm648 = vmor %vm646, %vm647
      %v649 = vsel %vm648, %v641, %v645
      %v650 = vand.u32 2147483647, %v429
      %vm651 = vcmp.eq.f32.partialorder %v650, 8.507059e+37
      %v652 = vand.u32 %v429, 2147483648
      %v653 = vor.u32 1.1754944e-38, %v652
      %v654 = vsel %vm651, %v653, %v649
      %v655 = vmul.f32 1.0, %v654
      %v656 = vrcp.pop %v430
      %v657 = vmul.f32 %v430, %v656
      %v658 = vsub.f32 1.0, %v657
      %v659 = vmul.f32 %v656, %v658
      %v660 = vadd.f32 %v656, %v659
      %vm661 = vweird.f32 %v430
      %vm662 = vweird.f32 %v656
      %vm663 = vmor %vm661, %vm662
      %v664 = vsel %vm663, %v656, %v660
      %v665 = vand.u32 2147483647, %v430
      %vm666 = vcmp.eq.f32.partialorder %v665, 8.507059e+37
      %v667 = vand.u32 %v430, 2147483648
      %v668 = vor.u32 1.1754944e-38, %v667
      %v669 = vsel %vm666, %v668, %v664
      %v670 = vmul.f32 1.0, %v669
      %v671 = vmul.f32 %v328, %v445
      %v672 = vmul.f32 %v330, %v460
      %v673 = vmul.f32 %v333, %v475
      %v674 = vmul.f32 %v335, %v490
      %v675 = vmul.f32 %v338, %v505
      %v676 = vmul.f32 %v340, %v520
      %v677 = vmul.f32 %v343, %v535
      %v678 = vmul.f32 %v345, %v550
      %v679 = vmul.f32 %v348, %v565
      %v680 = vmul.f32 %v350, %v580
      %v681 = vmul.f32 %v353, %v595
      %v682 = vmul.f32 %v355, %v610
      %v683 = vmul.f32 %v358, %v625
      %v684 = vmul.f32 %v360, %v640
      %v685 = vmul.f32 %v363, %v655
      %v686 = vmul.f32 %v365, %v670
      %v687 = vpack.c.bf16 %v671, %v671
      %v688 = vpack.c.bf16 %v672, %v672
      %v689 = vpack.c.bf16 %v673, %v673
      %v690 = vpack.c.bf16 %v674, %v674
      %v691 = vpack.c.bf16 %v675, %v675
      %v692 = vpack.c.bf16 %v676, %v676
      %v693 = vpack.c.bf16 %v677, %v677
      %v694 = vpack.c.bf16 %v678, %v678
      %v695 = vpack.c.bf16 %v679, %v679
      %v696 = vpack.c.bf16 %v680, %v680
      %v697 = vpack.c.bf16 %v681, %v681
      %v698 = vpack.c.bf16 %v682, %v682
      %v699 = vpack.c.bf16 %v683, %v683
      %v700 = vpack.c.bf16 %v684, %v684
      %v701 = vpack.c.bf16 %v685, %v685
      %v702 = vpack.c.bf16 %v686, %v686
      %vm703 = vcmask 257024
      %704 = vst.msk [vmem:[%s208] sm:$0xf] %vm703, %v687
      %705 = vst.msk [vmem:[%s208 + $0x4] sm:$0xf] %vm703, %v688
      %706 = vst.msk [vmem:[%s208 + $0x8] sm:$0xf] %vm703, %v689
      %707 = vst.msk [vmem:[%s208 + $0xc] sm:$0xf] %vm703, %v690
      %708 = vst.msk [vmem:[%s208 + $0x10] sm:$0xf] %vm703, %v691
      %709 = vst.msk [vmem:[%s208 + $0x14] sm:$0xf] %vm703, %v692
      %710 = vst.msk [vmem:[%s208 + $0x18] sm:$0xf] %vm703, %v693
      %711 = vst.msk [vmem:[%s208 + $0x1c] sm:$0xf] %vm703, %v694
      %712 = vst.msk [vmem:[%s208 + $0x20] sm:$0xf] %vm703, %v695
      %713 = vst.msk [vmem:[%s208 + $0x24] sm:$0xf] %vm703, %v696
      %714 = vst.msk [vmem:[%s208 + $0x28] sm:$0xf] %vm703, %v697
      %715 = vst.msk [vmem:[%s208 + $0x2c] sm:$0xf] %vm703, %v698
      %716 = vst.msk [vmem:[%s208 + $0x30] sm:$0xf] %vm703, %v699
      %717 = vst.msk [vmem:[%s208 + $0x34] sm:$0xf] %vm703, %v700
      %718 = vst.msk [vmem:[%s208 + $0x38] sm:$0xf] %vm703, %v701
      %719 = vst.msk [vmem:[%s208 + $0x3c] sm:$0xf] %vm703, %v702
      %s720 = smul.u32 16, %s19
      %p721 = scmp.lt.s32.totalorder %s18, 1
      %s722 = scalar_select %p721, %s18, 1
      %p723 = scmp.lt.s32.totalorder %s720, 31
      %s724 = scalar_select %p723, %s720, 31
      %s725 = smul.addr %s722, 32
      %s726 = sadd.s32 %s724, %s725
      %s727 = smul.addr %s726, 4
      %s728 = scalar_lea.vmem %s3, %s727
      // Predicated region
      $region33: #{efficientnet_b1_forward.4} parent=31 // pred_check
        %p729 = pneg %p116
      $region34: #{efficientnet_b1_forward.4} parent=31 // pred_check_branch
        %731 = sbr.rel (%p729) target = $region36
      $region35: #{efficientnet_b1_forward.4} parent=31 // pred_region
        %s732 = smul.u32 16, %s19
      $region36: #{efficientnet_b1_forward.4} parent=31 // pred_fallthru
        _
    $region32: #{efficientnet_b1_forward.4} parent=5 // pred_fallthru
      _
    %p733 = scmp.le.s32.totalorder 2, %s9
    // Predicated region
    $region37: #{efficientnet_b1_forward.4} parent=5 // pred_check
      %p734 = pneg %p733
    $region38: #{efficientnet_b1_forward.4} parent=5 // pred_check_branch
      %736 = sbr.rel (%p734) target = $region40
    $region39: #{efficientnet_b1_forward.4} parent=5 // pred_region
      %s737 = ssub.s32 %s9, 2
      // Predicated region
      $region41: #{efficientnet_b1_forward.4} parent=39 // pred_check
        %p738 = pneg %p122
      $region42: #{efficientnet_b1_forward.4} parent=39 // pred_check_branch
        %740 = sbr.rel (%p738) target = $region44
      $region43: #{efficientnet_b1_forward.4} parent=39 // pred_region
        %s741 = smul.u32 16, %s21
        %p742 = scmp.lt.s32.totalorder %s20, 1
        %s743 = scalar_select %p742, %s20, 1
        %p744 = scmp.lt.s32.totalorder %s741, 31
        %s745 = scalar_select %p744, %s741, 31
        %s746 = smul.addr %s743, 32
        %s747 = sadd.s32 %s745, %s746
        %s748 = smul.addr %s747, 4
        %s749 = scalar_lea.vmem %s3, %s748
      $region44: #{efficientnet_b1_forward.4} parent=39 // pred_fallthru
        _
    $region40: #{efficientnet_b1_forward.4} parent=5 // pred_fallthru
      _
  $region6: #{efficientnet_b1_forward.4} parent=0 // loop_footer
    %s13 = sadd.s32 1, %s9
  $region7: #{efficientnet_b1_forward.4} parent=0 // loop_footer_branch
    %8 = sbr.rel target = $region3
  $region8: #{efficientnet_b1_forward.4} parent=0 // loop_exit
    _

// kernel: efficientnet_b1_forward.6
$region0: #{efficientnet_b1_forward.6}
  #allocation0 [shape = 'u32[]', space=smem, size = 0x4, offset = 0x4, fixed_abs, tag = 'smem constant byte address 0x4 - core index']
  #allocation1 [shape = 'u32[72,128]{1,0:T(1,128)}', space=vmem, size = 0x9000, scoped, tag = 'internal scratch']
  %s0 = inlined_call_operand.vmem [shape: f32[2,512], index: 0, kind: input, shape index: {}]
  %s1 = inlined_call_operand.vmem [shape: f32[512,8], index: 1, kind: input, shape index: {}]
  %s2 = inlined_call_operand.vmem [shape: f32[1,8], index: 2, kind: input, shape index: {}]
  %s3 = inlined_call_operand.vmem [shape: f32[8,32], index: 3, kind: input, shape index: {}]
  %s4 = inlined_call_operand.vmem [shape: f32[1,32], index: 4, kind: input, shape index: {}]
  %s5 = inlined_call_operand.vmem [shape: f32[2,32], index: 5, kind: output, shape index: {}]
  %s6 = sld [smem:[#allocation0]]
  $region30: #{efficientnet_b1_forward.6} parent=0
    _
  %s8 = ssub.s32 1, %s6
  %s9 = scalar_select 0, %s8, %s6
  // Predicated region
  $region2: #{efficientnet_b1_forward.6} parent=0 // pred_check
    _
  $region3: #{efficientnet_b1_forward.6} parent=0 // pred_check_branch
    %11 = sbr.rel (0) target = $region5
  $region4: #{efficientnet_b1_forward.6} parent=0 // pred_region
    _
  $region5: #{efficientnet_b1_forward.6} parent=0 // pred_fallthru
    _
  // Predicated region
  $region6: #{efficientnet_b1_forward.6} parent=0 // pred_check
    _
  $region7: #{efficientnet_b1_forward.6} parent=0 // pred_check_branch
    %13 = sbr.rel (0) target = $region9
  $region8: #{efficientnet_b1_forward.6} parent=0 // pred_region
    _
  $region9: #{efficientnet_b1_forward.6} parent=0 // pred_fallthru
    _
  // Predicated region
  $region10: #{efficientnet_b1_forward.6} parent=0 // pred_check
    _
  $region11: #{efficientnet_b1_forward.6} parent=0 // pred_check_branch
    %15 = sbr.rel (0) target = $region13
  $region12: #{efficientnet_b1_forward.6} parent=0 // pred_region
    _
  $region13: #{efficientnet_b1_forward.6} parent=0 // pred_fallthru
    _
  // Predicated region
  $region14: #{efficientnet_b1_forward.6} parent=0 // pred_check
    _
  $region15: #{efficientnet_b1_forward.6} parent=0 // pred_check_branch
    %17 = sbr.rel (0) target = $region17
  $region16: #{efficientnet_b1_forward.6} parent=0 // pred_region
    _
  $region17: #{efficientnet_b1_forward.6} parent=0 // pred_fallthru
    _
  // Predicated region
  $region18: #{efficientnet_b1_forward.6} parent=0 // pred_check
    _
  $region19: #{efficientnet_b1_forward.6} parent=0 // pred_check_branch
    %19 = sbr.rel (0) target = $region21
  $region20: #{efficientnet_b1_forward.6} parent=0 // pred_region
    _
  $region21: #{efficientnet_b1_forward.6} parent=0 // pred_fallthru
    _
  %v20 = vld [vmem:[%s0] sm:$0xff]
  %v21 = vld [vmem:[%s1] sm:$0xff]
  %v22 = vld [vmem:[%s1 + $0x8] sm:$0xff]
  %v23 = vld [vmem:[%s1 + $0x10] sm:$0xff]
  %v24 = vld [vmem:[%s1 + $0x18] sm:$0xff]
  %v25 = vld [vmem:[%s1 + $0x20] sm:$0xff]
  %v26 = vld [vmem:[%s1 + $0x28] sm:$0xff]
  %v27 = vld [vmem:[%s1 + $0x30] sm:$0xff]
  %v28 = vld [vmem:[%s1 + $0x38] sm:$0xff]
  %v29 = vld [vmem:[%s1 + $0x40] sm:$0xff]
  %v30 = vld [vmem:[%s1 + $0x48] sm:$0xff]
  %v31 = vld [vmem:[%s1 + $0x50] sm:$0xff]
  %v32 = vld [vmem:[%s1 + $0x58] sm:$0xff]
  %v33 = vld [vmem:[%s1 + $0x60] sm:$0xff]
  %v34 = vld [vmem:[%s1 + $0x68] sm:$0xff]
  %v35 = vld [vmem:[%s1 + $0x70] sm:$0xff]
  %v36 = vld [vmem:[%s1 + $0x78] sm:$0xff]
  %v37 = vld [vmem:[%s1 + $0x80] sm:$0xff]
  %v38 = vld [vmem:[%s1 + $0x88] sm:$0xff]
  %v39 = vld [vmem:[%s1 + $0x90] sm:$0xff]
  %v40 = vld [vmem:[%s1 + $0x98] sm:$0xff]
  %v41 = vld [vmem:[%s1 + $0xa0] sm:$0xff]
  %v42 = vld [vmem:[%s1 + $0xa8] sm:$0xff]
  %v43 = vld [vmem:[%s1 + $0xb0] sm:$0xff]
  %v44 = vld [vmem:[%s1 + $0xb8] sm:$0xff]
  %v45 = vld [vmem:[%s1 + $0xc0] sm:$0xff]
  %v46 = vld [vmem:[%s1 + $0xc8] sm:$0xff]
  %v47 = vld [vmem:[%s1 + $0xd0] sm:$0xff]
  %v48 = vld [vmem:[%s1 + $0xd8] sm:$0xff]
  %v49 = vld [vmem:[%s1 + $0xe0] sm:$0xff]
  %v50 = vld [vmem:[%s1 + $0xe8] sm:$0xff]
  %v51 = vld [vmem:[%s1 + $0xf0] sm:$0xff]
  %v52 = vld [vmem:[%s1 + $0xf8] sm:$0xff]
  %v53 = vld [vmem:[%s1 + $0x100] sm:$0xff]
  %v54 = vld [vmem:[%s1 + $0x108] sm:$0xff]
  %v55 = vld [vmem:[%s1 + $0x110] sm:$0xff]
  %v56 = vld [vmem:[%s1 + $0x118] sm:$0xff]
  %v57 = vld [vmem:[%s1 + $0x120] sm:$0xff]
  %v58 = vld [vmem:[%s1 + $0x128] sm:$0xff]
  %v59 = vld [vmem:[%s1 + $0x130] sm:$0xff]
  %v60 = vld [vmem:[%s1 + $0x138] sm:$0xff]
  %v61 = vld [vmem:[%s1 + $0x140] sm:$0xff]
  %v62 = vld [vmem:[%s1 + $0x148] sm:$0xff]
  %v63 = vld [vmem:[%s1 + $0x150] sm:$0xff]
  %v64 = vld [vmem:[%s1 + $0x158] sm:$0xff]
  %v65 = vld [vmem:[%s1 + $0x160] sm:$0xff]
  %v66 = vld [vmem:[%s1 + $0x168] sm:$0xff]
  %v67 = vld [vmem:[%s1 + $0x170] sm:$0xff]
  %v68 = vld [vmem:[%s1 + $0x178] sm:$0xff]
  %v69 = vld [vmem:[%s1 + $0x180] sm:$0xff]
  %v70 = vld [vmem:[%s1 + $0x188] sm:$0xff]
  %v71 = vld [vmem:[%s1 + $0x190] sm:$0xff]
  %v72 = vld [vmem:[%s1 + $0x198] sm:$0xff]
  %v73 = vld [vmem:[%s1 + $0x1a0] sm:$0xff]
  %v74 = vld [vmem:[%s1 + $0x1a8] sm:$0xff]
  %v75 = vld [vmem:[%s1 + $0x1b0] sm:$0xff]
  %v76 = vld [vmem:[%s1 + $0x1b8] sm:$0xff]
  %v77 = vld [vmem:[%s1 + $0x1c0] sm:$0xff]
  %v78 = vld [vmem:[%s1 + $0x1c8] sm:$0xff]
  %v79 = vld [vmem:[%s1 + $0x1d0] sm:$0xff]
  %v80 = vld [vmem:[%s1 + $0x1d8] sm:$0xff]
  %v81 = vld [vmem:[%s1 + $0x1e0] sm:$0xff]
  %v82 = vld [vmem:[%s1 + $0x1e8] sm:$0xff]
  %v83 = vld [vmem:[%s1 + $0x1f0] sm:$0xff]
  %v84 = vld [vmem:[%s1 + $0x1f8] sm:$0xff]
  %86 = vst [vmem:[#allocation1] ss:$4 sm:$0xff] %v20
  %v87 = vld.sshfl [vmem:[#allocation1] sm:$0xff pattern:$0x73625140]
  %v88 = vld.sshfl [vmem:[#allocation1 + $0x8] sm:$0xff pattern:$0x73625140]
  %v89 = vld.sshfl [vmem:[#allocation1 + $0x10] sm:$0xff pattern:$0x73625140]
  %v90 = vld.sshfl [vmem:[#allocation1 + $0x18] sm:$0xff pattern:$0x73625140]
  %95 = vmatpush.msra.mxu0 %v36
  %96 = vmatpush.msra.mxu0 %v35
  %97 = vmatpush.msra.mxu0 %v34
  %98 = vmatpush.msra.mxu0 %v33
  %99 = vmatpush.msra.mxu0 %v32
  %100 = vmatpush.msra.mxu0 %v31
  %101 = vmatpush.msra.mxu0 %v30
  %102 = vmatpush.msra.mxu0 %v29
  %103 = vmatpush.msra.mxu0 %v28
  %104 = vmatpush.msra.mxu0 %v27
  %105 = vmatpush.msra.mxu0 %v26
  %106 = vmatpush.msra.mxu0 %v25
  %107 = vmatpush.msra.mxu0 %v24
  %108 = vmatpush.msra.mxu0 %v23
  %109 = vmatpush.msra.mxu0 %v22
  %110 = vmatpush.msra.mxu0 %v21
  %111 = vmatmul.f32.gmra.mxu0 %v87
  %v112 = vpop.f32.mrf.mxu0
  %v113 = vadd.f32 0.0, %v112
  %114 = vdwg.mxu0
  %115 = vmatpush.msra.mxu0 %v52
  %116 = vmatpush.msra.mxu0 %v51
  %117 = vmatpush.msra.mxu0 %v50
  %118 = vmatpush.msra.mxu0 %v49
  %119 = vmatpush.msra.mxu0 %v48
  %120 = vmatpush.msra.mxu0 %v47
  %121 = vmatpush.msra.mxu0 %v46
  %122 = vmatpush.msra.mxu0 %v45
  %123 = vmatpush.msra.mxu0 %v44
  %124 = vmatpush.msra.mxu0 %v43
  %125 = vmatpush.msra.mxu0 %v42
  %126 = vmatpush.msra.mxu0 %v41
  %127 = vmatpush.msra.mxu0 %v40
  %128 = vmatpush.msra.mxu0 %v39
  %129 = vmatpush.msra.mxu0 %v38
  %130 = vmatpush.msra.mxu0 %v37
  %131 = vmatmul.f32.gmra.mxu0 %v88
  %v132 = vpop.f32.mrf.mxu0
  %v133 = vadd.f32 %v113, %v132
  %134 = vdwg.mxu0
  %135 = vmatpush.msra.mxu0 %v68
  %136 = vmatpush.msra.mxu0 %v67
  %137 = vmatpush.msra.mxu0 %v66
  %138 = vmatpush.msra.mxu0 %v65
  %139 = vmatpush.msra.mxu0 %v64
  %140 = vmatpush.msra.mxu0 %v63
  %141 = vmatpush.msra.mxu0 %v62
  %142 = vmatpush.msra.mxu0 %v61
  %143 = vmatpush.msra.mxu0 %v60
  %144 = vmatpush.msra.mxu0 %v59
  %145 = vmatpush.msra.mxu0 %v58
  %146 = vmatpush.msra.mxu0 %v57
  %147 = vmatpush.msra.mxu0 %v56
  %148 = vmatpush.msra.mxu0 %v55
  %149 = vmatpush.msra.mxu0 %v54
  %150 = vmatpush.msra.mxu0 %v53
  %151 = vmatmul.f32.gmra.mxu0 %v89
  %v152 = vpop.f32.mrf.mxu0
  %v153 = vadd.f32 %v133, %v152
  %154 = vdwg.mxu0
  %155 = vmatpush.msra.mxu0 %v84
  %156 = vmatpush.msra.mxu0 %v83
  %157 = vmatpush.msra.mxu0 %v82
  %158 = vmatpush.msra.mxu0 %v81
  %159 = vmatpush.msra.mxu0 %v80
  %160 = vmatpush.msra.mxu0 %v79
  %161 = vmatpush.msra.mxu0 %v78
  %162 = vmatpush.msra.mxu0 %v77
  %163 = vmatpush.msra.mxu0 %v76
  %164 = vmatpush.msra.mxu0 %v75
  %165 = vmatpush.msra.mxu0 %v74
  %166 = vmatpush.msra.mxu0 %v73
  %167 = vmatpush.msra.mxu0 %v72
  %168 = vmatpush.msra.mxu0 %v71
  %169 = vmatpush.msra.mxu0 %v70
  %170 = vmatpush.msra.mxu0 %v69
  %171 = vmatmul.f32.gmra.mxu0 %v90
  %v172 = vpop.f32.mrf.mxu0
  %v173 = vadd.f32 %v153, %v172
  %174 = vdwg.mxu0
  %v175 = vmul.f32 %v173, 0.00390625
  %v176 = vld [vmem:[%s2] sm:$0x1]
  %v178 = vperm.slane %v176, 0
  %v180 = vadd.f32 %v175, %v178
  %v181 = vxor.u32 %v180, 2147483648
  %v182 = vmul.f32 %v181, 1.442695
  %v183 = vpow.pop %v182
  %v184 = vadd.f32 %v183, 1.0
  %v185 = vrcp.pop %v184
  %v186 = vmul.f32 %v184, %v185
  %v187 = vsub.f32 1.0, %v186
  %v188 = vmul.f32 %v185, %v187
  %v189 = vadd.f32 %v185, %v188
  %vm190 = vweird.f32 %v184
  %vm191 = vweird.f32 %v185
  %vm192 = vmor %vm190, %vm191
  %v193 = vsel %vm192, %v185, %v189
  %v194 = vand.u32 2147483647, %v184
  %vm195 = vcmp.eq.f32.partialorder %v194, 8.507059e+37
  %v196 = vand.u32 %v184, 2147483648
  %v197 = vor.u32 1.1754944e-38, %v196
  %v198 = vsel %vm195, %v197, %v193
  %v199 = vmul.f32 1.0, %v198
  %v200 = vmul.f32 %v180, %v199
  %v201 = vld [vmem:[%s3] sm:$0xff]
  %v202 = vld [vmem:[%s4] sm:$0x1]
  %v204 = vperm.slane %v202, 0
  %vm206 = vcmask 64512
  %v208 = vsel %vm206, %v200, 0
  %210 = vmatpush.msra.mxu0 0.0
  %211 = vmatpush.msra.mxu0 0.0
  %212 = vmatpush.msra.mxu0 0.0
  %213 = vmatpush.msra.mxu0 0.0
  %214 = vmatpush.msra.mxu0 0.0
  %215 = vmatpush.msra.mxu0 0.0
  %216 = vmatpush.msra.mxu0 0.0
  %217 = vmatpush.msra.mxu0 0.0
  %218 = vmatpush.msra.mxu0 0.0
  %219 = vmatpush.msra.mxu0 0.0
  %220 = vmatpush.msra.mxu0 0.0
  %221 = vmatpush.msra.mxu0 0.0
  %222 = vmatpush.msra.mxu0 0.0
  %223 = vmatpush.msra.mxu0 0.0
  %224 = vmatpush.msra.mxu0 0.0
  %225 = vmatpush.msra.mxu0 %v201
  %226 = vmatmul.f32.gmra.mxu0 %v208
  %v227 = vpop.f32.mrf.mxu0
  %v228 = vadd.f32 %v204, %v227
  %229 = vdwg.mxu0
  %v230 = vxor.u32 %v228, 2147483648
  %v231 = vmul.f32 %v230, 1.442695
  %v232 = vpow.pop %v231
  %v233 = vadd.f32 %v232, 1.0
  %v234 = vrcp.pop %v233
  %v235 = vmul.f32 %v233, %v234
  %v236 = vsub.f32 1.0, %v235
  %v237 = vmul.f32 %v234, %v236
  %v238 = vadd.f32 %v234, %v237
  %vm239 = vweird.f32 %v233
  %vm240 = vweird.f32 %v234
  %vm241 = vmor %vm239, %vm240
  %v242 = vsel %vm241, %v234, %v238
  %v243 = vand.u32 2147483647, %v233
  %vm244 = vcmp.eq.f32.partialorder %v243, 8.507059e+37
  %v245 = vand.u32 %v233, 2147483648
  %v246 = vor.u32 1.1754944e-38, %v245
  %v247 = vsel %vm244, %v246, %v242
  %v248 = vmul.f32 1.0, %v247
  %vm249 = vcmask 254976
  %250 = vst.msk [vmem:[%s5] sm:$0x3] %vm249, %v248
  // Predicated region
  $region22: #{efficientnet_b1_forward.6} parent=0 // pred_check
    _
  $region23: #{efficientnet_b1_forward.6} parent=0 // pred_check_branch
    %252 = sbr.rel (0) target = $region25
  $region24: #{efficientnet_b1_forward.6} parent=0 // pred_region
    _
  $region25: #{efficientnet_b1_forward.6} parent=0 // pred_fallthru
    _
  // Predicated region
  $region26: #{efficientnet_b1_forward.6} parent=0 // pred_check
    _
  $region27: #{efficientnet_b1_forward.6} parent=0 // pred_check_branch
    %254 = sbr.rel (0) target = $region29
  $region28: #{efficientnet_b1_forward.6} parent=0 // pred_region
    _
  $region29: #{efficientnet_b1_forward.6} parent=0 // pred_fallthru
    _

// kernel: efficientnet_b1_forward.7
$region0: #{efficientnet_b1_forward.7}
  #allocation0 [shape = 'u32[]', space=smem, size = 0x4, offset = 0x4, fixed_abs, tag = 'smem constant byte address 0x4 - core index']
  #allocation1 [shape = 'u32[72,128]{1,0:T(1,128)}', space=vmem, size = 0x9000, scoped, tag = 'internal scratch']
  #allocation2 [shape = 'bf16[32,1280]{1,0:T(8,128)(2,1)}', space=vmem, size = 0x14000, scoped, tag = 'scratch operand']
  #allocation3 [shape = 'f32[1,1280]{1,0:T(1,128)}', space=vmem, size = 0x1400, scoped, tag = 'scratch operand']
  %s0 = inlined_call_operand.vmem [shape: bf16[2,256,32], index: 0, kind: input, shape index: {}]
  %s1 = inlined_call_operand.vmem [shape: f32[2,32,1], index: 1, kind: input, shape index: {}]
  %s2 = inlined_call_operand.vmem [shape: f32[32,1280], index: 2, kind: input, shape index: {}]
  %s3 = inlined_call_operand.vmem [shape: f32[1,1280], index: 3, kind: input, shape index: {}]
  %s4 = inlined_call_operand.vmem [shape: f32[1280,10], index: 4, kind: input, shape index: {}]
  %s5 = inlined_call_operand.vmem [shape: f32[1,10], index: 5, kind: input, shape index: {}]
  %s6 = inlined_call_operand.hbm [shape: f32[2,1,10], index: 6, kind: output, shape index: {}]
  %s7 = sld [smem:[#allocation0]]
  $region65: #{efficientnet_b1_forward.7} parent=0
    _
  %s9 = ssub.s32 1, %s7
  %s10 = scalar_select 0, %s9, %s7
  $region1: #{efficientnet_b1_forward.7} parent=0
    #allocation4 [shape = 'u8[1024]{0}', space=vmem, size = 0x400, scoped, tag = 'output window, operand 0']
    #allocation5 [shape = 's32[2]{0}', space=sflag, size = 0x8, scoped, tag = 'scoped memory for efficientnet_b1_forward.7']
    %11 = vsyncpa [#allocation5], 0
    %s12 = scalar_lea.sflag [#allocation5], 1
    %13 = vsyncpa %s12, 0
    loop: start=0, step=1, limit=6
    $region2: #{efficientnet_b1_forward.7} parent=1 // loop_pre_header
      _
    $region3: #{efficientnet_b1_forward.7} parent=1 // loop_header
      %s15 = sphi 0, %s19
      %p16 = scmp.ge.s32.totalorder %s15, 6
      %s22 = sphi 0, %s34
      %s23 = sphi 0, %s30
      %s24 = sphi 0, %s22
      %s25 = sphi 0, %s23
      %s26 = sphi 0, %s24
      %s27 = sphi 0, %s25
      %s39 = sphi 0, %s41
      %s42 = sphi 0, %s39
      %s43 = sphi 0, %s42
      %s59 = sphi 0, %s43
      %s65 = sphi 0, %s67
      %s68 = sphi 0, %s65
      %s69 = sphi 0, %s68
      %s85 = sphi 0, %s69
      %s89 = sphi 0, %s89
      %s91 = sphi 0, %s89
      %s92 = sphi 0, %s91
      %s106 = sphi 0, %s92
      %s110 = sphi 0, %s110
      %s112 = sphi 0, %s110
      %s113 = sphi 0, %s112
      %s127 = sphi 0, %s113
      %s131 = sphi 0, %s131
      %s133 = sphi 0, %s131
      %s134 = sphi 0, %s133
      %s148 = sphi 0, %s134
      %s152 = sphi 0, %s152
      %s154 = sphi 0, %s152
      %s155 = sphi 0, %s154
      %s169 = sphi 0, %s155
      %s175 = sphi 0, %s177
      %s178 = sphi 0, %s175
      %s179 = sphi 0, %s178
      %s195 = sphi 0, %s179
    $region4: #{efficientnet_b1_forward.7} parent=1 // loop_header_branch
      %18 = sbr.rel (%p16) target = $region8
    $region5: #{efficientnet_b1_forward.7} parent=1 // loop_body
      %s20 = ssub.s32 %s15, 1
      %s21 = ssub.s32 %s15, 2
      %s28 = sadd.s32 1, %s23
      %p29 = scmp.ge.s32.totalorder %s28, 2
      %s30 = scalar_select %p29, 0, %s28
      %s31 = sadd.s32 1, %s22
      %s32 = scalar_select %p29, %s31, %s22
      %p33 = scmp.ge.s32.totalorder %s32, 2
      %s34 = scalar_select %p33, 0, %s32
      %s35 = ssub.s32 %s22, %s34
      %s36 = ssub.s32 %s23, %s30
      %s37 = sor.u32 %s35, %s36
      %p38 = scmp.eq.s32.totalorder %s37, 0
      %s40 = sadd.s32 %s39, 1
      %s41 = scalar_select %p38, %s39, %s40
      %p44 = pneg %p38
      %p45 = scmp.eq.s32.totalorder %s15, 3
      %p46 = por %p44, %p45
      %p47 = scmp.ne.s32.totalorder %s39, %s42
      %p48 = scmp.eq.s32.totalorder %s15, 0
      %p49 = por %p47, %p48
      %p50 = scmp.ne.s32.totalorder %s39, %s42
      %p51 = scmp.eq.s32.totalorder %s20, 3
      %p52 = por %p50, %p51
      %p53 = scmp.ne.s32.totalorder %s42, %s43
      %p54 = scmp.eq.s32.totalorder %s20, 0
      %p55 = por %p53, %p54
      %p56 = scmp.ne.s32.totalorder %s42, %s43
      %p57 = scmp.eq.s32.totalorder %s21, 3
      %p58 = por %p56, %p57
      %p60 = scmp.ne.s32.totalorder %s43, %s59
      %p61 = scmp.eq.s32.totalorder %s21, 0
      %p62 = por %p60, %p61
      %s63 = ssub.s32 %s22, %s34
      %p64 = scmp.eq.s32.totalorder %s63, 0
      %s66 = sadd.s32 %s65, 1
      %s67 = scalar_select %p64, %s65, %s66
      %p70 = pneg %p64
      %p71 = scmp.eq.s32.totalorder %s15, 3
      %p72 = por %p70, %p71
      %p73 = scmp.ne.s32.totalorder %s65, %s68
      %p74 = scmp.eq.s32.totalorder %s15, 0
      %p75 = por %p73, %p74
      %p76 = scmp.ne.s32.totalorder %s65, %s68
      %p77 = scmp.eq.s32.totalorder %s20, 3
      %p78 = por %p76, %p77
      %p79 = scmp.ne.s32.totalorder %s68, %s69
      %p80 = scmp.eq.s32.totalorder %s20, 0
      %p81 = por %p79, %p80
      %p82 = scmp.ne.s32.totalorder %s68, %s69
      %p83 = scmp.eq.s32.totalorder %s21, 3
      %p84 = por %p82, %p83
      %p86 = scmp.ne.s32.totalorder %s69, %s85
      %p87 = scmp.eq.s32.totalorder %s21, 0
      %p88 = por %p86, %p87
      %s90 = sadd.s32 %s89, 1
      %p93 = scmp.eq.s32.totalorder %s15, 3
      %p94 = scmp.ne.s32.totalorder %s89, %s91
      %p95 = scmp.eq.s32.totalorder %s15, 0
      %p96 = por %p94, %p95
      %p97 = scmp.ne.s32.totalorder %s89, %s91
      %p98 = scmp.eq.s32.totalorder %s20, 3
      %p99 = por %p97, %p98
      %p100 = scmp.ne.s32.totalorder %s91, %s92
      %p101 = scmp.eq.s32.totalorder %s20, 0
      %p102 = por %p100, %p101
      %p103 = scmp.ne.s32.totalorder %s91, %s92
      %p104 = scmp.eq.s32.totalorder %s21, 3
      %p105 = por %p103, %p104
      %p107 = scmp.ne.s32.totalorder %s92, %s106
      %p108 = scmp.eq.s32.totalorder %s21, 0
      %p109 = por %p107, %p108
      %s111 = sadd.s32 %s110, 1
      %p114 = scmp.eq.s32.totalorder %s15, 3
      %p115 = scmp.ne.s32.totalorder %s110, %s112
      %p116 = scmp.eq.s32.totalorder %s15, 0
      %p117 = por %p115, %p116
      %p118 = scmp.ne.s32.totalorder %s110, %s112
      %p119 = scmp.eq.s32.totalorder %s20, 3
      %p120 = por %p118, %p119
      %p121 = scmp.ne.s32.totalorder %s112, %s113
      %p122 = scmp.eq.s32.totalorder %s20, 0
      %p123 = por %p121, %p122
      %p124 = scmp.ne.s32.totalorder %s112, %s113
      %p125 = scmp.eq.s32.totalorder %s21, 3
      %p126 = por %p124, %p125
      %p128 = scmp.ne.s32.totalorder %s113, %s127
      %p129 = scmp.eq.s32.totalorder %s21, 0
      %p130 = por %p128, %p129
      %s132 = sadd.s32 %s131, 1
      %p135 = scmp.eq.s32.totalorder %s15, 3
      %p136 = scmp.ne.s32.totalorder %s131, %s133
      %p137 = scmp.eq.s32.totalorder %s15, 0
      %p138 = por %p136, %p137
      %p139 = scmp.ne.s32.totalorder %s131, %s133
      %p140 = scmp.eq.s32.totalorder %s20, 3
      %p141 = por %p139, %p140
      %p142 = scmp.ne.s32.totalorder %s133, %s134
      %p143 = scmp.eq.s32.totalorder %s20, 0
      %p144 = por %p142, %p143
      %p145 = scmp.ne.s32.totalorder %s133, %s134
      %p146 = scmp.eq.s32.totalorder %s21, 3
      %p147 = por %p145, %p146
      %p149 = scmp.ne.s32.totalorder %s134, %s148
      %p150 = scmp.eq.s32.totalorder %s21, 0
      %p151 = por %p149, %p150
      %s153 = sadd.s32 %s152, 1
      %p156 = scmp.eq.s32.totalorder %s15, 3
      %p157 = scmp.ne.s32.totalorder %s152, %s154
      %p158 = scmp.eq.s32.totalorder %s15, 0
      %p159 = por %p157, %p158
      %p160 = scmp.ne.s32.totalorder %s152, %s154
      %p161 = scmp.eq.s32.totalorder %s20, 3
      %p162 = por %p160, %p161
      %p163 = scmp.ne.s32.totalorder %s154, %s155
      %p164 = scmp.eq.s32.totalorder %s20, 0
      %p165 = por %p163, %p164
      %p166 = scmp.ne.s32.totalorder %s154, %s155
      %p167 = scmp.eq.s32.totalorder %s21, 3
      %p168 = por %p166, %p167
      %p170 = scmp.ne.s32.totalorder %s155, %s169
      %p171 = scmp.eq.s32.totalorder %s21, 0
      %p172 = por %p170, %p171
      %s173 = ssub.s32 %s22, %s34
      %p174 = scmp.eq.s32.totalorder %s173, 0
      %s176 = sadd.s32 %s175, 1
      %s177 = scalar_select %p174, %s175, %s176
      %p180 = pneg %p174
      %p181 = scmp.eq.s32.totalorder %s15, 3
      %p182 = por %p180, %p181
      %p183 = scmp.ne.s32.totalorder %s175, %s178
      %p184 = scmp.eq.s32.totalorder %s15, 0
      %p185 = por %p183, %p184
      %p186 = scmp.ne.s32.totalorder %s175, %s178
      %p187 = scmp.eq.s32.totalorder %s20, 3
      %p188 = por %p186, %p187
      %p189 = scmp.ne.s32.totalorder %s178, %s179
      %p190 = scmp.eq.s32.totalorder %s20, 0
      %p191 = por %p189, %p190
      %p192 = scmp.ne.s32.totalorder %s178, %s179
      %p193 = scmp.eq.s32.totalorder %s21, 3
      %p194 = por %p192, %p193
      %p196 = scmp.ne.s32.totalorder %s179, %s195
      %p197 = scmp.eq.s32.totalorder %s21, 0
      %p198 = por %p196, %p197
      %p199 = scmp.le.s32.totalorder 1, %s15
      %p200 = scmp.lt.s32.totalorder %s15, 5
      %p201 = pnand %p199, %p200
      %p202 = pneg %p201
      // Predicated region
      $region9: #{efficientnet_b1_forward.7} parent=5 // pred_check
        _
      $region10: #{efficientnet_b1_forward.7} parent=5 // pred_check_branch
        %204 = sbr.rel (%p201) target = $region12
      $region11: #{efficientnet_b1_forward.7} parent=5 // pred_region
        %s205 = ssub.s32 %s15, 1
        // Predicated region
        $region13: #{efficientnet_b1_forward.7} parent=11 // pred_check
          %p206 = pneg %p102
        $region14: #{efficientnet_b1_forward.7} parent=11 // pred_check_branch
          %208 = sbr.rel (%p206) target = $region16
        $region15: #{efficientnet_b1_forward.7} parent=11 // pred_region
          _
        $region16: #{efficientnet_b1_forward.7} parent=11 // pred_fallthru
          _
        // Predicated region
        $region17: #{efficientnet_b1_forward.7} parent=11 // pred_check
          %p209 = pneg %p123
        $region18: #{efficientnet_b1_forward.7} parent=11 // pred_check_branch
          %211 = sbr.rel (%p209) target = $region20
        $region19: #{efficientnet_b1_forward.7} parent=11 // pred_region
          _
        $region20: #{efficientnet_b1_forward.7} parent=11 // pred_fallthru
          _
        // Predicated region
        $region21: #{efficientnet_b1_forward.7} parent=11 // pred_check
          %p212 = pneg %p144
        $region22: #{efficientnet_b1_forward.7} parent=11 // pred_check_branch
          %214 = sbr.rel (%p212) target = $region24
        $region23: #{efficientnet_b1_forward.7} parent=11 // pred_region
          _
        $region24: #{efficientnet_b1_forward.7} parent=11 // pred_fallthru
          _
        // Predicated region
        $region25: #{efficientnet_b1_forward.7} parent=11 // pred_check
          %p215 = pneg %p165
        $region26: #{efficientnet_b1_forward.7} parent=11 // pred_check_branch
          %217 = sbr.rel (%p215) target = $region28
        $region27: #{efficientnet_b1_forward.7} parent=11 // pred_region
          _
        $region28: #{efficientnet_b1_forward.7} parent=11 // pred_fallthru
          _
      $region12: #{efficientnet_b1_forward.7} parent=5 // pred_fallthru
        _
      %p218 = scmp.lt.s32.totalorder %s15, 4
      // Predicated region
      $region29: #{efficientnet_b1_forward.7} parent=5 // pred_check
        %p219 = pneg %p218
      $region30: #{efficientnet_b1_forward.7} parent=5 // pred_check_branch
        %221 = sbr.rel (%p219) target = $region32
      $region31: #{efficientnet_b1_forward.7} parent=5 // pred_region
        // Predicated region
        $region33: #{efficientnet_b1_forward.7} parent=31 // pred_check
          %p222 = pneg %p49
        $region34: #{efficientnet_b1_forward.7} parent=31 // pred_check_branch
          %224 = sbr.rel (%p222) target = $region36
        $region35: #{efficientnet_b1_forward.7} parent=31 // pred_region
          %s225 = smul.u32 16, %s23
          %p226 = scmp.lt.s32.totalorder %s22, 1
          %s227 = scalar_select %p226, %s22, 1
          %p228 = scmp.lt.s32.totalorder %s225, 31
          %s229 = scalar_select %p228, %s225, 31
          %s230 = smul.addr %s227, 32
          %s231 = sadd.s32 %s229, %s230
          %s232 = smul.addr %s231, 4
          %s233 = scalar_lea.vmem %s0, %s232
          %s234 = smul.u32 16, %s23
        $region36: #{efficientnet_b1_forward.7} parent=31 // pred_fallthru
          _
        // Predicated region
        $region37: #{efficientnet_b1_forward.7} parent=31 // pred_check
          %p235 = pneg %p75
        $region38: #{efficientnet_b1_forward.7} parent=31 // pred_check_branch
          %237 = sbr.rel (%p235) target = $region40
        $region39: #{efficientnet_b1_forward.7} parent=31 // pred_region
          %p238 = scmp.lt.s32.totalorder %s22, 1
          %s239 = scalar_select %p238, %s22, 1
          %s240 = smul.addr %s239, 4
          %s241 = smul.addr %s240, 8
          %s242 = scalar_lea.vmem %s1, %s241
        $region40: #{efficientnet_b1_forward.7} parent=31 // pred_fallthru
          _
      $region32: #{efficientnet_b1_forward.7} parent=5 // pred_fallthru
        _
      %p243 = scmp.le.s32.totalorder 1, %s15
      %p244 = scmp.lt.s32.totalorder %s15, 5
      %p245 = pnand %p243, %p244
      %p246 = pneg %p245
      // Predicated region
      $region41: #{efficientnet_b1_forward.7} parent=5 // pred_check
        _
      $region42: #{efficientnet_b1_forward.7} parent=5 // pred_check_branch
        %248 = sbr.rel (%p245) target = $region44
      $region43: #{efficientnet_b1_forward.7} parent=5 // pred_region
        %s249 = ssub.s32 %s15, 1
        %s250 = smul.u32 16, %s25
        %p251 = scmp.lt.s32.totalorder %s24, 1
        %s252 = scalar_select %p251, %s24, 1
        %p253 = scmp.lt.s32.totalorder %s250, 31
        %s254 = scalar_select %p253, %s250, 31
        %s255 = smul.addr %s252, 32
        %s256 = sadd.s32 %s254, %s255
        %s257 = smul.addr %s256, 4
        %s258 = scalar_lea.vmem %s0, %s257
        %p259 = pneg %p55
        %p260 = pneg %p52
        %p261 = scmp.lt.s32.totalorder %s24, 1
        %s262 = scalar_select %p261, %s24, 1
        %s263 = smul.addr %s262, 4
        %s264 = smul.addr %s263, 8
        %s265 = scalar_lea.vmem %s1, %s264
        %p266 = pneg %p81
        %p267 = pneg %p78
        %p268 = pneg %p102
        %p269 = pneg %p99
        %p270 = pneg %p123
        %p271 = pneg %p120
        %p272 = pneg %p144
        %p273 = pneg %p141
        %p274 = pneg %p165
        %p275 = pneg %p162
        %p276 = pneg %p191
        %p277 = pneg %p188
        %s278 = sand.u32 %s178, 1
        %s279 = scalar_lea.sflag [#allocation5], %s278
        %s280 = sand.u32 %s178, 1
        %s281 = scalar_lea.vmem [#allocation4], %s280
        %s282 = smul.u32 16, %s25
        %p283 = scmp.lt.s32.totalorder %s24, 1
        %s284 = scalar_select %p283, %s24, 1
        %p285 = scmp.lt.s32.totalorder %s282, 31
        %s286 = scalar_select %p285, %s282, 31
        %s287 = smul.addr %s284, 32
        %s288 = sadd.s32 %s286, %s287
        %s289 = smul.addr %s288, 4
        %s290 = scalar_lea.vmem %s0, %s289
        %s291 = smul.u32 16, %s25
        %p292 = scmp.lt.s32.totalorder %s24, 1
        %s293 = scalar_select %p292, %s24, 1
        %s294 = smul.addr %s293, 4
        %s295 = smul.addr %s294, 8
        %s296 = scalar_lea.vmem %s1, %s295
        %p298 = scmp.eq.s32.totalorder %s25, 0
        // Predicated region
        $region45: #{efficientnet_b1_forward.7} parent=43 // pred_check
          %p299 = pneg %p298
        $region46: #{efficientnet_b1_forward.7} parent=43 // pred_check_branch
          %301 = sbr.rel (%p299) target = $region48
        $region47: #{efficientnet_b1_forward.7} parent=43 // pred_region
          %302 = vst [vmem:[#allocation3] sm:$0xff] 0.0
          %v303 = vlaneseq
          %vm304 = vcmp.ge.s32.totalorder %v303, 0
          %vm305 = vcmp.lt.s32.totalorder %v303, 256
          %vm306 = vmand %vm304, %vm305
          %307 = vst.msk [vmem:[#allocation3 + $0x8] sm:$0x3] %vm306, 0.0
          %v308 = vld [vmem:[%s296] sm:$0xff]
          %v309 = vld [vmem:[%s296 + $0x8] sm:$0xff]
          %v310 = vld [vmem:[%s296 + $0x10] sm:$0xff]
          %v311 = vld [vmem:[%s296 + $0x18] sm:$0xff]
          %v312 = vld [vmem:[%s2] sm:$0xff]
          %v313 = vld [vmem:[%s2 + $0x8] sm:$0xff]
          %v314 = vld [vmem:[%s2 + $0x10] sm:$0xff]
          %v315 = vld [vmem:[%s2 + $0x18] sm:$0xff]
          %v316 = vld [vmem:[%s2 + $0x20] sm:$0xff]
          %v317 = vld [vmem:[%s2 + $0x28] sm:$0xff]
          %v318 = vld [vmem:[%s2 + $0x30] sm:$0xff]
          %v319 = vld [vmem:[%s2 + $0x38] sm:$0xff]
          %v320 = vld [vmem:[%s2 + $0x40] sm:$0xff]
          %v321 = vld [vmem:[%s2 + $0x48] sm:$0xff]
          %v322 = vld [vmem:[%s2 + $0x50] sm:$0xff]
          %v323 = vld [vmem:[%s2 + $0x58] sm:$0xff]
          %v324 = vld [vmem:[%s2 + $0x60] sm:$0xff]
          %v325 = vld [vmem:[%s2 + $0x68] sm:$0xff]
          %v326 = vld [vmem:[%s2 + $0x70] sm:$0xff]
          %v327 = vld [vmem:[%s2 + $0x78] sm:$0xff]
          %v328 = vld [vmem:[%s2 + $0x80] sm:$0xff]
          %v329 = vld [vmem:[%s2 + $0x88] sm:$0xff]
          %v330 = vld [vmem:[%s2 + $0x90] sm:$0xff]
          %v331 = vld [vmem:[%s2 + $0x98] sm:$0xff]
          %v332 = vld [vmem:[%s2 + $0xa0] sm:$0xff]
          %v333 = vld [vmem:[%s2 + $0xa8] sm:$0xff]
          %v334 = vld [vmem:[%s2 + $0xb0] sm:$0xff]
          %v335 = vld [vmem:[%s2 + $0xb8] sm:$0xff]
          %v336 = vld [vmem:[%s2 + $0xc0] sm:$0xff]
          %v337 = vld [vmem:[%s2 + $0xc8] sm:$0xff]
          %v338 = vld [vmem:[%s2 + $0xd0] sm:$0xff]
          %v339 = vld [vmem:[%s2 + $0xd8] sm:$0xff]
          %v340 = vld [vmem:[%s2 + $0xe0] sm:$0xff]
          %v341 = vld [vmem:[%s2 + $0xe8] sm:$0xff]
          %v342 = vld [vmem:[%s2 + $0xf0] sm:$0xff]
          %v343 = vld [vmem:[%s2 + $0xf8] sm:$0xff]
          %v344 = vld [vmem:[%s2 + $0x100] sm:$0xff]
          %v345 = vld [vmem:[%s2 + $0x108] sm:$0xff]
          %v346 = vld [vmem:[%s2 + $0x110] sm:$0xff]
          %v347 = vld [vmem:[%s2 + $0x118] sm:$0xff]
          %v348 = vld [vmem:[%s2 + $0x120] sm:$0xff]
          %v349 = vld [vmem:[%s2 + $0x128] sm:$0xff]
          %v350 = vld [vmem:[%s2 + $0x130] sm:$0xff]
          %v351 = vld [vmem:[%s2 + $0x138] sm:$0xff]
          %353 = vset.pattern.permute.xlu0 0
          %354 = vperm.xlu0 %353, %v308
          %v355 = vpop.permute.xlu0 %354
          %358 = vset.pattern.permute.xlu0 0
          %359 = vperm.xlu0 %358, %v309
          %v360 = vpop.permute.xlu0 %359
          %363 = vset.pattern.permute.xlu0 0
          %364 = vperm.xlu0 %363, %v310
          %v365 = vpop.permute.xlu0 %364
          %368 = vset.pattern.permute.xlu0 0
          %369 = vperm.xlu0 %368, %v311
          %v370 = vpop.permute.xlu0 %369
          %v372 = vmul.f32 %v355, %v312
          %v373 = vmul.f32 %v355, %v313
          %v374 = vmul.f32 %v355, %v314
          %v375 = vmul.f32 %v355, %v315
          %v376 = vmul.f32 %v355, %v316
          %v377 = vmul.f32 %v355, %v317
          %v378 = vmul.f32 %v355, %v318
          %v379 = vmul.f32 %v355, %v319
          %v380 = vmul.f32 %v355, %v320
          %v381 = vmul.f32 %v355, %v321
          %v382 = vmul.f32 %v360, %v322
          %v383 = vmul.f32 %v360, %v323
          %v384 = vmul.f32 %v360, %v324
          %v385 = vmul.f32 %v360, %v325
          %v386 = vmul.f32 %v360, %v326
          %v387 = vmul.f32 %v360, %v327
          %v388 = vmul.f32 %v360, %v328
          %v389 = vmul.f32 %v360, %v329
          %v390 = vmul.f32 %v360, %v330
          %v391 = vmul.f32 %v360, %v331
          %v392 = vmul.f32 %v365, %v332
          %v393 = vmul.f32 %v365, %v333
          %v394 = vmul.f32 %v365, %v334
          %v395 = vmul.f32 %v365, %v335
          %v396 = vmul.f32 %v365, %v336
          %v397 = vmul.f32 %v365, %v337
          %v398 = vmul.f32 %v365, %v338
          %v399 = vmul.f32 %v365, %v339
          %v400 = vmul.f32 %v365, %v340
          %v401 = vmul.f32 %v365, %v341
          %v402 = vmul.f32 %v370, %v342
          %v403 = vmul.f32 %v370, %v343
          %v404 = vmul.f32 %v370, %v344
          %v405 = vmul.f32 %v370, %v345
          %v406 = vmul.f32 %v370, %v346
          %v407 = vmul.f32 %v370, %v347
          %v408 = vmul.f32 %v370, %v348
          %v409 = vmul.f32 %v370, %v349
          %v410 = vmul.f32 %v370, %v350
          %v411 = vmul.f32 %v370, %v351
          %v412 = vpack.c.bf16 %v373, %v372
          %v413 = vpack.c.bf16 %v375, %v374
          %v414 = vpack.c.bf16 %v377, %v376
          %v415 = vpack.c.bf16 %v379, %v378
          %v416 = vpack.c.bf16 %v381, %v380
          %v417 = vpack.c.bf16 %v383, %v382
          %v418 = vpack.c.bf16 %v385, %v384
          %v419 = vpack.c.bf16 %v387, %v386
          %v420 = vpack.c.bf16 %v389, %v388
          %v421 = vpack.c.bf16 %v391, %v390
          %v422 = vpack.c.bf16 %v393, %v392
          %v423 = vpack.c.bf16 %v395, %v394
          %v424 = vpack.c.bf16 %v397, %v396
          %v425 = vpack.c.bf16 %v399, %v398
          %v426 = vpack.c.bf16 %v401, %v400
          %v427 = vpack.c.bf16 %v403, %v402
          %v428 = vpack.c.bf16 %v405, %v404
          %v429 = vpack.c.bf16 %v407, %v406
          %v430 = vpack.c.bf16 %v409, %v408
          %v431 = vpack.c.bf16 %v411, %v410
          %432 = vst [vmem:[#allocation2] sm:$0xff] %v412
          %433 = vst [vmem:[#allocation2 + $0x8] sm:$0xff] %v413
          %434 = vst [vmem:[#allocation2 + $0x10] sm:$0xff] %v414
          %435 = vst [vmem:[#allocation2 + $0x18] sm:$0xff] %v415
          %436 = vst [vmem:[#allocation2 + $0x20] sm:$0xff] %v416
          %437 = vst [vmem:[#allocation2 + $0x28] sm:$0xff] %v417
          %438 = vst [vmem:[#allocation2 + $0x30] sm:$0xff] %v418
          %439 = vst [vmem:[#allocation2 + $0x38] sm:$0xff] %v419
          %440 = vst [vmem:[#allocation2 + $0x40] sm:$0xff] %v420
          %441 = vst [vmem:[#allocation2 + $0x48] sm:$0xff] %v421
          %442 = vst [vmem:[#allocation2 + $0x50] sm:$0xff] %v422
          %443 = vst [vmem:[#allocation2 + $0x58] sm:$0xff] %v423
          %444 = vst [vmem:[#allocation2 + $0x60] sm:$0xff] %v424
          %445 = vst [vmem:[#allocation2 + $0x68] sm:$0xff] %v425
          %446 = vst [vmem:[#allocation2 + $0x70] sm:$0xff] %v426
          %447 = vst [vmem:[#allocation2 + $0x78] sm:$0xff] %v427
          %448 = vst [vmem:[#allocation2 + $0x80] sm:$0xff] %v428
          %449 = vst [vmem:[#allocation2 + $0x88] sm:$0xff] %v429
          %450 = vst [vmem:[#allocation2 + $0x90] sm:$0xff] %v430
          %451 = vst [vmem:[#allocation2 + $0x98] sm:$0xff] %v431
        $region48: #{efficientnet_b1_forward.7} parent=43 // pred_fallthru
          _
        %v452 = vld [vmem:[%s290] sm:$0xf]
        %v453 = vld [vmem:[%s290 + $0x4] sm:$0xf]
        %v454 = vld [vmem:[%s290 + $0x8] sm:$0xf]
        %v455 = vld [vmem:[%s290 + $0xc] sm:$0xf]
        %v456 = vld [vmem:[%s290 + $0x10] sm:$0xf]
        %v457 = vld [vmem:[%s290 + $0x14] sm:$0xf]
        %v458 = vld [vmem:[%s290 + $0x18] sm:$0xf]
        %v459 = vld [vmem:[%s290 + $0x1c] sm:$0xf]
        %v460 = vld [vmem:[%s290 + $0x20] sm:$0xf]
        %v461 = vld [vmem:[%s290 + $0x24] sm:$0xf]
        %v462 = vld [vmem:[%s290 + $0x28] sm:$0xf]
        %v463 = vld [vmem:[%s290 + $0x2c] sm:$0xf]
        %v464 = vld [vmem:[%s290 + $0x30] sm:$0xf]
        %v465 = vld [vmem:[%s290 + $0x34] sm:$0xf]
        %v466 = vld [vmem:[%s290 + $0x38] sm:$0xf]
        %v467 = vld [vmem:[%s290 + $0x3c] sm:$0xf]
        %v468 = vld [vmem:[#allocation2] sm:$0xff]
        %v469 = vld [vmem:[#allocation2 + $0x8] sm:$0xff]
        %v470 = vld [vmem:[#allocation2 + $0x10] sm:$0xff]
        %v471 = vld [vmem:[#allocation2 + $0x18] sm:$0xff]
        %v472 = vld [vmem:[#allocation2 + $0x20] sm:$0xff]
        %v473 = vld [vmem:[#allocation2 + $0x28] sm:$0xff]
        %v474 = vld [vmem:[#allocation2 + $0x30] sm:$0xff]
        %v475 = vld [vmem:[#allocation2 + $0x38] sm:$0xff]
        %v476 = vld [vmem:[#allocation2 + $0x40] sm:$0xff]
        %v477 = vld [vmem:[#allocation2 + $0x48] sm:$0xff]
        %v478 = vld [vmem:[#allocation2 + $0x50] sm:$0xff]
        %v479 = vld [vmem:[#allocation2 + $0x58] sm:$0xff]
        %v480 = vld [vmem:[#allocation2 + $0x60] sm:$0xff]
        %v481 = vld [vmem:[#allocation2 + $0x68] sm:$0xff]
        %v482 = vld [vmem:[#allocation2 + $0x70] sm:$0xff]
        %v483 = vld [vmem:[#allocation2 + $0x78] sm:$0xff]
        %v484 = vld [vmem:[#allocation2 + $0x80] sm:$0xff]
        %v485 = vld [vmem:[#allocation2 + $0x88] sm:$0xff]
        %v486 = vld [vmem:[#allocation2 + $0x90] sm:$0xff]
        %v487 = vld [vmem:[#allocation2 + $0x98] sm:$0xff]
        %v488 = vld [vmem:[%s3] sm:$0xff]
        %v489 = vld [vmem:[%s3 + $0x8] sm:$0x3]
        %v492 = vperm.slane %v488, 0
        %v493 = vperm.slane %v488, 1
        %v494 = vperm.slane %v488, 2
        %v495 = vperm.slane %v488, 3
        %v496 = vperm.slane %v488, 4
        %v497 = vperm.slane %v488, 5
        %v498 = vperm.slane %v488, 6
        %v499 = vperm.slane %v488, 7
        %v500 = vperm.slane %v489, 0
        %v501 = vperm.slane %v489, 1
        %v528 = vunpack.c.l.b16 %v452
        %v529 = vunpack.c.l.b16 %v453
        %v530 = vunpack.c.l.b16 %v454
        %v531 = vunpack.c.l.b16 %v455
        %v532 = vunpack.c.l.b16 %v456
        %v533 = vunpack.c.l.b16 %v457
        %v534 = vunpack.c.l.b16 %v458
        %v535 = vunpack.c.l.b16 %v459
        %v536 = vunpack.c.l.b16 %v460
        %v537 = vunpack.c.l.b16 %v461
        %v538 = vunpack.c.l.b16 %v462
        %v539 = vunpack.c.l.b16 %v463
        %v540 = vunpack.c.l.b16 %v464
        %v541 = vunpack.c.l.b16 %v465
        %v542 = vunpack.c.l.b16 %v466
        %v543 = vunpack.c.l.b16 %v467
        %v544 = vpack.c.b16 %v529, %v528
        %v545 = vpack.c.b16 %v531, %v530
        %v546 = vpack.c.b16 %v533, %v532
        %v547 = vpack.c.b16 %v535, %v534
        %v548 = vpack.c.b16 %v537, %v536
        %v549 = vpack.c.b16 %v539, %v538
        %v550 = vpack.c.b16 %v541, %v540
        %v551 = vpack.c.b16 %v543, %v542
        %v572 = vunpack.c.l.b16 %v468
        %v573 = vunpack.c.h.b16 %v468
        %v574 = vunpack.c.l.b16 %v469
        %v575 = vunpack.c.h.b16 %v469
        %v576 = vunpack.c.l.b16 %v470
        %v577 = vunpack.c.h.b16 %v470
        %v578 = vunpack.c.l.b16 %v471
        %v579 = vunpack.c.h.b16 %v471
        %v580 = vunpack.c.l.b16 %v472
        %v581 = vunpack.c.h.b16 %v472
        %v582 = vunpack.c.l.b16 %v473
        %v583 = vunpack.c.h.b16 %v473
        %v584 = vunpack.c.l.b16 %v474
        %v585 = vunpack.c.h.b16 %v474
        %v586 = vunpack.c.l.b16 %v475
        %v587 = vunpack.c.h.b16 %v475
        %v588 = vunpack.c.l.b16 %v476
        %v589 = vunpack.c.h.b16 %v476
        %v590 = vunpack.c.l.b16 %v477
        %v591 = vunpack.c.h.b16 %v477
        %v592 = vunpack.c.l.b16 %v478
        %v593 = vunpack.c.h.b16 %v478
        %v594 = vunpack.c.l.b16 %v479
        %v595 = vunpack.c.h.b16 %v479
        %v596 = vunpack.c.l.b16 %v480
        %v597 = vunpack.c.h.b16 %v480
        %v598 = vunpack.c.l.b16 %v481
        %v599 = vunpack.c.h.b16 %v481
        %v600 = vunpack.c.l.b16 %v482
        %v601 = vunpack.c.h.b16 %v482
        %v602 = vunpack.c.l.b16 %v483
        %v603 = vunpack.c.h.b16 %v483
        %v604 = vunpack.c.l.b16 %v484
        %v605 = vunpack.c.h.b16 %v484
        %v606 = vunpack.c.l.b16 %v485
        %v607 = vunpack.c.h.b16 %v485
        %v608 = vunpack.c.l.b16 %v486
        %v609 = vunpack.c.h.b16 %v486
        %v610 = vunpack.c.l.b16 %v487
        %v611 = vunpack.c.h.b16 %v487
        %v612 = vpack.c.b16 %v582, %v572
        %v613 = vpack.c.b16 %v583, %v573
        %v614 = vpack.c.b16 %v584, %v574
        %v615 = vpack.c.b16 %v585, %v575
        %v616 = vpack.c.b16 %v586, %v576
        %v617 = vpack.c.b16 %v587, %v577
        %v618 = vpack.c.b16 %v588, %v578
        %v619 = vpack.c.b16 %v589, %v579
        %v620 = vpack.c.b16 %v590, %v580
        %v621 = vpack.c.b16 %v591, %v581
        %v622 = vpack.c.b16 %v602, %v592
        %v623 = vpack.c.b16 %v603, %v593
        %v624 = vpack.c.b16 %v604, %v594
        %v625 = vpack.c.b16 %v605, %v595
        %v626 = vpack.c.b16 %v606, %v596
        %v627 = vpack.c.b16 %v607, %v597
        %v628 = vpack.c.b16 %v608, %v598
        %v629 = vpack.c.b16 %v609, %v599
        %v630 = vpack.c.b16 %v610, %v600
        %v631 = vpack.c.b16 %v611, %v601
        %vm652 = vcmask 261120
        %v654 = vsel %vm652, %v544, 0
        %v657 = vsel %vm652, %v545, 0
        %v660 = vsel %vm652, %v546, 0
        %v663 = vsel %vm652, %v547, 0
        %v666 = vsel %vm652, %v548, 0
        %v669 = vsel %vm652, %v549, 0
        %v672 = vsel %vm652, %v550, 0
        %v675 = vsel %vm652, %v551, 0
        %677 = vmatpush.bf16.msra.mxu0 0
        %678 = vmatpush.bf16.msra.mxu0 0
        %679 = vmatpush.bf16.msra.mxu0 0
        %680 = vmatpush.bf16.msra.mxu0 0
        %681 = vmatpush.bf16.msra.mxu0 0
        %682 = vmatpush.bf16.msra.mxu0 0
        %683 = vmatpush.bf16.msra.mxu0 %v622
        %684 = vmatpush.bf16.msra.mxu0 %v612
        %685 = vmatmul.bf16.gmra.mxu0 %v654
        %v686 = vpop.f32.mrf.mxu0
        %v687 = vadd.f32 %v492, %v686
        %v688 = vpop.f32.mrf.mxu0
        %v689 = vadd.f32 %v492, %v688
        %690 = vmatmul.bf16.gmra.mxu0 %v657
        %v691 = vpop.f32.mrf.mxu0
        %v692 = vadd.f32 %v492, %v691
        %v693 = vpop.f32.mrf.mxu0
        %v694 = vadd.f32 %v492, %v693
        %695 = vmatmul.bf16.gmra.mxu0 %v660
        %v696 = vpop.f32.mrf.mxu0
        %v697 = vadd.f32 %v492, %v696
        %v698 = vpop.f32.mrf.mxu0
        %v699 = vadd.f32 %v492, %v698
        %700 = vmatmul.bf16.gmra.mxu0 %v663
        %v701 = vpop.f32.mrf.mxu0
        %v702 = vadd.f32 %v492, %v701
        %v703 = vpop.f32.mrf.mxu0
        %v704 = vadd.f32 %v492, %v703
        %705 = vmatmul.bf16.gmra.mxu0 %v666
        %v706 = vpop.f32.mrf.mxu0
        %v707 = vadd.f32 %v492, %v706
        %v708 = vpop.f32.mrf.mxu0
        %v709 = vadd.f32 %v492, %v708
        %710 = vmatmul.bf16.gmra.mxu0 %v669
        %v711 = vpop.f32.mrf.mxu0
        %v712 = vadd.f32 %v492, %v711
        %v713 = vpop.f32.mrf.mxu0
        %v714 = vadd.f32 %v492, %v713
        %715 = vmatmul.bf16.gmra.mxu0 %v672
        %v716 = vpop.f32.mrf.mxu0
        %v717 = vadd.f32 %v492, %v716
        %v718 = vpop.f32.mrf.mxu0
        %v719 = vadd.f32 %v492, %v718
        %720 = vmatmul.bf16.gmra.mxu0 %v675
        %v721 = vpop.f32.mrf.mxu0
        %v722 = vadd.f32 %v492, %v721
        %v723 = vpop.f32.mrf.mxu0
        %v724 = vadd.f32 %v492, %v723
        %725 = vdwg.mxu0
        %726 = vmatpush.bf16.msra.mxu0 0
        %727 = vmatpush.bf16.msra.mxu0 0
        %728 = vmatpush.bf16.msra.mxu0 0
        %729 = vmatpush.bf16.msra.mxu0 0
        %730 = vmatpush.bf16.msra.mxu0 0
        %731 = vmatpush.bf16.msra.mxu0 0
        %732 = vmatpush.bf16.msra.mxu0 %v623
        %733 = vmatpush.bf16.msra.mxu0 %v613
        %734 = vmatmul.bf16.gmra.mxu0 %v654
        %v735 = vpop.f32.mrf.mxu0
        %v736 = vadd.f32 %v493, %v735
        %v737 = vpop.f32.mrf.mxu0
        %v738 = vadd.f32 %v493, %v737
        %739 = vmatmul.bf16.gmra.mxu0 %v657
        %v740 = vpop.f32.mrf.mxu0
        %v741 = vadd.f32 %v493, %v740
        %v742 = vpop.f32.mrf.mxu0
        %v743 = vadd.f32 %v493, %v742
        %744 = vmatmul.bf16.gmra.mxu0 %v660
        %v745 = vpop.f32.mrf.mxu0
        %v746 = vadd.f32 %v493, %v745
        %v747 = vpop.f32.mrf.mxu0
        %v748 = vadd.f32 %v493, %v747
        %749 = vmatmul.bf16.gmra.mxu0 %v663
        %v750 = vpop.f32.mrf.mxu0
        %v751 = vadd.f32 %v493, %v750
        %v752 = vpop.f32.mrf.mxu0
        %v753 = vadd.f32 %v493, %v752
        %754 = vmatmul.bf16.gmra.mxu0 %v666
        %v755 = vpop.f32.mrf.mxu0
        %v756 = vadd.f32 %v493, %v755
        %v757 = vpop.f32.mrf.mxu0
        %v758 = vadd.f32 %v493, %v757
        %759 = vmatmul.bf16.gmra.mxu0 %v669
        %v760 = vpop.f32.mrf.mxu0
        %v761 = vadd.f32 %v493, %v760
        %v762 = vpop.f32.mrf.mxu0
        %v763 = vadd.f32 %v493, %v762
        %764 = vmatmul.bf16.gmra.mxu0 %v672
        %v765 = vpop.f32.mrf.mxu0
        %v766 = vadd.f32 %v493, %v765
        %v767 = vpop.f32.mrf.mxu0
        %v768 = vadd.f32 %v493, %v767
        %769 = vmatmul.bf16.gmra.mxu0 %v675
        %v770 = vpop.f32.mrf.mxu0
        %v771 = vadd.f32 %v493, %v770
        %v772 = vpop.f32.mrf.mxu0
        %v773 = vadd.f32 %v493, %v772
        %774 = vdwg.mxu0
        %775 = vmatpush.bf16.msra.mxu0 0
        %776 = vmatpush.bf16.msra.mxu0 0
        %777 = vmatpush.bf16.msra.mxu0 0
        %778 = vmatpush.bf16.msra.mxu0 0
        %779 = vmatpush.bf16.msra.mxu0 0
        %780 = vmatpush.bf16.msra.mxu0 0
        %781 = vmatpush.bf16.msra.mxu0 %v624
        %782 = vmatpush.bf16.msra.mxu0 %v614
        %783 = vmatmul.bf16.gmra.mxu0 %v654
        %v784 = vpop.f32.mrf.mxu0
        %v785 = vadd.f32 %v494, %v784
        %v786 = vpop.f32.mrf.mxu0
        %v787 = vadd.f32 %v494, %v786
        %788 = vmatmul.bf16.gmra.mxu0 %v657
        %v789 = vpop.f32.mrf.mxu0
        %v790 = vadd.f32 %v494, %v789
        %v791 = vpop.f32.mrf.mxu0
        %v792 = vadd.f32 %v494, %v791
        %793 = vmatmul.bf16.gmra.mxu0 %v660
        %v794 = vpop.f32.mrf.mxu0
        %v795 = vadd.f32 %v494, %v794
        %v796 = vpop.f32.mrf.mxu0
        %v797 = vadd.f32 %v494, %v796
        %798 = vmatmul.bf16.gmra.mxu0 %v663
        %v799 = vpop.f32.mrf.mxu0
        %v800 = vadd.f32 %v494, %v799
        %v801 = vpop.f32.mrf.mxu0
        %v802 = vadd.f32 %v494, %v801
        %803 = vmatmul.bf16.gmra.mxu0 %v666
        %v804 = vpop.f32.mrf.mxu0
        %v805 = vadd.f32 %v494, %v804
        %v806 = vpop.f32.mrf.mxu0
        %v807 = vadd.f32 %v494, %v806
        %808 = vmatmul.bf16.gmra.mxu0 %v669
        %v809 = vpop.f32.mrf.mxu0
        %v810 = vadd.f32 %v494, %v809
        %v811 = vpop.f32.mrf.mxu0
        %v812 = vadd.f32 %v494, %v811
        %813 = vmatmul.bf16.gmra.mxu0 %v672
        %v814 = vpop.f32.mrf.mxu0
        %v815 = vadd.f32 %v494, %v814
        %v816 = vpop.f32.mrf.mxu0
        %v817 = vadd.f32 %v494, %v816
        %818 = vmatmul.bf16.gmra.mxu0 %v675
        %v819 = vpop.f32.mrf.mxu0
        %v820 = vadd.f32 %v494, %v819
        %v821 = vpop.f32.mrf.mxu0
        %v822 = vadd.f32 %v494, %v821
        %823 = vdwg.mxu0
        %824 = vmatpush.bf16.msra.mxu0 0
        %825 = vmatpush.bf16.msra.mxu0 0
        %826 = vmatpush.bf16.msra.mxu0 0
        %827 = vmatpush.bf16.msra.mxu0 0
        %828 = vmatpush.bf16.msra.mxu0 0
        %829 = vmatpush.bf16.msra.mxu0 0
        %830 = vmatpush.bf16.msra.mxu0 %v625
        %831 = vmatpush.bf16.msra.mxu0 %v615
        %832 = vmatmul.bf16.gmra.mxu0 %v654
        %v833 = vpop.f32.mrf.mxu0
        %v834 = vadd.f32 %v495, %v833
        %v835 = vpop.f32.mrf.mxu0
        %v836 = vadd.f32 %v495, %v835
        %837 = vmatmul.bf16.gmra.mxu0 %v657
        %v838 = vpop.f32.mrf.mxu0
        %v839 = vadd.f32 %v495, %v838
        %v840 = vpop.f32.mrf.mxu0
        %v841 = vadd.f32 %v495, %v840
        %842 = vmatmul.bf16.gmra.mxu0 %v660
        %v843 = vpop.f32.mrf.mxu0
        %v844 = vadd.f32 %v495, %v843
        %v845 = vpop.f32.mrf.mxu0
        %v846 = vadd.f32 %v495, %v845
        %847 = vmatmul.bf16.gmra.mxu0 %v663
        %v848 = vpop.f32.mrf.mxu0
        %v849 = vadd.f32 %v495, %v848
        %v850 = vpop.f32.mrf.mxu0
        %v851 = vadd.f32 %v495, %v850
        %852 = vmatmul.bf16.gmra.mxu0 %v666
        %v853 = vpop.f32.mrf.mxu0
        %v854 = vadd.f32 %v495, %v853
        %v855 = vpop.f32.mrf.mxu0
        %v856 = vadd.f32 %v495, %v855
        %857 = vmatmul.bf16.gmra.mxu0 %v669
        %v858 = vpop.f32.mrf.mxu0
        %v859 = vadd.f32 %v495, %v858
        %v860 = vpop.f32.mrf.mxu0
        %v861 = vadd.f32 %v495, %v860
        %862 = vmatmul.bf16.gmra.mxu0 %v672
        %v863 = vpop.f32.mrf.mxu0
        %v864 = vadd.f32 %v495, %v863
        %v865 = vpop.f32.mrf.mxu0
        %v866 = vadd.f32 %v495, %v865
        %867 = vmatmul.bf16.gmra.mxu0 %v675
        %v868 = vpop.f32.mrf.mxu0
        %v869 = vadd.f32 %v495, %v868
        %v870 = vpop.f32.mrf.mxu0
        %v871 = vadd.f32 %v495, %v870
        %872 = vdwg.mxu0
        %873 = vmatpush.bf16.msra.mxu0 0
        %874 = vmatpush.bf16.msra.mxu0 0
        %875 = vmatpush.bf16.msra.mxu0 0
        %876 = vmatpush.bf16.msra.mxu0 0
        %877 = vmatpush.bf16.msra.mxu0 0
        %878 = vmatpush.bf16.msra.mxu0 0
        %879 = vmatpush.bf16.msra.mxu0 %v626
        %880 = vmatpush.bf16.msra.mxu0 %v616
        %881 = vmatmul.bf16.gmra.mxu0 %v654
        %v882 = vpop.f32.mrf.mxu0
        %v883 = vadd.f32 %v496, %v882
        %v884 = vpop.f32.mrf.mxu0
        %v885 = vadd.f32 %v496, %v884
        %886 = vmatmul.bf16.gmra.mxu0 %v657
        %v887 = vpop.f32.mrf.mxu0
        %v888 = vadd.f32 %v496, %v887
        %v889 = vpop.f32.mrf.mxu0
        %v890 = vadd.f32 %v496, %v889
        %891 = vmatmul.bf16.gmra.mxu0 %v660
        %v892 = vpop.f32.mrf.mxu0
        %v893 = vadd.f32 %v496, %v892
        %v894 = vpop.f32.mrf.mxu0
        %v895 = vadd.f32 %v496, %v894
        %896 = vmatmul.bf16.gmra.mxu0 %v663
        %v897 = vpop.f32.mrf.mxu0
        %v898 = vadd.f32 %v496, %v897
        %v899 = vpop.f32.mrf.mxu0
        %v900 = vadd.f32 %v496, %v899
        %901 = vmatmul.bf16.gmra.mxu0 %v666
        %v902 = vpop.f32.mrf.mxu0
        %v903 = vadd.f32 %v496, %v902
        %v904 = vpop.f32.mrf.mxu0
        %v905 = vadd.f32 %v496, %v904
        %906 = vmatmul.bf16.gmra.mxu0 %v669
        %v907 = vpop.f32.mrf.mxu0
        %v908 = vadd.f32 %v496, %v907
        %v909 = vpop.f32.mrf.mxu0
        %v910 = vadd.f32 %v496, %v909
        %911 = vmatmul.bf16.gmra.mxu0 %v672
        %v912 = vpop.f32.mrf.mxu0
        %v913 = vadd.f32 %v496, %v912
        %v914 = vpop.f32.mrf.mxu0
        %v915 = vadd.f32 %v496, %v914
        %916 = vmatmul.bf16.gmra.mxu0 %v675
        %v917 = vpop.f32.mrf.mxu0
        %v918 = vadd.f32 %v496, %v917
        %v919 = vpop.f32.mrf.mxu0
        %v920 = vadd.f32 %v496, %v919
        %921 = vdwg.mxu0
        %922 = vmatpush.bf16.msra.mxu0 0
        %923 = vmatpush.bf16.msra.mxu0 0
        %924 = vmatpush.bf16.msra.mxu0 0
        %925 = vmatpush.bf16.msra.mxu0 0
        %926 = vmatpush.bf16.msra.mxu0 0
        %927 = vmatpush.bf16.msra.mxu0 0
        %928 = vmatpush.bf16.msra.mxu0 %v627
        %929 = vmatpush.bf16.msra.mxu0 %v617
        %930 = vmatmul.bf16.gmra.mxu0 %v654
        %v931 = vpop.f32.mrf.mxu0
        %v932 = vadd.f32 %v497, %v931
        %v933 = vpop.f32.mrf.mxu0
        %v934 = vadd.f32 %v497, %v933
        %935 = vmatmul.bf16.gmra.mxu0 %v657
        %v936 = vpop.f32.mrf.mxu0
        %v937 = vadd.f32 %v497, %v936
        %v938 = vpop.f32.mrf.mxu0
        %v939 = vadd.f32 %v497, %v938
        %940 = vmatmul.bf16.gmra.mxu0 %v660
        %v941 = vpop.f32.mrf.mxu0
        %v942 = vadd.f32 %v497, %v941
        %v943 = vpop.f32.mrf.mxu0
        %v944 = vadd.f32 %v497, %v943
        %945 = vmatmul.bf16.gmra.mxu0 %v663
        %v946 = vpop.f32.mrf.mxu0
        %v947 = vadd.f32 %v497, %v946
        %v948 = vpop.f32.mrf.mxu0
        %v949 = vadd.f32 %v497, %v948
        %950 = vmatmul.bf16.gmra.mxu0 %v666
        %v951 = vpop.f32.mrf.mxu0
        %v952 = vadd.f32 %v497, %v951
        %v953 = vpop.f32.mrf.mxu0
        %v954 = vadd.f32 %v497, %v953
        %955 = vmatmul.bf16.gmra.mxu0 %v669
        %v956 = vpop.f32.mrf.mxu0
        %v957 = vadd.f32 %v497, %v956
        %v958 = vpop.f32.mrf.mxu0
        %v959 = vadd.f32 %v497, %v958
        %960 = vmatmul.bf16.gmra.mxu0 %v672
        %v961 = vpop.f32.mrf.mxu0
        %v962 = vadd.f32 %v497, %v961
        %v963 = vpop.f32.mrf.mxu0
        %v964 = vadd.f32 %v497, %v963
        %965 = vmatmul.bf16.gmra.mxu0 %v675
        %v966 = vpop.f32.mrf.mxu0
        %v967 = vadd.f32 %v497, %v966
        %v968 = vpop.f32.mrf.mxu0
        %v969 = vadd.f32 %v497, %v968
        %970 = vdwg.mxu0
        %971 = vmatpush.bf16.msra.mxu0 0
        %972 = vmatpush.bf16.msra.mxu0 0
        %973 = vmatpush.bf16.msra.mxu0 0
        %974 = vmatpush.bf16.msra.mxu0 0
        %975 = vmatpush.bf16.msra.mxu0 0
        %976 = vmatpush.bf16.msra.mxu0 0
        %977 = vmatpush.bf16.msra.mxu0 %v628
        %978 = vmatpush.bf16.msra.mxu0 %v618
        %979 = vmatmul.bf16.gmra.mxu0 %v654
        %v980 = vpop.f32.mrf.mxu0
        %v981 = vadd.f32 %v498, %v980
        %v982 = vpop.f32.mrf.mxu0
        %v983 = vadd.f32 %v498, %v982
        %984 = vmatmul.bf16.gmra.mxu0 %v657
        %v985 = vpop.f32.mrf.mxu0
        %v986 = vadd.f32 %v498, %v985
        %v987 = vpop.f32.mrf.mxu0
        %v988 = vadd.f32 %v498, %v987
        %989 = vmatmul.bf16.gmra.mxu0 %v660
        %v990 = vpop.f32.mrf.mxu0
        %v991 = vadd.f32 %v498, %v990
        %v992 = vpop.f32.mrf.mxu0
        %v993 = vadd.f32 %v498, %v992
        %994 = vmatmul.bf16.gmra.mxu0 %v663
        %v995 = vpop.f32.mrf.mxu0
        %v996 = vadd.f32 %v498, %v995
        %v997 = vpop.f32.mrf.mxu0
        %v998 = vadd.f32 %v498, %v997
        %999 = vmatmul.bf16.gmra.mxu0 %v666
        %v1000 = vpop.f32.mrf.mxu0
        %v1001 = vadd.f32 %v498, %v1000
        %v1002 = vpop.f32.mrf.mxu0
        %v1003 = vadd.f32 %v498, %v1002
        %1004 = vmatmul.bf16.gmra.mxu0 %v669
        %v1005 = vpop.f32.mrf.mxu0
        %v1006 = vadd.f32 %v498, %v1005
        %v1007 = vpop.f32.mrf.mxu0
        %v1008 = vadd.f32 %v498, %v1007
        %1009 = vmatmul.bf16.gmra.mxu0 %v672
        %v1010 = vpop.f32.mrf.mxu0
        %v1011 = vadd.f32 %v498, %v1010
        %v1012 = vpop.f32.mrf.mxu0
        %v1013 = vadd.f32 %v498, %v1012
        %1014 = vmatmul.bf16.gmra.mxu0 %v675
        %v1015 = vpop.f32.mrf.mxu0
        %v1016 = vadd.f32 %v498, %v1015
        %v1017 = vpop.f32.mrf.mxu0
        %v1018 = vadd.f32 %v498, %v1017
        %1019 = vdwg.mxu0
        %1020 = vmatpush.bf16.msra.mxu0 0
        %1021 = vmatpush.bf16.msra.mxu0 0
        %1022 = vmatpush.bf16.msra.mxu0 0
        %1023 = vmatpush.bf16.msra.mxu0 0
        %1024 = vmatpush.bf16.msra.mxu0 0
        %1025 = vmatpush.bf16.msra.mxu0 0
        %1026 = vmatpush.bf16.msra.mxu0 %v629
        %1027 = vmatpush.bf16.msra.mxu0 %v619
        %1028 = vmatmul.bf16.gmra.mxu0 %v654
        %v1029 = vpop.f32.mrf.mxu0
        %v1030 = vadd.f32 %v499, %v1029
        %v1031 = vpop.f32.mrf.mxu0
        %v1032 = vadd.f32 %v499, %v1031
        %1033 = vmatmul.bf16.gmra.mxu0 %v657
        %v1034 = vpop.f32.mrf.mxu0
        %v1035 = vadd.f32 %v499, %v1034
        %v1036 = vpop.f32.mrf.mxu0
        %v1037 = vadd.f32 %v499, %v1036
        %1038 = vmatmul.bf16.gmra.mxu0 %v660
        %v1039 = vpop.f32.mrf.mxu0
        %v1040 = vadd.f32 %v499, %v1039
        %v1041 = vpop.f32.mrf.mxu0
        %v1042 = vadd.f32 %v499, %v1041
        %1043 = vmatmul.bf16.gmra.mxu0 %v663
        %v1044 = vpop.f32.mrf.mxu0
        %v1045 = vadd.f32 %v499, %v1044
        %v1046 = vpop.f32.mrf.mxu0
        %v1047 = vadd.f32 %v499, %v1046
        %1048 = vmatmul.bf16.gmra.mxu0 %v666
        %v1049 = vpop.f32.mrf.mxu0
        %v1050 = vadd.f32 %v499, %v1049
        %v1051 = vpop.f32.mrf.mxu0
        %v1052 = vadd.f32 %v499, %v1051
        %1053 = vmatmul.bf16.gmra.mxu0 %v669
        %v1054 = vpop.f32.mrf.mxu0
        %v1055 = vadd.f32 %v499, %v1054
        %v1056 = vpop.f32.mrf.mxu0
        %v1057 = vadd.f32 %v499, %v1056
        %1058 = vmatmul.bf16.gmra.mxu0 %v672
        %v1059 = vpop.f32.mrf.mxu0
        %v1060 = vadd.f32 %v499, %v1059
        %v1061 = vpop.f32.mrf.mxu0
        %v1062 = vadd.f32 %v499, %v1061
        %1063 = vmatmul.bf16.gmra.mxu0 %v675
        %v1064 = vpop.f32.mrf.mxu0
        %v1065 = vadd.f32 %v499, %v1064
        %v1066 = vpop.f32.mrf.mxu0
        %v1067 = vadd.f32 %v499, %v1066
        %1068 = vdwg.mxu0
        %1069 = vmatpush.bf16.msra.mxu0 0
        %1070 = vmatpush.bf16.msra.mxu0 0
        %1071 = vmatpush.bf16.msra.mxu0 0
        %1072 = vmatpush.bf16.msra.mxu0 0
        %1073 = vmatpush.bf16.msra.mxu0 0
        %1074 = vmatpush.bf16.msra.mxu0 0
        %1075 = vmatpush.bf16.msra.mxu0 %v630
        %1076 = vmatpush.bf16.msra.mxu0 %v620
        %1077 = vmatmul.bf16.gmra.mxu0 %v654
        %v1078 = vpop.f32.mrf.mxu0
        %v1079 = vadd.f32 %v500, %v1078
        %v1080 = vpop.f32.mrf.mxu0
        %v1081 = vadd.f32 %v500, %v1080
        %1082 = vmatmul.bf16.gmra.mxu0 %v657
        %v1083 = vpop.f32.mrf.mxu0
        %v1084 = vadd.f32 %v500, %v1083
        %v1085 = vpop.f32.mrf.mxu0
        %v1086 = vadd.f32 %v500, %v1085
        %1087 = vmatmul.bf16.gmra.mxu0 %v660
        %v1088 = vpop.f32.mrf.mxu0
        %v1089 = vadd.f32 %v500, %v1088
        %v1090 = vpop.f32.mrf.mxu0
        %v1091 = vadd.f32 %v500, %v1090
        %1092 = vmatmul.bf16.gmra.mxu0 %v663
        %v1093 = vpop.f32.mrf.mxu0
        %v1094 = vadd.f32 %v500, %v1093
        %v1095 = vpop.f32.mrf.mxu0
        %v1096 = vadd.f32 %v500, %v1095
        %1097 = vmatmul.bf16.gmra.mxu0 %v666
        %v1098 = vpop.f32.mrf.mxu0
        %v1099 = vadd.f32 %v500, %v1098
        %v1100 = vpop.f32.mrf.mxu0
        %v1101 = vadd.f32 %v500, %v1100
        %1102 = vmatmul.bf16.gmra.mxu0 %v669
        %v1103 = vpop.f32.mrf.mxu0
        %v1104 = vadd.f32 %v500, %v1103
        %v1105 = vpop.f32.mrf.mxu0
        %v1106 = vadd.f32 %v500, %v1105
        %1107 = vmatmul.bf16.gmra.mxu0 %v672
        %v1108 = vpop.f32.mrf.mxu0
        %v1109 = vadd.f32 %v500, %v1108
        %v1110 = vpop.f32.mrf.mxu0
        %v1111 = vadd.f32 %v500, %v1110
        %1112 = vmatmul.bf16.gmra.mxu0 %v675
        %v1113 = vpop.f32.mrf.mxu0
        %v1114 = vadd.f32 %v500, %v1113
        %v1115 = vpop.f32.mrf.mxu0
        %v1116 = vadd.f32 %v500, %v1115
        %1117 = vdwg.mxu0
        %1118 = vmatpush.bf16.msra.mxu0 0
        %1119 = vmatpush.bf16.msra.mxu0 0
        %1120 = vmatpush.bf16.msra.mxu0 0
        %1121 = vmatpush.bf16.msra.mxu0 0
        %1122 = vmatpush.bf16.msra.mxu0 0
        %1123 = vmatpush.bf16.msra.mxu0 0
        %1124 = vmatpush.bf16.msra.mxu0 %v631
        %1125 = vmatpush.bf16.msra.mxu0 %v621
        %1126 = vmatmul.bf16.gmra.mxu0 %v654
        %v1127 = vpop.f32.mrf.mxu0
        %v1128 = vadd.f32 %v501, %v1127
        %v1129 = vpop.f32.mrf.mxu0
        %v1130 = vadd.f32 %v501, %v1129
        %1131 = vmatmul.bf16.gmra.mxu0 %v657
        %v1132 = vpop.f32.mrf.mxu0
        %v1133 = vadd.f32 %v501, %v1132
        %v1134 = vpop.f32.mrf.mxu0
        %v1135 = vadd.f32 %v501, %v1134
        %1136 = vmatmul.bf16.gmra.mxu0 %v660
        %v1137 = vpop.f32.mrf.mxu0
        %v1138 = vadd.f32 %v501, %v1137
        %v1139 = vpop.f32.mrf.mxu0
        %v1140 = vadd.f32 %v501, %v1139
        %1141 = vmatmul.bf16.gmra.mxu0 %v663
        %v1142 = vpop.f32.mrf.mxu0
        %v1143 = vadd.f32 %v501, %v1142
        %v1144 = vpop.f32.mrf.mxu0
        %v1145 = vadd.f32 %v501, %v1144
        %1146 = vmatmul.bf16.gmra.mxu0 %v666
        %v1147 = vpop.f32.mrf.mxu0
        %v1148 = vadd.f32 %v501, %v1147
        %v1149 = vpop.f32.mrf.mxu0
        %v1150 = vadd.f32 %v501, %v1149
        %1151 = vmatmul.bf16.gmra.mxu0 %v669
        %v1152 = vpop.f32.mrf.mxu0
        %v1153 = vadd.f32 %v501, %v1152
        %v1154 = vpop.f32.mrf.mxu0
        %v1155 = vadd.f32 %v501, %v1154
        %1156 = vmatmul.bf16.gmra.mxu0 %v672
        %v1157 = vpop.f32.mrf.mxu0
        %v1158 = vadd.f32 %v501, %v1157
        %v1159 = vpop.f32.mrf.mxu0
        %v1160 = vadd.f32 %v501, %v1159
        %1161 = vmatmul.bf16.gmra.mxu0 %v675
        %v1162 = vpop.f32.mrf.mxu0
        %v1163 = vadd.f32 %v501, %v1162
        %v1164 = vpop.f32.mrf.mxu0
        %v1165 = vadd.f32 %v501, %v1164
        %1166 = vdwg.mxu0
        %v1167 = vxor.u32 %v687, 2147483648
        %v1168 = vxor.u32 %v736, 2147483648
        %v1169 = vxor.u32 %v785, 2147483648
        %v1170 = vxor.u32 %v834, 2147483648
        %v1171 = vxor.u32 %v883, 2147483648
        %v1172 = vxor.u32 %v932, 2147483648
        %v1173 = vxor.u32 %v981, 2147483648
        %v1174 = vxor.u32 %v1030, 2147483648
        %v1175 = vxor.u32 %v1079, 2147483648
        %v1176 = vxor.u32 %v1128, 2147483648
        %v1177 = vxor.u32 %v689, 2147483648
        %v1178 = vxor.u32 %v738, 2147483648
        %v1179 = vxor.u32 %v787, 2147483648
        %v1180 = vxor.u32 %v836, 2147483648
        %v1181 = vxor.u32 %v885, 2147483648
        %v1182 = vxor.u32 %v934, 2147483648
        %v1183 = vxor.u32 %v983, 2147483648
        %v1184 = vxor.u32 %v1032, 2147483648
        %v1185 = vxor.u32 %v1081, 2147483648
        %v1186 = vxor.u32 %v1130, 2147483648
        %v1187 = vxor.u32 %v692, 2147483648
        %v1188 = vxor.u32 %v741, 2147483648
        %v1189 = vxor.u32 %v790, 2147483648
        %v1190 = vxor.u32 %v839, 2147483648
        %v1191 = vxor.u32 %v888, 2147483648
        %v1192 = vxor.u32 %v937, 2147483648
        %v1193 = vxor.u32 %v986, 2147483648
        %v1194 = vxor.u32 %v1035, 2147483648
        %v1195 = vxor.u32 %v1084, 2147483648
        %v1196 = vxor.u32 %v1133, 2147483648
        %v1197 = vxor.u32 %v694, 2147483648
        %v1198 = vxor.u32 %v743, 2147483648
        %v1199 = vxor.u32 %v792, 2147483648
        %v1200 = vxor.u32 %v841, 2147483648
        %v1201 = vxor.u32 %v890, 2147483648
        %v1202 = vxor.u32 %v939, 2147483648
        %v1203 = vxor.u32 %v988, 2147483648
        %v1204 = vxor.u32 %v1037, 2147483648
        %v1205 = vxor.u32 %v1086, 2147483648
        %v1206 = vxor.u32 %v1135, 2147483648
        %v1207 = vxor.u32 %v697, 2147483648
        %v1208 = vxor.u32 %v746, 2147483648
        %v1209 = vxor.u32 %v795, 2147483648
        %v1210 = vxor.u32 %v844, 2147483648
        %v1211 = vxor.u32 %v893, 2147483648
        %v1212 = vxor.u32 %v942, 2147483648
        %v1213 = vxor.u32 %v991, 2147483648
        %v1214 = vxor.u32 %v1040, 2147483648
        %v1215 = vxor.u32 %v1089, 2147483648
        %v1216 = vxor.u32 %v1138, 2147483648
        %v1217 = vxor.u32 %v699, 2147483648
        %v1218 = vxor.u32 %v748, 2147483648
        %v1219 = vxor.u32 %v797, 2147483648
        %v1220 = vxor.u32 %v846, 2147483648
        %v1221 = vxor.u32 %v895, 2147483648
        %v1222 = vxor.u32 %v944, 2147483648
        %v1223 = vxor.u32 %v993, 2147483648
        %v1224 = vxor.u32 %v1042, 2147483648
        %v1225 = vxor.u32 %v1091, 2147483648
        %v1226 = vxor.u32 %v1140, 2147483648
        %v1227 = vxor.u32 %v702, 2147483648
        %v1228 = vxor.u32 %v751, 2147483648
        %v1229 = vxor.u32 %v800, 2147483648
        %v1230 = vxor.u32 %v849, 2147483648
        %v1231 = vxor.u32 %v898, 2147483648
        %v1232 = vxor.u32 %v947, 2147483648
        %v1233 = vxor.u32 %v996, 2147483648
        %v1234 = vxor.u32 %v1045, 2147483648
        %v1235 = vxor.u32 %v1094, 2147483648
        %v1236 = vxor.u32 %v1143, 2147483648
        %v1237 = vxor.u32 %v704, 2147483648
        %v1238 = vxor.u32 %v753, 2147483648
        %v1239 = vxor.u32 %v802, 2147483648
        %v1240 = vxor.u32 %v851, 2147483648
        %v1241 = vxor.u32 %v900, 2147483648
        %v1242 = vxor.u32 %v949, 2147483648
        %v1243 = vxor.u32 %v998, 2147483648
        %v1244 = vxor.u32 %v1047, 2147483648
        %v1245 = vxor.u32 %v1096, 2147483648
        %v1246 = vxor.u32 %v1145, 2147483648
        %v1247 = vxor.u32 %v707, 2147483648
        %v1248 = vxor.u32 %v756, 2147483648
        %v1249 = vxor.u32 %v805, 2147483648
        %v1250 = vxor.u32 %v854, 2147483648
        %v1251 = vxor.u32 %v903, 2147483648
        %v1252 = vxor.u32 %v952, 2147483648
        %v1253 = vxor.u32 %v1001, 2147483648
        %v1254 = vxor.u32 %v1050, 2147483648
        %v1255 = vxor.u32 %v1099, 2147483648
        %v1256 = vxor.u32 %v1148, 2147483648
        %v1257 = vxor.u32 %v709, 2147483648
        %v1258 = vxor.u32 %v758, 2147483648
        %v1259 = vxor.u32 %v807, 2147483648
        %v1260 = vxor.u32 %v856, 2147483648
        %v1261 = vxor.u32 %v905, 2147483648
        %v1262 = vxor.u32 %v954, 2147483648
        %v1263 = vxor.u32 %v1003, 2147483648
        %v1264 = vxor.u32 %v1052, 2147483648
        %v1265 = vxor.u32 %v1101, 2147483648
        %v1266 = vxor.u32 %v1150, 2147483648
        %v1267 = vxor.u32 %v712, 2147483648
        %v1268 = vxor.u32 %v761, 2147483648
        %v1269 = vxor.u32 %v810, 2147483648
        %v1270 = vxor.u32 %v859, 2147483648
        %v1271 = vxor.u32 %v908, 2147483648
        %v1272 = vxor.u32 %v957, 2147483648
        %v1273 = vxor.u32 %v1006, 2147483648
        %v1274 = vxor.u32 %v1055, 2147483648
        %v1275 = vxor.u32 %v1104, 2147483648
        %v1276 = vxor.u32 %v1153, 2147483648
        %v1277 = vxor.u32 %v714, 2147483648
        %v1278 = vxor.u32 %v763, 2147483648
        %v1279 = vxor.u32 %v812, 2147483648
        %v1280 = vxor.u32 %v861, 2147483648
        %v1281 = vxor.u32 %v910, 2147483648
        %v1282 = vxor.u32 %v959, 2147483648
        %v1283 = vxor.u32 %v1008, 2147483648
        %v1284 = vxor.u32 %v1057, 2147483648
        %v1285 = vxor.u32 %v1106, 2147483648
        %v1286 = vxor.u32 %v1155, 2147483648
        %v1287 = vxor.u32 %v717, 2147483648
        %v1288 = vxor.u32 %v766, 2147483648
        %v1289 = vxor.u32 %v815, 2147483648
        %v1290 = vxor.u32 %v864, 2147483648
        %v1291 = vxor.u32 %v913, 2147483648
        %v1292 = vxor.u32 %v962, 2147483648
        %v1293 = vxor.u32 %v1011, 2147483648
        %v1294 = vxor.u32 %v1060, 2147483648
        %v1295 = vxor.u32 %v1109, 2147483648
        %v1296 = vxor.u32 %v1158, 2147483648
        %v1297 = vxor.u32 %v719, 2147483648
        %v1298 = vxor.u32 %v768, 2147483648
        %v1299 = vxor.u32 %v817, 2147483648
        %v1300 = vxor.u32 %v866, 2147483648
        %v1301 = vxor.u32 %v915, 2147483648
        %v1302 = vxor.u32 %v964, 2147483648
        %v1303 = vxor.u32 %v1013, 2147483648
        %v1304 = vxor.u32 %v1062, 2147483648
        %v1305 = vxor.u32 %v1111, 2147483648
        %v1306 = vxor.u32 %v1160, 2147483648
        %v1307 = vxor.u32 %v722, 2147483648
        %v1308 = vxor.u32 %v771, 2147483648
        %v1309 = vxor.u32 %v820, 2147483648
        %v1310 = vxor.u32 %v869, 2147483648
        %v1311 = vxor.u32 %v918, 2147483648
        %v1312 = vxor.u32 %v967, 2147483648
        %v1313 = vxor.u32 %v1016, 2147483648
        %v1314 = vxor.u32 %v1065, 2147483648
        %v1315 = vxor.u32 %v1114, 2147483648
        %v1316 = vxor.u32 %v1163, 2147483648
        %v1317 = vxor.u32 %v724, 2147483648
        %v1318 = vxor.u32 %v773, 2147483648
        %v1319 = vxor.u32 %v822, 2147483648
        %v1320 = vxor.u32 %v871, 2147483648
        %v1321 = vxor.u32 %v920, 2147483648
        %v1322 = vxor.u32 %v969, 2147483648
        %v1323 = vxor.u32 %v1018, 2147483648
        %v1324 = vxor.u32 %v1067, 2147483648
        %v1325 = vxor.u32 %v1116, 2147483648
        %v1326 = vxor.u32 %v1165, 2147483648
        %v1327 = vmul.f32 %v1167, 1.442695
        %v1328 = vpow.pop %v1327
        %v1329 = vmul.f32 %v1168, 1.442695
        %v1330 = vpow.pop %v1329
        %v1331 = vmul.f32 %v1169, 1.442695
        %v1332 = vpow.pop %v1331
        %v1333 = vmul.f32 %v1170, 1.442695
        %v1334 = vpow.pop %v1333
        %v1335 = vmul.f32 %v1171, 1.442695
        %v1336 = vpow.pop %v1335
        %v1337 = vmul.f32 %v1172, 1.442695
        %v1338 = vpow.pop %v1337
        %v1339 = vmul.f32 %v1173, 1.442695
        %v1340 = vpow.pop %v1339
        %v1341 = vmul.f32 %v1174, 1.442695
        %v1342 = vpow.pop %v1341
        %v1343 = vmul.f32 %v1175, 1.442695
        %v1344 = vpow.pop %v1343
        %v1345 = vmul.f32 %v1176, 1.442695
        %v1346 = vpow.pop %v1345
        %v1347 = vmul.f32 %v1177, 1.442695
        %v1348 = vpow.pop %v1347
        %v1349 = vmul.f32 %v1178, 1.442695
        %v1350 = vpow.pop %v1349
        %v1351 = vmul.f32 %v1179, 1.442695
        %v1352 = vpow.pop %v1351
        %v1353 = vmul.f32 %v1180, 1.442695
        %v1354 = vpow.pop %v1353
        %v1355 = vmul.f32 %v1181, 1.442695
        %v1356 = vpow.pop %v1355
        %v1357 = vmul.f32 %v1182, 1.442695
        %v1358 = vpow.pop %v1357
        %v1359 = vmul.f32 %v1183, 1.442695
        %v1360 = vpow.pop %v1359
        %v1361 = vmul.f32 %v1184, 1.442695
        %v1362 = vpow.pop %v1361
        %v1363 = vmul.f32 %v1185, 1.442695
        %v1364 = vpow.pop %v1363
        %v1365 = vmul.f32 %v1186, 1.442695
        %v1366 = vpow.pop %v1365
        %v1367 = vmul.f32 %v1187, 1.442695
        %v1368 = vpow.pop %v1367
        %v1369 = vmul.f32 %v1188, 1.442695
        %v1370 = vpow.pop %v1369
        %v1371 = vmul.f32 %v1189, 1.442695
        %v1372 = vpow.pop %v1371
        %v1373 = vmul.f32 %v1190, 1.442695
        %v1374 = vpow.pop %v1373
        %v1375 = vmul.f32 %v1191, 1.442695
        %v1376 = vpow.pop %v1375
        %v1377 = vmul.f32 %v1192, 1.442695
        %v1378 = vpow.pop %v1377
        %v1379 = vmul.f32 %v1193, 1.442695
        %v1380 = vpow.pop %v1379
        %v1381 = vmul.f32 %v1194, 1.442695
        %v1382 = vpow.pop %v1381
        %v1383 = vmul.f32 %v1195, 1.442695
        %v1384 = vpow.pop %v1383
        %v1385 = vmul.f32 %v1196, 1.442695
        %v1386 = vpow.pop %v1385
        %v1387 = vmul.f32 %v1197, 1.442695
        %v1388 = vpow.pop %v1387
        %v1389 = vmul.f32 %v1198, 1.442695
        %v1390 = vpow.pop %v1389
        %v1391 = vmul.f32 %v1199, 1.442695
        %v1392 = vpow.pop %v1391
        %v1393 = vmul.f32 %v1200, 1.442695
        %v1394 = vpow.pop %v1393
        %v1395 = vmul.f32 %v1201, 1.442695
        %v1396 = vpow.pop %v1395
        %v1397 = vmul.f32 %v1202, 1.442695
        %v1398 = vpow.pop %v1397
        %v1399 = vmul.f32 %v1203, 1.442695
        %v1400 = vpow.pop %v1399
        %v1401 = vmul.f32 %v1204, 1.442695
        %v1402 = vpow.pop %v1401
        %v1403 = vmul.f32 %v1205, 1.442695
        %v1404 = vpow.pop %v1403
        %v1405 = vmul.f32 %v1206, 1.442695
        %v1406 = vpow.pop %v1405
        %v1407 = vmul.f32 %v1207, 1.442695
        %v1408 = vpow.pop %v1407
        %v1409 = vmul.f32 %v1208, 1.442695
        %v1410 = vpow.pop %v1409
        %v1411 = vmul.f32 %v1209, 1.442695
        %v1412 = vpow.pop %v1411
        %v1413 = vmul.f32 %v1210, 1.442695
        %v1414 = vpow.pop %v1413
        %v1415 = vmul.f32 %v1211, 1.442695
        %v1416 = vpow.pop %v1415
        %v1417 = vmul.f32 %v1212, 1.442695
        %v1418 = vpow.pop %v1417
        %v1419 = vmul.f32 %v1213, 1.442695
        %v1420 = vpow.pop %v1419
        %v1421 = vmul.f32 %v1214, 1.442695
        %v1422 = vpow.pop %v1421
        %v1423 = vmul.f32 %v1215, 1.442695
        %v1424 = vpow.pop %v1423
        %v1425 = vmul.f32 %v1216, 1.442695
        %v1426 = vpow.pop %v1425
        %v1427 = vmul.f32 %v1217, 1.442695
        %v1428 = vpow.pop %v1427
        %v1429 = vmul.f32 %v1218, 1.442695
        %v1430 = vpow.pop %v1429
        %v1431 = vmul.f32 %v1219, 1.442695
        %v1432 = vpow.pop %v1431
        %v1433 = vmul.f32 %v1220, 1.442695
        %v1434 = vpow.pop %v1433
        %v1435 = vmul.f32 %v1221, 1.442695
        %v1436 = vpow.pop %v1435
        %v1437 = vmul.f32 %v1222, 1.442695
        %v1438 = vpow.pop %v1437
        %v1439 = vmul.f32 %v1223, 1.442695
        %v1440 = vpow.pop %v1439
        %v1441 = vmul.f32 %v1224, 1.442695
        %v1442 = vpow.pop %v1441
        %v1443 = vmul.f32 %v1225, 1.442695
        %v1444 = vpow.pop %v1443
        %v1445 = vmul.f32 %v1226, 1.442695
        %v1446 = vpow.pop %v1445
        %v1447 = vmul.f32 %v1227, 1.442695
        %v1448 = vpow.pop %v1447
        %v1449 = vmul.f32 %v1228, 1.442695
        %v1450 = vpow.pop %v1449
        %v1451 = vmul.f32 %v1229, 1.442695
        %v1452 = vpow.pop %v1451
        %v1453 = vmul.f32 %v1230, 1.442695
        %v1454 = vpow.pop %v1453
        %v1455 = vmul.f32 %v1231, 1.442695
        %v1456 = vpow.pop %v1455
        %v1457 = vmul.f32 %v1232, 1.442695
        %v1458 = vpow.pop %v1457
        %v1459 = vmul.f32 %v1233, 1.442695
        %v1460 = vpow.pop %v1459
        %v1461 = vmul.f32 %v1234, 1.442695
        %v1462 = vpow.pop %v1461
        %v1463 = vmul.f32 %v1235, 1.442695
        %v1464 = vpow.pop %v1463
        %v1465 = vmul.f32 %v1236, 1.442695
        %v1466 = vpow.pop %v1465
        %v1467 = vmul.f32 %v1237, 1.442695
        %v1468 = vpow.pop %v1467
        %v1469 = vmul.f32 %v1238, 1.442695
        %v1470 = vpow.pop %v1469
        %v1471 = vmul.f32 %v1239, 1.442695
        %v1472 = vpow.pop %v1471
        %v1473 = vmul.f32 %v1240, 1.442695
        %v1474 = vpow.pop %v1473
        %v1475 = vmul.f32 %v1241, 1.442695
        %v1476 = vpow.pop %v1475
        %v1477 = vmul.f32 %v1242, 1.442695
        %v1478 = vpow.pop %v1477
        %v1479 = vmul.f32 %v1243, 1.442695
        %v1480 = vpow.pop %v1479
        %v1481 = vmul.f32 %v1244, 1.442695
        %v1482 = vpow.pop %v1481
        %v1483 = vmul.f32 %v1245, 1.442695
        %v1484 = vpow.pop %v1483
        %v1485 = vmul.f32 %v1246, 1.442695
        %v1486 = vpow.pop %v1485
        %v1487 = vmul.f32 %v1247, 1.442695
        %v1488 = vpow.pop %v1487
        %v1489 = vmul.f32 %v1248, 1.442695
        %v1490 = vpow.pop %v1489
        %v1491 = vmul.f32 %v1249, 1.442695
        %v1492 = vpow.pop %v1491
        %v1493 = vmul.f32 %v1250, 1.442695
        %v1494 = vpow.pop %v1493
        %v1495 = vmul.f32 %v1251, 1.442695
        %v1496 = vpow.pop %v1495
        %v1497 = vmul.f32 %v1252, 1.442695
        %v1498 = vpow.pop %v1497
        %v1499 = vmul.f32 %v1253, 1.442695
        %v1500 = vpow.pop %v1499
        %v1501 = vmul.f32 %v1254, 1.442695
        %v1502 = vpow.pop %v1501
        %v1503 = vmul.f32 %v1255, 1.442695
        %v1504 = vpow.pop %v1503
        %v1505 = vmul.f32 %v1256, 1.442695
        %v1506 = vpow.pop %v1505
        %v1507 = vmul.f32 %v1257, 1.442695
        %v1508 = vpow.pop %v1507
        %v1509 = vmul.f32 %v1258, 1.442695
        %v1510 = vpow.pop %v1509
        %v1511 = vmul.f32 %v1259, 1.442695
        %v1512 = vpow.pop %v1511
        %v1513 = vmul.f32 %v1260, 1.442695
        %v1514 = vpow.pop %v1513
        %v1515 = vmul.f32 %v1261, 1.442695
        %v1516 = vpow.pop %v1515
        %v1517 = vmul.f32 %v1262, 1.442695
        %v1518 = vpow.pop %v1517
        %v1519 = vmul.f32 %v1263, 1.442695
        %v1520 = vpow.pop %v1519
        %v1521 = vmul.f32 %v1264, 1.442695
        %v1522 = vpow.pop %v1521
        %v1523 = vmul.f32 %v1265, 1.442695
        %v1524 = vpow.pop %v1523
        %v1525 = vmul.f32 %v1266, 1.442695
        %v1526 = vpow.pop %v1525
        %v1527 = vmul.f32 %v1267, 1.442695
        %v1528 = vpow.pop %v1527
        %v1529 = vmul.f32 %v1268, 1.442695
        %v1530 = vpow.pop %v1529
        %v1531 = vmul.f32 %v1269, 1.442695
        %v1532 = vpow.pop %v1531
        %v1533 = vmul.f32 %v1270, 1.442695
        %v1534 = vpow.pop %v1533
        %v1535 = vmul.f32 %v1271, 1.442695
        %v1536 = vpow.pop %v1535
        %v1537 = vmul.f32 %v1272, 1.442695
        %v1538 = vpow.pop %v1537
        %v1539 = vmul.f32 %v1273, 1.442695
        %v1540 = vpow.pop %v1539
        %v1541 = vmul.f32 %v1274, 1.442695
        %v1542 = vpow.pop %v1541
        %v1543 = vmul.f32 %v1275, 1.442695
        %v1544 = vpow.pop %v1543
        %v1545 = vmul.f32 %v1276, 1.442695
        %v1546 = vpow.pop %v1545
        %v1547 = vmul.f32 %v1277, 1.442695
        %v1548 = vpow.pop %v1547
        %v1549 = vmul.f32 %v1278, 1.442695
        %v1550 = vpow.pop %v1549
        %v1551 = vmul.f32 %v1279, 1.442695
        %v1552 = vpow.pop %v1551
        %v1553 = vmul.f32 %v1280, 1.442695
        %v1554 = vpow.pop %v1553
        %v1555 = vmul.f32 %v1281, 1.442695
        %v1556 = vpow.pop %v1555
        %v1557 = vmul.f32 %v1282, 1.442695
        %v1558 = vpow.pop %v1557
        %v1559 = vmul.f32 %v1283, 1.442695
        %v1560 = vpow.pop %v1559
        %v1561 = vmul.f32 %v1284, 1.442695
        %v1562 = vpow.pop %v1561
        %v1563 = vmul.f32 %v1285, 1.442695
        %v1564 = vpow.pop %v1563
        %v1565 = vmul.f32 %v1286, 1.442695
        %v1566 = vpow.pop %v1565
        %v1567 = vmul.f32 %v1287, 1.442695
        %v1568 = vpow.pop %v1567
        %v1569 = vmul.f32 %v1288, 1.442695
        %v1570 = vpow.pop %v1569
        %v1571 = vmul.f32 %v1289, 1.442695
        %v1572 = vpow.pop %v1571
        %v1573 = vmul.f32 %v1290, 1.442695
        %v1574 = vpow.pop %v1573
        %v1575 = vmul.f32 %v1291, 1.442695
        %v1576 = vpow.pop %v1575
        %v1577 = vmul.f32 %v1292, 1.442695
        %v1578 = vpow.pop %v1577
        %v1579 = vmul.f32 %v1293, 1.442695
        %v1580 = vpow.pop %v1579
        %v1581 = vmul.f32 %v1294, 1.442695
        %v1582 = vpow.pop %v1581
        %v1583 = vmul.f32 %v1295, 1.442695
        %v1584 = vpow.pop %v1583
        %v1585 = vmul.f32 %v1296, 1.442695
        %v1586 = vpow.pop %v1585
        %v1587 = vmul.f32 %v1297, 1.442695
        %v1588 = vpow.pop %v1587
        %v1589 = vmul.f32 %v1298, 1.442695
        %v1590 = vpow.pop %v1589
        %v1591 = vmul.f32 %v1299, 1.442695
        %v1592 = vpow.pop %v1591
        %v1593 = vmul.f32 %v1300, 1.442695
        %v1594 = vpow.pop %v1593
        %v1595 = vmul.f32 %v1301, 1.442695
        %v1596 = vpow.pop %v1595
        %v1597 = vmul.f32 %v1302, 1.442695
        %v1598 = vpow.pop %v1597
        %v1599 = vmul.f32 %v1303, 1.442695
        %v1600 = vpow.pop %v1599
        %v1601 = vmul.f32 %v1304, 1.442695
        %v1602 = vpow.pop %v1601
        %v1603 = vmul.f32 %v1305, 1.442695
        %v1604 = vpow.pop %v1603
        %v1605 = vmul.f32 %v1306, 1.442695
        %v1606 = vpow.pop %v1605
        %v1607 = vmul.f32 %v1307, 1.442695
        %v1608 = vpow.pop %v1607
        %v1609 = vmul.f32 %v1308, 1.442695
        %v1610 = vpow.pop %v1609
        %v1611 = vmul.f32 %v1309, 1.442695
        %v1612 = vpow.pop %v1611
        %v1613 = vmul.f32 %v1310, 1.442695
        %v1614 = vpow.pop %v1613
        %v1615 = vmul.f32 %v1311, 1.442695
        %v1616 = vpow.pop %v1615
        %v1617 = vmul.f32 %v1312, 1.442695
        %v1618 = vpow.pop %v1617
        %v1619 = vmul.f32 %v1313, 1.442695
        %v1620 = vpow.pop %v1619
        %v1621 = vmul.f32 %v1314, 1.442695
        %v1622 = vpow.pop %v1621
        %v1623 = vmul.f32 %v1315, 1.442695
        %v1624 = vpow.pop %v1623
        %v1625 = vmul.f32 %v1316, 1.442695
        %v1626 = vpow.pop %v1625
        %v1627 = vmul.f32 %v1317, 1.442695
        %v1628 = vpow.pop %v1627
        %v1629 = vmul.f32 %v1318, 1.442695
        %v1630 = vpow.pop %v1629
        %v1631 = vmul.f32 %v1319, 1.442695
        %v1632 = vpow.pop %v1631
        %v1633 = vmul.f32 %v1320, 1.442695
        %v1634 = vpow.pop %v1633
        %v1635 = vmul.f32 %v1321, 1.442695
        %v1636 = vpow.pop %v1635
        %v1637 = vmul.f32 %v1322, 1.442695
        %v1638 = vpow.pop %v1637
        %v1639 = vmul.f32 %v1323, 1.442695
        %v1640 = vpow.pop %v1639
        %v1641 = vmul.f32 %v1324, 1.442695
        %v1642 = vpow.pop %v1641
        %v1643 = vmul.f32 %v1325, 1.442695
        %v1644 = vpow.pop %v1643
        %v1645 = vmul.f32 %v1326, 1.442695
        %v1646 = vpow.pop %v1645
        %v1647 = vadd.f32 %v1328, 1.0
        %v1648 = vadd.f32 %v1330, 1.0
        %v1649 = vadd.f32 %v1332, 1.0
        %v1650 = vadd.f32 %v1334, 1.0
        %v1651 = vadd.f32 %v1336, 1.0
        %v1652 = vadd.f32 %v1338, 1.0
        %v1653 = vadd.f32 %v1340, 1.0
        %v1654 = vadd.f32 %v1342, 1.0
        %v1655 = vadd.f32 %v1344, 1.0
        %v1656 = vadd.f32 %v1346, 1.0
        %v1657 = vadd.f32 %v1348, 1.0
        %v1658 = vadd.f32 %v1350, 1.0
        %v1659 = vadd.f32 %v1352, 1.0
        %v1660 = vadd.f32 %v1354, 1.0
        %v1661 = vadd.f32 %v1356, 1.0
        %v1662 = vadd.f32 %v1358, 1.0
        %v1663 = vadd.f32 %v1360, 1.0
        %v1664 = vadd.f32 %v1362, 1.0
        %v1665 = vadd.f32 %v1364, 1.0
        %v1666 = vadd.f32 %v1366, 1.0
        %v1667 = vadd.f32 %v1368, 1.0
        %v1668 = vadd.f32 %v1370, 1.0
        %v1669 = vadd.f32 %v1372, 1.0
        %v1670 = vadd.f32 %v1374, 1.0
        %v1671 = vadd.f32 %v1376, 1.0
        %v1672 = vadd.f32 %v1378, 1.0
        %v1673 = vadd.f32 %v1380, 1.0
        %v1674 = vadd.f32 %v1382, 1.0
        %v1675 = vadd.f32 %v1384, 1.0
        %v1676 = vadd.f32 %v1386, 1.0
        %v1677 = vadd.f32 %v1388, 1.0
        %v1678 = vadd.f32 %v1390, 1.0
        %v1679 = vadd.f32 %v1392, 1.0
        %v1680 = vadd.f32 %v1394, 1.0
        %v1681 = vadd.f32 %v1396, 1.0
        %v1682 = vadd.f32 %v1398, 1.0
        %v1683 = vadd.f32 %v1400, 1.0
        %v1684 = vadd.f32 %v1402, 1.0
        %v1685 = vadd.f32 %v1404, 1.0
        %v1686 = vadd.f32 %v1406, 1.0
        %v1687 = vadd.f32 %v1408, 1.0
        %v1688 = vadd.f32 %v1410, 1.0
        %v1689 = vadd.f32 %v1412, 1.0
        %v1690 = vadd.f32 %v1414, 1.0
        %v1691 = vadd.f32 %v1416, 1.0
        %v1692 = vadd.f32 %v1418, 1.0
        %v1693 = vadd.f32 %v1420, 1.0
        %v1694 = vadd.f32 %v1422, 1.0
        %v1695 = vadd.f32 %v1424, 1.0
        %v1696 = vadd.f32 %v1426, 1.0
        %v1697 = vadd.f32 %v1428, 1.0
        %v1698 = vadd.f32 %v1430, 1.0
        %v1699 = vadd.f32 %v1432, 1.0
        %v1700 = vadd.f32 %v1434, 1.0
        %v1701 = vadd.f32 %v1436, 1.0
        %v1702 = vadd.f32 %v1438, 1.0
        %v1703 = vadd.f32 %v1440, 1.0
        %v1704 = vadd.f32 %v1442, 1.0
        %v1705 = vadd.f32 %v1444, 1.0
        %v1706 = vadd.f32 %v1446, 1.0
        %v1707 = vadd.f32 %v1448, 1.0
        %v1708 = vadd.f32 %v1450, 1.0
        %v1709 = vadd.f32 %v1452, 1.0
        %v1710 = vadd.f32 %v1454, 1.0
        %v1711 = vadd.f32 %v1456, 1.0
        %v1712 = vadd.f32 %v1458, 1.0
        %v1713 = vadd.f32 %v1460, 1.0
        %v1714 = vadd.f32 %v1462, 1.0
        %v1715 = vadd.f32 %v1464, 1.0
        %v1716 = vadd.f32 %v1466, 1.0
        %v1717 = vadd.f32 %v1468, 1.0
        %v1718 = vadd.f32 %v1470, 1.0
        %v1719 = vadd.f32 %v1472, 1.0
        %v1720 = vadd.f32 %v1474, 1.0
        %v1721 = vadd.f32 %v1476, 1.0
        %v1722 = vadd.f32 %v1478, 1.0
        %v1723 = vadd.f32 %v1480, 1.0
        %v1724 = vadd.f32 %v1482, 1.0
        %v1725 = vadd.f32 %v1484, 1.0
        %v1726 = vadd.f32 %v1486, 1.0
        %v1727 = vadd.f32 %v1488, 1.0
        %v1728 = vadd.f32 %v1490, 1.0
        %v1729 = vadd.f32 %v1492, 1.0
        %v1730 = vadd.f32 %v1494, 1.0
        %v1731 = vadd.f32 %v1496, 1.0
        %v1732 = vadd.f32 %v1498, 1.0
        %v1733 = vadd.f32 %v1500, 1.0
        %v1734 = vadd.f32 %v1502, 1.0
        %v1735 = vadd.f32 %v1504, 1.0
        %v1736 = vadd.f32 %v1506, 1.0
        %v1737 = vadd.f32 %v1508, 1.0
        %v1738 = vadd.f32 %v1510, 1.0
        %v1739 = vadd.f32 %v1512, 1.0
        %v1740 = vadd.f32 %v1514, 1.0
        %v1741 = vadd.f32 %v1516, 1.0
        %v1742 = vadd.f32 %v1518, 1.0
        %v1743 = vadd.f32 %v1520, 1.0
        %v1744 = vadd.f32 %v1522, 1.0
        %v1745 = vadd.f32 %v1524, 1.0
        %v1746 = vadd.f32 %v1526, 1.0
        %v1747 = vadd.f32 %v1528, 1.0
        %v1748 = vadd.f32 %v1530, 1.0
        %v1749 = vadd.f32 %v1532, 1.0
        %v1750 = vadd.f32 %v1534, 1.0
        %v1751 = vadd.f32 %v1536, 1.0
        %v1752 = vadd.f32 %v1538, 1.0
        %v1753 = vadd.f32 %v1540, 1.0
        %v1754 = vadd.f32 %v1542, 1.0
        %v1755 = vadd.f32 %v1544, 1.0
        %v1756 = vadd.f32 %v1546, 1.0
        %v1757 = vadd.f32 %v1548, 1.0
        %v1758 = vadd.f32 %v1550, 1.0
        %v1759 = vadd.f32 %v1552, 1.0
        %v1760 = vadd.f32 %v1554, 1.0
        %v1761 = vadd.f32 %v1556, 1.0
        %v1762 = vadd.f32 %v1558, 1.0
        %v1763 = vadd.f32 %v1560, 1.0
        %v1764 = vadd.f32 %v1562, 1.0
        %v1765 = vadd.f32 %v1564, 1.0
        %v1766 = vadd.f32 %v1566, 1.0
        %v1767 = vadd.f32 %v1568, 1.0
        %v1768 = vadd.f32 %v1570, 1.0
        %v1769 = vadd.f32 %v1572, 1.0
        %v1770 = vadd.f32 %v1574, 1.0
        %v1771 = vadd.f32 %v1576, 1.0
        %v1772 = vadd.f32 %v1578, 1.0
        %v1773 = vadd.f32 %v1580, 1.0
        %v1774 = vadd.f32 %v1582, 1.0
        %v1775 = vadd.f32 %v1584, 1.0
        %v1776 = vadd.f32 %v1586, 1.0
        %v1777 = vadd.f32 %v1588, 1.0
        %v1778 = vadd.f32 %v1590, 1.0
        %v1779 = vadd.f32 %v1592, 1.0
        %v1780 = vadd.f32 %v1594, 1.0
        %v1781 = vadd.f32 %v1596, 1.0
        %v1782 = vadd.f32 %v1598, 1.0
        %v1783 = vadd.f32 %v1600, 1.0
        %v1784 = vadd.f32 %v1602, 1.0
        %v1785 = vadd.f32 %v1604, 1.0
        %v1786 = vadd.f32 %v1606, 1.0
        %v1787 = vadd.f32 %v1608, 1.0
        %v1788 = vadd.f32 %v1610, 1.0
        %v1789 = vadd.f32 %v1612, 1.0
        %v1790 = vadd.f32 %v1614, 1.0
        %v1791 = vadd.f32 %v1616, 1.0
        %v1792 = vadd.f32 %v1618, 1.0
        %v1793 = vadd.f32 %v1620, 1.0
        %v1794 = vadd.f32 %v1622, 1.0
        %v1795 = vadd.f32 %v1624, 1.0
        %v1796 = vadd.f32 %v1626, 1.0
        %v1797 = vadd.f32 %v1628, 1.0
        %v1798 = vadd.f32 %v1630, 1.0
        %v1799 = vadd.f32 %v1632, 1.0
        %v1800 = vadd.f32 %v1634, 1.0
        %v1801 = vadd.f32 %v1636, 1.0
        %v1802 = vadd.f32 %v1638, 1.0
        %v1803 = vadd.f32 %v1640, 1.0
        %v1804 = vadd.f32 %v1642, 1.0
        %v1805 = vadd.f32 %v1644, 1.0
        %v1806 = vadd.f32 %v1646, 1.0
        %v1807 = vrcp.pop %v1647
        %v1808 = vmul.f32 %v1647, %v1807
        %v1809 = vsub.f32 1.0, %v1808
        %v1810 = vmul.f32 %v1807, %v1809
        %v1811 = vadd.f32 %v1807, %v1810
        %vm1812 = vweird.f32 %v1647
        %vm1813 = vweird.f32 %v1807
        %vm1814 = vmor %vm1812, %vm1813
        %v1815 = vsel %vm1814, %v1807, %v1811
        %v1816 = vand.u32 2147483647, %v1647
        %vm1817 = vcmp.eq.f32.partialorder %v1816, 8.507059e+37
        %v1818 = vand.u32 %v1647, 2147483648
        %v1819 = vor.u32 1.1754944e-38, %v1818
        %v1820 = vsel %vm1817, %v1819, %v1815
        %v1821 = vmul.f32 1.0, %v1820
        %v1822 = vrcp.pop %v1648
        %v1823 = vmul.f32 %v1648, %v1822
        %v1824 = vsub.f32 1.0, %v1823
        %v1825 = vmul.f32 %v1822, %v1824
        %v1826 = vadd.f32 %v1822, %v1825
        %vm1827 = vweird.f32 %v1648
        %vm1828 = vweird.f32 %v1822
        %vm1829 = vmor %vm1827, %vm1828
        %v1830 = vsel %vm1829, %v1822, %v1826
        %v1831 = vand.u32 2147483647, %v1648
        %vm1832 = vcmp.eq.f32.partialorder %v1831, 8.507059e+37
        %v1833 = vand.u32 %v1648, 2147483648
        %v1834 = vor.u32 1.1754944e-38, %v1833
        %v1835 = vsel %vm1832, %v1834, %v1830
        %v1836 = vmul.f32 1.0, %v1835
        %v1837 = vrcp.pop %v1649
        %v1838 = vmul.f32 %v1649, %v1837
        %v1839 = vsub.f32 1.0, %v1838
        %v1840 = vmul.f32 %v1837, %v1839
        %v1841 = vadd.f32 %v1837, %v1840
        %vm1842 = vweird.f32 %v1649
        %vm1843 = vweird.f32 %v1837
        %vm1844 = vmor %vm1842, %vm1843
        %v1845 = vsel %vm1844, %v1837, %v1841
        %v1846 = vand.u32 2147483647, %v1649
        %vm1847 = vcmp.eq.f32.partialorder %v1846, 8.507059e+37
        %v1848 = vand.u32 %v1649, 2147483648
        %v1849 = vor.u32 1.1754944e-38, %v1848
        %v1850 = vsel %vm1847, %v1849, %v1845
        %v1851 = vmul.f32 1.0, %v1850
        %v1852 = vrcp.pop %v1650
        %v1853 = vmul.f32 %v1650, %v1852
        %v1854 = vsub.f32 1.0, %v1853
        %v1855 = vmul.f32 %v1852, %v1854
        %v1856 = vadd.f32 %v1852, %v1855
        %vm1857 = vweird.f32 %v1650
        %vm1858 = vweird.f32 %v1852
        %vm1859 = vmor %vm1857, %vm1858
        %v1860 = vsel %vm1859, %v1852, %v1856
        %v1861 = vand.u32 2147483647, %v1650
        %vm1862 = vcmp.eq.f32.partialorder %v1861, 8.507059e+37
        %v1863 = vand.u32 %v1650, 2147483648
        %v1864 = vor.u32 1.1754944e-38, %v1863
        %v1865 = vsel %vm1862, %v1864, %v1860
        %v1866 = vmul.f32 1.0, %v1865
        %v1867 = vrcp.pop %v1651
        %v1868 = vmul.f32 %v1651, %v1867
        %v1869 = vsub.f32 1.0, %v1868
        %v1870 = vmul.f32 %v1867, %v1869
        %v1871 = vadd.f32 %v1867, %v1870
        %vm1872 = vweird.f32 %v1651
        %vm1873 = vweird.f32 %v1867
        %vm1874 = vmor %vm1872, %vm1873
        %v1875 = vsel %vm1874, %v1867, %v1871
        %v1876 = vand.u32 2147483647, %v1651
        %vm1877 = vcmp.eq.f32.partialorder %v1876, 8.507059e+37
        %v1878 = vand.u32 %v1651, 2147483648
        %v1879 = vor.u32 1.1754944e-38, %v1878
        %v1880 = vsel %vm1877, %v1879, %v1875
        %v1881 = vmul.f32 1.0, %v1880
        %v1882 = vrcp.pop %v1652
        %v1883 = vmul.f32 %v1652, %v1882
        %v1884 = vsub.f32 1.0, %v1883
        %v1885 = vmul.f32 %v1882, %v1884
        %v1886 = vadd.f32 %v1882, %v1885
        %vm1887 = vweird.f32 %v1652
        %vm1888 = vweird.f32 %v1882
        %vm1889 = vmor %vm1887, %vm1888
        %v1890 = vsel %vm1889, %v1882, %v1886
        %v1891 = vand.u32 2147483647, %v1652
        %vm1892 = vcmp.eq.f32.partialorder %v1891, 8.507059e+37
        %v1893 = vand.u32 %v1652, 2147483648
        %v1894 = vor.u32 1.1754944e-38, %v1893
        %v1895 = vsel %vm1892, %v1894, %v1890
        %v1896 = vmul.f32 1.0, %v1895
        %v1897 = vrcp.pop %v1653
        %v1898 = vmul.f32 %v1653, %v1897
        %v1899 = vsub.f32 1.0, %v1898
        %v1900 = vmul.f32 %v1897, %v1899
        %v1901 = vadd.f32 %v1897, %v1900
        %vm1902 = vweird.f32 %v1653
        %vm1903 = vweird.f32 %v1897
        %vm1904 = vmor %vm1902, %vm1903
        %v1905 = vsel %vm1904, %v1897, %v1901
        %v1906 = vand.u32 2147483647, %v1653
        %vm1907 = vcmp.eq.f32.partialorder %v1906, 8.507059e+37
        %v1908 = vand.u32 %v1653, 2147483648
        %v1909 = vor.u32 1.1754944e-38, %v1908
        %v1910 = vsel %vm1907, %v1909, %v1905
        %v1911 = vmul.f32 1.0, %v1910
        %v1912 = vrcp.pop %v1654
        %v1913 = vmul.f32 %v1654, %v1912
        %v1914 = vsub.f32 1.0, %v1913
        %v1915 = vmul.f32 %v1912, %v1914
        %v1916 = vadd.f32 %v1912, %v1915
        %vm1917 = vweird.f32 %v1654
        %vm1918 = vweird.f32 %v1912
        %vm1919 = vmor %vm1917, %vm1918
        %v1920 = vsel %vm1919, %v1912, %v1916
        %v1921 = vand.u32 2147483647, %v1654
        %vm1922 = vcmp.eq.f32.partialorder %v1921, 8.507059e+37
        %v1923 = vand.u32 %v1654, 2147483648
        %v1924 = vor.u32 1.1754944e-38, %v1923
        %v1925 = vsel %vm1922, %v1924, %v1920
        %v1926 = vmul.f32 1.0, %v1925
        %v1927 = vrcp.pop %v1655
        %v1928 = vmul.f32 %v1655, %v1927
        %v1929 = vsub.f32 1.0, %v1928
        %v1930 = vmul.f32 %v1927, %v1929
        %v1931 = vadd.f32 %v1927, %v1930
        %vm1932 = vweird.f32 %v1655
        %vm1933 = vweird.f32 %v1927
        %vm1934 = vmor %vm1932, %vm1933
        %v1935 = vsel %vm1934, %v1927, %v1931
        %v1936 = vand.u32 2147483647, %v1655
        %vm1937 = vcmp.eq.f32.partialorder %v1936, 8.507059e+37
        %v1938 = vand.u32 %v1655, 2147483648
        %v1939 = vor.u32 1.1754944e-38, %v1938
        %v1940 = vsel %vm1937, %v1939, %v1935
        %v1941 = vmul.f32 1.0, %v1940
        %v1942 = vrcp.pop %v1656
        %v1943 = vmul.f32 %v1656, %v1942
        %v1944 = vsub.f32 1.0, %v1943
        %v1945 = vmul.f32 %v1942, %v1944
        %v1946 = vadd.f32 %v1942, %v1945
        %vm1947 = vweird.f32 %v1656
        %vm1948 = vweird.f32 %v1942
        %vm1949 = vmor %vm1947, %vm1948
        %v1950 = vsel %vm1949, %v1942, %v1946
        %v1951 = vand.u32 2147483647, %v1656
        %vm1952 = vcmp.eq.f32.partialorder %v1951, 8.507059e+37
        %v1953 = vand.u32 %v1656, 2147483648
        %v1954 = vor.u32 1.1754944e-38, %v1953
        %v1955 = vsel %vm1952, %v1954, %v1950
        %v1956 = vmul.f32 1.0, %v1955
        %v1957 = vrcp.pop %v1657
        %v1958 = vmul.f32 %v1657, %v1957
        %v1959 = vsub.f32 1.0, %v1958
        %v1960 = vmul.f32 %v1957, %v1959
        %v1961 = vadd.f32 %v1957, %v1960
        %vm1962 = vweird.f32 %v1657
        %vm1963 = vweird.f32 %v1957
        %vm1964 = vmor %vm1962, %vm1963
        %v1965 = vsel %vm1964, %v1957, %v1961
        %v1966 = vand.u32 2147483647, %v1657
        %vm1967 = vcmp.eq.f32.partialorder %v1966, 8.507059e+37
        %v1968 = vand.u32 %v1657, 2147483648
        %v1969 = vor.u32 1.1754944e-38, %v1968
        %v1970 = vsel %vm1967, %v1969, %v1965
        %v1971 = vmul.f32 1.0, %v1970
        %v1972 = vrcp.pop %v1658
        %v1973 = vmul.f32 %v1658, %v1972
        %v1974 = vsub.f32 1.0, %v1973
        %v1975 = vmul.f32 %v1972, %v1974
        %v1976 = vadd.f32 %v1972, %v1975
        %vm1977 = vweird.f32 %v1658
        %vm1978 = vweird.f32 %v1972
        %vm1979 = vmor %vm1977, %vm1978
        %v1980 = vsel %vm1979, %v1972, %v1976
        %v1981 = vand.u32 2147483647, %v1658
        %vm1982 = vcmp.eq.f32.partialorder %v1981, 8.507059e+37
        %v1983 = vand.u32 %v1658, 2147483648
        %v1984 = vor.u32 1.1754944e-38, %v1983
        %v1985 = vsel %vm1982, %v1984, %v1980
        %v1986 = vmul.f32 1.0, %v1985
        %v1987 = vrcp.pop %v1659
        %v1988 = vmul.f32 %v1659, %v1987
        %v1989 = vsub.f32 1.0, %v1988
        %v1990 = vmul.f32 %v1987, %v1989
        %v1991 = vadd.f32 %v1987, %v1990
        %vm1992 = vweird.f32 %v1659
        %vm1993 = vweird.f32 %v1987
        %vm1994 = vmor %vm1992, %vm1993
        %v1995 = vsel %vm1994, %v1987, %v1991
        %v1996 = vand.u32 2147483647, %v1659
        %vm1997 = vcmp.eq.f32.partialorder %v1996, 8.507059e+37
        %v1998 = vand.u32 %v1659, 2147483648
        %v1999 = vor.u32 1.1754944e-38, %v1998
        %v2000 = vsel %vm1997, %v1999, %v1995
        %v2001 = vmul.f32 1.0, %v2000
        %v2002 = vrcp.pop %v1660
        %v2003 = vmul.f32 %v1660, %v2002
        %v2004 = vsub.f32 1.0, %v2003
        %v2005 = vmul.f32 %v2002, %v2004
        %v2006 = vadd.f32 %v2002, %v2005
        %vm2007 = vweird.f32 %v1660
        %vm2008 = vweird.f32 %v2002
        %vm2009 = vmor %vm2007, %vm2008
        %v2010 = vsel %vm2009, %v2002, %v2006
        %v2011 = vand.u32 2147483647, %v1660
        %vm2012 = vcmp.eq.f32.partialorder %v2011, 8.507059e+37
        %v2013 = vand.u32 %v1660, 2147483648
        %v2014 = vor.u32 1.1754944e-38, %v2013
        %v2015 = vsel %vm2012, %v2014, %v2010
        %v2016 = vmul.f32 1.0, %v2015
        %v2017 = vrcp.pop %v1661
        %v2018 = vmul.f32 %v1661, %v2017
        %v2019 = vsub.f32 1.0, %v2018
        %v2020 = vmul.f32 %v2017, %v2019
        %v2021 = vadd.f32 %v2017, %v2020
        %vm2022 = vweird.f32 %v1661
        %vm2023 = vweird.f32 %v2017
        %vm2024 = vmor %vm2022, %vm2023
        %v2025 = vsel %vm2024, %v2017, %v2021
        %v2026 = vand.u32 2147483647, %v1661
        %vm2027 = vcmp.eq.f32.partialorder %v2026, 8.507059e+37
        %v2028 = vand.u32 %v1661, 2147483648
        %v2029 = vor.u32 1.1754944e-38, %v2028
        %v2030 = vsel %vm2027, %v2029, %v2025
        %v2031 = vmul.f32 1.0, %v2030
        %v2032 = vrcp.pop %v1662
        %v2033 = vmul.f32 %v1662, %v2032
        %v2034 = vsub.f32 1.0, %v2033
        %v2035 = vmul.f32 %v2032, %v2034
        %v2036 = vadd.f32 %v2032, %v2035
        %vm2037 = vweird.f32 %v1662
        %vm2038 = vweird.f32 %v2032
        %vm2039 = vmor %vm2037, %vm2038
        %v2040 = vsel %vm2039, %v2032, %v2036
        %v2041 = vand.u32 2147483647, %v1662
        %vm2042 = vcmp.eq.f32.partialorder %v2041, 8.507059e+37
        %v2043 = vand.u32 %v1662, 2147483648
        %v2044 = vor.u32 1.1754944e-38, %v2043
        %v2045 = vsel %vm2042, %v2044, %v2040
        %v2046 = vmul.f32 1.0, %v2045
        %v2047 = vrcp.pop %v1663
        %v2048 = vmul.f32 %v1663, %v2047
        %v2049 = vsub.f32 1.0, %v2048
        %v2050 = vmul.f32 %v2047, %v2049
        %v2051 = vadd.f32 %v2047, %v2050
        %vm2052 = vweird.f32 %v1663
        %vm2053 = vweird.f32 %v2047
        %vm2054 = vmor %vm2052, %vm2053
        %v2055 = vsel %vm2054, %v2047, %v2051
        %v2056 = vand.u32 2147483647, %v1663
        %vm2057 = vcmp.eq.f32.partialorder %v2056, 8.507059e+37
        %v2058 = vand.u32 %v1663, 2147483648
        %v2059 = vor.u32 1.1754944e-38, %v2058
        %v2060 = vsel %vm2057, %v2059, %v2055
        %v2061 = vmul.f32 1.0, %v2060
        %v2062 = vrcp.pop %v1664
        %v2063 = vmul.f32 %v1664, %v2062
        %v2064 = vsub.f32 1.0, %v2063
        %v2065 = vmul.f32 %v2062, %v2064
        %v2066 = vadd.f32 %v2062, %v2065
        %vm2067 = vweird.f32 %v1664
        %vm2068 = vweird.f32 %v2062
        %vm2069 = vmor %vm2067, %vm2068
        %v2070 = vsel %vm2069, %v2062, %v2066
        %v2071 = vand.u32 2147483647, %v1664
        %vm2072 = vcmp.eq.f32.partialorder %v2071, 8.507059e+37
        %v2073 = vand.u32 %v1664, 2147483648
        %v2074 = vor.u32 1.1754944e-38, %v2073
        %v2075 = vsel %vm2072, %v2074, %v2070
        %v2076 = vmul.f32 1.0, %v2075
        %v2077 = vrcp.pop %v1665
        %v2078 = vmul.f32 %v1665, %v2077
        %v2079 = vsub.f32 1.0, %v2078
        %v2080 = vmul.f32 %v2077, %v2079
        %v2081 = vadd.f32 %v2077, %v2080
        %vm2082 = vweird.f32 %v1665
        %vm2083 = vweird.f32 %v2077
        %vm2084 = vmor %vm2082, %vm2083
        %v2085 = vsel %vm2084, %v2077, %v2081
        %v2086 = vand.u32 2147483647, %v1665
        %vm2087 = vcmp.eq.f32.partialorder %v2086, 8.507059e+37
        %v2088 = vand.u32 %v1665, 2147483648
        %v2089 = vor.u32 1.1754944e-38, %v2088
        %v2090 = vsel %vm2087, %v2089, %v2085
        %v2091 = vmul.f32 1.0, %v2090
        %v2092 = vrcp.pop %v1666
        %v2093 = vmul.f32 %v1666, %v2092
        %v2094 = vsub.f32 1.0, %v2093
        %v2095 = vmul.f32 %v2092, %v2094
        %v2096 = vadd.f32 %v2092, %v2095
        %vm2097 = vweird.f32 %v1666
        %vm2098 = vweird.f32 %v2092
        %vm2099 = vmor %vm2097, %vm2098
        %v2100 = vsel %vm2099, %v2092, %v2096
        %v2101 = vand.u32 2147483647, %v1666
        %vm2102 = vcmp.eq.f32.partialorder %v2101, 8.507059e+37
        %v2103 = vand.u32 %v1666, 2147483648
        %v2104 = vor.u32 1.1754944e-38, %v2103
        %v2105 = vsel %vm2102, %v2104, %v2100
        %v2106 = vmul.f32 1.0, %v2105
        %v2107 = vrcp.pop %v1667
        %v2108 = vmul.f32 %v1667, %v2107
        %v2109 = vsub.f32 1.0, %v2108
        %v2110 = vmul.f32 %v2107, %v2109
        %v2111 = vadd.f32 %v2107, %v2110
        %vm2112 = vweird.f32 %v1667
        %vm2113 = vweird.f32 %v2107
        %vm2114 = vmor %vm2112, %vm2113
        %v2115 = vsel %vm2114, %v2107, %v2111
        %v2116 = vand.u32 2147483647, %v1667
        %vm2117 = vcmp.eq.f32.partialorder %v2116, 8.507059e+37
        %v2118 = vand.u32 %v1667, 2147483648
        %v2119 = vor.u32 1.1754944e-38, %v2118
        %v2120 = vsel %vm2117, %v2119, %v2115
        %v2121 = vmul.f32 1.0, %v2120
        %v2122 = vrcp.pop %v1668
        %v2123 = vmul.f32 %v1668, %v2122
        %v2124 = vsub.f32 1.0, %v2123
        %v2125 = vmul.f32 %v2122, %v2124
        %v2126 = vadd.f32 %v2122, %v2125
        %vm2127 = vweird.f32 %v1668
        %vm2128 = vweird.f32 %v2122
        %vm2129 = vmor %vm2127, %vm2128
        %v2130 = vsel %vm2129, %v2122, %v2126
        %v2131 = vand.u32 2147483647, %v1668
        %vm2132 = vcmp.eq.f32.partialorder %v2131, 8.507059e+37
        %v2133 = vand.u32 %v1668, 2147483648
        %v2134 = vor.u32 1.1754944e-38, %v2133
        %v2135 = vsel %vm2132, %v2134, %v2130
        %v2136 = vmul.f32 1.0, %v2135
        %v2137 = vrcp.pop %v1669
        %v2138 = vmul.f32 %v1669, %v2137
        %v2139 = vsub.f32 1.0, %v2138
        %v2140 = vmul.f32 %v2137, %v2139
        %v2141 = vadd.f32 %v2137, %v2140
        %vm2142 = vweird.f32 %v1669
        %vm2143 = vweird.f32 %v2137
        %vm2144 = vmor %vm2142, %vm2143
        %v2145 = vsel %vm2144, %v2137, %v2141
        %v2146 = vand.u32 2147483647, %v1669
        %vm2147 = vcmp.eq.f32.partialorder %v2146, 8.507059e+37
        %v2148 = vand.u32 %v1669, 2147483648
        %v2149 = vor.u32 1.1754944e-38, %v2148
        %v2150 = vsel %vm2147, %v2149, %v2145
        %v2151 = vmul.f32 1.0, %v2150
        %v2152 = vrcp.pop %v1670
        %v2153 = vmul.f32 %v1670, %v2152
        %v2154 = vsub.f32 1.0, %v2153
        %v2155 = vmul.f32 %v2152, %v2154
        %v2156 = vadd.f32 %v2152, %v2155
        %vm2157 = vweird.f32 %v1670
        %vm2158 = vweird.f32 %v2152
        %vm2159 = vmor %vm2157, %vm2158
        %v2160 = vsel %vm2159, %v2152, %v2156
        %v2161 = vand.u32 2147483647, %v1670
        %vm2162 = vcmp.eq.f32.partialorder %v2161, 8.507059e+37
        %v2163 = vand.u32 %v1670, 2147483648
        %v2164 = vor.u32 1.1754944e-38, %v2163
        %v2165 = vsel %vm2162, %v2164, %v2160
        %v2166 = vmul.f32 1.0, %v2165
        %v2167 = vrcp.pop %v1671
        %v2168 = vmul.f32 %v1671, %v2167
        %v2169 = vsub.f32 1.0, %v2168
        %v2170 = vmul.f32 %v2167, %v2169
        %v2171 = vadd.f32 %v2167, %v2170
        %vm2172 = vweird.f32 %v1671
        %vm2173 = vweird.f32 %v2167
        %vm2174 = vmor %vm2172, %vm2173
        %v2175 = vsel %vm2174, %v2167, %v2171
        %v2176 = vand.u32 2147483647, %v1671
        %vm2177 = vcmp.eq.f32.partialorder %v2176, 8.507059e+37
        %v2178 = vand.u32 %v1671, 2147483648
        %v2179 = vor.u32 1.1754944e-38, %v2178
        %v2180 = vsel %vm2177, %v2179, %v2175
        %v2181 = vmul.f32 1.0, %v2180
        %v2182 = vrcp.pop %v1672
        %v2183 = vmul.f32 %v1672, %v2182
        %v2184 = vsub.f32 1.0, %v2183
        %v2185 = vmul.f32 %v2182, %v2184
        %v2186 = vadd.f32 %v2182, %v2185
        %vm2187 = vweird.f32 %v1672
        %vm2188 = vweird.f32 %v2182
        %vm2189 = vmor %vm2187, %vm2188
        %v2190 = vsel %vm2189, %v2182, %v2186
        %v2191 = vand.u32 2147483647, %v1672
        %vm2192 = vcmp.eq.f32.partialorder %v2191, 8.507059e+37
        %v2193 = vand.u32 %v1672, 2147483648
        %v2194 = vor.u32 1.1754944e-38, %v2193
        %v2195 = vsel %vm2192, %v2194, %v2190
        %v2196 = vmul.f32 1.0, %v2195
        %v2197 = vrcp.pop %v1673
        %v2198 = vmul.f32 %v1673, %v2197
        %v2199 = vsub.f32 1.0, %v2198
        %v2200 = vmul.f32 %v2197, %v2199
        %v2201 = vadd.f32 %v2197, %v2200
        %vm2202 = vweird.f32 %v1673
        %vm2203 = vweird.f32 %v2197
        %vm2204 = vmor %vm2202, %vm2203
        %v2205 = vsel %vm2204, %v2197, %v2201
        %v2206 = vand.u32 2147483647, %v1673
        %vm2207 = vcmp.eq.f32.partialorder %v2206, 8.507059e+37
        %v2208 = vand.u32 %v1673, 2147483648
        %v2209 = vor.u32 1.1754944e-38, %v2208
        %v2210 = vsel %vm2207, %v2209, %v2205
        %v2211 = vmul.f32 1.0, %v2210
        %v2212 = vrcp.pop %v1674
        %v2213 = vmul.f32 %v1674, %v2212
        %v2214 = vsub.f32 1.0, %v2213
        %v2215 = vmul.f32 %v2212, %v2214
        %v2216 = vadd.f32 %v2212, %v2215
        %vm2217 = vweird.f32 %v1674
        %vm2218 = vweird.f32 %v2212
        %vm2219 = vmor %vm2217, %vm2218
        %v2220 = vsel %vm2219, %v2212, %v2216
        %v2221 = vand.u32 2147483647, %v1674
        %vm2222 = vcmp.eq.f32.partialorder %v2221, 8.507059e+37
        %v2223 = vand.u32 %v1674, 2147483648
        %v2224 = vor.u32 1.1754944e-38, %v2223
        %v2225 = vsel %vm2222, %v2224, %v2220
        %v2226 = vmul.f32 1.0, %v2225
        %v2227 = vrcp.pop %v1675
        %v2228 = vmul.f32 %v1675, %v2227
        %v2229 = vsub.f32 1.0, %v2228
        %v2230 = vmul.f32 %v2227, %v2229
        %v2231 = vadd.f32 %v2227, %v2230
        %vm2232 = vweird.f32 %v1675
        %vm2233 = vweird.f32 %v2227
        %vm2234 = vmor %vm2232, %vm2233
        %v2235 = vsel %vm2234, %v2227, %v2231
        %v2236 = vand.u32 2147483647, %v1675
        %vm2237 = vcmp.eq.f32.partialorder %v2236, 8.507059e+37
        %v2238 = vand.u32 %v1675, 2147483648
        %v2239 = vor.u32 1.1754944e-38, %v2238
        %v2240 = vsel %vm2237, %v2239, %v2235
        %v2241 = vmul.f32 1.0, %v2240
        %v2242 = vrcp.pop %v1676
        %v2243 = vmul.f32 %v1676, %v2242
        %v2244 = vsub.f32 1.0, %v2243
        %v2245 = vmul.f32 %v2242, %v2244
        %v2246 = vadd.f32 %v2242, %v2245
        %vm2247 = vweird.f32 %v1676
        %vm2248 = vweird.f32 %v2242
        %vm2249 = vmor %vm2247, %vm2248
        %v2250 = vsel %vm2249, %v2242, %v2246
        %v2251 = vand.u32 2147483647, %v1676
        %vm2252 = vcmp.eq.f32.partialorder %v2251, 8.507059e+37
        %v2253 = vand.u32 %v1676, 2147483648
        %v2254 = vor.u32 1.1754944e-38, %v2253
        %v2255 = vsel %vm2252, %v2254, %v2250
        %v2256 = vmul.f32 1.0, %v2255
        %v2257 = vrcp.pop %v1677
        %v2258 = vmul.f32 %v1677, %v2257
        %v2259 = vsub.f32 1.0, %v2258
        %v2260 = vmul.f32 %v2257, %v2259
        %v2261 = vadd.f32 %v2257, %v2260
        %vm2262 = vweird.f32 %v1677
        %vm2263 = vweird.f32 %v2257
        %vm2264 = vmor %vm2262, %vm2263
        %v2265 = vsel %vm2264, %v2257, %v2261
        %v2266 = vand.u32 2147483647, %v1677
        %vm2267 = vcmp.eq.f32.partialorder %v2266, 8.507059e+37
        %v2268 = vand.u32 %v1677, 2147483648
        %v2269 = vor.u32 1.1754944e-38, %v2268
        %v2270 = vsel %vm2267, %v2269, %v2265
        %v2271 = vmul.f32 1.0, %v2270
        %v2272 = vrcp.pop %v1678
        %v2273 = vmul.f32 %v1678, %v2272
        %v2274 = vsub.f32 1.0, %v2273
        %v2275 = vmul.f32 %v2272, %v2274
        %v2276 = vadd.f32 %v2272, %v2275
        %vm2277 = vweird.f32 %v1678
        %vm2278 = vweird.f32 %v2272
        %vm2279 = vmor %vm2277, %vm2278
        %v2280 = vsel %vm2279, %v2272, %v2276
        %v2281 = vand.u32 2147483647, %v1678
        %vm2282 = vcmp.eq.f32.partialorder %v2281, 8.507059e+37
        %v2283 = vand.u32 %v1678, 2147483648
        %v2284 = vor.u32 1.1754944e-38, %v2283
        %v2285 = vsel %vm2282, %v2284, %v2280
        %v2286 = vmul.f32 1.0, %v2285
        %v2287 = vrcp.pop %v1679
        %v2288 = vmul.f32 %v1679, %v2287
        %v2289 = vsub.f32 1.0, %v2288
        %v2290 = vmul.f32 %v2287, %v2289
        %v2291 = vadd.f32 %v2287, %v2290
        %vm2292 = vweird.f32 %v1679
        %vm2293 = vweird.f32 %v2287
        %vm2294 = vmor %vm2292, %vm2293
        %v2295 = vsel %vm2294, %v2287, %v2291
        %v2296 = vand.u32 2147483647, %v1679
        %vm2297 = vcmp.eq.f32.partialorder %v2296, 8.507059e+37
        %v2298 = vand.u32 %v1679, 2147483648
        %v2299 = vor.u32 1.1754944e-38, %v2298
        %v2300 = vsel %vm2297, %v2299, %v2295
        %v2301 = vmul.f32 1.0, %v2300
        %v2302 = vrcp.pop %v1680
        %v2303 = vmul.f32 %v1680, %v2302
        %v2304 = vsub.f32 1.0, %v2303
        %v2305 = vmul.f32 %v2302, %v2304
        %v2306 = vadd.f32 %v2302, %v2305
        %vm2307 = vweird.f32 %v1680
        %vm2308 = vweird.f32 %v2302
        %vm2309 = vmor %vm2307, %vm2308
        %v2310 = vsel %vm2309, %v2302, %v2306
        %v2311 = vand.u32 2147483647, %v1680
        %vm2312 = vcmp.eq.f32.partialorder %v2311, 8.507059e+37
        %v2313 = vand.u32 %v1680, 2147483648
        %v2314 = vor.u32 1.1754944e-38, %v2313
        %v2315 = vsel %vm2312, %v2314, %v2310
        %v2316 = vmul.f32 1.0, %v2315
        %v2317 = vrcp.pop %v1681
        %v2318 = vmul.f32 %v1681, %v2317
        %v2319 = vsub.f32 1.0, %v2318
        %v2320 = vmul.f32 %v2317, %v2319
        %v2321 = vadd.f32 %v2317, %v2320
        %vm2322 = vweird.f32 %v1681
        %vm2323 = vweird.f32 %v2317
        %vm2324 = vmor %vm2322, %vm2323
        %v2325 = vsel %vm2324, %v2317, %v2321
        %v2326 = vand.u32 2147483647, %v1681
        %vm2327 = vcmp.eq.f32.partialorder %v2326, 8.507059e+37
        %v2328 = vand.u32 %v1681, 2147483648
        %v2329 = vor.u32 1.1754944e-38, %v2328
        %v2330 = vsel %vm2327, %v2329, %v2325
        %v2331 = vmul.f32 1.0, %v2330
        %v2332 = vrcp.pop %v1682
        %v2333 = vmul.f32 %v1682, %v2332
        %v2334 = vsub.f32 1.0, %v2333
        %v2335 = vmul.f32 %v2332, %v2334
        %v2336 = vadd.f32 %v2332, %v2335
        %vm2337 = vweird.f32 %v1682
        %vm2338 = vweird.f32 %v2332
        %vm2339 = vmor %vm2337, %vm2338
        %v2340 = vsel %vm2339, %v2332, %v2336
        %v2341 = vand.u32 2147483647, %v1682
        %vm2342 = vcmp.eq.f32.partialorder %v2341, 8.507059e+37
        %v2343 = vand.u32 %v1682, 2147483648
        %v2344 = vor.u32 1.1754944e-38, %v2343
        %v2345 = vsel %vm2342, %v2344, %v2340
        %v2346 = vmul.f32 1.0, %v2345
        %v2347 = vrcp.pop %v1683
        %v2348 = vmul.f32 %v1683, %v2347
        %v2349 = vsub.f32 1.0, %v2348
        %v2350 = vmul.f32 %v2347, %v2349
        %v2351 = vadd.f32 %v2347, %v2350
        %vm2352 = vweird.f32 %v1683
        %vm2353 = vweird.f32 %v2347
        %vm2354 = vmor %vm2352, %vm2353
        %v2355 = vsel %vm2354, %v2347, %v2351
        %v2356 = vand.u32 2147483647, %v1683
        %vm2357 = vcmp.eq.f32.partialorder %v2356, 8.507059e+37
        %v2358 = vand.u32 %v1683, 2147483648
        %v2359 = vor.u32 1.1754944e-38, %v2358
        %v2360 = vsel %vm2357, %v2359, %v2355
        %v2361 = vmul.f32 1.0, %v2360
        %v2362 = vrcp.pop %v1684
        %v2363 = vmul.f32 %v1684, %v2362
        %v2364 = vsub.f32 1.0, %v2363
        %v2365 = vmul.f32 %v2362, %v2364
        %v2366 = vadd.f32 %v2362, %v2365
        %vm2367 = vweird.f32 %v1684
        %vm2368 = vweird.f32 %v2362
        %vm2369 = vmor %vm2367, %vm2368
        %v2370 = vsel %vm2369, %v2362, %v2366
        %v2371 = vand.u32 2147483647, %v1684
        %vm2372 = vcmp.eq.f32.partialorder %v2371, 8.507059e+37
        %v2373 = vand.u32 %v1684, 2147483648
        %v2374 = vor.u32 1.1754944e-38, %v2373
        %v2375 = vsel %vm2372, %v2374, %v2370
        %v2376 = vmul.f32 1.0, %v2375
        %v2377 = vrcp.pop %v1685
        %v2378 = vmul.f32 %v1685, %v2377
        %v2379 = vsub.f32 1.0, %v2378
        %v2380 = vmul.f32 %v2377, %v2379
        %v2381 = vadd.f32 %v2377, %v2380
        %vm2382 = vweird.f32 %v1685
        %vm2383 = vweird.f32 %v2377
        %vm2384 = vmor %vm2382, %vm2383
        %v2385 = vsel %vm2384, %v2377, %v2381
        %v2386 = vand.u32 2147483647, %v1685
        %vm2387 = vcmp.eq.f32.partialorder %v2386, 8.507059e+37
        %v2388 = vand.u32 %v1685, 2147483648
        %v2389 = vor.u32 1.1754944e-38, %v2388
        %v2390 = vsel %vm2387, %v2389, %v2385
        %v2391 = vmul.f32 1.0, %v2390
        %v2392 = vrcp.pop %v1686
        %v2393 = vmul.f32 %v1686, %v2392
        %v2394 = vsub.f32 1.0, %v2393
        %v2395 = vmul.f32 %v2392, %v2394
        %v2396 = vadd.f32 %v2392, %v2395
        %vm2397 = vweird.f32 %v1686
        %vm2398 = vweird.f32 %v2392
        %vm2399 = vmor %vm2397, %vm2398
        %v2400 = vsel %vm2399, %v2392, %v2396
        %v2401 = vand.u32 2147483647, %v1686
        %vm2402 = vcmp.eq.f32.partialorder %v2401, 8.507059e+37
        %v2403 = vand.u32 %v1686, 2147483648
        %v2404 = vor.u32 1.1754944e-38, %v2403
        %v2405 = vsel %vm2402, %v2404, %v2400
        %v2406 = vmul.f32 1.0, %v2405
        %v2407 = vrcp.pop %v1687
        %v2408 = vmul.f32 %v1687, %v2407
        %v2409 = vsub.f32 1.0, %v2408
        %v2410 = vmul.f32 %v2407, %v2409
        %v2411 = vadd.f32 %v2407, %v2410
        %vm2412 = vweird.f32 %v1687
        %vm2413 = vweird.f32 %v2407
        %vm2414 = vmor %vm2412, %vm2413
        %v2415 = vsel %vm2414, %v2407, %v2411
        %v2416 = vand.u32 2147483647, %v1687
        %vm2417 = vcmp.eq.f32.partialorder %v2416, 8.507059e+37
        %v2418 = vand.u32 %v1687, 2147483648
        %v2419 = vor.u32 1.1754944e-38, %v2418
        %v2420 = vsel %vm2417, %v2419, %v2415
        %v2421 = vmul.f32 1.0, %v2420
        %v2422 = vrcp.pop %v1688
        %v2423 = vmul.f32 %v1688, %v2422
        %v2424 = vsub.f32 1.0, %v2423
        %v2425 = vmul.f32 %v2422, %v2424
        %v2426 = vadd.f32 %v2422, %v2425
        %vm2427 = vweird.f32 %v1688
        %vm2428 = vweird.f32 %v2422
        %vm2429 = vmor %vm2427, %vm2428
        %v2430 = vsel %vm2429, %v2422, %v2426
        %v2431 = vand.u32 2147483647, %v1688
        %vm2432 = vcmp.eq.f32.partialorder %v2431, 8.507059e+37
        %v2433 = vand.u32 %v1688, 2147483648
        %v2434 = vor.u32 1.1754944e-38, %v2433
        %v2435 = vsel %vm2432, %v2434, %v2430
        %v2436 = vmul.f32 1.0, %v2435
        %v2437 = vrcp.pop %v1689
        %v2438 = vmul.f32 %v1689, %v2437
        %v2439 = vsub.f32 1.0, %v2438
        %v2440 = vmul.f32 %v2437, %v2439
        %v2441 = vadd.f32 %v2437, %v2440
        %vm2442 = vweird.f32 %v1689
        %vm2443 = vweird.f32 %v2437
        %vm2444 = vmor %vm2442, %vm2443
        %v2445 = vsel %vm2444, %v2437, %v2441
        %v2446 = vand.u32 2147483647, %v1689
        %vm2447 = vcmp.eq.f32.partialorder %v2446, 8.507059e+37
        %v2448 = vand.u32 %v1689, 2147483648
        %v2449 = vor.u32 1.1754944e-38, %v2448
        %v2450 = vsel %vm2447, %v2449, %v2445
        %v2451 = vmul.f32 1.0, %v2450
        %v2452 = vrcp.pop %v1690
        %v2453 = vmul.f32 %v1690, %v2452
        %v2454 = vsub.f32 1.0, %v2453
        %v2455 = vmul.f32 %v2452, %v2454
        %v2456 = vadd.f32 %v2452, %v2455
        %vm2457 = vweird.f32 %v1690
        %vm2458 = vweird.f32 %v2452
        %vm2459 = vmor %vm2457, %vm2458
        %v2460 = vsel %vm2459, %v2452, %v2456
        %v2461 = vand.u32 2147483647, %v1690
        %vm2462 = vcmp.eq.f32.partialorder %v2461, 8.507059e+37
        %v2463 = vand.u32 %v1690, 2147483648
        %v2464 = vor.u32 1.1754944e-38, %v2463
        %v2465 = vsel %vm2462, %v2464, %v2460
        %v2466 = vmul.f32 1.0, %v2465
        %v2467 = vrcp.pop %v1691
        %v2468 = vmul.f32 %v1691, %v2467
        %v2469 = vsub.f32 1.0, %v2468
        %v2470 = vmul.f32 %v2467, %v2469
        %v2471 = vadd.f32 %v2467, %v2470
        %vm2472 = vweird.f32 %v1691
        %vm2473 = vweird.f32 %v2467
        %vm2474 = vmor %vm2472, %vm2473
        %v2475 = vsel %vm2474, %v2467, %v2471
        %v2476 = vand.u32 2147483647, %v1691
        %vm2477 = vcmp.eq.f32.partialorder %v2476, 8.507059e+37
        %v2478 = vand.u32 %v1691, 2147483648
        %v2479 = vor.u32 1.1754944e-38, %v2478
        %v2480 = vsel %vm2477, %v2479, %v2475
        %v2481 = vmul.f32 1.0, %v2480
        %v2482 = vrcp.pop %v1692
        %v2483 = vmul.f32 %v1692, %v2482
        %v2484 = vsub.f32 1.0, %v2483
        %v2485 = vmul.f32 %v2482, %v2484
        %v2486 = vadd.f32 %v2482, %v2485
        %vm2487 = vweird.f32 %v1692
        %vm2488 = vweird.f32 %v2482
        %vm2489 = vmor %vm2487, %vm2488
        %v2490 = vsel %vm2489, %v2482, %v2486
        %v2491 = vand.u32 2147483647, %v1692
        %vm2492 = vcmp.eq.f32.partialorder %v2491, 8.507059e+37
        %v2493 = vand.u32 %v1692, 2147483648
        %v2494 = vor.u32 1.1754944e-38, %v2493
        %v2495 = vsel %vm2492, %v2494, %v2490
        %v2496 = vmul.f32 1.0, %v2495
        %v2497 = vrcp.pop %v1693
        %v2498 = vmul.f32 %v1693, %v2497
        %v2499 = vsub.f32 1.0, %v2498
        %v2500 = vmul.f32 %v2497, %v2499
        %v2501 = vadd.f32 %v2497, %v2500
        %vm2502 = vweird.f32 %v1693
        %vm2503 = vweird.f32 %v2497
        %vm2504 = vmor %vm2502, %vm2503
        %v2505 = vsel %vm2504, %v2497, %v2501
        %v2506 = vand.u32 2147483647, %v1693
        %vm2507 = vcmp.eq.f32.partialorder %v2506, 8.507059e+37
        %v2508 = vand.u32 %v1693, 2147483648
        %v2509 = vor.u32 1.1754944e-38, %v2508
        %v2510 = vsel %vm2507, %v2509, %v2505
        %v2511 = vmul.f32 1.0, %v2510
        %v2512 = vrcp.pop %v1694
        %v2513 = vmul.f32 %v1694, %v2512
        %v2514 = vsub.f32 1.0, %v2513
        %v2515 = vmul.f32 %v2512, %v2514
        %v2516 = vadd.f32 %v2512, %v2515
        %vm2517 = vweird.f32 %v1694
        %vm2518 = vweird.f32 %v2512
        %vm2519 = vmor %vm2517, %vm2518
        %v2520 = vsel %vm2519, %v2512, %v2516
        %v2521 = vand.u32 2147483647, %v1694
        %vm2522 = vcmp.eq.f32.partialorder %v2521, 8.507059e+37
        %v2523 = vand.u32 %v1694, 2147483648
        %v2524 = vor.u32 1.1754944e-38, %v2523
        %v2525 = vsel %vm2522, %v2524, %v2520
        %v2526 = vmul.f32 1.0, %v2525
        %v2527 = vrcp.pop %v1695
        %v2528 = vmul.f32 %v1695, %v2527
        %v2529 = vsub.f32 1.0, %v2528
        %v2530 = vmul.f32 %v2527, %v2529
        %v2531 = vadd.f32 %v2527, %v2530
        %vm2532 = vweird.f32 %v1695
        %vm2533 = vweird.f32 %v2527
        %vm2534 = vmor %vm2532, %vm2533
        %v2535 = vsel %vm2534, %v2527, %v2531
        %v2536 = vand.u32 2147483647, %v1695
        %vm2537 = vcmp.eq.f32.partialorder %v2536, 8.507059e+37
        %v2538 = vand.u32 %v1695, 2147483648
        %v2539 = vor.u32 1.1754944e-38, %v2538
        %v2540 = vsel %vm2537, %v2539, %v2535
        %v2541 = vmul.f32 1.0, %v2540
        %v2542 = vrcp.pop %v1696
        %v2543 = vmul.f32 %v1696, %v2542
        %v2544 = vsub.f32 1.0, %v2543
        %v2545 = vmul.f32 %v2542, %v2544
        %v2546 = vadd.f32 %v2542, %v2545
        %vm2547 = vweird.f32 %v1696
        %vm2548 = vweird.f32 %v2542
        %vm2549 = vmor %vm2547, %vm2548
        %v2550 = vsel %vm2549, %v2542, %v2546
        %v2551 = vand.u32 2147483647, %v1696
        %vm2552 = vcmp.eq.f32.partialorder %v2551, 8.507059e+37
        %v2553 = vand.u32 %v1696, 2147483648
        %v2554 = vor.u32 1.1754944e-38, %v2553
        %v2555 = vsel %vm2552, %v2554, %v2550
        %v2556 = vmul.f32 1.0, %v2555
        %v2557 = vrcp.pop %v1697
        %v2558 = vmul.f32 %v1697, %v2557
        %v2559 = vsub.f32 1.0, %v2558
        %v2560 = vmul.f32 %v2557, %v2559
        %v2561 = vadd.f32 %v2557, %v2560
        %vm2562 = vweird.f32 %v1697
        %vm2563 = vweird.f32 %v2557
        %vm2564 = vmor %vm2562, %vm2563
        %v2565 = vsel %vm2564, %v2557, %v2561
        %v2566 = vand.u32 2147483647, %v1697
        %vm2567 = vcmp.eq.f32.partialorder %v2566, 8.507059e+37
        %v2568 = vand.u32 %v1697, 2147483648
        %v2569 = vor.u32 1.1754944e-38, %v2568
        %v2570 = vsel %vm2567, %v2569, %v2565
        %v2571 = vmul.f32 1.0, %v2570
        %v2572 = vrcp.pop %v1698
        %v2573 = vmul.f32 %v1698, %v2572
        %v2574 = vsub.f32 1.0, %v2573
        %v2575 = vmul.f32 %v2572, %v2574
        %v2576 = vadd.f32 %v2572, %v2575
        %vm2577 = vweird.f32 %v1698
        %vm2578 = vweird.f32 %v2572
        %vm2579 = vmor %vm2577, %vm2578
        %v2580 = vsel %vm2579, %v2572, %v2576
        %v2581 = vand.u32 2147483647, %v1698
        %vm2582 = vcmp.eq.f32.partialorder %v2581, 8.507059e+37
        %v2583 = vand.u32 %v1698, 2147483648
        %v2584 = vor.u32 1.1754944e-38, %v2583
        %v2585 = vsel %vm2582, %v2584, %v2580
        %v2586 = vmul.f32 1.0, %v2585
        %v2587 = vrcp.pop %v1699
        %v2588 = vmul.f32 %v1699, %v2587
        %v2589 = vsub.f32 1.0, %v2588
        %v2590 = vmul.f32 %v2587, %v2589
        %v2591 = vadd.f32 %v2587, %v2590
        %vm2592 = vweird.f32 %v1699
        %vm2593 = vweird.f32 %v2587
        %vm2594 = vmor %vm2592, %vm2593
        %v2595 = vsel %vm2594, %v2587, %v2591
        %v2596 = vand.u32 2147483647, %v1699
        %vm2597 = vcmp.eq.f32.partialorder %v2596, 8.507059e+37
        %v2598 = vand.u32 %v1699, 2147483648
        %v2599 = vor.u32 1.1754944e-38, %v2598
        %v2600 = vsel %vm2597, %v2599, %v2595
        %v2601 = vmul.f32 1.0, %v2600
        %v2602 = vrcp.pop %v1700
        %v2603 = vmul.f32 %v1700, %v2602
        %v2604 = vsub.f32 1.0, %v2603
        %v2605 = vmul.f32 %v2602, %v2604
        %v2606 = vadd.f32 %v2602, %v2605
        %vm2607 = vweird.f32 %v1700
        %vm2608 = vweird.f32 %v2602
        %vm2609 = vmor %vm2607, %vm2608
        %v2610 = vsel %vm2609, %v2602, %v2606
        %v2611 = vand.u32 2147483647, %v1700
        %vm2612 = vcmp.eq.f32.partialorder %v2611, 8.507059e+37
        %v2613 = vand.u32 %v1700, 2147483648
        %v2614 = vor.u32 1.1754944e-38, %v2613
        %v2615 = vsel %vm2612, %v2614, %v2610
        %v2616 = vmul.f32 1.0, %v2615
        %v2617 = vrcp.pop %v1701
        %v2618 = vmul.f32 %v1701, %v2617
        %v2619 = vsub.f32 1.0, %v2618
        %v2620 = vmul.f32 %v2617, %v2619
        %v2621 = vadd.f32 %v2617, %v2620
        %vm2622 = vweird.f32 %v1701
        %vm2623 = vweird.f32 %v2617
        %vm2624 = vmor %vm2622, %vm2623
        %v2625 = vsel %vm2624, %v2617, %v2621
        %v2626 = vand.u32 2147483647, %v1701
        %vm2627 = vcmp.eq.f32.partialorder %v2626, 8.507059e+37
        %v2628 = vand.u32 %v1701, 2147483648
        %v2629 = vor.u32 1.1754944e-38, %v2628
        %v2630 = vsel %vm2627, %v2629, %v2625
        %v2631 = vmul.f32 1.0, %v2630
        %v2632 = vrcp.pop %v1702
        %v2633 = vmul.f32 %v1702, %v2632
        %v2634 = vsub.f32 1.0, %v2633
        %v2635 = vmul.f32 %v2632, %v2634
        %v2636 = vadd.f32 %v2632, %v2635
        %vm2637 = vweird.f32 %v1702
        %vm2638 = vweird.f32 %v2632
        %vm2639 = vmor %vm2637, %vm2638
        %v2640 = vsel %vm2639, %v2632, %v2636
        %v2641 = vand.u32 2147483647, %v1702
        %vm2642 = vcmp.eq.f32.partialorder %v2641, 8.507059e+37
        %v2643 = vand.u32 %v1702, 2147483648
        %v2644 = vor.u32 1.1754944e-38, %v2643
        %v2645 = vsel %vm2642, %v2644, %v2640
        %v2646 = vmul.f32 1.0, %v2645
        %v2647 = vrcp.pop %v1703
        %v2648 = vmul.f32 %v1703, %v2647
        %v2649 = vsub.f32 1.0, %v2648
        %v2650 = vmul.f32 %v2647, %v2649
        %v2651 = vadd.f32 %v2647, %v2650
        %vm2652 = vweird.f32 %v1703
        %vm2653 = vweird.f32 %v2647
        %vm2654 = vmor %vm2652, %vm2653
        %v2655 = vsel %vm2654, %v2647, %v2651
        %v2656 = vand.u32 2147483647, %v1703
        %vm2657 = vcmp.eq.f32.partialorder %v2656, 8.507059e+37
        %v2658 = vand.u32 %v1703, 2147483648
        %v2659 = vor.u32 1.1754944e-38, %v2658
        %v2660 = vsel %vm2657, %v2659, %v2655
        %v2661 = vmul.f32 1.0, %v2660
        %v2662 = vrcp.pop %v1704
        %v2663 = vmul.f32 %v1704, %v2662
        %v2664 = vsub.f32 1.0, %v2663
        %v2665 = vmul.f32 %v2662, %v2664
        %v2666 = vadd.f32 %v2662, %v2665
        %vm2667 = vweird.f32 %v1704
        %vm2668 = vweird.f32 %v2662
        %vm2669 = vmor %vm2667, %vm2668
        %v2670 = vsel %vm2669, %v2662, %v2666
        %v2671 = vand.u32 2147483647, %v1704
        %vm2672 = vcmp.eq.f32.partialorder %v2671, 8.507059e+37
        %v2673 = vand.u32 %v1704, 2147483648
        %v2674 = vor.u32 1.1754944e-38, %v2673
        %v2675 = vsel %vm2672, %v2674, %v2670
        %v2676 = vmul.f32 1.0, %v2675
        %v2677 = vrcp.pop %v1705
        %v2678 = vmul.f32 %v1705, %v2677
        %v2679 = vsub.f32 1.0, %v2678
        %v2680 = vmul.f32 %v2677, %v2679
        %v2681 = vadd.f32 %v2677, %v2680
        %vm2682 = vweird.f32 %v1705
        %vm2683 = vweird.f32 %v2677
        %vm2684 = vmor %vm2682, %vm2683
        %v2685 = vsel %vm2684, %v2677, %v2681
        %v2686 = vand.u32 2147483647, %v1705
        %vm2687 = vcmp.eq.f32.partialorder %v2686, 8.507059e+37
        %v2688 = vand.u32 %v1705, 2147483648
        %v2689 = vor.u32 1.1754944e-38, %v2688
        %v2690 = vsel %vm2687, %v2689, %v2685
        %v2691 = vmul.f32 1.0, %v2690
        %v2692 = vrcp.pop %v1706
        %v2693 = vmul.f32 %v1706, %v2692
        %v2694 = vsub.f32 1.0, %v2693
        %v2695 = vmul.f32 %v2692, %v2694
        %v2696 = vadd.f32 %v2692, %v2695
        %vm2697 = vweird.f32 %v1706
        %vm2698 = vweird.f32 %v2692
        %vm2699 = vmor %vm2697, %vm2698
        %v2700 = vsel %vm2699, %v2692, %v2696
        %v2701 = vand.u32 2147483647, %v1706
        %vm2702 = vcmp.eq.f32.partialorder %v2701, 8.507059e+37
        %v2703 = vand.u32 %v1706, 2147483648
        %v2704 = vor.u32 1.1754944e-38, %v2703
        %v2705 = vsel %vm2702, %v2704, %v2700
        %v2706 = vmul.f32 1.0, %v2705
        %v2707 = vrcp.pop %v1707
        %v2708 = vmul.f32 %v1707, %v2707
        %v2709 = vsub.f32 1.0, %v2708
        %v2710 = vmul.f32 %v2707, %v2709
        %v2711 = vadd.f32 %v2707, %v2710
        %vm2712 = vweird.f32 %v1707
        %vm2713 = vweird.f32 %v2707
        %vm2714 = vmor %vm2712, %vm2713
        %v2715 = vsel %vm2714, %v2707, %v2711
        %v2716 = vand.u32 2147483647, %v1707
        %vm2717 = vcmp.eq.f32.partialorder %v2716, 8.507059e+37
        %v2718 = vand.u32 %v1707, 2147483648
        %v2719 = vor.u32 1.1754944e-38, %v2718
        %v2720 = vsel %vm2717, %v2719, %v2715
        %v2721 = vmul.f32 1.0, %v2720
        %v2722 = vrcp.pop %v1708
        %v2723 = vmul.f32 %v1708, %v2722
        %v2724 = vsub.f32 1.0, %v2723
        %v2725 = vmul.f32 %v2722, %v2724
        %v2726 = vadd.f32 %v2722, %v2725
        %vm2727 = vweird.f32 %v1708
        %vm2728 = vweird.f32 %v2722
        %vm2729 = vmor %vm2727, %vm2728
        %v2730 = vsel %vm2729, %v2722, %v2726
        %v2731 = vand.u32 2147483647, %v1708
        %vm2732 = vcmp.eq.f32.partialorder %v2731, 8.507059e+37
        %v2733 = vand.u32 %v1708, 2147483648
        %v2734 = vor.u32 1.1754944e-38, %v2733
        %v2735 = vsel %vm2732, %v2734, %v2730
        %v2736 = vmul.f32 1.0, %v2735
        %v2737 = vrcp.pop %v1709
        %v2738 = vmul.f32 %v1709, %v2737
        %v2739 = vsub.f32 1.0, %v2738
        %v2740 = vmul.f32 %v2737, %v2739
        %v2741 = vadd.f32 %v2737, %v2740
        %vm2742 = vweird.f32 %v1709
        %vm2743 = vweird.f32 %v2737
        %vm2744 = vmor %vm2742, %vm2743
        %v2745 = vsel %vm2744, %v2737, %v2741
        %v2746 = vand.u32 2147483647, %v1709
        %vm2747 = vcmp.eq.f32.partialorder %v2746, 8.507059e+37
        %v2748 = vand.u32 %v1709, 2147483648
        %v2749 = vor.u32 1.1754944e-38, %v2748
        %v2750 = vsel %vm2747, %v2749, %v2745
        %v2751 = vmul.f32 1.0, %v2750
        %v2752 = vrcp.pop %v1710
        %v2753 = vmul.f32 %v1710, %v2752
        %v2754 = vsub.f32 1.0, %v2753
        %v2755 = vmul.f32 %v2752, %v2754
        %v2756 = vadd.f32 %v2752, %v2755
        %vm2757 = vweird.f32 %v1710
        %vm2758 = vweird.f32 %v2752
        %vm2759 = vmor %vm2757, %vm2758
        %v2760 = vsel %vm2759, %v2752, %v2756
        %v2761 = vand.u32 2147483647, %v1710
        %vm2762 = vcmp.eq.f32.partialorder %v2761, 8.507059e+37
        %v2763 = vand.u32 %v1710, 2147483648
        %v2764 = vor.u32 1.1754944e-38, %v2763
        %v2765 = vsel %vm2762, %v2764, %v2760
        %v2766 = vmul.f32 1.0, %v2765
        %v2767 = vrcp.pop %v1711
        %v2768 = vmul.f32 %v1711, %v2767
        %v2769 = vsub.f32 1.0, %v2768
        %v2770 = vmul.f32 %v2767, %v2769
        %v2771 = vadd.f32 %v2767, %v2770
        %vm2772 = vweird.f32 %v1711
        %vm2773 = vweird.f32 %v2767
        %vm2774 = vmor %vm2772, %vm2773
        %v2775 = vsel %vm2774, %v2767, %v2771
        %v2776 = vand.u32 2147483647, %v1711
        %vm2777 = vcmp.eq.f32.partialorder %v2776, 8.507059e+37
        %v2778 = vand.u32 %v1711, 2147483648
        %v2779 = vor.u32 1.1754944e-38, %v2778
        %v2780 = vsel %vm2777, %v2779, %v2775
        %v2781 = vmul.f32 1.0, %v2780
        %v2782 = vrcp.pop %v1712
        %v2783 = vmul.f32 %v1712, %v2782
        %v2784 = vsub.f32 1.0, %v2783
        %v2785 = vmul.f32 %v2782, %v2784
        %v2786 = vadd.f32 %v2782, %v2785
        %vm2787 = vweird.f32 %v1712
        %vm2788 = vweird.f32 %v2782
        %vm2789 = vmor %vm2787, %vm2788
        %v2790 = vsel %vm2789, %v2782, %v2786
        %v2791 = vand.u32 2147483647, %v1712
        %vm2792 = vcmp.eq.f32.partialorder %v2791, 8.507059e+37
        %v2793 = vand.u32 %v1712, 2147483648
        %v2794 = vor.u32 1.1754944e-38, %v2793
        %v2795 = vsel %vm2792, %v2794, %v2790
        %v2796 = vmul.f32 1.0, %v2795
        %v2797 = vrcp.pop %v1713
        %v2798 = vmul.f32 %v1713, %v2797
        %v2799 = vsub.f32 1.0, %v2798
        %v2800 = vmul.f32 %v2797, %v2799
        %v2801 = vadd.f32 %v2797, %v2800
        %vm2802 = vweird.f32 %v1713
        %vm2803 = vweird.f32 %v2797
        %vm2804 = vmor %vm2802, %vm2803
        %v2805 = vsel %vm2804, %v2797, %v2801
        %v2806 = vand.u32 2147483647, %v1713
        %vm2807 = vcmp.eq.f32.partialorder %v2806, 8.507059e+37
        %v2808 = vand.u32 %v1713, 2147483648
        %v2809 = vor.u32 1.1754944e-38, %v2808
        %v2810 = vsel %vm2807, %v2809, %v2805
        %v2811 = vmul.f32 1.0, %v2810
        %v2812 = vrcp.pop %v1714
        %v2813 = vmul.f32 %v1714, %v2812
        %v2814 = vsub.f32 1.0, %v2813
        %v2815 = vmul.f32 %v2812, %v2814
        %v2816 = vadd.f32 %v2812, %v2815
        %vm2817 = vweird.f32 %v1714
        %vm2818 = vweird.f32 %v2812
        %vm2819 = vmor %vm2817, %vm2818
        %v2820 = vsel %vm2819, %v2812, %v2816
        %v2821 = vand.u32 2147483647, %v1714
        %vm2822 = vcmp.eq.f32.partialorder %v2821, 8.507059e+37
        %v2823 = vand.u32 %v1714, 2147483648
        %v2824 = vor.u32 1.1754944e-38, %v2823
        %v2825 = vsel %vm2822, %v2824, %v2820
        %v2826 = vmul.f32 1.0, %v2825
        %v2827 = vrcp.pop %v1715
        %v2828 = vmul.f32 %v1715, %v2827
        %v2829 = vsub.f32 1.0, %v2828
        %v2830 = vmul.f32 %v2827, %v2829
        %v2831 = vadd.f32 %v2827, %v2830
        %vm2832 = vweird.f32 %v1715
        %vm2833 = vweird.f32 %v2827
        %vm2834 = vmor %vm2832, %vm2833
        %v2835 = vsel %vm2834, %v2827, %v2831
        %v2836 = vand.u32 2147483647, %v1715
        %vm2837 = vcmp.eq.f32.partialorder %v2836, 8.507059e+37
        %v2838 = vand.u32 %v1715, 2147483648
        %v2839 = vor.u32 1.1754944e-38, %v2838
        %v2840 = vsel %vm2837, %v2839, %v2835
        %v2841 = vmul.f32 1.0, %v2840
        %v2842 = vrcp.pop %v1716
        %v2843 = vmul.f32 %v1716, %v2842
        %v2844 = vsub.f32 1.0, %v2843
        %v2845 = vmul.f32 %v2842, %v2844
        %v2846 = vadd.f32 %v2842, %v2845
        %vm2847 = vweird.f32 %v1716
        %vm2848 = vweird.f32 %v2842
        %vm2849 = vmor %vm2847, %vm2848
        %v2850 = vsel %vm2849, %v2842, %v2846
        %v2851 = vand.u32 2147483647, %v1716
        %vm2852 = vcmp.eq.f32.partialorder %v2851, 8.507059e+37
        %v2853 = vand.u32 %v1716, 2147483648
        %v2854 = vor.u32 1.1754944e-38, %v2853
        %v2855 = vsel %vm2852, %v2854, %v2850
        %v2856 = vmul.f32 1.0, %v2855
        %v2857 = vrcp.pop %v1717
        %v2858 = vmul.f32 %v1717, %v2857
        %v2859 = vsub.f32 1.0, %v2858
        %v2860 = vmul.f32 %v2857, %v2859
        %v2861 = vadd.f32 %v2857, %v2860
        %vm2862 = vweird.f32 %v1717
        %vm2863 = vweird.f32 %v2857
        %vm2864 = vmor %vm2862, %vm2863
        %v2865 = vsel %vm2864, %v2857, %v2861
        %v2866 = vand.u32 2147483647, %v1717
        %vm2867 = vcmp.eq.f32.partialorder %v2866, 8.507059e+37
        %v2868 = vand.u32 %v1717, 2147483648
        %v2869 = vor.u32 1.1754944e-38, %v2868
        %v2870 = vsel %vm2867, %v2869, %v2865
        %v2871 = vmul.f32 1.0, %v2870
        %v2872 = vrcp.pop %v1718
        %v2873 = vmul.f32 %v1718, %v2872
        %v2874 = vsub.f32 1.0, %v2873
        %v2875 = vmul.f32 %v2872, %v2874
        %v2876 = vadd.f32 %v2872, %v2875
        %vm2877 = vweird.f32 %v1718
        %vm2878 = vweird.f32 %v2872
        %vm2879 = vmor %vm2877, %vm2878
        %v2880 = vsel %vm2879, %v2872, %v2876
        %v2881 = vand.u32 2147483647, %v1718
        %vm2882 = vcmp.eq.f32.partialorder %v2881, 8.507059e+37
        %v2883 = vand.u32 %v1718, 2147483648
        %v2884 = vor.u32 1.1754944e-38, %v2883
        %v2885 = vsel %vm2882, %v2884, %v2880
        %v2886 = vmul.f32 1.0, %v2885
        %v2887 = vrcp.pop %v1719
        %v2888 = vmul.f32 %v1719, %v2887
        %v2889 = vsub.f32 1.0, %v2888
        %v2890 = vmul.f32 %v2887, %v2889
        %v2891 = vadd.f32 %v2887, %v2890
        %vm2892 = vweird.f32 %v1719
        %vm2893 = vweird.f32 %v2887
        %vm2894 = vmor %vm2892, %vm2893
        %v2895 = vsel %vm2894, %v2887, %v2891
        %v2896 = vand.u32 2147483647, %v1719
        %vm2897 = vcmp.eq.f32.partialorder %v2896, 8.507059e+37
        %v2898 = vand.u32 %v1719, 2147483648
        %v2899 = vor.u32 1.1754944e-38, %v2898
        %v2900 = vsel %vm2897, %v2899, %v2895
        %v2901 = vmul.f32 1.0, %v2900
        %v2902 = vrcp.pop %v1720
        %v2903 = vmul.f32 %v1720, %v2902
        %v2904 = vsub.f32 1.0, %v2903
        %v2905 = vmul.f32 %v2902, %v2904
        %v2906 = vadd.f32 %v2902, %v2905
        %vm2907 = vweird.f32 %v1720
        %vm2908 = vweird.f32 %v2902
        %vm2909 = vmor %vm2907, %vm2908
        %v2910 = vsel %vm2909, %v2902, %v2906
        %v2911 = vand.u32 2147483647, %v1720
        %vm2912 = vcmp.eq.f32.partialorder %v2911, 8.507059e+37
        %v2913 = vand.u32 %v1720, 2147483648
        %v2914 = vor.u32 1.1754944e-38, %v2913
        %v2915 = vsel %vm2912, %v2914, %v2910
        %v2916 = vmul.f32 1.0, %v2915
        %v2917 = vrcp.pop %v1721
        %v2918 = vmul.f32 %v1721, %v2917
        %v2919 = vsub.f32 1.0, %v2918
        %v2920 = vmul.f32 %v2917, %v2919
        %v2921 = vadd.f32 %v2917, %v2920
        %vm2922 = vweird.f32 %v1721
        %vm2923 = vweird.f32 %v2917
        %vm2924 = vmor %vm2922, %vm2923
        %v2925 = vsel %vm2924, %v2917, %v2921
        %v2926 = vand.u32 2147483647, %v1721
        %vm2927 = vcmp.eq.f32.partialorder %v2926, 8.507059e+37
        %v2928 = vand.u32 %v1721, 2147483648
        %v2929 = vor.u32 1.1754944e-38, %v2928
        %v2930 = vsel %vm2927, %v2929, %v2925
        %v2931 = vmul.f32 1.0, %v2930
        %v2932 = vrcp.pop %v1722
        %v2933 = vmul.f32 %v1722, %v2932
        %v2934 = vsub.f32 1.0, %v2933
        %v2935 = vmul.f32 %v2932, %v2934
        %v2936 = vadd.f32 %v2932, %v2935
        %vm2937 = vweird.f32 %v1722
        %vm2938 = vweird.f32 %v2932
        %vm2939 = vmor %vm2937, %vm2938
        %v2940 = vsel %vm2939, %v2932, %v2936
        %v2941 = vand.u32 2147483647, %v1722
        %vm2942 = vcmp.eq.f32.partialorder %v2941, 8.507059e+37
        %v2943 = vand.u32 %v1722, 2147483648
        %v2944 = vor.u32 1.1754944e-38, %v2943
        %v2945 = vsel %vm2942, %v2944, %v2940
        %v2946 = vmul.f32 1.0, %v2945
        %v2947 = vrcp.pop %v1723
        %v2948 = vmul.f32 %v1723, %v2947
        %v2949 = vsub.f32 1.0, %v2948
        %v2950 = vmul.f32 %v2947, %v2949
        %v2951 = vadd.f32 %v2947, %v2950
        %vm2952 = vweird.f32 %v1723
        %vm2953 = vweird.f32 %v2947
        %vm2954 = vmor %vm2952, %vm2953
        %v2955 = vsel %vm2954, %v2947, %v2951
        %v2956 = vand.u32 2147483647, %v1723
        %vm2957 = vcmp.eq.f32.partialorder %v2956, 8.507059e+37
        %v2958 = vand.u32 %v1723, 2147483648
        %v2959 = vor.u32 1.1754944e-38, %v2958
        %v2960 = vsel %vm2957, %v2959, %v2955
        %v2961 = vmul.f32 1.0, %v2960
        %v2962 = vrcp.pop %v1724
        %v2963 = vmul.f32 %v1724, %v2962
        %v2964 = vsub.f32 1.0, %v2963
        %v2965 = vmul.f32 %v2962, %v2964
        %v2966 = vadd.f32 %v2962, %v2965
        %vm2967 = vweird.f32 %v1724
        %vm2968 = vweird.f32 %v2962
        %vm2969 = vmor %vm2967, %vm2968
        %v2970 = vsel %vm2969, %v2962, %v2966
        %v2971 = vand.u32 2147483647, %v1724
        %vm2972 = vcmp.eq.f32.partialorder %v2971, 8.507059e+37
        %v2973 = vand.u32 %v1724, 2147483648
        %v2974 = vor.u32 1.1754944e-38, %v2973
        %v2975 = vsel %vm2972, %v2974, %v2970
        %v2976 = vmul.f32 1.0, %v2975
        %v2977 = vrcp.pop %v1725
        %v2978 = vmul.f32 %v1725, %v2977
        %v2979 = vsub.f32 1.0, %v2978
        %v2980 = vmul.f32 %v2977, %v2979
        %v2981 = vadd.f32 %v2977, %v2980
        %vm2982 = vweird.f32 %v1725
        %vm2983 = vweird.f32 %v2977
        %vm2984 = vmor %vm2982, %vm2983
        %v2985 = vsel %vm2984, %v2977, %v2981
        %v2986 = vand.u32 2147483647, %v1725
        %vm2987 = vcmp.eq.f32.partialorder %v2986, 8.507059e+37
        %v2988 = vand.u32 %v1725, 2147483648
        %v2989 = vor.u32 1.1754944e-38, %v2988
        %v2990 = vsel %vm2987, %v2989, %v2985
        %v2991 = vmul.f32 1.0, %v2990
        %v2992 = vrcp.pop %v1726
        %v2993 = vmul.f32 %v1726, %v2992
        %v2994 = vsub.f32 1.0, %v2993
        %v2995 = vmul.f32 %v2992, %v2994
        %v2996 = vadd.f32 %v2992, %v2995
        %vm2997 = vweird.f32 %v1726
        %vm2998 = vweird.f32 %v2992
        %vm2999 = vmor %vm2997, %vm2998
        %v3000 = vsel %vm2999, %v2992, %v2996
        %v3001 = vand.u32 2147483647, %v1726
        %vm3002 = vcmp.eq.f32.partialorder %v3001, 8.507059e+37
        %v3003 = vand.u32 %v1726, 2147483648
        %v3004 = vor.u32 1.1754944e-38, %v3003
        %v3005 = vsel %vm3002, %v3004, %v3000
        %v3006 = vmul.f32 1.0, %v3005
        %v3007 = vrcp.pop %v1727
        %v3008 = vmul.f32 %v1727, %v3007
        %v3009 = vsub.f32 1.0, %v3008
        %v3010 = vmul.f32 %v3007, %v3009
        %v3011 = vadd.f32 %v3007, %v3010
        %vm3012 = vweird.f32 %v1727
        %vm3013 = vweird.f32 %v3007
        %vm3014 = vmor %vm3012, %vm3013
        %v3015 = vsel %vm3014, %v3007, %v3011
        %v3016 = vand.u32 2147483647, %v1727
        %vm3017 = vcmp.eq.f32.partialorder %v3016, 8.507059e+37
        %v3018 = vand.u32 %v1727, 2147483648
        %v3019 = vor.u32 1.1754944e-38, %v3018
        %v3020 = vsel %vm3017, %v3019, %v3015
        %v3021 = vmul.f32 1.0, %v3020
        %v3022 = vrcp.pop %v1728
        %v3023 = vmul.f32 %v1728, %v3022
        %v3024 = vsub.f32 1.0, %v3023
        %v3025 = vmul.f32 %v3022, %v3024
        %v3026 = vadd.f32 %v3022, %v3025
        %vm3027 = vweird.f32 %v1728
        %vm3028 = vweird.f32 %v3022
        %vm3029 = vmor %vm3027, %vm3028
        %v3030 = vsel %vm3029, %v3022, %v3026
        %v3031 = vand.u32 2147483647, %v1728
        %vm3032 = vcmp.eq.f32.partialorder %v3031, 8.507059e+37
        %v3033 = vand.u32 %v1728, 2147483648
        %v3034 = vor.u32 1.1754944e-38, %v3033
        %v3035 = vsel %vm3032, %v3034, %v3030
        %v3036 = vmul.f32 1.0, %v3035
        %v3037 = vrcp.pop %v1729
        %v3038 = vmul.f32 %v1729, %v3037
        %v3039 = vsub.f32 1.0, %v3038
        %v3040 = vmul.f32 %v3037, %v3039
        %v3041 = vadd.f32 %v3037, %v3040
        %vm3042 = vweird.f32 %v1729
        %vm3043 = vweird.f32 %v3037
        %vm3044 = vmor %vm3042, %vm3043
        %v3045 = vsel %vm3044, %v3037, %v3041
        %v3046 = vand.u32 2147483647, %v1729
        %vm3047 = vcmp.eq.f32.partialorder %v3046, 8.507059e+37
        %v3048 = vand.u32 %v1729, 2147483648
        %v3049 = vor.u32 1.1754944e-38, %v3048
        %v3050 = vsel %vm3047, %v3049, %v3045
        %v3051 = vmul.f32 1.0, %v3050
        %v3052 = vrcp.pop %v1730
        %v3053 = vmul.f32 %v1730, %v3052
        %v3054 = vsub.f32 1.0, %v3053
        %v3055 = vmul.f32 %v3052, %v3054
        %v3056 = vadd.f32 %v3052, %v3055
        %vm3057 = vweird.f32 %v1730
        %vm3058 = vweird.f32 %v3052
        %vm3059 = vmor %vm3057, %vm3058
        %v3060 = vsel %vm3059, %v3052, %v3056
        %v3061 = vand.u32 2147483647, %v1730
        %vm3062 = vcmp.eq.f32.partialorder %v3061, 8.507059e+37
        %v3063 = vand.u32 %v1730, 2147483648
        %v3064 = vor.u32 1.1754944e-38, %v3063
        %v3065 = vsel %vm3062, %v3064, %v3060
        %v3066 = vmul.f32 1.0, %v3065
        %v3067 = vrcp.pop %v1731
        %v3068 = vmul.f32 %v1731, %v3067
        %v3069 = vsub.f32 1.0, %v3068
        %v3070 = vmul.f32 %v3067, %v3069
        %v3071 = vadd.f32 %v3067, %v3070
        %vm3072 = vweird.f32 %v1731
        %vm3073 = vweird.f32 %v3067
        %vm3074 = vmor %vm3072, %vm3073
        %v3075 = vsel %vm3074, %v3067, %v3071
        %v3076 = vand.u32 2147483647, %v1731
        %vm3077 = vcmp.eq.f32.partialorder %v3076, 8.507059e+37
        %v3078 = vand.u32 %v1731, 2147483648
        %v3079 = vor.u32 1.1754944e-38, %v3078
        %v3080 = vsel %vm3077, %v3079, %v3075
        %v3081 = vmul.f32 1.0, %v3080
        %v3082 = vrcp.pop %v1732
        %v3083 = vmul.f32 %v1732, %v3082
        %v3084 = vsub.f32 1.0, %v3083
        %v3085 = vmul.f32 %v3082, %v3084
        %v3086 = vadd.f32 %v3082, %v3085
        %vm3087 = vweird.f32 %v1732
        %vm3088 = vweird.f32 %v3082
        %vm3089 = vmor %vm3087, %vm3088
        %v3090 = vsel %vm3089, %v3082, %v3086
        %v3091 = vand.u32 2147483647, %v1732
        %vm3092 = vcmp.eq.f32.partialorder %v3091, 8.507059e+37
        %v3093 = vand.u32 %v1732, 2147483648
        %v3094 = vor.u32 1.1754944e-38, %v3093
        %v3095 = vsel %vm3092, %v3094, %v3090
        %v3096 = vmul.f32 1.0, %v3095
        %v3097 = vrcp.pop %v1733
        %v3098 = vmul.f32 %v1733, %v3097
        %v3099 = vsub.f32 1.0, %v3098
        %v3100 = vmul.f32 %v3097, %v3099
        %v3101 = vadd.f32 %v3097, %v3100
        %vm3102 = vweird.f32 %v1733
        %vm3103 = vweird.f32 %v3097
        %vm3104 = vmor %vm3102, %vm3103
        %v3105 = vsel %vm3104, %v3097, %v3101
        %v3106 = vand.u32 2147483647, %v1733
        %vm3107 = vcmp.eq.f32.partialorder %v3106, 8.507059e+37
        %v3108 = vand.u32 %v1733, 2147483648
        %v3109 = vor.u32 1.1754944e-38, %v3108
        %v3110 = vsel %vm3107, %v3109, %v3105
        %v3111 = vmul.f32 1.0, %v3110
        %v3112 = vrcp.pop %v1734
        %v3113 = vmul.f32 %v1734, %v3112
        %v3114 = vsub.f32 1.0, %v3113
        %v3115 = vmul.f32 %v3112, %v3114
        %v3116 = vadd.f32 %v3112, %v3115
        %vm3117 = vweird.f32 %v1734
        %vm3118 = vweird.f32 %v3112
        %vm3119 = vmor %vm3117, %vm3118
        %v3120 = vsel %vm3119, %v3112, %v3116
        %v3121 = vand.u32 2147483647, %v1734
        %vm3122 = vcmp.eq.f32.partialorder %v3121, 8.507059e+37
        %v3123 = vand.u32 %v1734, 2147483648
        %v3124 = vor.u32 1.1754944e-38, %v3123
        %v3125 = vsel %vm3122, %v3124, %v3120
        %v3126 = vmul.f32 1.0, %v3125
        %v3127 = vrcp.pop %v1735
        %v3128 = vmul.f32 %v1735, %v3127
        %v3129 = vsub.f32 1.0, %v3128
        %v3130 = vmul.f32 %v3127, %v3129
        %v3131 = vadd.f32 %v3127, %v3130
        %vm3132 = vweird.f32 %v1735
        %vm3133 = vweird.f32 %v3127
        %vm3134 = vmor %vm3132, %vm3133
        %v3135 = vsel %vm3134, %v3127, %v3131
        %v3136 = vand.u32 2147483647, %v1735
        %vm3137 = vcmp.eq.f32.partialorder %v3136, 8.507059e+37
        %v3138 = vand.u32 %v1735, 2147483648
        %v3139 = vor.u32 1.1754944e-38, %v3138
        %v3140 = vsel %vm3137, %v3139, %v3135
        %v3141 = vmul.f32 1.0, %v3140
        %v3142 = vrcp.pop %v1736
        %v3143 = vmul.f32 %v1736, %v3142
        %v3144 = vsub.f32 1.0, %v3143
        %v3145 = vmul.f32 %v3142, %v3144
        %v3146 = vadd.f32 %v3142, %v3145
        %vm3147 = vweird.f32 %v1736
        %vm3148 = vweird.f32 %v3142
        %vm3149 = vmor %vm3147, %vm3148
        %v3150 = vsel %vm3149, %v3142, %v3146
        %v3151 = vand.u32 2147483647, %v1736
        %vm3152 = vcmp.eq.f32.partialorder %v3151, 8.507059e+37
        %v3153 = vand.u32 %v1736, 2147483648
        %v3154 = vor.u32 1.1754944e-38, %v3153
        %v3155 = vsel %vm3152, %v3154, %v3150
        %v3156 = vmul.f32 1.0, %v3155
        %v3157 = vrcp.pop %v1737
        %v3158 = vmul.f32 %v1737, %v3157
        %v3159 = vsub.f32 1.0, %v3158
        %v3160 = vmul.f32 %v3157, %v3159
        %v3161 = vadd.f32 %v3157, %v3160
        %vm3162 = vweird.f32 %v1737
        %vm3163 = vweird.f32 %v3157
        %vm3164 = vmor %vm3162, %vm3163
        %v3165 = vsel %vm3164, %v3157, %v3161
        %v3166 = vand.u32 2147483647, %v1737
        %vm3167 = vcmp.eq.f32.partialorder %v3166, 8.507059e+37
        %v3168 = vand.u32 %v1737, 2147483648
        %v3169 = vor.u32 1.1754944e-38, %v3168
        %v3170 = vsel %vm3167, %v3169, %v3165
        %v3171 = vmul.f32 1.0, %v3170
        %v3172 = vrcp.pop %v1738
        %v3173 = vmul.f32 %v1738, %v3172
        %v3174 = vsub.f32 1.0, %v3173
        %v3175 = vmul.f32 %v3172, %v3174
        %v3176 = vadd.f32 %v3172, %v3175
        %vm3177 = vweird.f32 %v1738
        %vm3178 = vweird.f32 %v3172
        %vm3179 = vmor %vm3177, %vm3178
        %v3180 = vsel %vm3179, %v3172, %v3176
        %v3181 = vand.u32 2147483647, %v1738
        %vm3182 = vcmp.eq.f32.partialorder %v3181, 8.507059e+37
        %v3183 = vand.u32 %v1738, 2147483648
        %v3184 = vor.u32 1.1754944e-38, %v3183
        %v3185 = vsel %vm3182, %v3184, %v3180
        %v3186 = vmul.f32 1.0, %v3185
        %v3187 = vrcp.pop %v1739
        %v3188 = vmul.f32 %v1739, %v3187
        %v3189 = vsub.f32 1.0, %v3188
        %v3190 = vmul.f32 %v3187, %v3189
        %v3191 = vadd.f32 %v3187, %v3190
        %vm3192 = vweird.f32 %v1739
        %vm3193 = vweird.f32 %v3187
        %vm3194 = vmor %vm3192, %vm3193
        %v3195 = vsel %vm3194, %v3187, %v3191
        %v3196 = vand.u32 2147483647, %v1739
        %vm3197 = vcmp.eq.f32.partialorder %v3196, 8.507059e+37
        %v3198 = vand.u32 %v1739, 2147483648
        %v3199 = vor.u32 1.1754944e-38, %v3198
        %v3200 = vsel %vm3197, %v3199, %v3195
        %v3201 = vmul.f32 1.0, %v3200
        %v3202 = vrcp.pop %v1740
        %v3203 = vmul.f32 %v1740, %v3202
        %v3204 = vsub.f32 1.0, %v3203
        %v3205 = vmul.f32 %v3202, %v3204
        %v3206 = vadd.f32 %v3202, %v3205
        %vm3207 = vweird.f32 %v1740
        %vm3208 = vweird.f32 %v3202
        %vm3209 = vmor %vm3207, %vm3208
        %v3210 = vsel %vm3209, %v3202, %v3206
        %v3211 = vand.u32 2147483647, %v1740
        %vm3212 = vcmp.eq.f32.partialorder %v3211, 8.507059e+37
        %v3213 = vand.u32 %v1740, 2147483648
        %v3214 = vor.u32 1.1754944e-38, %v3213
        %v3215 = vsel %vm3212, %v3214, %v3210
        %v3216 = vmul.f32 1.0, %v3215
        %v3217 = vrcp.pop %v1741
        %v3218 = vmul.f32 %v1741, %v3217
        %v3219 = vsub.f32 1.0, %v3218
        %v3220 = vmul.f32 %v3217, %v3219
        %v3221 = vadd.f32 %v3217, %v3220
        %vm3222 = vweird.f32 %v1741
        %vm3223 = vweird.f32 %v3217
        %vm3224 = vmor %vm3222, %vm3223
        %v3225 = vsel %vm3224, %v3217, %v3221
        %v3226 = vand.u32 2147483647, %v1741
        %vm3227 = vcmp.eq.f32.partialorder %v3226, 8.507059e+37
        %v3228 = vand.u32 %v1741, 2147483648
        %v3229 = vor.u32 1.1754944e-38, %v3228
        %v3230 = vsel %vm3227, %v3229, %v3225
        %v3231 = vmul.f32 1.0, %v3230
        %v3232 = vrcp.pop %v1742
        %v3233 = vmul.f32 %v1742, %v3232
        %v3234 = vsub.f32 1.0, %v3233
        %v3235 = vmul.f32 %v3232, %v3234
        %v3236 = vadd.f32 %v3232, %v3235
        %vm3237 = vweird.f32 %v1742
        %vm3238 = vweird.f32 %v3232
        %vm3239 = vmor %vm3237, %vm3238
        %v3240 = vsel %vm3239, %v3232, %v3236
        %v3241 = vand.u32 2147483647, %v1742
        %vm3242 = vcmp.eq.f32.partialorder %v3241, 8.507059e+37
        %v3243 = vand.u32 %v1742, 2147483648
        %v3244 = vor.u32 1.1754944e-38, %v3243
        %v3245 = vsel %vm3242, %v3244, %v3240
        %v3246 = vmul.f32 1.0, %v3245
        %v3247 = vrcp.pop %v1743
        %v3248 = vmul.f32 %v1743, %v3247
        %v3249 = vsub.f32 1.0, %v3248
        %v3250 = vmul.f32 %v3247, %v3249
        %v3251 = vadd.f32 %v3247, %v3250
        %vm3252 = vweird.f32 %v1743
        %vm3253 = vweird.f32 %v3247
        %vm3254 = vmor %vm3252, %vm3253
        %v3255 = vsel %vm3254, %v3247, %v3251
        %v3256 = vand.u32 2147483647, %v1743
        %vm3257 = vcmp.eq.f32.partialorder %v3256, 8.507059e+37
        %v3258 = vand.u32 %v1743, 2147483648
        %v3259 = vor.u32 1.1754944e-38, %v3258
        %v3260 = vsel %vm3257, %v3259, %v3255
        %v3261 = vmul.f32 1.0, %v3260
        %v3262 = vrcp.pop %v1744
        %v3263 = vmul.f32 %v1744, %v3262
        %v3264 = vsub.f32 1.0, %v3263
        %v3265 = vmul.f32 %v3262, %v3264
        %v3266 = vadd.f32 %v3262, %v3265
        %vm3267 = vweird.f32 %v1744
        %vm3268 = vweird.f32 %v3262
        %vm3269 = vmor %vm3267, %vm3268
        %v3270 = vsel %vm3269, %v3262, %v3266
        %v3271 = vand.u32 2147483647, %v1744
        %vm3272 = vcmp.eq.f32.partialorder %v3271, 8.507059e+37
        %v3273 = vand.u32 %v1744, 2147483648
        %v3274 = vor.u32 1.1754944e-38, %v3273
        %v3275 = vsel %vm3272, %v3274, %v3270
        %v3276 = vmul.f32 1.0, %v3275
        %v3277 = vrcp.pop %v1745
        %v3278 = vmul.f32 %v1745, %v3277
        %v3279 = vsub.f32 1.0, %v3278
        %v3280 = vmul.f32 %v3277, %v3279
        %v3281 = vadd.f32 %v3277, %v3280
        %vm3282 = vweird.f32 %v1745
        %vm3283 = vweird.f32 %v3277
        %vm3284 = vmor %vm3282, %vm3283
        %v3285 = vsel %vm3284, %v3277, %v3281
        %v3286 = vand.u32 2147483647, %v1745
        %vm3287 = vcmp.eq.f32.partialorder %v3286, 8.507059e+37
        %v3288 = vand.u32 %v1745, 2147483648
        %v3289 = vor.u32 1.1754944e-38, %v3288
        %v3290 = vsel %vm3287, %v3289, %v3285
        %v3291 = vmul.f32 1.0, %v3290
        %v3292 = vrcp.pop %v1746
        %v3293 = vmul.f32 %v1746, %v3292
        %v3294 = vsub.f32 1.0, %v3293
        %v3295 = vmul.f32 %v3292, %v3294
        %v3296 = vadd.f32 %v3292, %v3295
        %vm3297 = vweird.f32 %v1746
        %vm3298 = vweird.f32 %v3292
        %vm3299 = vmor %vm3297, %vm3298
        %v3300 = vsel %vm3299, %v3292, %v3296
        %v3301 = vand.u32 2147483647, %v1746
        %vm3302 = vcmp.eq.f32.partialorder %v3301, 8.507059e+37
        %v3303 = vand.u32 %v1746, 2147483648
        %v3304 = vor.u32 1.1754944e-38, %v3303
        %v3305 = vsel %vm3302, %v3304, %v3300
        %v3306 = vmul.f32 1.0, %v3305
        %v3307 = vrcp.pop %v1747
        %v3308 = vmul.f32 %v1747, %v3307
        %v3309 = vsub.f32 1.0, %v3308
        %v3310 = vmul.f32 %v3307, %v3309
        %v3311 = vadd.f32 %v3307, %v3310
        %vm3312 = vweird.f32 %v1747
        %vm3313 = vweird.f32 %v3307
        %vm3314 = vmor %vm3312, %vm3313
        %v3315 = vsel %vm3314, %v3307, %v3311
        %v3316 = vand.u32 2147483647, %v1747
        %vm3317 = vcmp.eq.f32.partialorder %v3316, 8.507059e+37
        %v3318 = vand.u32 %v1747, 2147483648
        %v3319 = vor.u32 1.1754944e-38, %v3318
        %v3320 = vsel %vm3317, %v3319, %v3315
        %v3321 = vmul.f32 1.0, %v3320
        %v3322 = vrcp.pop %v1748
        %v3323 = vmul.f32 %v1748, %v3322
        %v3324 = vsub.f32 1.0, %v3323
        %v3325 = vmul.f32 %v3322, %v3324
        %v3326 = vadd.f32 %v3322, %v3325
        %vm3327 = vweird.f32 %v1748
        %vm3328 = vweird.f32 %v3322
        %vm3329 = vmor %vm3327, %vm3328
        %v3330 = vsel %vm3329, %v3322, %v3326
        %v3331 = vand.u32 2147483647, %v1748
        %vm3332 = vcmp.eq.f32.partialorder %v3331, 8.507059e+37
        %v3333 = vand.u32 %v1748, 2147483648
        %v3334 = vor.u32 1.1754944e-38, %v3333
        %v3335 = vsel %vm3332, %v3334, %v3330
        %v3336 = vmul.f32 1.0, %v3335
        %v3337 = vrcp.pop %v1749
        %v3338 = vmul.f32 %v1749, %v3337
        %v3339 = vsub.f32 1.0, %v3338
        %v3340 = vmul.f32 %v3337, %v3339
        %v3341 = vadd.f32 %v3337, %v3340
        %vm3342 = vweird.f32 %v1749
        %vm3343 = vweird.f32 %v3337
        %vm3344 = vmor %vm3342, %vm3343
        %v3345 = vsel %vm3344, %v3337, %v3341
        %v3346 = vand.u32 2147483647, %v1749
        %vm3347 = vcmp.eq.f32.partialorder %v3346, 8.507059e+37
        %v3348 = vand.u32 %v1749, 2147483648
        %v3349 = vor.u32 1.1754944e-38, %v3348
        %v3350 = vsel %vm3347, %v3349, %v3345
        %v3351 = vmul.f32 1.0, %v3350
        %v3352 = vrcp.pop %v1750
        %v3353 = vmul.f32 %v1750, %v3352
        %v3354 = vsub.f32 1.0, %v3353
        %v3355 = vmul.f32 %v3352, %v3354
        %v3356 = vadd.f32 %v3352, %v3355
        %vm3357 = vweird.f32 %v1750
        %vm3358 = vweird.f32 %v3352
        %vm3359 = vmor %vm3357, %vm3358
        %v3360 = vsel %vm3359, %v3352, %v3356
        %v3361 = vand.u32 2147483647, %v1750
        %vm3362 = vcmp.eq.f32.partialorder %v3361, 8.507059e+37
        %v3363 = vand.u32 %v1750, 2147483648
        %v3364 = vor.u32 1.1754944e-38, %v3363
        %v3365 = vsel %vm3362, %v3364, %v3360
        %v3366 = vmul.f32 1.0, %v3365
        %v3367 = vrcp.pop %v1751
        %v3368 = vmul.f32 %v1751, %v3367
        %v3369 = vsub.f32 1.0, %v3368
        %v3370 = vmul.f32 %v3367, %v3369
        %v3371 = vadd.f32 %v3367, %v3370
        %vm3372 = vweird.f32 %v1751
        %vm3373 = vweird.f32 %v3367
        %vm3374 = vmor %vm3372, %vm3373
        %v3375 = vsel %vm3374, %v3367, %v3371
        %v3376 = vand.u32 2147483647, %v1751
        %vm3377 = vcmp.eq.f32.partialorder %v3376, 8.507059e+37
        %v3378 = vand.u32 %v1751, 2147483648
        %v3379 = vor.u32 1.1754944e-38, %v3378
        %v3380 = vsel %vm3377, %v3379, %v3375
        %v3381 = vmul.f32 1.0, %v3380
        %v3382 = vrcp.pop %v1752
        %v3383 = vmul.f32 %v1752, %v3382
        %v3384 = vsub.f32 1.0, %v3383
        %v3385 = vmul.f32 %v3382, %v3384
        %v3386 = vadd.f32 %v3382, %v3385
        %vm3387 = vweird.f32 %v1752
        %vm3388 = vweird.f32 %v3382
        %vm3389 = vmor %vm3387, %vm3388
        %v3390 = vsel %vm3389, %v3382, %v3386
        %v3391 = vand.u32 2147483647, %v1752
        %vm3392 = vcmp.eq.f32.partialorder %v3391, 8.507059e+37
        %v3393 = vand.u32 %v1752, 2147483648
        %v3394 = vor.u32 1.1754944e-38, %v3393
        %v3395 = vsel %vm3392, %v3394, %v3390
        %v3396 = vmul.f32 1.0, %v3395
        %v3397 = vrcp.pop %v1753
        %v3398 = vmul.f32 %v1753, %v3397
        %v3399 = vsub.f32 1.0, %v3398
        %v3400 = vmul.f32 %v3397, %v3399
        %v3401 = vadd.f32 %v3397, %v3400
        %vm3402 = vweird.f32 %v1753
        %vm3403 = vweird.f32 %v3397
        %vm3404 = vmor %vm3402, %vm3403
        %v3405 = vsel %vm3404, %v3397, %v3401
        %v3406 = vand.u32 2147483647, %v1753
        %vm3407 = vcmp.eq.f32.partialorder %v3406, 8.507059e+37
        %v3408 = vand.u32 %v1753, 2147483648
        %v3409 = vor.u32 1.1754944e-38, %v3408
        %v3410 = vsel %vm3407, %v3409, %v3405
        %v3411 = vmul.f32 1.0, %v3410
        %v3412 = vrcp.pop %v1754
        %v3413 = vmul.f32 %v1754, %v3412
        %v3414 = vsub.f32 1.0, %v3413
        %v3415 = vmul.f32 %v3412, %v3414
        %v3416 = vadd.f32 %v3412, %v3415
        %vm3417 = vweird.f32 %v1754
        %vm3418 = vweird.f32 %v3412
        %vm3419 = vmor %vm3417, %vm3418
        %v3420 = vsel %vm3419, %v3412, %v3416
        %v3421 = vand.u32 2147483647, %v1754
        %vm3422 = vcmp.eq.f32.partialorder %v3421, 8.507059e+37
        %v3423 = vand.u32 %v1754, 2147483648
        %v3424 = vor.u32 1.1754944e-38, %v3423
        %v3425 = vsel %vm3422, %v3424, %v3420
        %v3426 = vmul.f32 1.0, %v3425
        %v3427 = vrcp.pop %v1755
        %v3428 = vmul.f32 %v1755, %v3427
        %v3429 = vsub.f32 1.0, %v3428
        %v3430 = vmul.f32 %v3427, %v3429
        %v3431 = vadd.f32 %v3427, %v3430
        %vm3432 = vweird.f32 %v1755
        %vm3433 = vweird.f32 %v3427
        %vm3434 = vmor %vm3432, %vm3433
        %v3435 = vsel %vm3434, %v3427, %v3431
        %v3436 = vand.u32 2147483647, %v1755
        %vm3437 = vcmp.eq.f32.partialorder %v3436, 8.507059e+37
        %v3438 = vand.u32 %v1755, 2147483648
        %v3439 = vor.u32 1.1754944e-38, %v3438
        %v3440 = vsel %vm3437, %v3439, %v3435
        %v3441 = vmul.f32 1.0, %v3440
        %v3442 = vrcp.pop %v1756
        %v3443 = vmul.f32 %v1756, %v3442
        %v3444 = vsub.f32 1.0, %v3443
        %v3445 = vmul.f32 %v3442, %v3444
        %v3446 = vadd.f32 %v3442, %v3445
        %vm3447 = vweird.f32 %v1756
        %vm3448 = vweird.f32 %v3442
        %vm3449 = vmor %vm3447, %vm3448
        %v3450 = vsel %vm3449, %v3442, %v3446
        %v3451 = vand.u32 2147483647, %v1756
        %vm3452 = vcmp.eq.f32.partialorder %v3451, 8.507059e+37
        %v3453 = vand.u32 %v1756, 2147483648
        %v3454 = vor.u32 1.1754944e-38, %v3453
        %v3455 = vsel %vm3452, %v3454, %v3450
        %v3456 = vmul.f32 1.0, %v3455
        %v3457 = vrcp.pop %v1757
        %v3458 = vmul.f32 %v1757, %v3457
        %v3459 = vsub.f32 1.0, %v3458
        %v3460 = vmul.f32 %v3457, %v3459
        %v3461 = vadd.f32 %v3457, %v3460
        %vm3462 = vweird.f32 %v1757
        %vm3463 = vweird.f32 %v3457
        %vm3464 = vmor %vm3462, %vm3463
        %v3465 = vsel %vm3464, %v3457, %v3461
        %v3466 = vand.u32 2147483647, %v1757
        %vm3467 = vcmp.eq.f32.partialorder %v3466, 8.507059e+37
        %v3468 = vand.u32 %v1757, 2147483648
        %v3469 = vor.u32 1.1754944e-38, %v3468
        %v3470 = vsel %vm3467, %v3469, %v3465
        %v3471 = vmul.f32 1.0, %v3470
        %v3472 = vrcp.pop %v1758
        %v3473 = vmul.f32 %v1758, %v3472
        %v3474 = vsub.f32 1.0, %v3473
        %v3475 = vmul.f32 %v3472, %v3474
        %v3476 = vadd.f32 %v3472, %v3475
        %vm3477 = vweird.f32 %v1758
        %vm3478 = vweird.f32 %v3472
        %vm3479 = vmor %vm3477, %vm3478
        %v3480 = vsel %vm3479, %v3472, %v3476
        %v3481 = vand.u32 2147483647, %v1758
        %vm3482 = vcmp.eq.f32.partialorder %v3481, 8.507059e+37
        %v3483 = vand.u32 %v1758, 2147483648
        %v3484 = vor.u32 1.1754944e-38, %v3483
        %v3485 = vsel %vm3482, %v3484, %v3480
        %v3486 = vmul.f32 1.0, %v3485
        %v3487 = vrcp.pop %v1759
        %v3488 = vmul.f32 %v1759, %v3487
        %v3489 = vsub.f32 1.0, %v3488
        %v3490 = vmul.f32 %v3487, %v3489
        %v3491 = vadd.f32 %v3487, %v3490
        %vm3492 = vweird.f32 %v1759
        %vm3493 = vweird.f32 %v3487
        %vm3494 = vmor %vm3492, %vm3493
        %v3495 = vsel %vm3494, %v3487, %v3491
        %v3496 = vand.u32 2147483647, %v1759
        %vm3497 = vcmp.eq.f32.partialorder %v3496, 8.507059e+37
        %v3498 = vand.u32 %v1759, 2147483648
        %v3499 = vor.u32 1.1754944e-38, %v3498
        %v3500 = vsel %vm3497, %v3499, %v3495
        %v3501 = vmul.f32 1.0, %v3500
        %v3502 = vrcp.pop %v1760
        %v3503 = vmul.f32 %v1760, %v3502
        %v3504 = vsub.f32 1.0, %v3503
        %v3505 = vmul.f32 %v3502, %v3504
        %v3506 = vadd.f32 %v3502, %v3505
        %vm3507 = vweird.f32 %v1760
        %vm3508 = vweird.f32 %v3502
        %vm3509 = vmor %vm3507, %vm3508
        %v3510 = vsel %vm3509, %v3502, %v3506
        %v3511 = vand.u32 2147483647, %v1760
        %vm3512 = vcmp.eq.f32.partialorder %v3511, 8.507059e+37
        %v3513 = vand.u32 %v1760, 2147483648
        %v3514 = vor.u32 1.1754944e-38, %v3513
        %v3515 = vsel %vm3512, %v3514, %v3510
        %v3516 = vmul.f32 1.0, %v3515
        %v3517 = vrcp.pop %v1761
        %v3518 = vmul.f32 %v1761, %v3517
        %v3519 = vsub.f32 1.0, %v3518
        %v3520 = vmul.f32 %v3517, %v3519
        %v3521 = vadd.f32 %v3517, %v3520
        %vm3522 = vweird.f32 %v1761
        %vm3523 = vweird.f32 %v3517
        %vm3524 = vmor %vm3522, %vm3523
        %v3525 = vsel %vm3524, %v3517, %v3521
        %v3526 = vand.u32 2147483647, %v1761
        %vm3527 = vcmp.eq.f32.partialorder %v3526, 8.507059e+37
        %v3528 = vand.u32 %v1761, 2147483648
        %v3529 = vor.u32 1.1754944e-38, %v3528
        %v3530 = vsel %vm3527, %v3529, %v3525
        %v3531 = vmul.f32 1.0, %v3530
        %v3532 = vrcp.pop %v1762
        %v3533 = vmul.f32 %v1762, %v3532
        %v3534 = vsub.f32 1.0, %v3533
        %v3535 = vmul.f32 %v3532, %v3534
        %v3536 = vadd.f32 %v3532, %v3535
        %vm3537 = vweird.f32 %v1762
        %vm3538 = vweird.f32 %v3532
        %vm3539 = vmor %vm3537, %vm3538
        %v3540 = vsel %vm3539, %v3532, %v3536
        %v3541 = vand.u32 2147483647, %v1762
        %vm3542 = vcmp.eq.f32.partialorder %v3541, 8.507059e+37
        %v3543 = vand.u32 %v1762, 2147483648
        %v3544 = vor.u32 1.1754944e-38, %v3543
        %v3545 = vsel %vm3542, %v3544, %v3540
        %v3546 = vmul.f32 1.0, %v3545
        %v3547 = vrcp.pop %v1763
        %v3548 = vmul.f32 %v1763, %v3547
        %v3549 = vsub.f32 1.0, %v3548
        %v3550 = vmul.f32 %v3547, %v3549
        %v3551 = vadd.f32 %v3547, %v3550
        %vm3552 = vweird.f32 %v1763
        %vm3553 = vweird.f32 %v3547
        %vm3554 = vmor %vm3552, %vm3553
        %v3555 = vsel %vm3554, %v3547, %v3551
        %v3556 = vand.u32 2147483647, %v1763
        %vm3557 = vcmp.eq.f32.partialorder %v3556, 8.507059e+37
        %v3558 = vand.u32 %v1763, 2147483648
        %v3559 = vor.u32 1.1754944e-38, %v3558
        %v3560 = vsel %vm3557, %v3559, %v3555
        %v3561 = vmul.f32 1.0, %v3560
        %v3562 = vrcp.pop %v1764
        %v3563 = vmul.f32 %v1764, %v3562
        %v3564 = vsub.f32 1.0, %v3563
        %v3565 = vmul.f32 %v3562, %v3564
        %v3566 = vadd.f32 %v3562, %v3565
        %vm3567 = vweird.f32 %v1764
        %vm3568 = vweird.f32 %v3562
        %vm3569 = vmor %vm3567, %vm3568
        %v3570 = vsel %vm3569, %v3562, %v3566
        %v3571 = vand.u32 2147483647, %v1764
        %vm3572 = vcmp.eq.f32.partialorder %v3571, 8.507059e+37
        %v3573 = vand.u32 %v1764, 2147483648
        %v3574 = vor.u32 1.1754944e-38, %v3573
        %v3575 = vsel %vm3572, %v3574, %v3570
        %v3576 = vmul.f32 1.0, %v3575
        %v3577 = vrcp.pop %v1765
        %v3578 = vmul.f32 %v1765, %v3577
        %v3579 = vsub.f32 1.0, %v3578
        %v3580 = vmul.f32 %v3577, %v3579
        %v3581 = vadd.f32 %v3577, %v3580
        %vm3582 = vweird.f32 %v1765
        %vm3583 = vweird.f32 %v3577
        %vm3584 = vmor %vm3582, %vm3583
        %v3585 = vsel %vm3584, %v3577, %v3581
        %v3586 = vand.u32 2147483647, %v1765
        %vm3587 = vcmp.eq.f32.partialorder %v3586, 8.507059e+37
        %v3588 = vand.u32 %v1765, 2147483648
        %v3589 = vor.u32 1.1754944e-38, %v3588
        %v3590 = vsel %vm3587, %v3589, %v3585
        %v3591 = vmul.f32 1.0, %v3590
        %v3592 = vrcp.pop %v1766
        %v3593 = vmul.f32 %v1766, %v3592
        %v3594 = vsub.f32 1.0, %v3593
        %v3595 = vmul.f32 %v3592, %v3594
        %v3596 = vadd.f32 %v3592, %v3595
        %vm3597 = vweird.f32 %v1766
        %vm3598 = vweird.f32 %v3592
        %vm3599 = vmor %vm3597, %vm3598
        %v3600 = vsel %vm3599, %v3592, %v3596
        %v3601 = vand.u32 2147483647, %v1766
        %vm3602 = vcmp.eq.f32.partialorder %v3601, 8.507059e+37
        %v3603 = vand.u32 %v1766, 2147483648
        %v3604 = vor.u32 1.1754944e-38, %v3603
        %v3605 = vsel %vm3602, %v3604, %v3600
        %v3606 = vmul.f32 1.0, %v3605
        %v3607 = vrcp.pop %v1767
        %v3608 = vmul.f32 %v1767, %v3607
        %v3609 = vsub.f32 1.0, %v3608
        %v3610 = vmul.f32 %v3607, %v3609
        %v3611 = vadd.f32 %v3607, %v3610
        %vm3612 = vweird.f32 %v1767
        %vm3613 = vweird.f32 %v3607
        %vm3614 = vmor %vm3612, %vm3613
        %v3615 = vsel %vm3614, %v3607, %v3611
        %v3616 = vand.u32 2147483647, %v1767
        %vm3617 = vcmp.eq.f32.partialorder %v3616, 8.507059e+37
        %v3618 = vand.u32 %v1767, 2147483648
        %v3619 = vor.u32 1.1754944e-38, %v3618
        %v3620 = vsel %vm3617, %v3619, %v3615
        %v3621 = vmul.f32 1.0, %v3620
        %v3622 = vrcp.pop %v1768
        %v3623 = vmul.f32 %v1768, %v3622
        %v3624 = vsub.f32 1.0, %v3623
        %v3625 = vmul.f32 %v3622, %v3624
        %v3626 = vadd.f32 %v3622, %v3625
        %vm3627 = vweird.f32 %v1768
        %vm3628 = vweird.f32 %v3622
        %vm3629 = vmor %vm3627, %vm3628
        %v3630 = vsel %vm3629, %v3622, %v3626
        %v3631 = vand.u32 2147483647, %v1768
        %vm3632 = vcmp.eq.f32.partialorder %v3631, 8.507059e+37
        %v3633 = vand.u32 %v1768, 2147483648
        %v3634 = vor.u32 1.1754944e-38, %v3633
        %v3635 = vsel %vm3632, %v3634, %v3630
        %v3636 = vmul.f32 1.0, %v3635
        %v3637 = vrcp.pop %v1769
        %v3638 = vmul.f32 %v1769, %v3637
        %v3639 = vsub.f32 1.0, %v3638
        %v3640 = vmul.f32 %v3637, %v3639
        %v3641 = vadd.f32 %v3637, %v3640
        %vm3642 = vweird.f32 %v1769
        %vm3643 = vweird.f32 %v3637
        %vm3644 = vmor %vm3642, %vm3643
        %v3645 = vsel %vm3644, %v3637, %v3641
        %v3646 = vand.u32 2147483647, %v1769
        %vm3647 = vcmp.eq.f32.partialorder %v3646, 8.507059e+37
        %v3648 = vand.u32 %v1769, 2147483648
        %v3649 = vor.u32 1.1754944e-38, %v3648
        %v3650 = vsel %vm3647, %v3649, %v3645
        %v3651 = vmul.f32 1.0, %v3650
        %v3652 = vrcp.pop %v1770
        %v3653 = vmul.f32 %v1770, %v3652
        %v3654 = vsub.f32 1.0, %v3653
        %v3655 = vmul.f32 %v3652, %v3654
        %v3656 = vadd.f32 %v3652, %v3655
        %vm3657 = vweird.f32 %v1770
        %vm3658 = vweird.f32 %v3652
        %vm3659 = vmor %vm3657, %vm3658
        %v3660 = vsel %vm3659, %v3652, %v3656
        %v3661 = vand.u32 2147483647, %v1770
        %vm3662 = vcmp.eq.f32.partialorder %v3661, 8.507059e+37
        %v3663 = vand.u32 %v1770, 2147483648
        %v3664 = vor.u32 1.1754944e-38, %v3663
        %v3665 = vsel %vm3662, %v3664, %v3660
        %v3666 = vmul.f32 1.0, %v3665
        %v3667 = vrcp.pop %v1771
        %v3668 = vmul.f32 %v1771, %v3667
        %v3669 = vsub.f32 1.0, %v3668
        %v3670 = vmul.f32 %v3667, %v3669
        %v3671 = vadd.f32 %v3667, %v3670
        %vm3672 = vweird.f32 %v1771
        %vm3673 = vweird.f32 %v3667
        %vm3674 = vmor %vm3672, %vm3673
        %v3675 = vsel %vm3674, %v3667, %v3671
        %v3676 = vand.u32 2147483647, %v1771
        %vm3677 = vcmp.eq.f32.partialorder %v3676, 8.507059e+37
        %v3678 = vand.u32 %v1771, 2147483648
        %v3679 = vor.u32 1.1754944e-38, %v3678
        %v3680 = vsel %vm3677, %v3679, %v3675
        %v3681 = vmul.f32 1.0, %v3680
        %v3682 = vrcp.pop %v1772
        %v3683 = vmul.f32 %v1772, %v3682
        %v3684 = vsub.f32 1.0, %v3683
        %v3685 = vmul.f32 %v3682, %v3684
        %v3686 = vadd.f32 %v3682, %v3685
        %vm3687 = vweird.f32 %v1772
        %vm3688 = vweird.f32 %v3682
        %vm3689 = vmor %vm3687, %vm3688
        %v3690 = vsel %vm3689, %v3682, %v3686
        %v3691 = vand.u32 2147483647, %v1772
        %vm3692 = vcmp.eq.f32.partialorder %v3691, 8.507059e+37
        %v3693 = vand.u32 %v1772, 2147483648
        %v3694 = vor.u32 1.1754944e-38, %v3693
        %v3695 = vsel %vm3692, %v3694, %v3690
        %v3696 = vmul.f32 1.0, %v3695
        %v3697 = vrcp.pop %v1773
        %v3698 = vmul.f32 %v1773, %v3697
        %v3699 = vsub.f32 1.0, %v3698
        %v3700 = vmul.f32 %v3697, %v3699
        %v3701 = vadd.f32 %v3697, %v3700
        %vm3702 = vweird.f32 %v1773
        %vm3703 = vweird.f32 %v3697
        %vm3704 = vmor %vm3702, %vm3703
        %v3705 = vsel %vm3704, %v3697, %v3701
        %v3706 = vand.u32 2147483647, %v1773
        %vm3707 = vcmp.eq.f32.partialorder %v3706, 8.507059e+37
        %v3708 = vand.u32 %v1773, 2147483648
        %v3709 = vor.u32 1.1754944e-38, %v3708
        %v3710 = vsel %vm3707, %v3709, %v3705
        %v3711 = vmul.f32 1.0, %v3710
        %v3712 = vrcp.pop %v1774
        %v3713 = vmul.f32 %v1774, %v3712
        %v3714 = vsub.f32 1.0, %v3713
        %v3715 = vmul.f32 %v3712, %v3714
        %v3716 = vadd.f32 %v3712, %v3715
        %vm3717 = vweird.f32 %v1774
        %vm3718 = vweird.f32 %v3712
        %vm3719 = vmor %vm3717, %vm3718
        %v3720 = vsel %vm3719, %v3712, %v3716
        %v3721 = vand.u32 2147483647, %v1774
        %vm3722 = vcmp.eq.f32.partialorder %v3721, 8.507059e+37
        %v3723 = vand.u32 %v1774, 2147483648
        %v3724 = vor.u32 1.1754944e-38, %v3723
        %v3725 = vsel %vm3722, %v3724, %v3720
        %v3726 = vmul.f32 1.0, %v3725
        %v3727 = vrcp.pop %v1775
        %v3728 = vmul.f32 %v1775, %v3727
        %v3729 = vsub.f32 1.0, %v3728
        %v3730 = vmul.f32 %v3727, %v3729
        %v3731 = vadd.f32 %v3727, %v3730
        %vm3732 = vweird.f32 %v1775
        %vm3733 = vweird.f32 %v3727
        %vm3734 = vmor %vm3732, %vm3733
        %v3735 = vsel %vm3734, %v3727, %v3731
        %v3736 = vand.u32 2147483647, %v1775
        %vm3737 = vcmp.eq.f32.partialorder %v3736, 8.507059e+37
        %v3738 = vand.u32 %v1775, 2147483648
        %v3739 = vor.u32 1.1754944e-38, %v3738
        %v3740 = vsel %vm3737, %v3739, %v3735
        %v3741 = vmul.f32 1.0, %v3740
        %v3742 = vrcp.pop %v1776
        %v3743 = vmul.f32 %v1776, %v3742
        %v3744 = vsub.f32 1.0, %v3743
        %v3745 = vmul.f32 %v3742, %v3744
        %v3746 = vadd.f32 %v3742, %v3745
        %vm3747 = vweird.f32 %v1776
        %vm3748 = vweird.f32 %v3742
        %vm3749 = vmor %vm3747, %vm3748
        %v3750 = vsel %vm3749, %v3742, %v3746
        %v3751 = vand.u32 2147483647, %v1776
        %vm3752 = vcmp.eq.f32.partialorder %v3751, 8.507059e+37
        %v3753 = vand.u32 %v1776, 2147483648
        %v3754 = vor.u32 1.1754944e-38, %v3753
        %v3755 = vsel %vm3752, %v3754, %v3750
        %v3756 = vmul.f32 1.0, %v3755
        %v3757 = vrcp.pop %v1777
        %v3758 = vmul.f32 %v1777, %v3757
        %v3759 = vsub.f32 1.0, %v3758
        %v3760 = vmul.f32 %v3757, %v3759
        %v3761 = vadd.f32 %v3757, %v3760
        %vm3762 = vweird.f32 %v1777
        %vm3763 = vweird.f32 %v3757
        %vm3764 = vmor %vm3762, %vm3763
        %v3765 = vsel %vm3764, %v3757, %v3761
        %v3766 = vand.u32 2147483647, %v1777
        %vm3767 = vcmp.eq.f32.partialorder %v3766, 8.507059e+37
        %v3768 = vand.u32 %v1777, 2147483648
        %v3769 = vor.u32 1.1754944e-38, %v3768
        %v3770 = vsel %vm3767, %v3769, %v3765
        %v3771 = vmul.f32 1.0, %v3770
        %v3772 = vrcp.pop %v1778
        %v3773 = vmul.f32 %v1778, %v3772
        %v3774 = vsub.f32 1.0, %v3773
        %v3775 = vmul.f32 %v3772, %v3774
        %v3776 = vadd.f32 %v3772, %v3775
        %vm3777 = vweird.f32 %v1778
        %vm3778 = vweird.f32 %v3772
        %vm3779 = vmor %vm3777, %vm3778
        %v3780 = vsel %vm3779, %v3772, %v3776
        %v3781 = vand.u32 2147483647, %v1778
        %vm3782 = vcmp.eq.f32.partialorder %v3781, 8.507059e+37
        %v3783 = vand.u32 %v1778, 2147483648
        %v3784 = vor.u32 1.1754944e-38, %v3783
        %v3785 = vsel %vm3782, %v3784, %v3780
        %v3786 = vmul.f32 1.0, %v3785
        %v3787 = vrcp.pop %v1779
        %v3788 = vmul.f32 %v1779, %v3787
        %v3789 = vsub.f32 1.0, %v3788
        %v3790 = vmul.f32 %v3787, %v3789
        %v3791 = vadd.f32 %v3787, %v3790
        %vm3792 = vweird.f32 %v1779
        %vm3793 = vweird.f32 %v3787
        %vm3794 = vmor %vm3792, %vm3793
        %v3795 = vsel %vm3794, %v3787, %v3791
        %v3796 = vand.u32 2147483647, %v1779
        %vm3797 = vcmp.eq.f32.partialorder %v3796, 8.507059e+37
        %v3798 = vand.u32 %v1779, 2147483648
        %v3799 = vor.u32 1.1754944e-38, %v3798
        %v3800 = vsel %vm3797, %v3799, %v3795
        %v3801 = vmul.f32 1.0, %v3800
        %v3802 = vrcp.pop %v1780
        %v3803 = vmul.f32 %v1780, %v3802
        %v3804 = vsub.f32 1.0, %v3803
        %v3805 = vmul.f32 %v3802, %v3804
        %v3806 = vadd.f32 %v3802, %v3805
        %vm3807 = vweird.f32 %v1780
        %vm3808 = vweird.f32 %v3802
        %vm3809 = vmor %vm3807, %vm3808
        %v3810 = vsel %vm3809, %v3802, %v3806
        %v3811 = vand.u32 2147483647, %v1780
        %vm3812 = vcmp.eq.f32.partialorder %v3811, 8.507059e+37
        %v3813 = vand.u32 %v1780, 2147483648
        %v3814 = vor.u32 1.1754944e-38, %v3813
        %v3815 = vsel %vm3812, %v3814, %v3810
        %v3816 = vmul.f32 1.0, %v3815
        %v3817 = vrcp.pop %v1781
        %v3818 = vmul.f32 %v1781, %v3817
        %v3819 = vsub.f32 1.0, %v3818
        %v3820 = vmul.f32 %v3817, %v3819
        %v3821 = vadd.f32 %v3817, %v3820
        %vm3822 = vweird.f32 %v1781
        %vm3823 = vweird.f32 %v3817
        %vm3824 = vmor %vm3822, %vm3823
        %v3825 = vsel %vm3824, %v3817, %v3821
        %v3826 = vand.u32 2147483647, %v1781
        %vm3827 = vcmp.eq.f32.partialorder %v3826, 8.507059e+37
        %v3828 = vand.u32 %v1781, 2147483648
        %v3829 = vor.u32 1.1754944e-38, %v3828
        %v3830 = vsel %vm3827, %v3829, %v3825
        %v3831 = vmul.f32 1.0, %v3830
        %v3832 = vrcp.pop %v1782
        %v3833 = vmul.f32 %v1782, %v3832
        %v3834 = vsub.f32 1.0, %v3833
        %v3835 = vmul.f32 %v3832, %v3834
        %v3836 = vadd.f32 %v3832, %v3835
        %vm3837 = vweird.f32 %v1782
        %vm3838 = vweird.f32 %v3832
        %vm3839 = vmor %vm3837, %vm3838
        %v3840 = vsel %vm3839, %v3832, %v3836
        %v3841 = vand.u32 2147483647, %v1782
        %vm3842 = vcmp.eq.f32.partialorder %v3841, 8.507059e+37
        %v3843 = vand.u32 %v1782, 2147483648
        %v3844 = vor.u32 1.1754944e-38, %v3843
        %v3845 = vsel %vm3842, %v3844, %v3840
        %v3846 = vmul.f32 1.0, %v3845
        %v3847 = vrcp.pop %v1783
        %v3848 = vmul.f32 %v1783, %v3847
        %v3849 = vsub.f32 1.0, %v3848
        %v3850 = vmul.f32 %v3847, %v3849
        %v3851 = vadd.f32 %v3847, %v3850
        %vm3852 = vweird.f32 %v1783
        %vm3853 = vweird.f32 %v3847
        %vm3854 = vmor %vm3852, %vm3853
        %v3855 = vsel %vm3854, %v3847, %v3851
        %v3856 = vand.u32 2147483647, %v1783
        %vm3857 = vcmp.eq.f32.partialorder %v3856, 8.507059e+37
        %v3858 = vand.u32 %v1783, 2147483648
        %v3859 = vor.u32 1.1754944e-38, %v3858
        %v3860 = vsel %vm3857, %v3859, %v3855
        %v3861 = vmul.f32 1.0, %v3860
        %v3862 = vrcp.pop %v1784
        %v3863 = vmul.f32 %v1784, %v3862
        %v3864 = vsub.f32 1.0, %v3863
        %v3865 = vmul.f32 %v3862, %v3864
        %v3866 = vadd.f32 %v3862, %v3865
        %vm3867 = vweird.f32 %v1784
        %vm3868 = vweird.f32 %v3862
        %vm3869 = vmor %vm3867, %vm3868
        %v3870 = vsel %vm3869, %v3862, %v3866
        %v3871 = vand.u32 2147483647, %v1784
        %vm3872 = vcmp.eq.f32.partialorder %v3871, 8.507059e+37
        %v3873 = vand.u32 %v1784, 2147483648
        %v3874 = vor.u32 1.1754944e-38, %v3873
        %v3875 = vsel %vm3872, %v3874, %v3870
        %v3876 = vmul.f32 1.0, %v3875
        %v3877 = vrcp.pop %v1785
        %v3878 = vmul.f32 %v1785, %v3877
        %v3879 = vsub.f32 1.0, %v3878
        %v3880 = vmul.f32 %v3877, %v3879
        %v3881 = vadd.f32 %v3877, %v3880
        %vm3882 = vweird.f32 %v1785
        %vm3883 = vweird.f32 %v3877
        %vm3884 = vmor %vm3882, %vm3883
        %v3885 = vsel %vm3884, %v3877, %v3881
        %v3886 = vand.u32 2147483647, %v1785
        %vm3887 = vcmp.eq.f32.partialorder %v3886, 8.507059e+37
        %v3888 = vand.u32 %v1785, 2147483648
        %v3889 = vor.u32 1.1754944e-38, %v3888
        %v3890 = vsel %vm3887, %v3889, %v3885
        %v3891 = vmul.f32 1.0, %v3890
        %v3892 = vrcp.pop %v1786
        %v3893 = vmul.f32 %v1786, %v3892
        %v3894 = vsub.f32 1.0, %v3893
        %v3895 = vmul.f32 %v3892, %v3894
        %v3896 = vadd.f32 %v3892, %v3895
        %vm3897 = vweird.f32 %v1786
        %vm3898 = vweird.f32 %v3892
        %vm3899 = vmor %vm3897, %vm3898
        %v3900 = vsel %vm3899, %v3892, %v3896
        %v3901 = vand.u32 2147483647, %v1786
        %vm3902 = vcmp.eq.f32.partialorder %v3901, 8.507059e+37
        %v3903 = vand.u32 %v1786, 2147483648
        %v3904 = vor.u32 1.1754944e-38, %v3903
        %v3905 = vsel %vm3902, %v3904, %v3900
        %v3906 = vmul.f32 1.0, %v3905
        %v3907 = vrcp.pop %v1787
        %v3908 = vmul.f32 %v1787, %v3907
        %v3909 = vsub.f32 1.0, %v3908
        %v3910 = vmul.f32 %v3907, %v3909
        %v3911 = vadd.f32 %v3907, %v3910
        %vm3912 = vweird.f32 %v1787
        %vm3913 = vweird.f32 %v3907
        %vm3914 = vmor %vm3912, %vm3913
        %v3915 = vsel %vm3914, %v3907, %v3911
        %v3916 = vand.u32 2147483647, %v1787
        %vm3917 = vcmp.eq.f32.partialorder %v3916, 8.507059e+37
        %v3918 = vand.u32 %v1787, 2147483648
        %v3919 = vor.u32 1.1754944e-38, %v3918
        %v3920 = vsel %vm3917, %v3919, %v3915
        %v3921 = vmul.f32 1.0, %v3920
        %v3922 = vrcp.pop %v1788
        %v3923 = vmul.f32 %v1788, %v3922
        %v3924 = vsub.f32 1.0, %v3923
        %v3925 = vmul.f32 %v3922, %v3924
        %v3926 = vadd.f32 %v3922, %v3925
        %vm3927 = vweird.f32 %v1788
        %vm3928 = vweird.f32 %v3922
        %vm3929 = vmor %vm3927, %vm3928
        %v3930 = vsel %vm3929, %v3922, %v3926
        %v3931 = vand.u32 2147483647, %v1788
        %vm3932 = vcmp.eq.f32.partialorder %v3931, 8.507059e+37
        %v3933 = vand.u32 %v1788, 2147483648
        %v3934 = vor.u32 1.1754944e-38, %v3933
        %v3935 = vsel %vm3932, %v3934, %v3930
        %v3936 = vmul.f32 1.0, %v3935
        %v3937 = vrcp.pop %v1789
        %v3938 = vmul.f32 %v1789, %v3937
        %v3939 = vsub.f32 1.0, %v3938
        %v3940 = vmul.f32 %v3937, %v3939
        %v3941 = vadd.f32 %v3937, %v3940
        %vm3942 = vweird.f32 %v1789
        %vm3943 = vweird.f32 %v3937
        %vm3944 = vmor %vm3942, %vm3943
        %v3945 = vsel %vm3944, %v3937, %v3941
        %v3946 = vand.u32 2147483647, %v1789
        %vm3947 = vcmp.eq.f32.partialorder %v3946, 8.507059e+37
        %v3948 = vand.u32 %v1789, 2147483648
        %v3949 = vor.u32 1.1754944e-38, %v3948
        %v3950 = vsel %vm3947, %v3949, %v3945
        %v3951 = vmul.f32 1.0, %v3950
        %v3952 = vrcp.pop %v1790
        %v3953 = vmul.f32 %v1790, %v3952
        %v3954 = vsub.f32 1.0, %v3953
        %v3955 = vmul.f32 %v3952, %v3954
        %v3956 = vadd.f32 %v3952, %v3955
        %vm3957 = vweird.f32 %v1790
        %vm3958 = vweird.f32 %v3952
        %vm3959 = vmor %vm3957, %vm3958
        %v3960 = vsel %vm3959, %v3952, %v3956
        %v3961 = vand.u32 2147483647, %v1790
        %vm3962 = vcmp.eq.f32.partialorder %v3961, 8.507059e+37
        %v3963 = vand.u32 %v1790, 2147483648
        %v3964 = vor.u32 1.1754944e-38, %v3963
        %v3965 = vsel %vm3962, %v3964, %v3960
        %v3966 = vmul.f32 1.0, %v3965
        %v3967 = vrcp.pop %v1791
        %v3968 = vmul.f32 %v1791, %v3967
        %v3969 = vsub.f32 1.0, %v3968
        %v3970 = vmul.f32 %v3967, %v3969
        %v3971 = vadd.f32 %v3967, %v3970
        %vm3972 = vweird.f32 %v1791
        %vm3973 = vweird.f32 %v3967
        %vm3974 = vmor %vm3972, %vm3973
        %v3975 = vsel %vm3974, %v3967, %v3971
        %v3976 = vand.u32 2147483647, %v1791
        %vm3977 = vcmp.eq.f32.partialorder %v3976, 8.507059e+37
        %v3978 = vand.u32 %v1791, 2147483648
        %v3979 = vor.u32 1.1754944e-38, %v3978
        %v3980 = vsel %vm3977, %v3979, %v3975
        %v3981 = vmul.f32 1.0, %v3980
        %v3982 = vrcp.pop %v1792
        %v3983 = vmul.f32 %v1792, %v3982
        %v3984 = vsub.f32 1.0, %v3983
        %v3985 = vmul.f32 %v3982, %v3984
        %v3986 = vadd.f32 %v3982, %v3985
        %vm3987 = vweird.f32 %v1792
        %vm3988 = vweird.f32 %v3982
        %vm3989 = vmor %vm3987, %vm3988
        %v3990 = vsel %vm3989, %v3982, %v3986
        %v3991 = vand.u32 2147483647, %v1792
        %vm3992 = vcmp.eq.f32.partialorder %v3991, 8.507059e+37
        %v3993 = vand.u32 %v1792, 2147483648
        %v3994 = vor.u32 1.1754944e-38, %v3993
        %v3995 = vsel %vm3992, %v3994, %v3990
        %v3996 = vmul.f32 1.0, %v3995
        %v3997 = vrcp.pop %v1793
        %v3998 = vmul.f32 %v1793, %v3997
        %v3999 = vsub.f32 1.0, %v3998
        %v4000 = vmul.f32 %v3997, %v3999
        %v4001 = vadd.f32 %v3997, %v4000
        %vm4002 = vweird.f32 %v1793
        %vm4003 = vweird.f32 %v3997
        %vm4004 = vmor %vm4002, %vm4003
        %v4005 = vsel %vm4004, %v3997, %v4001
        %v4006 = vand.u32 2147483647, %v1793
        %vm4007 = vcmp.eq.f32.partialorder %v4006, 8.507059e+37
        %v4008 = vand.u32 %v1793, 2147483648
        %v4009 = vor.u32 1.1754944e-38, %v4008
        %v4010 = vsel %vm4007, %v4009, %v4005
        %v4011 = vmul.f32 1.0, %v4010
        %v4012 = vrcp.pop %v1794
        %v4013 = vmul.f32 %v1794, %v4012
        %v4014 = vsub.f32 1.0, %v4013
        %v4015 = vmul.f32 %v4012, %v4014
        %v4016 = vadd.f32 %v4012, %v4015
        %vm4017 = vweird.f32 %v1794
        %vm4018 = vweird.f32 %v4012
        %vm4019 = vmor %vm4017, %vm4018
        %v4020 = vsel %vm4019, %v4012, %v4016
        %v4021 = vand.u32 2147483647, %v1794
        %vm4022 = vcmp.eq.f32.partialorder %v4021, 8.507059e+37
        %v4023 = vand.u32 %v1794, 2147483648
        %v4024 = vor.u32 1.1754944e-38, %v4023
        %v4025 = vsel %vm4022, %v4024, %v4020
        %v4026 = vmul.f32 1.0, %v4025
        %v4027 = vrcp.pop %v1795
        %v4028 = vmul.f32 %v1795, %v4027
        %v4029 = vsub.f32 1.0, %v4028
        %v4030 = vmul.f32 %v4027, %v4029
        %v4031 = vadd.f32 %v4027, %v4030
        %vm4032 = vweird.f32 %v1795
        %vm4033 = vweird.f32 %v4027
        %vm4034 = vmor %vm4032, %vm4033
        %v4035 = vsel %vm4034, %v4027, %v4031
        %v4036 = vand.u32 2147483647, %v1795
        %vm4037 = vcmp.eq.f32.partialorder %v4036, 8.507059e+37
        %v4038 = vand.u32 %v1795, 2147483648
        %v4039 = vor.u32 1.1754944e-38, %v4038
        %v4040 = vsel %vm4037, %v4039, %v4035
        %v4041 = vmul.f32 1.0, %v4040
        %v4042 = vrcp.pop %v1796
        %v4043 = vmul.f32 %v1796, %v4042
        %v4044 = vsub.f32 1.0, %v4043
        %v4045 = vmul.f32 %v4042, %v4044
        %v4046 = vadd.f32 %v4042, %v4045
        %vm4047 = vweird.f32 %v1796
        %vm4048 = vweird.f32 %v4042
        %vm4049 = vmor %vm4047, %vm4048
        %v4050 = vsel %vm4049, %v4042, %v4046
        %v4051 = vand.u32 2147483647, %v1796
        %vm4052 = vcmp.eq.f32.partialorder %v4051, 8.507059e+37
        %v4053 = vand.u32 %v1796, 2147483648
        %v4054 = vor.u32 1.1754944e-38, %v4053
        %v4055 = vsel %vm4052, %v4054, %v4050
        %v4056 = vmul.f32 1.0, %v4055
        %v4057 = vrcp.pop %v1797
        %v4058 = vmul.f32 %v1797, %v4057
        %v4059 = vsub.f32 1.0, %v4058
        %v4060 = vmul.f32 %v4057, %v4059
        %v4061 = vadd.f32 %v4057, %v4060
        %vm4062 = vweird.f32 %v1797
        %vm4063 = vweird.f32 %v4057
        %vm4064 = vmor %vm4062, %vm4063
        %v4065 = vsel %vm4064, %v4057, %v4061
        %v4066 = vand.u32 2147483647, %v1797
        %vm4067 = vcmp.eq.f32.partialorder %v4066, 8.507059e+37
        %v4068 = vand.u32 %v1797, 2147483648
        %v4069 = vor.u32 1.1754944e-38, %v4068
        %v4070 = vsel %vm4067, %v4069, %v4065
        %v4071 = vmul.f32 1.0, %v4070
        %v4072 = vrcp.pop %v1798
        %v4073 = vmul.f32 %v1798, %v4072
        %v4074 = vsub.f32 1.0, %v4073
        %v4075 = vmul.f32 %v4072, %v4074
        %v4076 = vadd.f32 %v4072, %v4075
        %vm4077 = vweird.f32 %v1798
        %vm4078 = vweird.f32 %v4072
        %vm4079 = vmor %vm4077, %vm4078
        %v4080 = vsel %vm4079, %v4072, %v4076
        %v4081 = vand.u32 2147483647, %v1798
        %vm4082 = vcmp.eq.f32.partialorder %v4081, 8.507059e+37
        %v4083 = vand.u32 %v1798, 2147483648
        %v4084 = vor.u32 1.1754944e-38, %v4083
        %v4085 = vsel %vm4082, %v4084, %v4080
        %v4086 = vmul.f32 1.0, %v4085
        %v4087 = vrcp.pop %v1799
        %v4088 = vmul.f32 %v1799, %v4087
        %v4089 = vsub.f32 1.0, %v4088
        %v4090 = vmul.f32 %v4087, %v4089
        %v4091 = vadd.f32 %v4087, %v4090
        %vm4092 = vweird.f32 %v1799
        %vm4093 = vweird.f32 %v4087
        %vm4094 = vmor %vm4092, %vm4093
        %v4095 = vsel %vm4094, %v4087, %v4091
        %v4096 = vand.u32 2147483647, %v1799
        %vm4097 = vcmp.eq.f32.partialorder %v4096, 8.507059e+37
        %v4098 = vand.u32 %v1799, 2147483648
        %v4099 = vor.u32 1.1754944e-38, %v4098
        %v4100 = vsel %vm4097, %v4099, %v4095
        %v4101 = vmul.f32 1.0, %v4100
        %v4102 = vrcp.pop %v1800
        %v4103 = vmul.f32 %v1800, %v4102
        %v4104 = vsub.f32 1.0, %v4103
        %v4105 = vmul.f32 %v4102, %v4104
        %v4106 = vadd.f32 %v4102, %v4105
        %vm4107 = vweird.f32 %v1800
        %vm4108 = vweird.f32 %v4102
        %vm4109 = vmor %vm4107, %vm4108
        %v4110 = vsel %vm4109, %v4102, %v4106
        %v4111 = vand.u32 2147483647, %v1800
        %vm4112 = vcmp.eq.f32.partialorder %v4111, 8.507059e+37
        %v4113 = vand.u32 %v1800, 2147483648
        %v4114 = vor.u32 1.1754944e-38, %v4113
        %v4115 = vsel %vm4112, %v4114, %v4110
        %v4116 = vmul.f32 1.0, %v4115
        %v4117 = vrcp.pop %v1801
        %v4118 = vmul.f32 %v1801, %v4117
        %v4119 = vsub.f32 1.0, %v4118
        %v4120 = vmul.f32 %v4117, %v4119
        %v4121 = vadd.f32 %v4117, %v4120
        %vm4122 = vweird.f32 %v1801
        %vm4123 = vweird.f32 %v4117
        %vm4124 = vmor %vm4122, %vm4123
        %v4125 = vsel %vm4124, %v4117, %v4121
        %v4126 = vand.u32 2147483647, %v1801
        %vm4127 = vcmp.eq.f32.partialorder %v4126, 8.507059e+37
        %v4128 = vand.u32 %v1801, 2147483648
        %v4129 = vor.u32 1.1754944e-38, %v4128
        %v4130 = vsel %vm4127, %v4129, %v4125
        %v4131 = vmul.f32 1.0, %v4130
        %v4132 = vrcp.pop %v1802
        %v4133 = vmul.f32 %v1802, %v4132
        %v4134 = vsub.f32 1.0, %v4133
        %v4135 = vmul.f32 %v4132, %v4134
        %v4136 = vadd.f32 %v4132, %v4135
        %vm4137 = vweird.f32 %v1802
        %vm4138 = vweird.f32 %v4132
        %vm4139 = vmor %vm4137, %vm4138
        %v4140 = vsel %vm4139, %v4132, %v4136
        %v4141 = vand.u32 2147483647, %v1802
        %vm4142 = vcmp.eq.f32.partialorder %v4141, 8.507059e+37
        %v4143 = vand.u32 %v1802, 2147483648
        %v4144 = vor.u32 1.1754944e-38, %v4143
        %v4145 = vsel %vm4142, %v4144, %v4140
        %v4146 = vmul.f32 1.0, %v4145
        %v4147 = vrcp.pop %v1803
        %v4148 = vmul.f32 %v1803, %v4147
        %v4149 = vsub.f32 1.0, %v4148
        %v4150 = vmul.f32 %v4147, %v4149
        %v4151 = vadd.f32 %v4147, %v4150
        %vm4152 = vweird.f32 %v1803
        %vm4153 = vweird.f32 %v4147
        %vm4154 = vmor %vm4152, %vm4153
        %v4155 = vsel %vm4154, %v4147, %v4151
        %v4156 = vand.u32 2147483647, %v1803
        %vm4157 = vcmp.eq.f32.partialorder %v4156, 8.507059e+37
        %v4158 = vand.u32 %v1803, 2147483648
        %v4159 = vor.u32 1.1754944e-38, %v4158
        %v4160 = vsel %vm4157, %v4159, %v4155
        %v4161 = vmul.f32 1.0, %v4160
        %v4162 = vrcp.pop %v1804
        %v4163 = vmul.f32 %v1804, %v4162
        %v4164 = vsub.f32 1.0, %v4163
        %v4165 = vmul.f32 %v4162, %v4164
        %v4166 = vadd.f32 %v4162, %v4165
        %vm4167 = vweird.f32 %v1804
        %vm4168 = vweird.f32 %v4162
        %vm4169 = vmor %vm4167, %vm4168
        %v4170 = vsel %vm4169, %v4162, %v4166
        %v4171 = vand.u32 2147483647, %v1804
        %vm4172 = vcmp.eq.f32.partialorder %v4171, 8.507059e+37
        %v4173 = vand.u32 %v1804, 2147483648
        %v4174 = vor.u32 1.1754944e-38, %v4173
        %v4175 = vsel %vm4172, %v4174, %v4170
        %v4176 = vmul.f32 1.0, %v4175
        %v4177 = vrcp.pop %v1805
        %v4178 = vmul.f32 %v1805, %v4177
        %v4179 = vsub.f32 1.0, %v4178
        %v4180 = vmul.f32 %v4177, %v4179
        %v4181 = vadd.f32 %v4177, %v4180
        %vm4182 = vweird.f32 %v1805
        %vm4183 = vweird.f32 %v4177
        %vm4184 = vmor %vm4182, %vm4183
        %v4185 = vsel %vm4184, %v4177, %v4181
        %v4186 = vand.u32 2147483647, %v1805
        %vm4187 = vcmp.eq.f32.partialorder %v4186, 8.507059e+37
        %v4188 = vand.u32 %v1805, 2147483648
        %v4189 = vor.u32 1.1754944e-38, %v4188
        %v4190 = vsel %vm4187, %v4189, %v4185
        %v4191 = vmul.f32 1.0, %v4190
        %v4192 = vrcp.pop %v1806
        %v4193 = vmul.f32 %v1806, %v4192
        %v4194 = vsub.f32 1.0, %v4193
        %v4195 = vmul.f32 %v4192, %v4194
        %v4196 = vadd.f32 %v4192, %v4195
        %vm4197 = vweird.f32 %v1806
        %vm4198 = vweird.f32 %v4192
        %vm4199 = vmor %vm4197, %vm4198
        %v4200 = vsel %vm4199, %v4192, %v4196
        %v4201 = vand.u32 2147483647, %v1806
        %vm4202 = vcmp.eq.f32.partialorder %v4201, 8.507059e+37
        %v4203 = vand.u32 %v1806, 2147483648
        %v4204 = vor.u32 1.1754944e-38, %v4203
        %v4205 = vsel %vm4202, %v4204, %v4200
        %v4206 = vmul.f32 1.0, %v4205
        %v4207 = vmul.f32 %v687, %v1821
        %v4208 = vmul.f32 %v736, %v1836
        %v4209 = vmul.f32 %v785, %v1851
        %v4210 = vmul.f32 %v834, %v1866
        %v4211 = vmul.f32 %v883, %v1881
        %v4212 = vmul.f32 %v932, %v1896
        %v4213 = vmul.f32 %v981, %v1911
        %v4214 = vmul.f32 %v1030, %v1926
        %v4215 = vmul.f32 %v1079, %v1941
        %v4216 = vmul.f32 %v1128, %v1956
        %v4217 = vmul.f32 %v689, %v1971
        %v4218 = vmul.f32 %v738, %v1986
        %v4219 = vmul.f32 %v787, %v2001
        %v4220 = vmul.f32 %v836, %v2016
        %v4221 = vmul.f32 %v885, %v2031
        %v4222 = vmul.f32 %v934, %v2046
        %v4223 = vmul.f32 %v983, %v2061
        %v4224 = vmul.f32 %v1032, %v2076
        %v4225 = vmul.f32 %v1081, %v2091
        %v4226 = vmul.f32 %v1130, %v2106
        %v4227 = vmul.f32 %v692, %v2121
        %v4228 = vmul.f32 %v741, %v2136
        %v4229 = vmul.f32 %v790, %v2151
        %v4230 = vmul.f32 %v839, %v2166
        %v4231 = vmul.f32 %v888, %v2181
        %v4232 = vmul.f32 %v937, %v2196
        %v4233 = vmul.f32 %v986, %v2211
        %v4234 = vmul.f32 %v1035, %v2226
        %v4235 = vmul.f32 %v1084, %v2241
        %v4236 = vmul.f32 %v1133, %v2256
        %v4237 = vmul.f32 %v694, %v2271
        %v4238 = vmul.f32 %v743, %v2286
        %v4239 = vmul.f32 %v792, %v2301
        %v4240 = vmul.f32 %v841, %v2316
        %v4241 = vmul.f32 %v890, %v2331
        %v4242 = vmul.f32 %v939, %v2346
        %v4243 = vmul.f32 %v988, %v2361
        %v4244 = vmul.f32 %v1037, %v2376
        %v4245 = vmul.f32 %v1086, %v2391
        %v4246 = vmul.f32 %v1135, %v2406
        %v4247 = vmul.f32 %v697, %v2421
        %v4248 = vmul.f32 %v746, %v2436
        %v4249 = vmul.f32 %v795, %v2451
        %v4250 = vmul.f32 %v844, %v2466
        %v4251 = vmul.f32 %v893, %v2481
        %v4252 = vmul.f32 %v942, %v2496
        %v4253 = vmul.f32 %v991, %v2511
        %v4254 = vmul.f32 %v1040, %v2526
        %v4255 = vmul.f32 %v1089, %v2541
        %v4256 = vmul.f32 %v1138, %v2556
        %v4257 = vmul.f32 %v699, %v2571
        %v4258 = vmul.f32 %v748, %v2586
        %v4259 = vmul.f32 %v797, %v2601
        %v4260 = vmul.f32 %v846, %v2616
        %v4261 = vmul.f32 %v895, %v2631
        %v4262 = vmul.f32 %v944, %v2646
        %v4263 = vmul.f32 %v993, %v2661
        %v4264 = vmul.f32 %v1042, %v2676
        %v4265 = vmul.f32 %v1091, %v2691
        %v4266 = vmul.f32 %v1140, %v2706
        %v4267 = vmul.f32 %v702, %v2721
        %v4268 = vmul.f32 %v751, %v2736
        %v4269 = vmul.f32 %v800, %v2751
        %v4270 = vmul.f32 %v849, %v2766
        %v4271 = vmul.f32 %v898, %v2781
        %v4272 = vmul.f32 %v947, %v2796
        %v4273 = vmul.f32 %v996, %v2811
        %v4274 = vmul.f32 %v1045, %v2826
        %v4275 = vmul.f32 %v1094, %v2841
        %v4276 = vmul.f32 %v1143, %v2856
        %v4277 = vmul.f32 %v704, %v2871
        %v4278 = vmul.f32 %v753, %v2886
        %v4279 = vmul.f32 %v802, %v2901
        %v4280 = vmul.f32 %v851, %v2916
        %v4281 = vmul.f32 %v900, %v2931
        %v4282 = vmul.f32 %v949, %v2946
        %v4283 = vmul.f32 %v998, %v2961
        %v4284 = vmul.f32 %v1047, %v2976
        %v4285 = vmul.f32 %v1096, %v2991
        %v4286 = vmul.f32 %v1145, %v3006
        %v4287 = vmul.f32 %v707, %v3021
        %v4288 = vmul.f32 %v756, %v3036
        %v4289 = vmul.f32 %v805, %v3051
        %v4290 = vmul.f32 %v854, %v3066
        %v4291 = vmul.f32 %v903, %v3081
        %v4292 = vmul.f32 %v952, %v3096
        %v4293 = vmul.f32 %v1001, %v3111
        %v4294 = vmul.f32 %v1050, %v3126
        %v4295 = vmul.f32 %v1099, %v3141
        %v4296 = vmul.f32 %v1148, %v3156
        %v4297 = vmul.f32 %v709, %v3171
        %v4298 = vmul.f32 %v758, %v3186
        %v4299 = vmul.f32 %v807, %v3201
        %v4300 = vmul.f32 %v856, %v3216
        %v4301 = vmul.f32 %v905, %v3231
        %v4302 = vmul.f32 %v954, %v3246
        %v4303 = vmul.f32 %v1003, %v3261
        %v4304 = vmul.f32 %v1052, %v3276
        %v4305 = vmul.f32 %v1101, %v3291
        %v4306 = vmul.f32 %v1150, %v3306
        %v4307 = vmul.f32 %v712, %v3321
        %v4308 = vmul.f32 %v761, %v3336
        %v4309 = vmul.f32 %v810, %v3351
        %v4310 = vmul.f32 %v859, %v3366
        %v4311 = vmul.f32 %v908, %v3381
        %v4312 = vmul.f32 %v957, %v3396
        %v4313 = vmul.f32 %v1006, %v3411
        %v4314 = vmul.f32 %v1055, %v3426
        %v4315 = vmul.f32 %v1104, %v3441
        %v4316 = vmul.f32 %v1153, %v3456
        %v4317 = vmul.f32 %v714, %v3471
        %v4318 = vmul.f32 %v763, %v3486
        %v4319 = vmul.f32 %v812, %v3501
        %v4320 = vmul.f32 %v861, %v3516
        %v4321 = vmul.f32 %v910, %v3531
        %v4322 = vmul.f32 %v959, %v3546
        %v4323 = vmul.f32 %v1008, %v3561
        %v4324 = vmul.f32 %v1057, %v3576
        %v4325 = vmul.f32 %v1106, %v3591
        %v4326 = vmul.f32 %v1155, %v3606
        %v4327 = vmul.f32 %v717, %v3621
        %v4328 = vmul.f32 %v766, %v3636
        %v4329 = vmul.f32 %v815, %v3651
        %v4330 = vmul.f32 %v864, %v3666
        %v4331 = vmul.f32 %v913, %v3681
        %v4332 = vmul.f32 %v962, %v3696
        %v4333 = vmul.f32 %v1011, %v3711
        %v4334 = vmul.f32 %v1060, %v3726
        %v4335 = vmul.f32 %v1109, %v3741
        %v4336 = vmul.f32 %v1158, %v3756
        %v4337 = vmul.f32 %v719, %v3771
        %v4338 = vmul.f32 %v768, %v3786
        %v4339 = vmul.f32 %v817, %v3801
        %v4340 = vmul.f32 %v866, %v3816
        %v4341 = vmul.f32 %v915, %v3831
        %v4342 = vmul.f32 %v964, %v3846
        %v4343 = vmul.f32 %v1013, %v3861
        %v4344 = vmul.f32 %v1062, %v3876
        %v4345 = vmul.f32 %v1111, %v3891
        %v4346 = vmul.f32 %v1160, %v3906
        %v4347 = vmul.f32 %v722, %v3921
        %v4348 = vmul.f32 %v771, %v3936
        %v4349 = vmul.f32 %v820, %v3951
        %v4350 = vmul.f32 %v869, %v3966
        %v4351 = vmul.f32 %v918, %v3981
        %v4352 = vmul.f32 %v967, %v3996
        %v4353 = vmul.f32 %v1016, %v4011
        %v4354 = vmul.f32 %v1065, %v4026
        %v4355 = vmul.f32 %v1114, %v4041
        %v4356 = vmul.f32 %v1163, %v4056
        %v4357 = vmul.f32 %v724, %v4071
        %v4358 = vmul.f32 %v773, %v4086
        %v4359 = vmul.f32 %v822, %v4101
        %v4360 = vmul.f32 %v871, %v4116
        %v4361 = vmul.f32 %v920, %v4131
        %v4362 = vmul.f32 %v969, %v4146
        %v4363 = vmul.f32 %v1018, %v4161
        %v4364 = vmul.f32 %v1067, %v4176
        %v4365 = vmul.f32 %v1116, %v4191
        %v4366 = vmul.f32 %v1165, %v4206
        %v4367 = vmax.f32 %v4207, 0.0
        %v4368 = vmax.f32 %v4208, 0.0
        %v4369 = vmax.f32 %v4209, 0.0
        %v4370 = vmax.f32 %v4210, 0.0
        %v4371 = vmax.f32 %v4211, 0.0
        %v4372 = vmax.f32 %v4212, 0.0
        %v4373 = vmax.f32 %v4213, 0.0
        %v4374 = vmax.f32 %v4214, 0.0
        %v4375 = vmax.f32 %v4215, 0.0
        %v4376 = vmax.f32 %v4216, 0.0
        %v4377 = vmax.f32 %v4217, 0.0
        %v4378 = vmax.f32 %v4218, 0.0
        %v4379 = vmax.f32 %v4219, 0.0
        %v4380 = vmax.f32 %v4220, 0.0
        %v4381 = vmax.f32 %v4221, 0.0
        %v4382 = vmax.f32 %v4222, 0.0
        %v4383 = vmax.f32 %v4223, 0.0
        %v4384 = vmax.f32 %v4224, 0.0
        %v4385 = vmax.f32 %v4225, 0.0
        %v4386 = vmax.f32 %v4226, 0.0
        %v4387 = vmax.f32 %v4227, 0.0
        %v4388 = vmax.f32 %v4228, 0.0
        %v4389 = vmax.f32 %v4229, 0.0
        %v4390 = vmax.f32 %v4230, 0.0
        %v4391 = vmax.f32 %v4231, 0.0
        %v4392 = vmax.f32 %v4232, 0.0
        %v4393 = vmax.f32 %v4233, 0.0
        %v4394 = vmax.f32 %v4234, 0.0
        %v4395 = vmax.f32 %v4235, 0.0
        %v4396 = vmax.f32 %v4236, 0.0
        %v4397 = vmax.f32 %v4237, 0.0
        %v4398 = vmax.f32 %v4238, 0.0
        %v4399 = vmax.f32 %v4239, 0.0
        %v4400 = vmax.f32 %v4240, 0.0
        %v4401 = vmax.f32 %v4241, 0.0
        %v4402 = vmax.f32 %v4242, 0.0
        %v4403 = vmax.f32 %v4243, 0.0
        %v4404 = vmax.f32 %v4244, 0.0
        %v4405 = vmax.f32 %v4245, 0.0
        %v4406 = vmax.f32 %v4246, 0.0
        %v4407 = vmax.f32 %v4247, 0.0
        %v4408 = vmax.f32 %v4248, 0.0
        %v4409 = vmax.f32 %v4249, 0.0
        %v4410 = vmax.f32 %v4250, 0.0
        %v4411 = vmax.f32 %v4251, 0.0
        %v4412 = vmax.f32 %v4252, 0.0
        %v4413 = vmax.f32 %v4253, 0.0
        %v4414 = vmax.f32 %v4254, 0.0
        %v4415 = vmax.f32 %v4255, 0.0
        %v4416 = vmax.f32 %v4256, 0.0
        %v4417 = vmax.f32 %v4257, 0.0
        %v4418 = vmax.f32 %v4258, 0.0
        %v4419 = vmax.f32 %v4259, 0.0
        %v4420 = vmax.f32 %v4260, 0.0
        %v4421 = vmax.f32 %v4261, 0.0
        %v4422 = vmax.f32 %v4262, 0.0
        %v4423 = vmax.f32 %v4263, 0.0
        %v4424 = vmax.f32 %v4264, 0.0
        %v4425 = vmax.f32 %v4265, 0.0
        %v4426 = vmax.f32 %v4266, 0.0
        %v4427 = vmax.f32 %v4267, 0.0
        %v4428 = vmax.f32 %v4268, 0.0
        %v4429 = vmax.f32 %v4269, 0.0
        %v4430 = vmax.f32 %v4270, 0.0
        %v4431 = vmax.f32 %v4271, 0.0
        %v4432 = vmax.f32 %v4272, 0.0
        %v4433 = vmax.f32 %v4273, 0.0
        %v4434 = vmax.f32 %v4274, 0.0
        %v4435 = vmax.f32 %v4275, 0.0
        %v4436 = vmax.f32 %v4276, 0.0
        %v4437 = vmax.f32 %v4277, 0.0
        %v4438 = vmax.f32 %v4278, 0.0
        %v4439 = vmax.f32 %v4279, 0.0
        %v4440 = vmax.f32 %v4280, 0.0
        %v4441 = vmax.f32 %v4281, 0.0
        %v4442 = vmax.f32 %v4282, 0.0
        %v4443 = vmax.f32 %v4283, 0.0
        %v4444 = vmax.f32 %v4284, 0.0
        %v4445 = vmax.f32 %v4285, 0.0
        %v4446 = vmax.f32 %v4286, 0.0
        %v4447 = vmax.f32 %v4287, 0.0
        %v4448 = vmax.f32 %v4288, 0.0
        %v4449 = vmax.f32 %v4289, 0.0
        %v4450 = vmax.f32 %v4290, 0.0
        %v4451 = vmax.f32 %v4291, 0.0
        %v4452 = vmax.f32 %v4292, 0.0
        %v4453 = vmax.f32 %v4293, 0.0
        %v4454 = vmax.f32 %v4294, 0.0
        %v4455 = vmax.f32 %v4295, 0.0
        %v4456 = vmax.f32 %v4296, 0.0
        %v4457 = vmax.f32 %v4297, 0.0
        %v4458 = vmax.f32 %v4298, 0.0
        %v4459 = vmax.f32 %v4299, 0.0
        %v4460 = vmax.f32 %v4300, 0.0
        %v4461 = vmax.f32 %v4301, 0.0
        %v4462 = vmax.f32 %v4302, 0.0
        %v4463 = vmax.f32 %v4303, 0.0
        %v4464 = vmax.f32 %v4304, 0.0
        %v4465 = vmax.f32 %v4305, 0.0
        %v4466 = vmax.f32 %v4306, 0.0
        %v4467 = vmax.f32 %v4307, 0.0
        %v4468 = vmax.f32 %v4308, 0.0
        %v4469 = vmax.f32 %v4309, 0.0
        %v4470 = vmax.f32 %v4310, 0.0
        %v4471 = vmax.f32 %v4311, 0.0
        %v4472 = vmax.f32 %v4312, 0.0
        %v4473 = vmax.f32 %v4313, 0.0
        %v4474 = vmax.f32 %v4314, 0.0
        %v4475 = vmax.f32 %v4315, 0.0
        %v4476 = vmax.f32 %v4316, 0.0
        %v4477 = vmax.f32 %v4317, 0.0
        %v4478 = vmax.f32 %v4318, 0.0
        %v4479 = vmax.f32 %v4319, 0.0
        %v4480 = vmax.f32 %v4320, 0.0
        %v4481 = vmax.f32 %v4321, 0.0
        %v4482 = vmax.f32 %v4322, 0.0
        %v4483 = vmax.f32 %v4323, 0.0
        %v4484 = vmax.f32 %v4324, 0.0
        %v4485 = vmax.f32 %v4325, 0.0
        %v4486 = vmax.f32 %v4326, 0.0
        %v4487 = vmax.f32 %v4327, 0.0
        %v4488 = vmax.f32 %v4328, 0.0
        %v4489 = vmax.f32 %v4329, 0.0
        %v4490 = vmax.f32 %v4330, 0.0
        %v4491 = vmax.f32 %v4331, 0.0
        %v4492 = vmax.f32 %v4332, 0.0
        %v4493 = vmax.f32 %v4333, 0.0
        %v4494 = vmax.f32 %v4334, 0.0
        %v4495 = vmax.f32 %v4335, 0.0
        %v4496 = vmax.f32 %v4336, 0.0
        %v4497 = vmax.f32 %v4337, 0.0
        %v4498 = vmax.f32 %v4338, 0.0
        %v4499 = vmax.f32 %v4339, 0.0
        %v4500 = vmax.f32 %v4340, 0.0
        %v4501 = vmax.f32 %v4341, 0.0
        %v4502 = vmax.f32 %v4342, 0.0
        %v4503 = vmax.f32 %v4343, 0.0
        %v4504 = vmax.f32 %v4344, 0.0
        %v4505 = vmax.f32 %v4345, 0.0
        %v4506 = vmax.f32 %v4346, 0.0
        %v4507 = vmax.f32 %v4347, 0.0
        %v4508 = vmax.f32 %v4348, 0.0
        %v4509 = vmax.f32 %v4349, 0.0
        %v4510 = vmax.f32 %v4350, 0.0
        %v4511 = vmax.f32 %v4351, 0.0
        %v4512 = vmax.f32 %v4352, 0.0
        %v4513 = vmax.f32 %v4353, 0.0
        %v4514 = vmax.f32 %v4354, 0.0
        %v4515 = vmax.f32 %v4355, 0.0
        %v4516 = vmax.f32 %v4356, 0.0
        %v4517 = vmax.f32 %v4357, 0.0
        %v4518 = vmax.f32 %v4358, 0.0
        %v4519 = vmax.f32 %v4359, 0.0
        %v4520 = vmax.f32 %v4360, 0.0
        %v4521 = vmax.f32 %v4361, 0.0
        %v4522 = vmax.f32 %v4362, 0.0
        %v4523 = vmax.f32 %v4363, 0.0
        %v4524 = vmax.f32 %v4364, 0.0
        %v4525 = vmax.f32 %v4365, 0.0
        %v4526 = vmax.f32 %v4366, 0.0
        %v4527 = vld [vmem:[#allocation3] sm:$0xff]
        %v4528 = vld [vmem:[#allocation3 + $0x8] sm:$0x3]
        %v4529 = vadd.f32 %v4367, %v4377
        %v4530 = vadd.f32 %v4529, %v4387
        %v4531 = vadd.f32 %v4530, %v4397
        %v4532 = vadd.f32 %v4531, %v4407
        %v4533 = vadd.f32 %v4532, %v4417
        %v4534 = vadd.f32 %v4533, %v4427
        %v4535 = vadd.f32 %v4534, %v4437
        %v4536 = vadd.f32 %v4535, %v4447
        %v4537 = vadd.f32 %v4536, %v4457
        %v4538 = vadd.f32 %v4537, %v4467
        %v4539 = vadd.f32 %v4538, %v4477
        %v4540 = vadd.f32 %v4539, %v4487
        %v4541 = vadd.f32 %v4540, %v4497
        %v4542 = vadd.f32 %v4541, %v4507
        %v4543 = vadd.f32 %v4542, %v4517
        %v4544 = vrot.slane %v4543, 4
        %v4545 = vadd.f32 %v4543, %v4544
        %v4546 = vrot.slane %v4545, 2
        %v4547 = vadd.f32 %v4545, %v4546
        %v4548 = vrot.slane %v4547, 1
        %v4549 = vadd.f32 %v4547, %v4548
        %v4550 = vadd.f32 %v4368, %v4378
        %v4551 = vadd.f32 %v4550, %v4388
        %v4552 = vadd.f32 %v4551, %v4398
        %v4553 = vadd.f32 %v4552, %v4408
        %v4554 = vadd.f32 %v4553, %v4418
        %v4555 = vadd.f32 %v4554, %v4428
        %v4556 = vadd.f32 %v4555, %v4438
        %v4557 = vadd.f32 %v4556, %v4448
        %v4558 = vadd.f32 %v4557, %v4458
        %v4559 = vadd.f32 %v4558, %v4468
        %v4560 = vadd.f32 %v4559, %v4478
        %v4561 = vadd.f32 %v4560, %v4488
        %v4562 = vadd.f32 %v4561, %v4498
        %v4563 = vadd.f32 %v4562, %v4508
        %v4564 = vadd.f32 %v4563, %v4518
        %v4565 = vrot.slane %v4564, 4
        %v4566 = vadd.f32 %v4564, %v4565
        %v4567 = vrot.slane %v4566, 2
        %v4568 = vadd.f32 %v4566, %v4567
        %v4569 = vrot.slane %v4568, 1
        %v4570 = vadd.f32 %v4568, %v4569
        %v4571 = vadd.f32 %v4369, %v4379
        %v4572 = vadd.f32 %v4571, %v4389
        %v4573 = vadd.f32 %v4572, %v4399
        %v4574 = vadd.f32 %v4573, %v4409
        %v4575 = vadd.f32 %v4574, %v4419
        %v4576 = vadd.f32 %v4575, %v4429
        %v4577 = vadd.f32 %v4576, %v4439
        %v4578 = vadd.f32 %v4577, %v4449
        %v4579 = vadd.f32 %v4578, %v4459
        %v4580 = vadd.f32 %v4579, %v4469
        %v4581 = vadd.f32 %v4580, %v4479
        %v4582 = vadd.f32 %v4581, %v4489
        %v4583 = vadd.f32 %v4582, %v4499
        %v4584 = vadd.f32 %v4583, %v4509
        %v4585 = vadd.f32 %v4584, %v4519
        %v4586 = vrot.slane %v4585, 4
        %v4587 = vadd.f32 %v4585, %v4586
        %v4588 = vrot.slane %v4587, 2
        %v4589 = vadd.f32 %v4587, %v4588
        %v4590 = vrot.slane %v4589, 1
        %v4591 = vadd.f32 %v4589, %v4590
        %v4592 = vadd.f32 %v4370, %v4380
        %v4593 = vadd.f32 %v4592, %v4390
        %v4594 = vadd.f32 %v4593, %v4400
        %v4595 = vadd.f32 %v4594, %v4410
        %v4596 = vadd.f32 %v4595, %v4420
        %v4597 = vadd.f32 %v4596, %v4430
        %v4598 = vadd.f32 %v4597, %v4440
        %v4599 = vadd.f32 %v4598, %v4450
        %v4600 = vadd.f32 %v4599, %v4460
        %v4601 = vadd.f32 %v4600, %v4470
        %v4602 = vadd.f32 %v4601, %v4480
        %v4603 = vadd.f32 %v4602, %v4490
        %v4604 = vadd.f32 %v4603, %v4500
        %v4605 = vadd.f32 %v4604, %v4510
        %v4606 = vadd.f32 %v4605, %v4520
        %v4607 = vrot.slane %v4606, 4
        %v4608 = vadd.f32 %v4606, %v4607
        %v4609 = vrot.slane %v4608, 2
        %v4610 = vadd.f32 %v4608, %v4609
        %v4611 = vrot.slane %v4610, 1
        %v4612 = vadd.f32 %v4610, %v4611
        %v4613 = vadd.f32 %v4371, %v4381
        %v4614 = vadd.f32 %v4613, %v4391
        %v4615 = vadd.f32 %v4614, %v4401
        %v4616 = vadd.f32 %v4615, %v4411
        %v4617 = vadd.f32 %v4616, %v4421
        %v4618 = vadd.f32 %v4617, %v4431
        %v4619 = vadd.f32 %v4618, %v4441
        %v4620 = vadd.f32 %v4619, %v4451
        %v4621 = vadd.f32 %v4620, %v4461
        %v4622 = vadd.f32 %v4621, %v4471
        %v4623 = vadd.f32 %v4622, %v4481
        %v4624 = vadd.f32 %v4623, %v4491
        %v4625 = vadd.f32 %v4624, %v4501
        %v4626 = vadd.f32 %v4625, %v4511
        %v4627 = vadd.f32 %v4626, %v4521
        %v4628 = vrot.slane %v4627, 4
        %v4629 = vadd.f32 %v4627, %v4628
        %v4630 = vrot.slane %v4629, 2
        %v4631 = vadd.f32 %v4629, %v4630
        %v4632 = vrot.slane %v4631, 1
        %v4633 = vadd.f32 %v4631, %v4632
        %v4634 = vadd.f32 %v4372, %v4382
        %v4635 = vadd.f32 %v4634, %v4392
        %v4636 = vadd.f32 %v4635, %v4402
        %v4637 = vadd.f32 %v4636, %v4412
        %v4638 = vadd.f32 %v4637, %v4422
        %v4639 = vadd.f32 %v4638, %v4432
        %v4640 = vadd.f32 %v4639, %v4442
        %v4641 = vadd.f32 %v4640, %v4452
        %v4642 = vadd.f32 %v4641, %v4462
        %v4643 = vadd.f32 %v4642, %v4472
        %v4644 = vadd.f32 %v4643, %v4482
        %v4645 = vadd.f32 %v4644, %v4492
        %v4646 = vadd.f32 %v4645, %v4502
        %v4647 = vadd.f32 %v4646, %v4512
        %v4648 = vadd.f32 %v4647, %v4522
        %v4649 = vrot.slane %v4648, 4
        %v4650 = vadd.f32 %v4648, %v4649
        %v4651 = vrot.slane %v4650, 2
        %v4652 = vadd.f32 %v4650, %v4651
        %v4653 = vrot.slane %v4652, 1
        %v4654 = vadd.f32 %v4652, %v4653
        %v4655 = vadd.f32 %v4373, %v4383
        %v4656 = vadd.f32 %v4655, %v4393
        %v4657 = vadd.f32 %v4656, %v4403
        %v4658 = vadd.f32 %v4657, %v4413
        %v4659 = vadd.f32 %v4658, %v4423
        %v4660 = vadd.f32 %v4659, %v4433
        %v4661 = vadd.f32 %v4660, %v4443
        %v4662 = vadd.f32 %v4661, %v4453
        %v4663 = vadd.f32 %v4662, %v4463
        %v4664 = vadd.f32 %v4663, %v4473
        %v4665 = vadd.f32 %v4664, %v4483
        %v4666 = vadd.f32 %v4665, %v4493
        %v4667 = vadd.f32 %v4666, %v4503
        %v4668 = vadd.f32 %v4667, %v4513
        %v4669 = vadd.f32 %v4668, %v4523
        %v4670 = vrot.slane %v4669, 4
        %v4671 = vadd.f32 %v4669, %v4670
        %v4672 = vrot.slane %v4671, 2
        %v4673 = vadd.f32 %v4671, %v4672
        %v4674 = vrot.slane %v4673, 1
        %v4675 = vadd.f32 %v4673, %v4674
        %v4676 = vadd.f32 %v4374, %v4384
        %v4677 = vadd.f32 %v4676, %v4394
        %v4678 = vadd.f32 %v4677, %v4404
        %v4679 = vadd.f32 %v4678, %v4414
        %v4680 = vadd.f32 %v4679, %v4424
        %v4681 = vadd.f32 %v4680, %v4434
        %v4682 = vadd.f32 %v4681, %v4444
        %v4683 = vadd.f32 %v4682, %v4454
        %v4684 = vadd.f32 %v4683, %v4464
        %v4685 = vadd.f32 %v4684, %v4474
        %v4686 = vadd.f32 %v4685, %v4484
        %v4687 = vadd.f32 %v4686, %v4494
        %v4688 = vadd.f32 %v4687, %v4504
        %v4689 = vadd.f32 %v4688, %v4514
        %v4690 = vadd.f32 %v4689, %v4524
        %v4691 = vrot.slane %v4690, 4
        %v4692 = vadd.f32 %v4690, %v4691
        %v4693 = vrot.slane %v4692, 2
        %v4694 = vadd.f32 %v4692, %v4693
        %v4695 = vrot.slane %v4694, 1
        %v4696 = vadd.f32 %v4694, %v4695
        %v4697 = vadd.f32 %v4375, %v4385
        %v4698 = vadd.f32 %v4697, %v4395
        %v4699 = vadd.f32 %v4698, %v4405
        %v4700 = vadd.f32 %v4699, %v4415
        %v4701 = vadd.f32 %v4700, %v4425
        %v4702 = vadd.f32 %v4701, %v4435
        %v4703 = vadd.f32 %v4702, %v4445
        %v4704 = vadd.f32 %v4703, %v4455
        %v4705 = vadd.f32 %v4704, %v4465
        %v4706 = vadd.f32 %v4705, %v4475
        %v4707 = vadd.f32 %v4706, %v4485
        %v4708 = vadd.f32 %v4707, %v4495
        %v4709 = vadd.f32 %v4708, %v4505
        %v4710 = vadd.f32 %v4709, %v4515
        %v4711 = vadd.f32 %v4710, %v4525
        %v4712 = vrot.slane %v4711, 4
        %v4713 = vadd.f32 %v4711, %v4712
        %v4714 = vrot.slane %v4713, 2
        %v4715 = vadd.f32 %v4713, %v4714
        %v4716 = vrot.slane %v4715, 1
        %v4717 = vadd.f32 %v4715, %v4716
        %v4718 = vadd.f32 %v4376, %v4386
        %v4719 = vadd.f32 %v4718, %v4396
        %v4720 = vadd.f32 %v4719, %v4406
        %v4721 = vadd.f32 %v4720, %v4416
        %v4722 = vadd.f32 %v4721, %v4426
        %v4723 = vadd.f32 %v4722, %v4436
        %v4724 = vadd.f32 %v4723, %v4446
        %v4725 = vadd.f32 %v4724, %v4456
        %v4726 = vadd.f32 %v4725, %v4466
        %v4727 = vadd.f32 %v4726, %v4476
        %v4728 = vadd.f32 %v4727, %v4486
        %v4729 = vadd.f32 %v4728, %v4496
        %v4730 = vadd.f32 %v4729, %v4506
        %v4731 = vadd.f32 %v4730, %v4516
        %v4732 = vadd.f32 %v4731, %v4526
        %v4733 = vrot.slane %v4732, 4
        %v4734 = vadd.f32 %v4732, %v4733
        %v4735 = vrot.slane %v4734, 2
        %v4736 = vadd.f32 %v4734, %v4735
        %v4737 = vrot.slane %v4736, 1
        %v4738 = vadd.f32 %v4736, %v4737
        %v4749 = vrot.slane %v4570, 7
        %v4750 = vrot.slane %v4591, 6
        %v4751 = vrot.slane %v4612, 5
        %v4752 = vrot.slane %v4633, 4
        %v4753 = vrot.slane %v4654, 3
        %v4754 = vrot.slane %v4675, 2
        %v4755 = vrot.slane %v4696, 1
        %v4756 = vrot.slane %v4738, 7
        %vm4757 = vcmask 1040384
        %v4758 = vsel %vm4757, %v4549, %v4749
        %vm4759 = vcmask 1042434
        %v4760 = vsel %vm4759, %v4750, %v4751
        %vm4761 = vcmask 1041408
        %v4762 = vsel %vm4761, %v4758, %v4760
        %vm4763 = vcmask 1044484
        %v4764 = vsel %vm4763, %v4752, %v4753
        %vm4765 = vcmask 1046534
        %v4766 = vsel %vm4765, %v4754, %v4755
        %vm4767 = vcmask 1045508
        %v4768 = vsel %vm4767, %v4764, %v4766
        %vm4769 = vcmask 1043456
        %v4770 = vsel %vm4769, %v4762, %v4768
        %v4771 = vsel %vm4757, %v4717, %v4756
        %v4774 = vadd.f32 %v4527, %v4770
        %v4775 = vadd.f32 %v4528, %v4771
        %4776 = vst [vmem:[#allocation3] sm:$0xff] %v4774
        %v4777 = vlaneseq
        %vm4778 = vcmp.ge.s32.totalorder %v4777, 0
        %vm4779 = vcmp.lt.s32.totalorder %v4777, 256
        %vm4780 = vmand %vm4778, %vm4779
        %4781 = vst.msk [vmem:[#allocation3 + $0x8] sm:$0x3] %vm4780, %v4775
        %p4782 = scmp.eq.s32.totalorder %s25, 1
        // Predicated region
        $region49: #{efficientnet_b1_forward.7} parent=43 // pred_check
          %p4783 = pneg %p4782
        $region50: #{efficientnet_b1_forward.7} parent=43 // pred_check_branch
          %4785 = sbr.rel (%p4783) target = $region52
        $region51: #{efficientnet_b1_forward.7} parent=43 // pred_region
          %v4786 = vld [vmem:[#allocation3] sm:$0xff]
          %v4787 = vld [vmem:[#allocation3 + $0x8] sm:$0x3]
          %v4788 = vmul.f32 %v4786, 0.00390625
          %v4789 = vmul.f32 %v4787, 0.00390625
          %v4790 = vld [vmem:[%s4] sm:$0xff]
          %v4791 = vld [vmem:[%s4 + $0x8] sm:$0xff]
          %v4792 = vld [vmem:[%s4 + $0x10] sm:$0xff]
          %v4793 = vld [vmem:[%s4 + $0x18] sm:$0xff]
          %v4794 = vld [vmem:[%s4 + $0x20] sm:$0xff]
          %v4795 = vld [vmem:[%s4 + $0x28] sm:$0xff]
          %v4796 = vld [vmem:[%s4 + $0x30] sm:$0xff]
          %v4797 = vld [vmem:[%s4 + $0x38] sm:$0xff]
          %v4798 = vld [vmem:[%s4 + $0x40] sm:$0xff]
          %v4799 = vld [vmem:[%s4 + $0x48] sm:$0xff]
          %v4800 = vld [vmem:[%s4 + $0x50] sm:$0xff]
          %v4801 = vld [vmem:[%s4 + $0x58] sm:$0xff]
          %v4802 = vld [vmem:[%s4 + $0x60] sm:$0xff]
          %v4803 = vld [vmem:[%s4 + $0x68] sm:$0xff]
          %v4804 = vld [vmem:[%s4 + $0x70] sm:$0xff]
          %v4805 = vld [vmem:[%s4 + $0x78] sm:$0xff]
          %v4806 = vld [vmem:[%s4 + $0x80] sm:$0xff]
          %v4807 = vld [vmem:[%s4 + $0x88] sm:$0xff]
          %v4808 = vld [vmem:[%s4 + $0x90] sm:$0xff]
          %v4809 = vld [vmem:[%s4 + $0x98] sm:$0xff]
          %v4810 = vld [vmem:[%s4 + $0xa0] sm:$0xff]
          %v4811 = vld [vmem:[%s4 + $0xa8] sm:$0xff]
          %v4812 = vld [vmem:[%s4 + $0xb0] sm:$0xff]
          %v4813 = vld [vmem:[%s4 + $0xb8] sm:$0xff]
          %v4814 = vld [vmem:[%s4 + $0xc0] sm:$0xff]
          %v4815 = vld [vmem:[%s4 + $0xc8] sm:$0xff]
          %v4816 = vld [vmem:[%s4 + $0xd0] sm:$0xff]
          %v4817 = vld [vmem:[%s4 + $0xd8] sm:$0xff]
          %v4818 = vld [vmem:[%s4 + $0xe0] sm:$0xff]
          %v4819 = vld [vmem:[%s4 + $0xe8] sm:$0xff]
          %v4820 = vld [vmem:[%s4 + $0xf0] sm:$0xff]
          %v4821 = vld [vmem:[%s4 + $0xf8] sm:$0xff]
          %v4822 = vld [vmem:[%s4 + $0x100] sm:$0xff]
          %v4823 = vld [vmem:[%s4 + $0x108] sm:$0xff]
          %v4824 = vld [vmem:[%s4 + $0x110] sm:$0xff]
          %v4825 = vld [vmem:[%s4 + $0x118] sm:$0xff]
          %v4826 = vld [vmem:[%s4 + $0x120] sm:$0xff]
          %v4827 = vld [vmem:[%s4 + $0x128] sm:$0xff]
          %v4828 = vld [vmem:[%s4 + $0x130] sm:$0xff]
          %v4829 = vld [vmem:[%s4 + $0x138] sm:$0xff]
          %v4830 = vld [vmem:[%s4 + $0x140] sm:$0xff]
          %v4831 = vld [vmem:[%s4 + $0x148] sm:$0xff]
          %v4832 = vld [vmem:[%s4 + $0x150] sm:$0xff]
          %v4833 = vld [vmem:[%s4 + $0x158] sm:$0xff]
          %v4834 = vld [vmem:[%s4 + $0x160] sm:$0xff]
          %v4835 = vld [vmem:[%s4 + $0x168] sm:$0xff]
          %v4836 = vld [vmem:[%s4 + $0x170] sm:$0xff]
          %v4837 = vld [vmem:[%s4 + $0x178] sm:$0xff]
          %v4838 = vld [vmem:[%s4 + $0x180] sm:$0xff]
          %v4839 = vld [vmem:[%s4 + $0x188] sm:$0xff]
          %v4840 = vld [vmem:[%s4 + $0x190] sm:$0xff]
          %v4841 = vld [vmem:[%s4 + $0x198] sm:$0xff]
          %v4842 = vld [vmem:[%s4 + $0x1a0] sm:$0xff]
          %v4843 = vld [vmem:[%s4 + $0x1a8] sm:$0xff]
          %v4844 = vld [vmem:[%s4 + $0x1b0] sm:$0xff]
          %v4845 = vld [vmem:[%s4 + $0x1b8] sm:$0xff]
          %v4846 = vld [vmem:[%s4 + $0x1c0] sm:$0xff]
          %v4847 = vld [vmem:[%s4 + $0x1c8] sm:$0xff]
          %v4848 = vld [vmem:[%s4 + $0x1d0] sm:$0xff]
          %v4849 = vld [vmem:[%s4 + $0x1d8] sm:$0xff]
          %v4850 = vld [vmem:[%s4 + $0x1e0] sm:$0xff]
          %v4851 = vld [vmem:[%s4 + $0x1e8] sm:$0xff]
          %v4852 = vld [vmem:[%s4 + $0x1f0] sm:$0xff]
          %v4853 = vld [vmem:[%s4 + $0x1f8] sm:$0xff]
          %v4854 = vld [vmem:[%s4 + $0x200] sm:$0xff]
          %v4855 = vld [vmem:[%s4 + $0x208] sm:$0xff]
          %v4856 = vld [vmem:[%s4 + $0x210] sm:$0xff]
          %v4857 = vld [vmem:[%s4 + $0x218] sm:$0xff]
          %v4858 = vld [vmem:[%s4 + $0x220] sm:$0xff]
          %v4859 = vld [vmem:[%s4 + $0x228] sm:$0xff]
          %v4860 = vld [vmem:[%s4 + $0x230] sm:$0xff]
          %v4861 = vld [vmem:[%s4 + $0x238] sm:$0xff]
          %v4862 = vld [vmem:[%s4 + $0x240] sm:$0xff]
          %v4863 = vld [vmem:[%s4 + $0x248] sm:$0xff]
          %v4864 = vld [vmem:[%s4 + $0x250] sm:$0xff]
          %v4865 = vld [vmem:[%s4 + $0x258] sm:$0xff]
          %v4866 = vld [vmem:[%s4 + $0x260] sm:$0xff]
          %v4867 = vld [vmem:[%s4 + $0x268] sm:$0xff]
          %v4868 = vld [vmem:[%s4 + $0x270] sm:$0xff]
          %v4869 = vld [vmem:[%s4 + $0x278] sm:$0xff]
          %v4870 = vld [vmem:[%s4 + $0x280] sm:$0xff]
          %v4871 = vld [vmem:[%s4 + $0x288] sm:$0xff]
          %v4872 = vld [vmem:[%s4 + $0x290] sm:$0xff]
          %v4873 = vld [vmem:[%s4 + $0x298] sm:$0xff]
          %v4874 = vld [vmem:[%s4 + $0x2a0] sm:$0xff]
          %v4875 = vld [vmem:[%s4 + $0x2a8] sm:$0xff]
          %v4876 = vld [vmem:[%s4 + $0x2b0] sm:$0xff]
          %v4877 = vld [vmem:[%s4 + $0x2b8] sm:$0xff]
          %v4878 = vld [vmem:[%s4 + $0x2c0] sm:$0xff]
          %v4879 = vld [vmem:[%s4 + $0x2c8] sm:$0xff]
          %v4880 = vld [vmem:[%s4 + $0x2d0] sm:$0xff]
          %v4881 = vld [vmem:[%s4 + $0x2d8] sm:$0xff]
          %v4882 = vld [vmem:[%s4 + $0x2e0] sm:$0xff]
          %v4883 = vld [vmem:[%s4 + $0x2e8] sm:$0xff]
          %v4884 = vld [vmem:[%s4 + $0x2f0] sm:$0xff]
          %v4885 = vld [vmem:[%s4 + $0x2f8] sm:$0xff]
          %v4886 = vld [vmem:[%s4 + $0x300] sm:$0xff]
          %v4887 = vld [vmem:[%s4 + $0x308] sm:$0xff]
          %v4888 = vld [vmem:[%s4 + $0x310] sm:$0xff]
          %v4889 = vld [vmem:[%s4 + $0x318] sm:$0xff]
          %v4890 = vld [vmem:[%s4 + $0x320] sm:$0xff]
          %v4891 = vld [vmem:[%s4 + $0x328] sm:$0xff]
          %v4892 = vld [vmem:[%s4 + $0x330] sm:$0xff]
          %v4893 = vld [vmem:[%s4 + $0x338] sm:$0xff]
          %v4894 = vld [vmem:[%s4 + $0x340] sm:$0xff]
          %v4895 = vld [vmem:[%s4 + $0x348] sm:$0xff]
          %v4896 = vld [vmem:[%s4 + $0x350] sm:$0xff]
          %v4897 = vld [vmem:[%s4 + $0x358] sm:$0xff]
          %v4898 = vld [vmem:[%s4 + $0x360] sm:$0xff]
          %v4899 = vld [vmem:[%s4 + $0x368] sm:$0xff]
          %v4900 = vld [vmem:[%s4 + $0x370] sm:$0xff]
          %v4901 = vld [vmem:[%s4 + $0x378] sm:$0xff]
          %v4902 = vld [vmem:[%s4 + $0x380] sm:$0xff]
          %v4903 = vld [vmem:[%s4 + $0x388] sm:$0xff]
          %v4904 = vld [vmem:[%s4 + $0x390] sm:$0xff]
          %v4905 = vld [vmem:[%s4 + $0x398] sm:$0xff]
          %v4906 = vld [vmem:[%s4 + $0x3a0] sm:$0xff]
          %v4907 = vld [vmem:[%s4 + $0x3a8] sm:$0xff]
          %v4908 = vld [vmem:[%s4 + $0x3b0] sm:$0xff]
          %v4909 = vld [vmem:[%s4 + $0x3b8] sm:$0xff]
          %v4910 = vld [vmem:[%s4 + $0x3c0] sm:$0xff]
          %v4911 = vld [vmem:[%s4 + $0x3c8] sm:$0xff]
          %v4912 = vld [vmem:[%s4 + $0x3d0] sm:$0xff]
          %v4913 = vld [vmem:[%s4 + $0x3d8] sm:$0xff]
          %v4914 = vld [vmem:[%s4 + $0x3e0] sm:$0xff]
          %v4915 = vld [vmem:[%s4 + $0x3e8] sm:$0xff]
          %v4916 = vld [vmem:[%s4 + $0x3f0] sm:$0xff]
          %v4917 = vld [vmem:[%s4 + $0x3f8] sm:$0xff]
          %v4918 = vld [vmem:[%s4 + $0x400] sm:$0xff]
          %v4919 = vld [vmem:[%s4 + $0x408] sm:$0xff]
          %v4920 = vld [vmem:[%s4 + $0x410] sm:$0xff]
          %v4921 = vld [vmem:[%s4 + $0x418] sm:$0xff]
          %v4922 = vld [vmem:[%s4 + $0x420] sm:$0xff]
          %v4923 = vld [vmem:[%s4 + $0x428] sm:$0xff]
          %v4924 = vld [vmem:[%s4 + $0x430] sm:$0xff]
          %v4925 = vld [vmem:[%s4 + $0x438] sm:$0xff]
          %v4926 = vld [vmem:[%s4 + $0x440] sm:$0xff]
          %v4927 = vld [vmem:[%s4 + $0x448] sm:$0xff]
          %v4928 = vld [vmem:[%s4 + $0x450] sm:$0xff]
          %v4929 = vld [vmem:[%s4 + $0x458] sm:$0xff]
          %v4930 = vld [vmem:[%s4 + $0x460] sm:$0xff]
          %v4931 = vld [vmem:[%s4 + $0x468] sm:$0xff]
          %v4932 = vld [vmem:[%s4 + $0x470] sm:$0xff]
          %v4933 = vld [vmem:[%s4 + $0x478] sm:$0xff]
          %v4934 = vld [vmem:[%s4 + $0x480] sm:$0xff]
          %v4935 = vld [vmem:[%s4 + $0x488] sm:$0xff]
          %v4936 = vld [vmem:[%s4 + $0x490] sm:$0xff]
          %v4937 = vld [vmem:[%s4 + $0x498] sm:$0xff]
          %v4938 = vld [vmem:[%s4 + $0x4a0] sm:$0xff]
          %v4939 = vld [vmem:[%s4 + $0x4a8] sm:$0xff]
          %v4940 = vld [vmem:[%s4 + $0x4b0] sm:$0xff]
          %v4941 = vld [vmem:[%s4 + $0x4b8] sm:$0xff]
          %v4942 = vld [vmem:[%s4 + $0x4c0] sm:$0xff]
          %v4943 = vld [vmem:[%s4 + $0x4c8] sm:$0xff]
          %v4944 = vld [vmem:[%s4 + $0x4d0] sm:$0xff]
          %v4945 = vld [vmem:[%s4 + $0x4d8] sm:$0xff]
          %v4946 = vld [vmem:[%s4 + $0x4e0] sm:$0xff]
          %v4947 = vld [vmem:[%s4 + $0x4e8] sm:$0xff]
          %v4948 = vld [vmem:[%s4 + $0x4f0] sm:$0xff]
          %v4949 = vld [vmem:[%s4 + $0x4f8] sm:$0xff]
          %v4950 = vld [vmem:[%s5] sm:$0x1]
          %v4953 = vperm.slane %v4788, 0
          %v4954 = vperm.slane %v4788, 1
          %v4955 = vperm.slane %v4788, 2
          %v4956 = vperm.slane %v4788, 3
          %v4957 = vperm.slane %v4788, 4
          %v4958 = vperm.slane %v4788, 5
          %v4959 = vperm.slane %v4788, 6
          %v4960 = vperm.slane %v4788, 7
          %v4961 = vperm.slane %v4789, 0
          %v4962 = vperm.slane %v4789, 1
          %4973 = vmatpush.msra.mxu0 %v4805
          %4974 = vmatpush.msra.mxu0 %v4804
          %4975 = vmatpush.msra.mxu0 %v4803
          %4976 = vmatpush.msra.mxu0 %v4802
          %4977 = vmatpush.msra.mxu0 %v4801
          %4978 = vmatpush.msra.mxu0 %v4800
          %4979 = vmatpush.msra.mxu0 %v4799
          %4980 = vmatpush.msra.mxu0 %v4798
          %4981 = vmatpush.msra.mxu0 %v4797
          %4982 = vmatpush.msra.mxu0 %v4796
          %4983 = vmatpush.msra.mxu0 %v4795
          %4984 = vmatpush.msra.mxu0 %v4794
          %4985 = vmatpush.msra.mxu0 %v4793
          %4986 = vmatpush.msra.mxu0 %v4792
          %4987 = vmatpush.msra.mxu0 %v4791
          %4988 = vmatpush.msra.mxu0 %v4790
          %4989 = vmatmul.f32.gmra.mxu0 %v4953
          %v4990 = vpop.f32.mrf.mxu0
          %v4991 = vadd.f32 %v4950, %v4990
          %4992 = vdwg.mxu0
          %4993 = vmatpush.msra.mxu0 %v4821
          %4994 = vmatpush.msra.mxu0 %v4820
          %4995 = vmatpush.msra.mxu0 %v4819
          %4996 = vmatpush.msra.mxu0 %v4818
          %4997 = vmatpush.msra.mxu0 %v4817
          %4998 = vmatpush.msra.mxu0 %v4816
          %4999 = vmatpush.msra.mxu0 %v4815
          %5000 = vmatpush.msra.mxu0 %v4814
          %5001 = vmatpush.msra.mxu0 %v4813
          %5002 = vmatpush.msra.mxu0 %v4812
          %5003 = vmatpush.msra.mxu0 %v4811
          %5004 = vmatpush.msra.mxu0 %v4810
          %5005 = vmatpush.msra.mxu0 %v4809
          %5006 = vmatpush.msra.mxu0 %v4808
          %5007 = vmatpush.msra.mxu0 %v4807
          %5008 = vmatpush.msra.mxu0 %v4806
          %5009 = vmatmul.f32.gmra.mxu0 %v4954
          %v5010 = vpop.f32.mrf.mxu0
          %v5011 = vadd.f32 %v4991, %v5010
          %5012 = vdwg.mxu0
          %5013 = vmatpush.msra.mxu0 %v4837
          %5014 = vmatpush.msra.mxu0 %v4836
          %5015 = vmatpush.msra.mxu0 %v4835
          %5016 = vmatpush.msra.mxu0 %v4834
          %5017 = vmatpush.msra.mxu0 %v4833
          %5018 = vmatpush.msra.mxu0 %v4832
          %5019 = vmatpush.msra.mxu0 %v4831
          %5020 = vmatpush.msra.mxu0 %v4830
          %5021 = vmatpush.msra.mxu0 %v4829
          %5022 = vmatpush.msra.mxu0 %v4828
          %5023 = vmatpush.msra.mxu0 %v4827
          %5024 = vmatpush.msra.mxu0 %v4826
          %5025 = vmatpush.msra.mxu0 %v4825
          %5026 = vmatpush.msra.mxu0 %v4824
          %5027 = vmatpush.msra.mxu0 %v4823
          %5028 = vmatpush.msra.mxu0 %v4822
          %5029 = vmatmul.f32.gmra.mxu0 %v4955
          %v5030 = vpop.f32.mrf.mxu0
          %v5031 = vadd.f32 %v5011, %v5030
          %5032 = vdwg.mxu0
          %5033 = vmatpush.msra.mxu0 %v4853
          %5034 = vmatpush.msra.mxu0 %v4852
          %5035 = vmatpush.msra.mxu0 %v4851
          %5036 = vmatpush.msra.mxu0 %v4850
          %5037 = vmatpush.msra.mxu0 %v4849
          %5038 = vmatpush.msra.mxu0 %v4848
          %5039 = vmatpush.msra.mxu0 %v4847
          %5040 = vmatpush.msra.mxu0 %v4846
          %5041 = vmatpush.msra.mxu0 %v4845
          %5042 = vmatpush.msra.mxu0 %v4844
          %5043 = vmatpush.msra.mxu0 %v4843
          %5044 = vmatpush.msra.mxu0 %v4842
          %5045 = vmatpush.msra.mxu0 %v4841
          %5046 = vmatpush.msra.mxu0 %v4840
          %5047 = vmatpush.msra.mxu0 %v4839
          %5048 = vmatpush.msra.mxu0 %v4838
          %5049 = vmatmul.f32.gmra.mxu0 %v4956
          %v5050 = vpop.f32.mrf.mxu0
          %v5051 = vadd.f32 %v5031, %v5050
          %5052 = vdwg.mxu0
          %5053 = vmatpush.msra.mxu0 %v4869
          %5054 = vmatpush.msra.mxu0 %v4868
          %5055 = vmatpush.msra.mxu0 %v4867
          %5056 = vmatpush.msra.mxu0 %v4866
          %5057 = vmatpush.msra.mxu0 %v4865
          %5058 = vmatpush.msra.mxu0 %v4864
          %5059 = vmatpush.msra.mxu0 %v4863
          %5060 = vmatpush.msra.mxu0 %v4862
          %5061 = vmatpush.msra.mxu0 %v4861
          %5062 = vmatpush.msra.mxu0 %v4860
          %5063 = vmatpush.msra.mxu0 %v4859
          %5064 = vmatpush.msra.mxu0 %v4858
          %5065 = vmatpush.msra.mxu0 %v4857
          %5066 = vmatpush.msra.mxu0 %v4856
          %5067 = vmatpush.msra.mxu0 %v4855
          %5068 = vmatpush.msra.mxu0 %v4854
          %5069 = vmatmul.f32.gmra.mxu0 %v4957
          %v5070 = vpop.f32.mrf.mxu0
          %v5071 = vadd.f32 %v5051, %v5070
          %5072 = vdwg.mxu0
          %5073 = vmatpush.msra.mxu0 %v4885
          %5074 = vmatpush.msra.mxu0 %v4884
          %5075 = vmatpush.msra.mxu0 %v4883
          %5076 = vmatpush.msra.mxu0 %v4882
          %5077 = vmatpush.msra.mxu0 %v4881
          %5078 = vmatpush.msra.mxu0 %v4880
          %5079 = vmatpush.msra.mxu0 %v4879
          %5080 = vmatpush.msra.mxu0 %v4878
          %5081 = vmatpush.msra.mxu0 %v4877
          %5082 = vmatpush.msra.mxu0 %v4876
          %5083 = vmatpush.msra.mxu0 %v4875
          %5084 = vmatpush.msra.mxu0 %v4874
          %5085 = vmatpush.msra.mxu0 %v4873
          %5086 = vmatpush.msra.mxu0 %v4872
          %5087 = vmatpush.msra.mxu0 %v4871
          %5088 = vmatpush.msra.mxu0 %v4870
          %5089 = vmatmul.f32.gmra.mxu0 %v4958
          %v5090 = vpop.f32.mrf.mxu0
          %v5091 = vadd.f32 %v5071, %v5090
          %5092 = vdwg.mxu0
          %5093 = vmatpush.msra.mxu0 %v4901
          %5094 = vmatpush.msra.mxu0 %v4900
          %5095 = vmatpush.msra.mxu0 %v4899
          %5096 = vmatpush.msra.mxu0 %v4898
          %5097 = vmatpush.msra.mxu0 %v4897
          %5098 = vmatpush.msra.mxu0 %v4896
          %5099 = vmatpush.msra.mxu0 %v4895
          %5100 = vmatpush.msra.mxu0 %v4894
          %5101 = vmatpush.msra.mxu0 %v4893
          %5102 = vmatpush.msra.mxu0 %v4892
          %5103 = vmatpush.msra.mxu0 %v4891
          %5104 = vmatpush.msra.mxu0 %v4890
          %5105 = vmatpush.msra.mxu0 %v4889
          %5106 = vmatpush.msra.mxu0 %v4888
          %5107 = vmatpush.msra.mxu0 %v4887
          %5108 = vmatpush.msra.mxu0 %v4886
          %5109 = vmatmul.f32.gmra.mxu0 %v4959
          %v5110 = vpop.f32.mrf.mxu0
          %v5111 = vadd.f32 %v5091, %v5110
          %5112 = vdwg.mxu0
          %5113 = vmatpush.msra.mxu0 %v4917
          %5114 = vmatpush.msra.mxu0 %v4916
          %5115 = vmatpush.msra.mxu0 %v4915
          %5116 = vmatpush.msra.mxu0 %v4914
          %5117 = vmatpush.msra.mxu0 %v4913
          %5118 = vmatpush.msra.mxu0 %v4912
          %5119 = vmatpush.msra.mxu0 %v4911
          %5120 = vmatpush.msra.mxu0 %v4910
          %5121 = vmatpush.msra.mxu0 %v4909
          %5122 = vmatpush.msra.mxu0 %v4908
          %5123 = vmatpush.msra.mxu0 %v4907
          %5124 = vmatpush.msra.mxu0 %v4906
          %5125 = vmatpush.msra.mxu0 %v4905
          %5126 = vmatpush.msra.mxu0 %v4904
          %5127 = vmatpush.msra.mxu0 %v4903
          %5128 = vmatpush.msra.mxu0 %v4902
          %5129 = vmatmul.f32.gmra.mxu0 %v4960
          %v5130 = vpop.f32.mrf.mxu0
          %v5131 = vadd.f32 %v5111, %v5130
          %5132 = vdwg.mxu0
          %5133 = vmatpush.msra.mxu0 %v4933
          %5134 = vmatpush.msra.mxu0 %v4932
          %5135 = vmatpush.msra.mxu0 %v4931
          %5136 = vmatpush.msra.mxu0 %v4930
          %5137 = vmatpush.msra.mxu0 %v4929
          %5138 = vmatpush.msra.mxu0 %v4928
          %5139 = vmatpush.msra.mxu0 %v4927
          %5140 = vmatpush.msra.mxu0 %v4926
          %5141 = vmatpush.msra.mxu0 %v4925
          %5142 = vmatpush.msra.mxu0 %v4924
          %5143 = vmatpush.msra.mxu0 %v4923
          %5144 = vmatpush.msra.mxu0 %v4922
          %5145 = vmatpush.msra.mxu0 %v4921
          %5146 = vmatpush.msra.mxu0 %v4920
          %5147 = vmatpush.msra.mxu0 %v4919
          %5148 = vmatpush.msra.mxu0 %v4918
          %5149 = vmatmul.f32.gmra.mxu0 %v4961
          %v5150 = vpop.f32.mrf.mxu0
          %v5151 = vadd.f32 %v5131, %v5150
          %5152 = vdwg.mxu0
          %5153 = vmatpush.msra.mxu0 %v4949
          %5154 = vmatpush.msra.mxu0 %v4948
          %5155 = vmatpush.msra.mxu0 %v4947
          %5156 = vmatpush.msra.mxu0 %v4946
          %5157 = vmatpush.msra.mxu0 %v4945
          %5158 = vmatpush.msra.mxu0 %v4944
          %5159 = vmatpush.msra.mxu0 %v4943
          %5160 = vmatpush.msra.mxu0 %v4942
          %5161 = vmatpush.msra.mxu0 %v4941
          %5162 = vmatpush.msra.mxu0 %v4940
          %5163 = vmatpush.msra.mxu0 %v4939
          %5164 = vmatpush.msra.mxu0 %v4938
          %5165 = vmatpush.msra.mxu0 %v4937
          %5166 = vmatpush.msra.mxu0 %v4936
          %5167 = vmatpush.msra.mxu0 %v4935
          %5168 = vmatpush.msra.mxu0 %v4934
          %5169 = vmatmul.f32.gmra.mxu0 %v4962
          %v5170 = vpop.f32.mrf.mxu0
          %v5171 = vadd.f32 %v5151, %v5170
          %5172 = vdwg.mxu0
          %vm5173 = vcmask 73728
          %5174 = vst.msk [vmem:[%s281] sm:$0x1] %vm5173, %v5171
        $region52: #{efficientnet_b1_forward.7} parent=43 // pred_fallthru
          _
        %s5175 = sand.u32 %s178, 1
        %s5176 = scalar_lea.sflag [#allocation5], %s5175
        %s5177 = sand.u32 %s178, 1
        %s5178 = scalar_lea.vmem [#allocation4], %s5177
        // Predicated region
        $region53: #{efficientnet_b1_forward.7} parent=43 // pred_check
          %p5179 = pneg %p188
        $region54: #{efficientnet_b1_forward.7} parent=43 // pred_check_branch
          %5181 = sbr.rel (%p5179) target = $region56
        $region55: #{efficientnet_b1_forward.7} parent=43 // pred_region
          %5183 = vsyncadd %s5176, 0
          %s5184 = scalar_lea.hbm %s6, %s24
          %s5186 = sshll.u32 %s5178, 4
          %s5187 = int_to_ptr.vmem [resolvable:$true] %s5186
          %s5188 = sshll.u32 %s5184, 4
          %s5189 = int_to_ptr.hbm [resolvable:$true] %s5188
          %5191 = dma.vmem_to_hbm [thread:$0]  %s5187, 16, %s5189, %s5176
        $region56: #{efficientnet_b1_forward.7} parent=43 // pred_fallthru
          _
      $region44: #{efficientnet_b1_forward.7} parent=5 // pred_fallthru
        _
      %p5192 = scmp.le.s32.totalorder 2, %s15
      // Predicated region
      $region57: #{efficientnet_b1_forward.7} parent=5 // pred_check
        %p5193 = pneg %p5192
      $region58: #{efficientnet_b1_forward.7} parent=5 // pred_check_branch
        %5195 = sbr.rel (%p5193) target = $region60
      $region59: #{efficientnet_b1_forward.7} parent=5 // pred_region
        %s5196 = ssub.s32 %s15, 2
        // Predicated region
        $region61: #{efficientnet_b1_forward.7} parent=59 // pred_check
          %p5197 = pneg %p194
        $region62: #{efficientnet_b1_forward.7} parent=59 // pred_check_branch
          %5199 = sbr.rel (%p5197) target = $region64
        $region63: #{efficientnet_b1_forward.7} parent=59 // pred_region
          %s5200 = sand.u32 %s179, 1
          %s5201 = scalar_lea.sflag [#allocation5], %s5200
          %s5202 = sand.u32 %s179, 1
          %s5203 = scalar_lea.vmem [#allocation4], %s5202
          %5205 = dma.done %s5201, 16
        $region64: #{efficientnet_b1_forward.7} parent=59 // pred_fallthru
          _
      $region60: #{efficientnet_b1_forward.7} parent=5 // pred_fallthru
        _
    $region6: #{efficientnet_b1_forward.7} parent=1 // loop_footer
      %s19 = sadd.s32 1, %s15
    $region7: #{efficientnet_b1_forward.7} parent=1 // loop_footer_branch
      %14 = sbr.rel target = $region3
    $region8: #{efficientnet_b1_forward.7} parent=1 // loop_exit
      _
    %5206 = vsyncpa [#allocation5], 1
    %s5207 = scalar_lea.sflag [#allocation5], 1
    %5208 = vsyncpa %s5207, 1

</llo_original>
